<compile_context>
chip_gen: v7x
topology: tpu7x:2x2x1
jax: 0.10.0
libtpu: 0.0.40
codegen_flags: <defaults>
</compile_context>

<pallas_src>
import numpy as np
import jax
import jax.numpy as jnp
from jax.experimental import pallas as pl
from jax.experimental.pallas import tpu as pltpu


_VMEM_LIMIT = 32 * 1024 * 1024   # safe on v5e/v6e (128 MiB) and v7x (64 MiB)
_NEG_SLOPE = 0.2
_EPS = 1e-5


# ----------------------------- kernel helpers ------------------------------

def _leaky(x):
    return jnp.where(x > 0, x, _NEG_SLOPE * x)


def _conv_from_refs(x_bf16, r_ref, t_ref):
    """4x4 stride-2 conv:  sum_di (R_di @ x) @ T_di   -> [Ho, Wo*Co] f32.

    R_di ([4, Ho, Hi], 0/1) selects the padded input rows for kernel row di;
    T_di ([4, Wi*Ci, Wo*Co]) is the Toeplitz form of the weights with the
    W-direction stride-2 + zero padding baked in."""
    acc = None
    for di in range(4):
        sel = jnp.dot(r_ref[di], x_bf16, preferred_element_type=jnp.float32)
        part = jnp.dot(sel.astype(jnp.bfloat16), t_ref[di],
                       preferred_element_type=jnp.float32)
        acc = part if acc is None else acc + part
    return acc


def _conv_in_lrelu(x_f32, r_ref, t_ref, p_ref, g_ref, b_ref):
    """Conv(no bias) + InstanceNorm2d(affine) + LeakyReLU, fully in VMEM."""
    acc = _conv_from_refs(x_f32.astype(jnp.bfloat16), r_ref, t_ref)   # [Ho, Wo*Co]
    # per-channel mean, broadcast back to the (w, c) lane layout via P
    s1 = jnp.sum(acc, axis=0, keepdims=True)                          # [1, Wo*Co]
    mean = jnp.dot(s1, p_ref[...], preferred_element_type=jnp.float32)
    d = acc - mean                                                    # reused below
    s2 = jnp.sum(d * d, axis=0, keepdims=True)
    var = jnp.dot(s2, p_ref[...], preferred_element_type=jnp.float32)
    y = d * jax.lax.rsqrt(var + _EPS) * g_ref[...] + b_ref[...]
    return _leaky(y)


def _critic_kernel(x_ref,
                   r1_ref, t1_ref, b1_ref,
                   r2_ref, t2_ref, p2_ref, g2_ref, be2_ref,
                   r3_ref, t3_ref, p3_ref, g3_ref, be3_ref,
                   r4_ref, t4_ref, p4_ref, g4_ref, be4_ref,
                   w5_ref, b5_ref,
                   o_ref):
    # one grid step == one sample, everything stays in VMEM
    x0 = x_ref[0]                                                    # [64, 192] bf16
    # conv1 + bias + LeakyReLU
    h = _leaky(_conv_from_refs(x0, r1_ref, t1_ref) + b1_ref[...])    # [32, 256]
    # three fused Conv + InstanceNorm(affine) + LeakyReLU blocks
    h = _conv_in_lrelu(h, r2_ref, t2_ref, p2_ref, g2_ref, be2_ref)   # [16, 256]
    h = _conv_in_lrelu(h, r3_ref, t3_ref, p3_ref, g3_ref, be3_ref)   # [ 8, 256]
    h = _conv_in_lrelu(h, r4_ref, t4_ref, p4_ref, g4_ref, be4_ref)   # [ 4, 256]
    # final Conv2d(fd*8, 1, 4, 2, 0): a full VPU dot over the [4, 256] slab
    prod = h * w5_ref[...].astype(jnp.float32)
    val = jnp.sum(jnp.sum(prod, axis=1, keepdims=True), axis=0, keepdims=True)
    o_ref[0] = val + b5_ref[...]                                      # [1, 1]


# ------------------------- parameter preparation ---------------------------

def init_critic_params(key, img_channels, features_d):
    """Raw parameters in PyTorch Conv2d / InstanceNorm2d layouts."""
    fd = features_d
    ks = iter(jax.random.split(key, 16))
    p = {}
    p["c1_w"] = jax.random.normal(next(ks), (fd, img_channels, 4, 4)) * 0.02
    p["c1_b"] = jax.random.normal(next(ks), (fd,)) * 0.02
    chans = [(fd, fd * 2), (fd * 2, fd * 4), (fd * 4, fd * 8)]
    for i, (ic, oc) in enumerate(chans, start=2):
        p[f"c{i}_w"] = jax.random.normal(next(ks), (oc, ic, 4, 4)) * 0.02
        p[f"c{i}_g"] = 1.0 + 0.1 * jax.random.normal(next(ks), (oc,))
        p[f"c{i}_b"] = 0.1 * jax.random.normal(next(ks), (oc,))
    p["c5_w"] = jax.random.normal(next(ks), (1, fd * 8, 4, 4)) * 0.02
    p["c5_b"] = jax.random.normal(next(ks), (1,)) * 0.02
    return jax.tree_util.tree_map(lambda a: a.astype(jnp.float32), p)


def _rowsel(hi, ho, pad):
    """R[di, i, :] selects input row (2*i + di - pad); zero row if padded."""
    r = np.zeros((4, ho, hi), np.float32)
    for di in range(4):
        for i in range(ho):
            h = 2 * i + di - pad
            if 0 <= h < hi:
                r[di, i, h] = 1.0
    return r


def _toeplitz_w(w, wi, wo, pad):
    """w: [Co, Ci, 4, 4] -> T[di, wi*Ci + c, wo*Co + co] = w[co, c, di, dj]
    with dj = wi - 2*wo + pad (stride-2 + zero padding baked in)."""
    co, ci = w.shape[0], w.shape[1]
    t = np.zeros((4, wi * ci, wo * co), np.float32)
    for di in range(4):
        for o in range(wo):
            for dj in range(4):
                col = 2 * o + dj - pad
                if 0 <= col < wi:
                    t[di, col * ci:(col + 1) * ci, o * co:(o + 1) * co] += \
                        w[:, :, di, dj].T
    return t


def prepare_params(raw, img_size=64):
    """One-time reorder of parameters into row-selection / Toeplitz matrices."""
    npr = {k: np.asarray(v, np.float32) for k, v in raw.items()}
    p = {}
    size = img_size
    # conv1 (bias=True)
    ho = size // 2
    p["r1"] = jnp.asarray(_rowsel(size, ho, 1), jnp.bfloat16)
    p["t1"] = jnp.asarray(_toeplitz_w(npr["c1_w"], size, ho, 1), jnp.bfloat16)
    p["b1"] = jnp.asarray(np.tile(npr["c1_b"], ho)[None, :], jnp.float32)
    size = ho
    # blocks 2-4: conv(no bias) + InstanceNorm(affine) + LeakyReLU
    for i in (2, 3, 4):
        w = npr[f"c{i}_w"]
        co = w.shape[0]
        ho = size // 2
        p[f"r{i}"] = jnp.asarray(_rowsel(size, ho, 1), jnp.bfloat16)
        p[f"t{i}"] = jnp.asarray(_toeplitz_w(w, size, ho, 1), jnp.bfloat16)
        # channel-comb matrix: sums over w per channel and re-broadcasts,
        # with the 1/(Ho*Wo) mean divisor folded in
        pm = np.tile(np.eye(co, dtype=np.float32), (ho, ho)) / float(ho * ho)
        p[f"p{i}"] = jnp.asarray(pm, jnp.float32)
        p[f"g{i}"] = jnp.asarray(np.tile(npr[f"c{i}_g"], ho)[None, :], jnp.float32)
        p[f"be{i}"] = jnp.asarray(np.tile(npr[f"c{i}_b"], ho)[None, :], jnp.float32)
        size = ho
    assert size == 4, "Critic requires 64x64 input (64->32->16->8->4->1)."
    # conv5: OC=1, k=4, s=2, p=0 on a 4x4 map -> plain dot over the [4, 4*C] slab
    w5 = npr["c5_w"][0]                                  # [C, 4, 4]
    w5m = np.transpose(w5, (1, 2, 0)).reshape(4, 4 * w5.shape[0])
    p["w5"] = jnp.asarray(w5m, jnp.bfloat16)
    p["b5"] = jnp.asarray(npr["c5_b"].reshape(1, 1), jnp.float32)
    return p


_PARAM_ORDER = ("r1", "t1", "b1",
                "r2", "t2", "p2", "g2", "be2",
                "r3", "t3", "p3", "g3", "be3",
                "r4", "t4", "p4", "g4", "be4",
                "w5", "b5")


# ------------------------------- forward -----------------------------------

@jax.jit
def critic_forward(params, x_nchw):
    n, c, h, w = x_nchw.shape
    # single layout transform at the model boundary: NCHW -> [N, H, W*C] bf16
    x = x_nchw.transpose(0, 2, 3, 1).reshape(n, h, w * c).astype(jnp.bfloat16)
    consts = [params[k] for k in _PARAM_ORDER]

    in_specs = [pl.BlockSpec((1, h, w * c), lambda i: (i, 0, 0))]
    for a in consts:
        in_specs.append(
            pl.BlockSpec(a.shape, lambda i, _nd=a.ndim: (0,) * _nd))

    out = pl.pallas_call(
        _critic_kernel,
        out_shape=jax.ShapeDtypeStruct((n, 1, 1), jnp.float32),
        grid=(n,),
        in_specs=in_specs,
        out_specs=pl.BlockSpec((1, 1, 1), lambda i: (i, 0, 0)),
        compiler_params=pltpu.CompilerParams(
            dimension_semantics=("parallel",),
            vmem_limit_bytes=_VMEM_LIMIT),
    )(x, *consts)
    return out.reshape(n, 1, 1, 1)


# --------------------------- pure-JAX reference ----------------------------

def _ref_forward(raw, x):
    def conv(y, w, b=None, stride=2, pad=1):
        out = jax.lax.conv_general_dilated(
            y, w, window_strides=(stride, stride),
            padding=[(pad, pad), (pad, pad)],
            dimension_numbers=("NCHW", "OIHW", "NCHW"),
            precision=jax.lax.Precision.HIGHEST)
        if b is not None:
            out = out + b.reshape(1, -1, 1, 1)
        return out

    def lrelu(y):
        return jnp.where(y > 0, y, _NEG_SLOPE * y)

    def inorm(y, g, b):
        m = jnp.mean(y, axis=(2, 3), keepdims=True)
        v = jnp.mean(jnp.square(y - m), axis=(2, 3), keepdims=True)
        return (y - m) * jax.lax.rsqrt(v + _EPS) * g.reshape(1, -1, 1, 1) \
            + b.reshape(1, -1, 1, 1)

    h = lrelu(conv(x, raw["c1_w"], raw["c1_b"]))
    for i in (2, 3, 4):
        h = lrelu(inorm(conv(h, raw[f"c{i}_w"]),
                        raw[f"c{i}_g"], raw[f"c{i}_b"]))
    return conv(h, raw["c5_w"], raw["c5_b"], stride=2, pad=0)


# ---------------------------------- main ------------------------------------

if __name__ == "__main__":
    key = jax.random.PRNGKey(0)
    k_param, k_x = jax.random.split(key)

    img_channels, features_d = 3, 8
    batch, H, W = 2, 64, 64      # 64x64 is the minimum spatial size the
                                 # architecture supports (64->32->16->8->4->1)
    x = jax.random.normal(k_x, (batch, img_channels, H, W), jnp.float32)

    raw_params = init_critic_params(k_param, img_channels, features_d)
    params = prepare_params(raw_params, img_size=H)   # one-time prep (host side)

    out = jax.block_until_ready(critic_forward(params, x))
    assert out.shape == (batch, 1, 1, 1), out.shape
    assert bool(jnp.all(jnp.isfinite(out)))

    # tolerance-based check vs an f32 XLA reference (bf16 MXU inputs in-kernel)
    ref = jax.block_until_ready(_ref_forward(raw_params, x))
    np.testing.assert_allclose(np.asarray(out), np.asarray(ref),
                               rtol=0.1, atol=0.1)

    print("KERNEL_OK")
</pallas_src>

<mosaic_0001>
module attributes {stable_mosaic.version = 11 : i64} {
  func.func @_critic_kernel(%arg0: i32, %arg1: memref<1x64x192xbf16, #tpu.memory_space<vmem>>, %arg2: memref<4x32x64xbf16, #tpu.memory_space<vmem>>, %arg3: memref<4x192x256xbf16, #tpu.memory_space<vmem>>, %arg4: memref<1x256xf32, #tpu.memory_space<vmem>>, %arg5: memref<4x16x32xbf16, #tpu.memory_space<vmem>>, %arg6: memref<4x256x256xbf16, #tpu.memory_space<vmem>>, %arg7: memref<256x256xf32, #tpu.memory_space<vmem>>, %arg8: memref<1x256xf32, #tpu.memory_space<vmem>>, %arg9: memref<1x256xf32, #tpu.memory_space<vmem>>, %arg10: memref<4x8x16xbf16, #tpu.memory_space<vmem>>, %arg11: memref<4x256x256xbf16, #tpu.memory_space<vmem>>, %arg12: memref<256x256xf32, #tpu.memory_space<vmem>>, %arg13: memref<1x256xf32, #tpu.memory_space<vmem>>, %arg14: memref<1x256xf32, #tpu.memory_space<vmem>>, %arg15: memref<4x4x8xbf16, #tpu.memory_space<vmem>>, %arg16: memref<4x256x256xbf16, #tpu.memory_space<vmem>>, %arg17: memref<256x256xf32, #tpu.memory_space<vmem>>, %arg18: memref<1x256xf32, #tpu.memory_space<vmem>>, %arg19: memref<1x256xf32, #tpu.memory_space<vmem>>, %arg20: memref<4x256xbf16, #tpu.memory_space<vmem>>, %arg21: memref<1x1xf32, #tpu.memory_space<vmem>>, %arg22: memref<1x1x1xf32, #tpu.memory_space<vmem>>) attributes {dimension_semantics = [#tpu.dimension_semantics<parallel>], iteration_bounds = array<i64: 2>, scalar_prefetch = 0 : i64, scratch_operands = 0 : i64, tpu.core_type = #tpu.core_type<tc>, window_params = [{transform_indices = @transform_0, window_bounds = array<i64: 1, 64, 192>}, {pipeline_mode = #tpu.pipeline_mode<synchronous>, transform_indices = @transform_1, window_bounds = array<i64: 4, 32, 64>}, {pipeline_mode = #tpu.pipeline_mode<synchronous>, transform_indices = @transform_2, window_bounds = array<i64: 4, 192, 256>}, {pipeline_mode = #tpu.pipeline_mode<synchronous>, transform_indices = @transform_3, window_bounds = array<i64: 1, 256>}, {pipeline_mode = #tpu.pipeline_mode<synchronous>, transform_indices = @transform_4, window_bounds = array<i64: 4, 16, 32>}, {pipeline_mode = #tpu.pipeline_mode<synchronous>, transform_indices = @transform_5, window_bounds = array<i64: 4, 256, 256>}, {pipeline_mode = #tpu.pipeline_mode<synchronous>, transform_indices = @transform_6, window_bounds = array<i64: 256, 256>}, {pipeline_mode = #tpu.pipeline_mode<synchronous>, transform_indices = @transform_7, window_bounds = array<i64: 1, 256>}, {pipeline_mode = #tpu.pipeline_mode<synchronous>, transform_indices = @transform_8, window_bounds = array<i64: 1, 256>}, {pipeline_mode = #tpu.pipeline_mode<synchronous>, transform_indices = @transform_9, window_bounds = array<i64: 4, 8, 16>}, {pipeline_mode = #tpu.pipeline_mode<synchronous>, transform_indices = @transform_10, window_bounds = array<i64: 4, 256, 256>}, {pipeline_mode = #tpu.pipeline_mode<synchronous>, transform_indices = @transform_11, window_bounds = array<i64: 256, 256>}, {pipeline_mode = #tpu.pipeline_mode<synchronous>, transform_indices = @transform_12, window_bounds = array<i64: 1, 256>}, {pipeline_mode = #tpu.pipeline_mode<synchronous>, transform_indices = @transform_13, window_bounds = array<i64: 1, 256>}, {pipeline_mode = #tpu.pipeline_mode<synchronous>, transform_indices = @transform_14, window_bounds = array<i64: 4, 4, 8>}, {pipeline_mode = #tpu.pipeline_mode<synchronous>, transform_indices = @transform_15, window_bounds = array<i64: 4, 256, 256>}, {pipeline_mode = #tpu.pipeline_mode<synchronous>, transform_indices = @transform_16, window_bounds = array<i64: 256, 256>}, {pipeline_mode = #tpu.pipeline_mode<synchronous>, transform_indices = @transform_17, window_bounds = array<i64: 1, 256>}, {pipeline_mode = #tpu.pipeline_mode<synchronous>, transform_indices = @transform_18, window_bounds = array<i64: 1, 256>}, {pipeline_mode = #tpu.pipeline_mode<synchronous>, transform_indices = @transform_19, window_bounds = array<i64: 4, 256>}, {pipeline_mode = #tpu.pipeline_mode<synchronous>, transform_indices = @transform_20, window_bounds = array<i64: 1, 1>}, {transform_indices = @transform_21, window_bounds = array<i64: 1, 1, 1>}]} {
    %c0 = arith.constant 0 : index
    %c0_0 = arith.constant 0 : index
    %c0_1 = arith.constant 0 : index
    %0 = vector.load %arg1[%c0, %c0_0, %c0_1] : memref<1x64x192xbf16, #tpu.memory_space<vmem>>, vector<1x64x192xbf16>
    %1 = vector.shape_cast %0 : vector<1x64x192xbf16> to vector<64x192xbf16>
    %c0_2 = arith.constant 0 : index
    %c0_3 = arith.constant 0 : index
    %c0_4 = arith.constant 0 : index
    %2 = vector.load %arg2[%c0_2, %c0_3, %c0_4] : memref<4x32x64xbf16, #tpu.memory_space<vmem>>, vector<1x32x64xbf16>
    %3 = vector.shape_cast %2 : vector<1x32x64xbf16> to vector<32x64xbf16>
    %cst = arith.constant dense<0.000000e+00> : vector<32x192xf32>
    %4 = tpu.matmul %3, %1, %cst {dimension_numbers = #tpu.dot_dimension_numbers<[1], [0], [0], [1], [0, 0, 1, 1], [], []>} : vector<32x64xbf16>, vector<64x192xbf16>, vector<32x192xf32> -> vector<32x192xf32>
    %5 = arith.truncf %4 : vector<32x192xf32> to vector<32x192xbf16>
    %c0_5 = arith.constant 0 : index
    %c0_6 = arith.constant 0 : index
    %c0_7 = arith.constant 0 : index
    %6 = vector.load %arg3[%c0_5, %c0_6, %c0_7] : memref<4x192x256xbf16, #tpu.memory_space<vmem>>, vector<1x192x256xbf16>
    %7 = vector.shape_cast %6 : vector<1x192x256xbf16> to vector<192x256xbf16>
    %cst_8 = arith.constant dense<0.000000e+00> : vector<32x256xf32>
    %8 = tpu.matmul %5, %7, %cst_8 {dimension_numbers = #tpu.dot_dimension_numbers<[1], [0], [0], [1], [0, 0, 1, 1], [], []>} : vector<32x192xbf16>, vector<192x256xbf16>, vector<32x256xf32> -> vector<32x256xf32>
    %c1 = arith.constant 1 : index
    %c0_9 = arith.constant 0 : index
    %c0_10 = arith.constant 0 : index
    %9 = vector.load %arg2[%c1, %c0_9, %c0_10] : memref<4x32x64xbf16, #tpu.memory_space<vmem>>, vector<1x32x64xbf16>
    %10 = vector.shape_cast %9 : vector<1x32x64xbf16> to vector<32x64xbf16>
    %cst_11 = arith.constant dense<0.000000e+00> : vector<32x192xf32>
    %11 = tpu.matmul %10, %1, %cst_11 {dimension_numbers = #tpu.dot_dimension_numbers<[1], [0], [0], [1], [0, 0, 1, 1], [], []>} : vector<32x64xbf16>, vector<64x192xbf16>, vector<32x192xf32> -> vector<32x192xf32>
    %12 = arith.truncf %11 : vector<32x192xf32> to vector<32x192xbf16>
    %c1_12 = arith.constant 1 : index
    %c0_13 = arith.constant 0 : index
    %c0_14 = arith.constant 0 : index
    %13 = vector.load %arg3[%c1_12, %c0_13, %c0_14] : memref<4x192x256xbf16, #tpu.memory_space<vmem>>, vector<1x192x256xbf16>
    %14 = vector.shape_cast %13 : vector<1x192x256xbf16> to vector<192x256xbf16>
    %cst_15 = arith.constant dense<0.000000e+00> : vector<32x256xf32>
    %15 = tpu.matmul %12, %14, %cst_15 {dimension_numbers = #tpu.dot_dimension_numbers<[1], [0], [0], [1], [0, 0, 1, 1], [], []>} : vector<32x192xbf16>, vector<192x256xbf16>, vector<32x256xf32> -> vector<32x256xf32>
    %16 = arith.addf %8, %15 : vector<32x256xf32>
    %c2 = arith.constant 2 : index
    %c0_16 = arith.constant 0 : index
    %c0_17 = arith.constant 0 : index
    %17 = vector.load %arg2[%c2, %c0_16, %c0_17] : memref<4x32x64xbf16, #tpu.memory_space<vmem>>, vector<1x32x64xbf16>
    %18 = vector.shape_cast %17 : vector<1x32x64xbf16> to vector<32x64xbf16>
    %cst_18 = arith.constant dense<0.000000e+00> : vector<32x192xf32>
    %19 = tpu.matmul %18, %1, %cst_18 {dimension_numbers = #tpu.dot_dimension_numbers<[1], [0], [0], [1], [0, 0, 1, 1], [], []>} : vector<32x64xbf16>, vector<64x192xbf16>, vector<32x192xf32> -> vector<32x192xf32>
    %20 = arith.truncf %19 : vector<32x192xf32> to vector<32x192xbf16>
    %c2_19 = arith.constant 2 : index
    %c0_20 = arith.constant 0 : index
    %c0_21 = arith.constant 0 : index
    %21 = vector.load %arg3[%c2_19, %c0_20, %c0_21] : memref<4x192x256xbf16, #tpu.memory_space<vmem>>, vector<1x192x256xbf16>
    %22 = vector.shape_cast %21 : vector<1x192x256xbf16> to vector<192x256xbf16>
    %cst_22 = arith.constant dense<0.000000e+00> : vector<32x256xf32>
    %23 = tpu.matmul %20, %22, %cst_22 {dimension_numbers = #tpu.dot_dimension_numbers<[1], [0], [0], [1], [0, 0, 1, 1], [], []>} : vector<32x192xbf16>, vector<192x256xbf16>, vector<32x256xf32> -> vector<32x256xf32>
    %24 = arith.addf %16, %23 : vector<32x256xf32>
    %c3 = arith.constant 3 : index
    %c0_23 = arith.constant 0 : index
    %c0_24 = arith.constant 0 : index
    %25 = vector.load %arg2[%c3, %c0_23, %c0_24] : memref<4x32x64xbf16, #tpu.memory_space<vmem>>, vector<1x32x64xbf16>
    %26 = vector.shape_cast %25 : vector<1x32x64xbf16> to vector<32x64xbf16>
    %cst_25 = arith.constant dense<0.000000e+00> : vector<32x192xf32>
    %27 = tpu.matmul %26, %1, %cst_25 {dimension_numbers = #tpu.dot_dimension_numbers<[1], [0], [0], [1], [0, 0, 1, 1], [], []>} : vector<32x64xbf16>, vector<64x192xbf16>, vector<32x192xf32> -> vector<32x192xf32>
    %28 = arith.truncf %27 : vector<32x192xf32> to vector<32x192xbf16>
    %c3_26 = arith.constant 3 : index
    %c0_27 = arith.constant 0 : index
    %c0_28 = arith.constant 0 : index
    %29 = vector.load %arg3[%c3_26, %c0_27, %c0_28] : memref<4x192x256xbf16, #tpu.memory_space<vmem>>, vector<1x192x256xbf16>
    %30 = vector.shape_cast %29 : vector<1x192x256xbf16> to vector<192x256xbf16>
    %cst_29 = arith.constant dense<0.000000e+00> : vector<32x256xf32>
    %31 = tpu.matmul %28, %30, %cst_29 {dimension_numbers = #tpu.dot_dimension_numbers<[1], [0], [0], [1], [0, 0, 1, 1], [], []>} : vector<32x192xbf16>, vector<192x256xbf16>, vector<32x256xf32> -> vector<32x256xf32>
    %32 = arith.addf %24, %31 : vector<32x256xf32>
    %c0_30 = arith.constant 0 : index
    %c0_31 = arith.constant 0 : index
    %33 = vector.load %arg4[%c0_30, %c0_31] : memref<1x256xf32, #tpu.memory_space<vmem>>, vector<1x256xf32>
    %34 = vector.broadcast %33 : vector<1x256xf32> to vector<32x256xf32>
    %35 = arith.addf %32, %34 : vector<32x256xf32>
    %cst_32 = arith.constant 0.000000e+00 : f32
    %36 = vector.broadcast %cst_32 : f32 to vector<32x256xf32>
    %37 = arith.cmpf ogt, %35, %36 : vector<32x256xf32>
    %cst_33 = arith.constant 2.000000e-01 : f32
    %38 = vector.broadcast %cst_33 : f32 to vector<32x256xf32>
    %39 = arith.mulf %38, %35 : vector<32x256xf32>
    %40 = arith.select %37, %35, %39 : vector<32x256xi1>, vector<32x256xf32>
    %41 = arith.truncf %40 : vector<32x256xf32> to vector<32x256xbf16>
    %c0_34 = arith.constant 0 : index
    %c0_35 = arith.constant 0 : index
    %c0_36 = arith.constant 0 : index
    %42 = vector.load %arg5[%c0_34, %c0_35, %c0_36] : memref<4x16x32xbf16, #tpu.memory_space<vmem>>, vector<1x16x32xbf16>
    %43 = vector.shape_cast %42 : vector<1x16x32xbf16> to vector<16x32xbf16>
    %cst_37 = arith.constant dense<0.000000e+00> : vector<16x256xf32>
    %44 = tpu.matmul %43, %41, %cst_37 {dimension_numbers = #tpu.dot_dimension_numbers<[1], [0], [0], [1], [0, 0, 1, 1], [], []>} : vector<16x32xbf16>, vector<32x256xbf16>, vector<16x256xf32> -> vector<16x256xf32>
    %45 = arith.truncf %44 : vector<16x256xf32> to vector<16x256xbf16>
    %c0_38 = arith.constant 0 : index
    %c0_39 = arith.constant 0 : index
    %c0_40 = arith.constant 0 : index
    %46 = vector.load %arg6[%c0_38, %c0_39, %c0_40] : memref<4x256x256xbf16, #tpu.memory_space<vmem>>, vector<1x256x256xbf16>
    %47 = vector.shape_cast %46 : vector<1x256x256xbf16> to vector<256x256xbf16>
    %cst_41 = arith.constant dense<0.000000e+00> : vector<16x256xf32>
    %48 = tpu.matmul %45, %47, %cst_41 {dimension_numbers = #tpu.dot_dimension_numbers<[1], [0], [0], [1], [0, 0, 1, 1], [], []>} : vector<16x256xbf16>, vector<256x256xbf16>, vector<16x256xf32> -> vector<16x256xf32>
    %c1_42 = arith.constant 1 : index
    %c0_43 = arith.constant 0 : index
    %c0_44 = arith.constant 0 : index
    %49 = vector.load %arg5[%c1_42, %c0_43, %c0_44] : memref<4x16x32xbf16, #tpu.memory_space<vmem>>, vector<1x16x32xbf16>
    %50 = vector.shape_cast %49 : vector<1x16x32xbf16> to vector<16x32xbf16>
    %cst_45 = arith.constant dense<0.000000e+00> : vector<16x256xf32>
    %51 = tpu.matmul %50, %41, %cst_45 {dimension_numbers = #tpu.dot_dimension_numbers<[1], [0], [0], [1], [0, 0, 1, 1], [], []>} : vector<16x32xbf16>, vector<32x256xbf16>, vector<16x256xf32> -> vector<16x256xf32>
    %52 = arith.truncf %51 : vector<16x256xf32> to vector<16x256xbf16>
    %c1_46 = arith.constant 1 : index
    %c0_47 = arith.constant 0 : index
    %c0_48 = arith.constant 0 : index
    %53 = vector.load %arg6[%c1_46, %c0_47, %c0_48] : memref<4x256x256xbf16, #tpu.memory_space<vmem>>, vector<1x256x256xbf16>
    %54 = vector.shape_cast %53 : vector<1x256x256xbf16> to vector<256x256xbf16>
    %cst_49 = arith.constant dense<0.000000e+00> : vector<16x256xf32>
    %55 = tpu.matmul %52, %54, %cst_49 {dimension_numbers = #tpu.dot_dimension_numbers<[1], [0], [0], [1], [0, 0, 1, 1], [], []>} : vector<16x256xbf16>, vector<256x256xbf16>, vector<16x256xf32> -> vector<16x256xf32>
    %56 = arith.addf %48, %55 : vector<16x256xf32>
    %c2_50 = arith.constant 2 : index
    %c0_51 = arith.constant 0 : index
    %c0_52 = arith.constant 0 : index
    %57 = vector.load %arg5[%c2_50, %c0_51, %c0_52] : memref<4x16x32xbf16, #tpu.memory_space<vmem>>, vector<1x16x32xbf16>
    %58 = vector.shape_cast %57 : vector<1x16x32xbf16> to vector<16x32xbf16>
    %cst_53 = arith.constant dense<0.000000e+00> : vector<16x256xf32>
    %59 = tpu.matmul %58, %41, %cst_53 {dimension_numbers = #tpu.dot_dimension_numbers<[1], [0], [0], [1], [0, 0, 1, 1], [], []>} : vector<16x32xbf16>, vector<32x256xbf16>, vector<16x256xf32> -> vector<16x256xf32>
    %60 = arith.truncf %59 : vector<16x256xf32> to vector<16x256xbf16>
    %c2_54 = arith.constant 2 : index
    %c0_55 = arith.constant 0 : index
    %c0_56 = arith.constant 0 : index
    %61 = vector.load %arg6[%c2_54, %c0_55, %c0_56] : memref<4x256x256xbf16, #tpu.memory_space<vmem>>, vector<1x256x256xbf16>
    %62 = vector.shape_cast %61 : vector<1x256x256xbf16> to vector<256x256xbf16>
    %cst_57 = arith.constant dense<0.000000e+00> : vector<16x256xf32>
    %63 = tpu.matmul %60, %62, %cst_57 {dimension_numbers = #tpu.dot_dimension_numbers<[1], [0], [0], [1], [0, 0, 1, 1], [], []>} : vector<16x256xbf16>, vector<256x256xbf16>, vector<16x256xf32> -> vector<16x256xf32>
    %64 = arith.addf %56, %63 : vector<16x256xf32>
    %c3_58 = arith.constant 3 : index
    %c0_59 = arith.constant 0 : index
    %c0_60 = arith.constant 0 : index
    %65 = vector.load %arg5[%c3_58, %c0_59, %c0_60] : memref<4x16x32xbf16, #tpu.memory_space<vmem>>, vector<1x16x32xbf16>
    %66 = vector.shape_cast %65 : vector<1x16x32xbf16> to vector<16x32xbf16>
    %cst_61 = arith.constant dense<0.000000e+00> : vector<16x256xf32>
    %67 = tpu.matmul %66, %41, %cst_61 {dimension_numbers = #tpu.dot_dimension_numbers<[1], [0], [0], [1], [0, 0, 1, 1], [], []>} : vector<16x32xbf16>, vector<32x256xbf16>, vector<16x256xf32> -> vector<16x256xf32>
    %68 = arith.truncf %67 : vector<16x256xf32> to vector<16x256xbf16>
    %c3_62 = arith.constant 3 : index
    %c0_63 = arith.constant 0 : index
    %c0_64 = arith.constant 0 : index
    %69 = vector.load %arg6[%c3_62, %c0_63, %c0_64] : memref<4x256x256xbf16, #tpu.memory_space<vmem>>, vector<1x256x256xbf16>
    %70 = vector.shape_cast %69 : vector<1x256x256xbf16> to vector<256x256xbf16>
    %cst_65 = arith.constant dense<0.000000e+00> : vector<16x256xf32>
    %71 = tpu.matmul %68, %70, %cst_65 {dimension_numbers = #tpu.dot_dimension_numbers<[1], [0], [0], [1], [0, 0, 1, 1], [], []>} : vector<16x256xbf16>, vector<256x256xbf16>, vector<16x256xf32> -> vector<16x256xf32>
    %72 = arith.addf %64, %71 : vector<16x256xf32>
    %cst_66 = arith.constant dense<0.000000e+00> : vector<256xf32>
    %73 = vector.multi_reduction <add>, %72, %cst_66 [0] : vector<16x256xf32> to vector<256xf32>
    %74 = vector.shape_cast %73 : vector<256xf32> to vector<1x256xf32>
    %c0_67 = arith.constant 0 : index
    %c0_68 = arith.constant 0 : index
    %75 = vector.load %arg7[%c0_67, %c0_68] : memref<256x256xf32, #tpu.memory_space<vmem>>, vector<256x256xf32>
    %cst_69 = arith.constant dense<0.000000e+00> : vector<1x256xf32>
    %76 = tpu.matmul %74, %75, %cst_69 {dimension_numbers = #tpu.dot_dimension_numbers<[1], [0], [0], [1], [0, 0, 1, 1], [], []>} : vector<1x256xf32>, vector<256x256xf32>, vector<1x256xf32> -> vector<1x256xf32>
    %77 = vector.broadcast %76 : vector<1x256xf32> to vector<16x256xf32>
    %78 = arith.subf %72, %77 : vector<16x256xf32>
    %79 = arith.mulf %78, %78 : vector<16x256xf32>
    %cst_70 = arith.constant dense<0.000000e+00> : vector<256xf32>
    %80 = vector.multi_reduction <add>, %79, %cst_70 [0] : vector<16x256xf32> to vector<256xf32>
    %81 = vector.shape_cast %80 : vector<256xf32> to vector<1x256xf32>
    %c0_71 = arith.constant 0 : index
    %c0_72 = arith.constant 0 : index
    %82 = vector.load %arg7[%c0_71, %c0_72] : memref<256x256xf32, #tpu.memory_space<vmem>>, vector<256x256xf32>
    %cst_73 = arith.constant dense<0.000000e+00> : vector<1x256xf32>
    %83 = tpu.matmul %81, %82, %cst_73 {dimension_numbers = #tpu.dot_dimension_numbers<[1], [0], [0], [1], [0, 0, 1, 1], [], []>} : vector<1x256xf32>, vector<256x256xf32>, vector<1x256xf32> -> vector<1x256xf32>
    %cst_74 = arith.constant 9.99999974E-6 : f32
    %84 = vector.broadcast %cst_74 : f32 to vector<1x256xf32>
    %85 = arith.addf %83, %84 : vector<1x256xf32>
    %86 = math.rsqrt %85 : vector<1x256xf32>
    %87 = vector.broadcast %86 : vector<1x256xf32> to vector<16x256xf32>
    %88 = arith.mulf %78, %87 : vector<16x256xf32>
    %c0_75 = arith.constant 0 : index
    %c0_76 = arith.constant 0 : index
    %89 = vector.load %arg8[%c0_75, %c0_76] : memref<1x256xf32, #tpu.memory_space<vmem>>, vector<1x256xf32>
    %90 = vector.broadcast %89 : vector<1x256xf32> to vector<16x256xf32>
    %91 = arith.mulf %88, %90 : vector<16x256xf32>
    %c0_77 = arith.constant 0 : index
    %c0_78 = arith.constant 0 : index
    %92 = vector.load %arg9[%c0_77, %c0_78] : memref<1x256xf32, #tpu.memory_space<vmem>>, vector<1x256xf32>
    %93 = vector.broadcast %92 : vector<1x256xf32> to vector<16x256xf32>
    %94 = arith.addf %91, %93 : vector<16x256xf32>
    %cst_79 = arith.constant 0.000000e+00 : f32
    %95 = vector.broadcast %cst_79 : f32 to vector<16x256xf32>
    %96 = arith.cmpf ogt, %94, %95 : vector<16x256xf32>
    %cst_80 = arith.constant 2.000000e-01 : f32
    %97 = vector.broadcast %cst_80 : f32 to vector<16x256xf32>
    %98 = arith.mulf %97, %94 : vector<16x256xf32>
    %99 = arith.select %96, %94, %98 : vector<16x256xi1>, vector<16x256xf32>
    %100 = arith.truncf %99 : vector<16x256xf32> to vector<16x256xbf16>
    %c0_81 = arith.constant 0 : index
    %c0_82 = arith.constant 0 : index
    %c0_83 = arith.constant 0 : index
    %101 = vector.load %arg10[%c0_81, %c0_82, %c0_83] : memref<4x8x16xbf16, #tpu.memory_space<vmem>>, vector<1x8x16xbf16>
    %102 = vector.shape_cast %101 : vector<1x8x16xbf16> to vector<8x16xbf16>
    %cst_84 = arith.constant dense<0.000000e+00> : vector<8x256xf32>
    %103 = tpu.matmul %102, %100, %cst_84 {dimension_numbers = #tpu.dot_dimension_numbers<[1], [0], [0], [1], [0, 0, 1, 1], [], []>} : vector<8x16xbf16>, vector<16x256xbf16>, vector<8x256xf32> -> vector<8x256xf32>
    %104 = arith.truncf %103 : vector<8x256xf32> to vector<8x256xbf16>
    %c0_85 = arith.constant 0 : index
    %c0_86 = arith.constant 0 : index
    %c0_87 = arith.constant 0 : index
    %105 = vector.load %arg11[%c0_85, %c0_86, %c0_87] : memref<4x256x256xbf16, #tpu.memory_space<vmem>>, vector<1x256x256xbf16>
    %106 = vector.shape_cast %105 : vector<1x256x256xbf16> to vector<256x256xbf16>
    %cst_88 = arith.constant dense<0.000000e+00> : vector<8x256xf32>
    %107 = tpu.matmul %104, %106, %cst_88 {dimension_numbers = #tpu.dot_dimension_numbers<[1], [0], [0], [1], [0, 0, 1, 1], [], []>} : vector<8x256xbf16>, vector<256x256xbf16>, vector<8x256xf32> -> vector<8x256xf32>
    %c1_89 = arith.constant 1 : index
    %c0_90 = arith.constant 0 : index
    %c0_91 = arith.constant 0 : index
    %108 = vector.load %arg10[%c1_89, %c0_90, %c0_91] : memref<4x8x16xbf16, #tpu.memory_space<vmem>>, vector<1x8x16xbf16>
    %109 = vector.shape_cast %108 : vector<1x8x16xbf16> to vector<8x16xbf16>
    %cst_92 = arith.constant dense<0.000000e+00> : vector<8x256xf32>
    %110 = tpu.matmul %109, %100, %cst_92 {dimension_numbers = #tpu.dot_dimension_numbers<[1], [0], [0], [1], [0, 0, 1, 1], [], []>} : vector<8x16xbf16>, vector<16x256xbf16>, vector<8x256xf32> -> vector<8x256xf32>
    %111 = arith.truncf %110 : vector<8x256xf32> to vector<8x256xbf16>
    %c1_93 = arith.constant 1 : index
    %c0_94 = arith.constant 0 : index
    %c0_95 = arith.constant 0 : index
    %112 = vector.load %arg11[%c1_93, %c0_94, %c0_95] : memref<4x256x256xbf16, #tpu.memory_space<vmem>>, vector<1x256x256xbf16>
    %113 = vector.shape_cast %112 : vector<1x256x256xbf16> to vector<256x256xbf16>
    %cst_96 = arith.constant dense<0.000000e+00> : vector<8x256xf32>
    %114 = tpu.matmul %111, %113, %cst_96 {dimension_numbers = #tpu.dot_dimension_numbers<[1], [0], [0], [1], [0, 0, 1, 1], [], []>} : vector<8x256xbf16>, vector<256x256xbf16>, vector<8x256xf32> -> vector<8x256xf32>
    %115 = arith.addf %107, %114 : vector<8x256xf32>
    %c2_97 = arith.constant 2 : index
    %c0_98 = arith.constant 0 : index
    %c0_99 = arith.constant 0 : index
    %116 = vector.load %arg10[%c2_97, %c0_98, %c0_99] : memref<4x8x16xbf16, #tpu.memory_space<vmem>>, vector<1x8x16xbf16>
    %117 = vector.shape_cast %116 : vector<1x8x16xbf16> to vector<8x16xbf16>
    %cst_100 = arith.constant dense<0.000000e+00> : vector<8x256xf32>
    %118 = tpu.matmul %117, %100, %cst_100 {dimension_numbers = #tpu.dot_dimension_numbers<[1], [0], [0], [1], [0, 0, 1, 1], [], []>} : vector<8x16xbf16>, vector<16x256xbf16>, vector<8x256xf32> -> vector<8x256xf32>
    %119 = arith.truncf %118 : vector<8x256xf32> to vector<8x256xbf16>
    %c2_101 = arith.constant 2 : index
    %c0_102 = arith.constant 0 : index
    %c0_103 = arith.constant 0 : index
    %120 = vector.load %arg11[%c2_101, %c0_102, %c0_103] : memref<4x256x256xbf16, #tpu.memory_space<vmem>>, vector<1x256x256xbf16>
    %121 = vector.shape_cast %120 : vector<1x256x256xbf16> to vector<256x256xbf16>
    %cst_104 = arith.constant dense<0.000000e+00> : vector<8x256xf32>
    %122 = tpu.matmul %119, %121, %cst_104 {dimension_numbers = #tpu.dot_dimension_numbers<[1], [0], [0], [1], [0, 0, 1, 1], [], []>} : vector<8x256xbf16>, vector<256x256xbf16>, vector<8x256xf32> -> vector<8x256xf32>
    %123 = arith.addf %115, %122 : vector<8x256xf32>
    %c3_105 = arith.constant 3 : index
    %c0_106 = arith.constant 0 : index
    %c0_107 = arith.constant 0 : index
    %124 = vector.load %arg10[%c3_105, %c0_106, %c0_107] : memref<4x8x16xbf16, #tpu.memory_space<vmem>>, vector<1x8x16xbf16>
    %125 = vector.shape_cast %124 : vector<1x8x16xbf16> to vector<8x16xbf16>
    %cst_108 = arith.constant dense<0.000000e+00> : vector<8x256xf32>
    %126 = tpu.matmul %125, %100, %cst_108 {dimension_numbers = #tpu.dot_dimension_numbers<[1], [0], [0], [1], [0, 0, 1, 1], [], []>} : vector<8x16xbf16>, vector<16x256xbf16>, vector<8x256xf32> -> vector<8x256xf32>
    %127 = arith.truncf %126 : vector<8x256xf32> to vector<8x256xbf16>
    %c3_109 = arith.constant 3 : index
    %c0_110 = arith.constant 0 : index
    %c0_111 = arith.constant 0 : index
    %128 = vector.load %arg11[%c3_109, %c0_110, %c0_111] : memref<4x256x256xbf16, #tpu.memory_space<vmem>>, vector<1x256x256xbf16>
    %129 = vector.shape_cast %128 : vector<1x256x256xbf16> to vector<256x256xbf16>
    %cst_112 = arith.constant dense<0.000000e+00> : vector<8x256xf32>
    %130 = tpu.matmul %127, %129, %cst_112 {dimension_numbers = #tpu.dot_dimension_numbers<[1], [0], [0], [1], [0, 0, 1, 1], [], []>} : vector<8x256xbf16>, vector<256x256xbf16>, vector<8x256xf32> -> vector<8x256xf32>
    %131 = arith.addf %123, %130 : vector<8x256xf32>
    %cst_113 = arith.constant dense<0.000000e+00> : vector<256xf32>
    %132 = vector.multi_reduction <add>, %131, %cst_113 [0] : vector<8x256xf32> to vector<256xf32>
    %133 = vector.shape_cast %132 : vector<256xf32> to vector<1x256xf32>
    %c0_114 = arith.constant 0 : index
    %c0_115 = arith.constant 0 : index
    %134 = vector.load %arg12[%c0_114, %c0_115] : memref<256x256xf32, #tpu.memory_space<vmem>>, vector<256x256xf32>
    %cst_116 = arith.constant dense<0.000000e+00> : vector<1x256xf32>
    %135 = tpu.matmul %133, %134, %cst_116 {dimension_numbers = #tpu.dot_dimension_numbers<[1], [0], [0], [1], [0, 0, 1, 1], [], []>} : vector<1x256xf32>, vector<256x256xf32>, vector<1x256xf32> -> vector<1x256xf32>
    %136 = vector.broadcast %135 : vector<1x256xf32> to vector<8x256xf32>
    %137 = arith.subf %131, %136 : vector<8x256xf32>
    %138 = arith.mulf %137, %137 : vector<8x256xf32>
    %cst_117 = arith.constant dense<0.000000e+00> : vector<256xf32>
    %139 = vector.multi_reduction <add>, %138, %cst_117 [0] : vector<8x256xf32> to vector<256xf32>
    %140 = vector.shape_cast %139 : vector<256xf32> to vector<1x256xf32>
    %c0_118 = arith.constant 0 : index
    %c0_119 = arith.constant 0 : index
    %141 = vector.load %arg12[%c0_118, %c0_119] : memref<256x256xf32, #tpu.memory_space<vmem>>, vector<256x256xf32>
    %cst_120 = arith.constant dense<0.000000e+00> : vector<1x256xf32>
    %142 = tpu.matmul %140, %141, %cst_120 {dimension_numbers = #tpu.dot_dimension_numbers<[1], [0], [0], [1], [0, 0, 1, 1], [], []>} : vector<1x256xf32>, vector<256x256xf32>, vector<1x256xf32> -> vector<1x256xf32>
    %cst_121 = arith.constant 9.99999974E-6 : f32
    %143 = vector.broadcast %cst_121 : f32 to vector<1x256xf32>
    %144 = arith.addf %142, %143 : vector<1x256xf32>
    %145 = math.rsqrt %144 : vector<1x256xf32>
    %146 = vector.broadcast %145 : vector<1x256xf32> to vector<8x256xf32>
    %147 = arith.mulf %137, %146 : vector<8x256xf32>
    %c0_122 = arith.constant 0 : index
    %c0_123 = arith.constant 0 : index
    %148 = vector.load %arg13[%c0_122, %c0_123] : memref<1x256xf32, #tpu.memory_space<vmem>>, vector<1x256xf32>
    %149 = vector.broadcast %148 : vector<1x256xf32> to vector<8x256xf32>
    %150 = arith.mulf %147, %149 : vector<8x256xf32>
    %c0_124 = arith.constant 0 : index
    %c0_125 = arith.constant 0 : index
    %151 = vector.load %arg14[%c0_124, %c0_125] : memref<1x256xf32, #tpu.memory_space<vmem>>, vector<1x256xf32>
    %152 = vector.broadcast %151 : vector<1x256xf32> to vector<8x256xf32>
    %153 = arith.addf %150, %152 : vector<8x256xf32>
    %cst_126 = arith.constant 0.000000e+00 : f32
    %154 = vector.broadcast %cst_126 : f32 to vector<8x256xf32>
    %155 = arith.cmpf ogt, %153, %154 : vector<8x256xf32>
    %cst_127 = arith.constant 2.000000e-01 : f32
    %156 = vector.broadcast %cst_127 : f32 to vector<8x256xf32>
    %157 = arith.mulf %156, %153 : vector<8x256xf32>
    %158 = arith.select %155, %153, %157 : vector<8x256xi1>, vector<8x256xf32>
    %159 = arith.truncf %158 : vector<8x256xf32> to vector<8x256xbf16>
    %c0_128 = arith.constant 0 : index
    %c0_129 = arith.constant 0 : index
    %c0_130 = arith.constant 0 : index
    %160 = vector.load %arg15[%c0_128, %c0_129, %c0_130] : memref<4x4x8xbf16, #tpu.memory_space<vmem>>, vector<1x4x8xbf16>
    %161 = vector.shape_cast %160 : vector<1x4x8xbf16> to vector<4x8xbf16>
    %cst_131 = arith.constant dense<0.000000e+00> : vector<4x256xf32>
    %162 = tpu.matmul %161, %159, %cst_131 {dimension_numbers = #tpu.dot_dimension_numbers<[1], [0], [0], [1], [0, 0, 1, 1], [], []>} : vector<4x8xbf16>, vector<8x256xbf16>, vector<4x256xf32> -> vector<4x256xf32>
    %163 = arith.truncf %162 : vector<4x256xf32> to vector<4x256xbf16>
    %c0_132 = arith.constant 0 : index
    %c0_133 = arith.constant 0 : index
    %c0_134 = arith.constant 0 : index
    %164 = vector.load %arg16[%c0_132, %c0_133, %c0_134] : memref<4x256x256xbf16, #tpu.memory_space<vmem>>, vector<1x256x256xbf16>
    %165 = vector.shape_cast %164 : vector<1x256x256xbf16> to vector<256x256xbf16>
    %cst_135 = arith.constant dense<0.000000e+00> : vector<4x256xf32>
    %166 = tpu.matmul %163, %165, %cst_135 {dimension_numbers = #tpu.dot_dimension_numbers<[1], [0], [0], [1], [0, 0, 1, 1], [], []>} : vector<4x256xbf16>, vector<256x256xbf16>, vector<4x256xf32> -> vector<4x256xf32>
    %c1_136 = arith.constant 1 : index
    %c0_137 = arith.constant 0 : index
    %c0_138 = arith.constant 0 : index
    %167 = vector.load %arg15[%c1_136, %c0_137, %c0_138] : memref<4x4x8xbf16, #tpu.memory_space<vmem>>, vector<1x4x8xbf16>
    %168 = vector.shape_cast %167 : vector<1x4x8xbf16> to vector<4x8xbf16>
    %cst_139 = arith.constant dense<0.000000e+00> : vector<4x256xf32>
    %169 = tpu.matmul %168, %159, %cst_139 {dimension_numbers = #tpu.dot_dimension_numbers<[1], [0], [0], [1], [0, 0, 1, 1], [], []>} : vector<4x8xbf16>, vector<8x256xbf16>, vector<4x256xf32> -> vector<4x256xf32>
    %170 = arith.truncf %169 : vector<4x256xf32> to vector<4x256xbf16>
    %c1_140 = arith.constant 1 : index
    %c0_141 = arith.constant 0 : index
    %c0_142 = arith.constant 0 : index
    %171 = vector.load %arg16[%c1_140, %c0_141, %c0_142] : memref<4x256x256xbf16, #tpu.memory_space<vmem>>, vector<1x256x256xbf16>
    %172 = vector.shape_cast %171 : vector<1x256x256xbf16> to vector<256x256xbf16>
    %cst_143 = arith.constant dense<0.000000e+00> : vector<4x256xf32>
    %173 = tpu.matmul %170, %172, %cst_143 {dimension_numbers = #tpu.dot_dimension_numbers<[1], [0], [0], [1], [0, 0, 1, 1], [], []>} : vector<4x256xbf16>, vector<256x256xbf16>, vector<4x256xf32> -> vector<4x256xf32>
    %174 = arith.addf %166, %173 : vector<4x256xf32>
    %c2_144 = arith.constant 2 : index
    %c0_145 = arith.constant 0 : index
    %c0_146 = arith.constant 0 : index
    %175 = vector.load %arg15[%c2_144, %c0_145, %c0_146] : memref<4x4x8xbf16, #tpu.memory_space<vmem>>, vector<1x4x8xbf16>
    %176 = vector.shape_cast %175 : vector<1x4x8xbf16> to vector<4x8xbf16>
    %cst_147 = arith.constant dense<0.000000e+00> : vector<4x256xf32>
    %177 = tpu.matmul %176, %159, %cst_147 {dimension_numbers = #tpu.dot_dimension_numbers<[1], [0], [0], [1], [0, 0, 1, 1], [], []>} : vector<4x8xbf16>, vector<8x256xbf16>, vector<4x256xf32> -> vector<4x256xf32>
    %178 = arith.truncf %177 : vector<4x256xf32> to vector<4x256xbf16>
    %c2_148 = arith.constant 2 : index
    %c0_149 = arith.constant 0 : index
    %c0_150 = arith.constant 0 : index
    %179 = vector.load %arg16[%c2_148, %c0_149, %c0_150] : memref<4x256x256xbf16, #tpu.memory_space<vmem>>, vector<1x256x256xbf16>
    %180 = vector.shape_cast %179 : vector<1x256x256xbf16> to vector<256x256xbf16>
    %cst_151 = arith.constant dense<0.000000e+00> : vector<4x256xf32>
    %181 = tpu.matmul %178, %180, %cst_151 {dimension_numbers = #tpu.dot_dimension_numbers<[1], [0], [0], [1], [0, 0, 1, 1], [], []>} : vector<4x256xbf16>, vector<256x256xbf16>, vector<4x256xf32> -> vector<4x256xf32>
    %182 = arith.addf %174, %181 : vector<4x256xf32>
    %c3_152 = arith.constant 3 : index
    %c0_153 = arith.constant 0 : index
    %c0_154 = arith.constant 0 : index
    %183 = vector.load %arg15[%c3_152, %c0_153, %c0_154] : memref<4x4x8xbf16, #tpu.memory_space<vmem>>, vector<1x4x8xbf16>
    %184 = vector.shape_cast %183 : vector<1x4x8xbf16> to vector<4x8xbf16>
    %cst_155 = arith.constant dense<0.000000e+00> : vector<4x256xf32>
    %185 = tpu.matmul %184, %159, %cst_155 {dimension_numbers = #tpu.dot_dimension_numbers<[1], [0], [0], [1], [0, 0, 1, 1], [], []>} : vector<4x8xbf16>, vector<8x256xbf16>, vector<4x256xf32> -> vector<4x256xf32>
    %186 = arith.truncf %185 : vector<4x256xf32> to vector<4x256xbf16>
    %c3_156 = arith.constant 3 : index
    %c0_157 = arith.constant 0 : index
    %c0_158 = arith.constant 0 : index
    %187 = vector.load %arg16[%c3_156, %c0_157, %c0_158] : memref<4x256x256xbf16, #tpu.memory_space<vmem>>, vector<1x256x256xbf16>
    %188 = vector.shape_cast %187 : vector<1x256x256xbf16> to vector<256x256xbf16>
    %cst_159 = arith.constant dense<0.000000e+00> : vector<4x256xf32>
    %189 = tpu.matmul %186, %188, %cst_159 {dimension_numbers = #tpu.dot_dimension_numbers<[1], [0], [0], [1], [0, 0, 1, 1], [], []>} : vector<4x256xbf16>, vector<256x256xbf16>, vector<4x256xf32> -> vector<4x256xf32>
    %190 = arith.addf %182, %189 : vector<4x256xf32>
    %cst_160 = arith.constant dense<0.000000e+00> : vector<256xf32>
    %191 = vector.multi_reduction <add>, %190, %cst_160 [0] : vector<4x256xf32> to vector<256xf32>
    %192 = vector.shape_cast %191 : vector<256xf32> to vector<1x256xf32>
    %c0_161 = arith.constant 0 : index
    %c0_162 = arith.constant 0 : index
    %193 = vector.load %arg17[%c0_161, %c0_162] : memref<256x256xf32, #tpu.memory_space<vmem>>, vector<256x256xf32>
    %cst_163 = arith.constant dense<0.000000e+00> : vector<1x256xf32>
    %194 = tpu.matmul %192, %193, %cst_163 {dimension_numbers = #tpu.dot_dimension_numbers<[1], [0], [0], [1], [0, 0, 1, 1], [], []>} : vector<1x256xf32>, vector<256x256xf32>, vector<1x256xf32> -> vector<1x256xf32>
    %195 = vector.broadcast %194 : vector<1x256xf32> to vector<4x256xf32>
    %196 = arith.subf %190, %195 : vector<4x256xf32>
    %197 = arith.mulf %196, %196 : vector<4x256xf32>
    %cst_164 = arith.constant dense<0.000000e+00> : vector<256xf32>
    %198 = vector.multi_reduction <add>, %197, %cst_164 [0] : vector<4x256xf32> to vector<256xf32>
    %199 = vector.shape_cast %198 : vector<256xf32> to vector<1x256xf32>
    %c0_165 = arith.constant 0 : index
    %c0_166 = arith.constant 0 : index
    %200 = vector.load %arg17[%c0_165, %c0_166] : memref<256x256xf32, #tpu.memory_space<vmem>>, vector<256x256xf32>
    %cst_167 = arith.constant dense<0.000000e+00> : vector<1x256xf32>
    %201 = tpu.matmul %199, %200, %cst_167 {dimension_numbers = #tpu.dot_dimension_numbers<[1], [0], [0], [1], [0, 0, 1, 1], [], []>} : vector<1x256xf32>, vector<256x256xf32>, vector<1x256xf32> -> vector<1x256xf32>
    %cst_168 = arith.constant 9.99999974E-6 : f32
    %202 = vector.broadcast %cst_168 : f32 to vector<1x256xf32>
    %203 = arith.addf %201, %202 : vector<1x256xf32>
    %204 = math.rsqrt %203 : vector<1x256xf32>
    %205 = vector.broadcast %204 : vector<1x256xf32> to vector<4x256xf32>
    %206 = arith.mulf %196, %205 : vector<4x256xf32>
    %c0_169 = arith.constant 0 : index
    %c0_170 = arith.constant 0 : index
    %207 = vector.load %arg18[%c0_169, %c0_170] : memref<1x256xf32, #tpu.memory_space<vmem>>, vector<1x256xf32>
    %208 = vector.broadcast %207 : vector<1x256xf32> to vector<4x256xf32>
    %209 = arith.mulf %206, %208 : vector<4x256xf32>
    %c0_171 = arith.constant 0 : index
    %c0_172 = arith.constant 0 : index
    %210 = vector.load %arg19[%c0_171, %c0_172] : memref<1x256xf32, #tpu.memory_space<vmem>>, vector<1x256xf32>
    %211 = vector.broadcast %210 : vector<1x256xf32> to vector<4x256xf32>
    %212 = arith.addf %209, %211 : vector<4x256xf32>
    %cst_173 = arith.constant 0.000000e+00 : f32
    %213 = vector.broadcast %cst_173 : f32 to vector<4x256xf32>
    %214 = arith.cmpf ogt, %212, %213 : vector<4x256xf32>
    %cst_174 = arith.constant 2.000000e-01 : f32
    %215 = vector.broadcast %cst_174 : f32 to vector<4x256xf32>
    %216 = arith.mulf %215, %212 : vector<4x256xf32>
    %217 = arith.select %214, %212, %216 : vector<4x256xi1>, vector<4x256xf32>
    %c0_175 = arith.constant 0 : index
    %c0_176 = arith.constant 0 : index
    %218 = vector.load %arg20[%c0_175, %c0_176] : memref<4x256xbf16, #tpu.memory_space<vmem>>, vector<4x256xbf16>
    %219 = arith.extf %218 : vector<4x256xbf16> to vector<4x256xf32>
    %220 = arith.mulf %217, %219 : vector<4x256xf32>
    %cst_177 = arith.constant dense<0.000000e+00> : vector<4xf32>
    %221 = vector.multi_reduction <add>, %220, %cst_177 [1] : vector<4x256xf32> to vector<4xf32>
    %222 = vector.shape_cast %221 : vector<4xf32> to vector<4x1xf32>
    %cst_178 = arith.constant dense<0.000000e+00> : vector<1xf32>
    %223 = vector.multi_reduction <add>, %222, %cst_178 [0] : vector<4x1xf32> to vector<1xf32>
    %224 = vector.shape_cast %223 : vector<1xf32> to vector<1x1xf32>
    %c0_179 = arith.constant 0 : index
    %c0_180 = arith.constant 0 : index
    %225 = vector.load %arg21[%c0_179, %c0_180] : memref<1x1xf32, #tpu.memory_space<vmem>>, vector<1x1xf32>
    %226 = arith.addf %224, %225 : vector<1x1xf32>
    %c0_181 = arith.constant 0 : index
    %c0_182 = arith.constant 0 : index
    %c0_183 = arith.constant 0 : index
    %227 = vector.load %arg22[%c0_181, %c0_182, %c0_183] : memref<1x1x1xf32, #tpu.memory_space<vmem>>, vector<1x1x1xf32>
    %228 = vector.shape_cast %227 : vector<1x1x1xf32> to vector<1x1xf32>
    %229 = vector.shape_cast %226 : vector<1x1xf32> to vector<1x1x1xf32>
    tpu.vector_store %arg22[%c0_181, %c0_182, %c0_183], %229 {strides = array<i32>} : memref<1x1x1xf32, #tpu.memory_space<vmem>>, vector<1x1x1xf32>,
    return
  }
  func.func @transform_0(%arg0: i32) -> (i32, i32, i32) {
    %c0_i32 = arith.constant 0 : i32
    %c0_i32_0 = arith.constant 0 : i32
    %c0_i32_1 = arith.constant 0 : i32
    return %arg0, %c0_i32, %c0_i32_0 : i32, i32, i32
  }
  func.func @transform_1(%arg0: i32) -> (i32, i32, i32) {
    %c0_i32 = arith.constant 0 : i32
    %c0_i32_0 = arith.constant 0 : i32
    %c0_i32_1 = arith.constant 0 : i32
    %c0_i32_2 = arith.constant 0 : i32
    return %c0_i32, %c0_i32_0, %c0_i32_1 : i32, i32, i32
  }
  func.func @transform_2(%arg0: i32) -> (i32, i32, i32) {
    %c0_i32 = arith.constant 0 : i32
    %c0_i32_0 = arith.constant 0 : i32
    %c0_i32_1 = arith.constant 0 : i32
    %c0_i32_2 = arith.constant 0 : i32
    return %c0_i32, %c0_i32_0, %c0_i32_1 : i32, i32, i32
  }
  func.func @transform_3(%arg0: i32) -> (i32, i32) {
    %c0_i32 = arith.constant 0 : i32
    %c0_i32_0 = arith.constant 0 : i32
    %c0_i32_1 = arith.constant 0 : i32
    return %c0_i32, %c0_i32_0 : i32, i32
  }
  func.func @transform_4(%arg0: i32) -> (i32, i32, i32) {
    %c0_i32 = arith.constant 0 : i32
    %c0_i32_0 = arith.constant 0 : i32
    %c0_i32_1 = arith.constant 0 : i32
    %c0_i32_2 = arith.constant 0 : i32
    return %c0_i32, %c0_i32_0, %c0_i32_1 : i32, i32, i32
  }
  func.func @transform_5(%arg0: i32) -> (i32, i32, i32) {
    %c0_i32 = arith.constant 0 : i32
    %c0_i32_0 = arith.constant 0 : i32
    %c0_i32_1 = arith.constant 0 : i32
    %c0_i32_2 = arith.constant 0 : i32
    return %c0_i32, %c0_i32_0, %c0_i32_1 : i32, i32, i32
  }
  func.func @transform_6(%arg0: i32) -> (i32, i32) {
    %c0_i32 = arith.constant 0 : i32
    %c0_i32_0 = arith.constant 0 : i32
    %c0_i32_1 = arith.constant 0 : i32
    return %c0_i32, %c0_i32_0 : i32, i32
  }
  func.func @transform_7(%arg0: i32) -> (i32, i32) {
    %c0_i32 = arith.constant 0 : i32
    %c0_i32_0 = arith.constant 0 : i32
    %c0_i32_1 = arith.constant 0 : i32
    return %c0_i32, %c0_i32_0 : i32, i32
  }
  func.func @transform_8(%arg0: i32) -> (i32, i32) {
    %c0_i32 = arith.constant 0 : i32
    %c0_i32_0 = arith.constant 0 : i32
    %c0_i32_1 = arith.constant 0 : i32
    return %c0_i32, %c0_i32_0 : i32, i32
  }
  func.func @transform_9(%arg0: i32) -> (i32, i32, i32) {
    %c0_i32 = arith.constant 0 : i32
    %c0_i32_0 = arith.constant 0 : i32
    %c0_i32_1 = arith.constant 0 : i32
    %c0_i32_2 = arith.constant 0 : i32
    return %c0_i32, %c0_i32_0, %c0_i32_1 : i32, i32, i32
  }
  func.func @transform_10(%arg0: i32) -> (i32, i32, i32) {
    %c0_i32 = arith.constant 0 : i32
    %c0_i32_0 = arith.constant 0 : i32
    %c0_i32_1 = arith.constant 0 : i32
    %c0_i32_2 = arith.constant 0 : i32
    return %c0_i32, %c0_i32_0, %c0_i32_1 : i32, i32, i32
  }
  func.func @transform_11(%arg0: i32) -> (i32, i32) {
    %c0_i32 = arith.constant 0 : i32
    %c0_i32_0 = arith.constant 0 : i32
    %c0_i32_1 = arith.constant 0 : i32
    return %c0_i32, %c0_i32_0 : i32, i32
  }
  func.func @transform_12(%arg0: i32) -> (i32, i32) {
    %c0_i32 = arith.constant 0 : i32
    %c0_i32_0 = arith.constant 0 : i32
    %c0_i32_1 = arith.constant 0 : i32
    return %c0_i32, %c0_i32_0 : i32, i32
  }
  func.func @transform_13(%arg0: i32) -> (i32, i32) {
    %c0_i32 = arith.constant 0 : i32
    %c0_i32_0 = arith.constant 0 : i32
    %c0_i32_1 = arith.constant 0 : i32
    return %c0_i32, %c0_i32_0 : i32, i32
  }
  func.func @transform_14(%arg0: i32) -> (i32, i32, i32) {
    %c0_i32 = arith.constant 0 : i32
    %c0_i32_0 = arith.constant 0 : i32
    %c0_i32_1 = arith.constant 0 : i32
    %c0_i32_2 = arith.constant 0 : i32
    return %c0_i32, %c0_i32_0, %c0_i32_1 : i32, i32, i32
  }
  func.func @transform_15(%arg0: i32) -> (i32, i32, i32) {
    %c0_i32 = arith.constant 0 : i32
    %c0_i32_0 = arith.constant 0 : i32
    %c0_i32_1 = arith.constant 0 : i32
    %c0_i32_2 = arith.constant 0 : i32
    return %c0_i32, %c0_i32_0, %c0_i32_1 : i32, i32, i32
  }
  func.func @transform_16(%arg0: i32) -> (i32, i32) {
    %c0_i32 = arith.constant 0 : i32
    %c0_i32_0 = arith.constant 0 : i32
    %c0_i32_1 = arith.constant 0 : i32
    return %c0_i32, %c0_i32_0 : i32, i32
  }
  func.func @transform_17(%arg0: i32) -> (i32, i32) {
    %c0_i32 = arith.constant 0 : i32
    %c0_i32_0 = arith.constant 0 : i32
    %c0_i32_1 = arith.constant 0 : i32
    return %c0_i32, %c0_i32_0 : i32, i32
  }
  func.func @transform_18(%arg0: i32) -> (i32, i32) {
    %c0_i32 = arith.constant 0 : i32
    %c0_i32_0 = arith.constant 0 : i32
    %c0_i32_1 = arith.constant 0 : i32
    return %c0_i32, %c0_i32_0 : i32, i32
  }
  func.func @transform_19(%arg0: i32) -> (i32, i32) {
    %c0_i32 = arith.constant 0 : i32
    %c0_i32_0 = arith.constant 0 : i32
    %c0_i32_1 = arith.constant 0 : i32
    return %c0_i32, %c0_i32_0 : i32, i32
  }
  func.func @transform_20(%arg0: i32) -> (i32, i32) {
    %c0_i32 = arith.constant 0 : i32
    %c0_i32_0 = arith.constant 0 : i32
    %c0_i32_1 = arith.constant 0 : i32
    return %c0_i32, %c0_i32_0 : i32, i32
  }
  func.func @transform_21(%arg0: i32) -> (i32, i32, i32) {
    %c0_i32 = arith.constant 0 : i32
    %c0_i32_0 = arith.constant 0 : i32
    %c0_i32_1 = arith.constant 0 : i32
    return %arg0, %c0_i32, %c0_i32_0 : i32, i32, i32
  }
}

</mosaic_0001>

<llo_original>
// kernel: critic_forward.1
$region0: #{critic_forward.1}
  #allocation0 [shape = 'u32[]', space=smem, size = 0x4, offset = 0x4, fixed_abs, tag = 'smem constant byte address 0x4 - core index']
  #allocation1 [shape = 'u32[144,128]{1,0:T(1,128)}', space=vmem, size = 0x12000, scoped, tag = 'internal scratch']
  #allocation2 [shape = 'f32[1,1]{1,0:T(1,128)S(1)}', space=vmem, size = 0x200, scoped, tag = 'scoped memory for critic_forward.1']
  %s0 = inlined_call_operand.vmem [shape: bf16[2,64,192], index: 0, kind: input, shape index: {}]
  %s1 = inlined_call_operand.vmem [shape: bf16[4,32,64], index: 1, kind: input, shape index: {}]
  %s2 = inlined_call_operand.hbm [shape: bf16[4,192,256], index: 2, kind: input, shape index: {}]
  %s3 = inlined_call_operand.vmem [shape: f32[1,256], index: 3, kind: input, shape index: {}]
  %s4 = inlined_call_operand.vmem [shape: bf16[4,16,32], index: 4, kind: input, shape index: {}]
  %s5 = inlined_call_operand.vmem [shape: bf16[4,256,256], index: 5, kind: input, shape index: {}]
  %s6 = inlined_call_operand.hbm [shape: f32[256,256], index: 6, kind: input, shape index: {}]
  %s7 = inlined_call_operand.vmem [shape: f32[1,256], index: 7, kind: input, shape index: {}]
  %s8 = inlined_call_operand.vmem [shape: f32[1,256], index: 8, kind: input, shape index: {}]
  %s9 = inlined_call_operand.vmem [shape: bf16[4,8,16], index: 9, kind: input, shape index: {}]
  %s10 = inlined_call_operand.hbm [shape: bf16[4,256,256], index: 10, kind: input, shape index: {}]
  %s11 = inlined_call_operand.hbm [shape: f32[256,256], index: 11, kind: input, shape index: {}]
  %s12 = inlined_call_operand.vmem [shape: f32[1,256], index: 12, kind: input, shape index: {}]
  %s13 = inlined_call_operand.vmem [shape: f32[1,256], index: 13, kind: input, shape index: {}]
  %s14 = inlined_call_operand.vmem [shape: bf16[4,4,8], index: 14, kind: input, shape index: {}]
  %s15 = inlined_call_operand.hbm [shape: bf16[4,256,256], index: 15, kind: input, shape index: {}]
  %s16 = inlined_call_operand.hbm [shape: f32[256,256], index: 16, kind: input, shape index: {}]
  %s17 = inlined_call_operand.vmem [shape: f32[1,256], index: 17, kind: input, shape index: {}]
  %s18 = inlined_call_operand.vmem [shape: f32[1,256], index: 18, kind: input, shape index: {}]
  %s19 = inlined_call_operand.vmem [shape: bf16[4,256], index: 19, kind: input, shape index: {}]
  %s20 = inlined_call_operand.<no memory space> [shape: f32[1,1], index: 20, kind: input, shape index: {}]
  %s21 = inlined_call_operand.vmem [shape: f32[2,1,1], index: 21, kind: output, shape index: {}]
  %s22 = sld [smem:[#allocation0]]
  $region141: #{critic_forward.1} parent=0
    _
  %s24 = ssub.s32 1, %s22
  %s25 = scalar_select 0, %s24, %s22
  %v26 = vstv %s20
  %27 = vst [vmem:[#allocation2] sm:$0x1] %v26
  $region1: #{critic_forward.1} parent=0
    #allocation3 [shape = 'u8[393216]{0}', space=vmem, size = 0x60000, scoped, tag = 'input window, operand 2, single buffered']
    #allocation4 [shape = 's32[2]{0}', space=sflag, size = 0x8, scoped, tag = 'scoped memory for critic_forward.1']
    #allocation5 [shape = 'u8[262144]{0}', space=vmem, size = 0x40000, scoped, tag = 'input window, operand 6, single buffered']
    #allocation6 [shape = 's32[1]{0}', space=sflag, size = 0x4, scoped, tag = 'scoped memory for critic_forward.1']
    #allocation7 [shape = 'u8[524288]{0}', space=vmem, size = 0x80000, scoped, tag = 'input window, operand 10, single buffered']
    #allocation8 [shape = 'u8[262144]{0}', space=vmem, size = 0x40000, scoped, tag = 'input window, operand 11, single buffered']
    #allocation9 [shape = 's32[1]{0}', space=sflag, size = 0x4, scoped, tag = 'scoped memory for critic_forward.1']
    #allocation10 [shape = 'u8[524288]{0}', space=vmem, size = 0x80000, scoped, tag = 'input window, operand 15, single buffered']
    #allocation11 [shape = 'u8[262144]{0}', space=vmem, size = 0x40000, scoped, tag = 'input window, operand 16, single buffered']
    #allocation12 [shape = 's32[1]{0}', space=sflag, size = 0x4, scoped, tag = 'scoped memory for critic_forward.1']
    %28 = vsyncpa [#allocation4], 0
    %29 = vsyncpa [#allocation6], 0
    %30 = vsyncpa [#allocation9], 0
    %31 = vsyncpa [#allocation12], 0
    loop: start=0, step=1, limit=4
    $region2: #{critic_forward.1} parent=1 // loop_pre_header
      _
    $region3: #{critic_forward.1} parent=1 // loop_header
      %s33 = sphi 0, %s37
      %p34 = scmp.ge.s32.totalorder %s33, 4
      %s43 = sphi 0, %s45
      %s46 = sphi 0, %s43
      %s47 = sphi 0, %s46
      %s63 = sphi 0, %s47
      %s67 = sphi 0, %s67
      %s69 = sphi 0, %s67
      %s70 = sphi 0, %s69
      %s84 = sphi 0, %s70
      %s88 = sphi 0, %s88
      %s90 = sphi 0, %s88
      %s91 = sphi 0, %s90
      %s105 = sphi 0, %s91
      %s109 = sphi 0, %s109
      %s111 = sphi 0, %s109
      %s112 = sphi 0, %s111
      %s126 = sphi 0, %s112
      %s130 = sphi 0, %s130
      %s132 = sphi 0, %s130
      %s133 = sphi 0, %s132
      %s147 = sphi 0, %s133
      %s151 = sphi 0, %s151
      %s153 = sphi 0, %s151
      %s154 = sphi 0, %s153
      %s168 = sphi 0, %s154
      %s172 = sphi 0, %s172
      %s174 = sphi 0, %s172
      %s175 = sphi 0, %s174
      %s189 = sphi 0, %s175
      %s193 = sphi 0, %s193
      %s195 = sphi 0, %s193
      %s196 = sphi 0, %s195
      %s210 = sphi 0, %s196
      %s214 = sphi 0, %s214
      %s216 = sphi 0, %s214
      %s217 = sphi 0, %s216
      %s231 = sphi 0, %s217
      %s235 = sphi 0, %s235
      %s237 = sphi 0, %s235
      %s238 = sphi 0, %s237
      %s252 = sphi 0, %s238
      %s256 = sphi 0, %s256
      %s258 = sphi 0, %s256
      %s259 = sphi 0, %s258
      %s273 = sphi 0, %s259
      %s277 = sphi 0, %s277
      %s279 = sphi 0, %s277
      %s280 = sphi 0, %s279
      %s294 = sphi 0, %s280
      %s298 = sphi 0, %s298
      %s300 = sphi 0, %s298
      %s301 = sphi 0, %s300
      %s315 = sphi 0, %s301
      %s319 = sphi 0, %s319
      %s321 = sphi 0, %s319
      %s322 = sphi 0, %s321
      %s336 = sphi 0, %s322
      %s340 = sphi 0, %s340
      %s342 = sphi 0, %s340
      %s343 = sphi 0, %s342
      %s357 = sphi 0, %s343
      %s361 = sphi 0, %s361
      %s363 = sphi 0, %s361
      %s364 = sphi 0, %s363
      %s378 = sphi 0, %s364
      %s382 = sphi 0, %s382
      %s384 = sphi 0, %s382
      %s385 = sphi 0, %s384
      %s399 = sphi 0, %s385
      %s403 = sphi 0, %s403
      %s405 = sphi 0, %s403
      %s406 = sphi 0, %s405
      %s420 = sphi 0, %s406
      %s424 = sphi 0, %s424
      %s426 = sphi 0, %s424
      %s427 = sphi 0, %s426
      %s441 = sphi 0, %s427
      %s445 = sphi 0, %s445
      %s447 = sphi 0, %s445
      %s448 = sphi 0, %s447
      %s462 = sphi 0, %s448
      %s466 = sphi 0, %s466
      %s468 = sphi 0, %s466
      %s469 = sphi 0, %s468
      %s483 = sphi 0, %s469
      %s489 = sphi 0, %s491
      %s492 = sphi 0, %s489
      %s493 = sphi 0, %s492
      %s509 = sphi 0, %s493
    $region4: #{critic_forward.1} parent=1 // loop_header_branch
      %36 = sbr.rel (%p34) target = $region8
    $region5: #{critic_forward.1} parent=1 // loop_body
      %s38 = ssub.s32 %s33, 1
      %s39 = ssub.s32 %s33, 2
      %s40 = sadd.s32 %s33, 1
      %s41 = ssub.s32 %s33, %s40
      %p42 = scmp.eq.s32.totalorder %s41, 0
      %s44 = sadd.s32 %s43, 1
      %s45 = scalar_select %p42, %s43, %s44
      %p48 = pneg %p42
      %p49 = scmp.eq.s32.totalorder %s33, 1
      %p50 = por %p48, %p49
      %p51 = scmp.ne.s32.totalorder %s43, %s46
      %p52 = scmp.eq.s32.totalorder %s33, 0
      %p53 = por %p51, %p52
      %p54 = scmp.ne.s32.totalorder %s43, %s46
      %p55 = scmp.eq.s32.totalorder %s38, 1
      %p56 = por %p54, %p55
      %p57 = scmp.ne.s32.totalorder %s46, %s47
      %p58 = scmp.eq.s32.totalorder %s38, 0
      %p59 = por %p57, %p58
      %p60 = scmp.ne.s32.totalorder %s46, %s47
      %p61 = scmp.eq.s32.totalorder %s39, 1
      %p62 = por %p60, %p61
      %p64 = scmp.ne.s32.totalorder %s47, %s63
      %p65 = scmp.eq.s32.totalorder %s39, 0
      %p66 = por %p64, %p65
      %s68 = sadd.s32 %s67, 1
      %p71 = scmp.eq.s32.totalorder %s33, 1
      %p72 = scmp.ne.s32.totalorder %s67, %s69
      %p73 = scmp.eq.s32.totalorder %s33, 0
      %p74 = por %p72, %p73
      %p75 = scmp.ne.s32.totalorder %s67, %s69
      %p76 = scmp.eq.s32.totalorder %s38, 1
      %p77 = por %p75, %p76
      %p78 = scmp.ne.s32.totalorder %s69, %s70
      %p79 = scmp.eq.s32.totalorder %s38, 0
      %p80 = por %p78, %p79
      %p81 = scmp.ne.s32.totalorder %s69, %s70
      %p82 = scmp.eq.s32.totalorder %s39, 1
      %p83 = por %p81, %p82
      %p85 = scmp.ne.s32.totalorder %s70, %s84
      %p86 = scmp.eq.s32.totalorder %s39, 0
      %p87 = por %p85, %p86
      %s89 = sadd.s32 %s88, 1
      %p92 = scmp.eq.s32.totalorder %s33, 1
      %p93 = scmp.ne.s32.totalorder %s88, %s90
      %p94 = scmp.eq.s32.totalorder %s33, 0
      %p95 = por %p93, %p94
      %p96 = scmp.ne.s32.totalorder %s88, %s90
      %p97 = scmp.eq.s32.totalorder %s38, 1
      %p98 = por %p96, %p97
      %p99 = scmp.ne.s32.totalorder %s90, %s91
      %p100 = scmp.eq.s32.totalorder %s38, 0
      %p101 = por %p99, %p100
      %p102 = scmp.ne.s32.totalorder %s90, %s91
      %p103 = scmp.eq.s32.totalorder %s39, 1
      %p104 = por %p102, %p103
      %p106 = scmp.ne.s32.totalorder %s91, %s105
      %p107 = scmp.eq.s32.totalorder %s39, 0
      %p108 = por %p106, %p107
      %s110 = sadd.s32 %s109, 1
      %p113 = scmp.eq.s32.totalorder %s33, 1
      %p114 = scmp.ne.s32.totalorder %s109, %s111
      %p115 = scmp.eq.s32.totalorder %s33, 0
      %p116 = por %p114, %p115
      %p117 = scmp.ne.s32.totalorder %s109, %s111
      %p118 = scmp.eq.s32.totalorder %s38, 1
      %p119 = por %p117, %p118
      %p120 = scmp.ne.s32.totalorder %s111, %s112
      %p121 = scmp.eq.s32.totalorder %s38, 0
      %p122 = por %p120, %p121
      %p123 = scmp.ne.s32.totalorder %s111, %s112
      %p124 = scmp.eq.s32.totalorder %s39, 1
      %p125 = por %p123, %p124
      %p127 = scmp.ne.s32.totalorder %s112, %s126
      %p128 = scmp.eq.s32.totalorder %s39, 0
      %p129 = por %p127, %p128
      %s131 = sadd.s32 %s130, 1
      %p134 = scmp.eq.s32.totalorder %s33, 1
      %p135 = scmp.ne.s32.totalorder %s130, %s132
      %p136 = scmp.eq.s32.totalorder %s33, 0
      %p137 = por %p135, %p136
      %p138 = scmp.ne.s32.totalorder %s130, %s132
      %p139 = scmp.eq.s32.totalorder %s38, 1
      %p140 = por %p138, %p139
      %p141 = scmp.ne.s32.totalorder %s132, %s133
      %p142 = scmp.eq.s32.totalorder %s38, 0
      %p143 = por %p141, %p142
      %p144 = scmp.ne.s32.totalorder %s132, %s133
      %p145 = scmp.eq.s32.totalorder %s39, 1
      %p146 = por %p144, %p145
      %p148 = scmp.ne.s32.totalorder %s133, %s147
      %p149 = scmp.eq.s32.totalorder %s39, 0
      %p150 = por %p148, %p149
      %s152 = sadd.s32 %s151, 1
      %p155 = scmp.eq.s32.totalorder %s33, 1
      %p156 = scmp.ne.s32.totalorder %s151, %s153
      %p157 = scmp.eq.s32.totalorder %s33, 0
      %p158 = por %p156, %p157
      %p159 = scmp.ne.s32.totalorder %s151, %s153
      %p160 = scmp.eq.s32.totalorder %s38, 1
      %p161 = por %p159, %p160
      %p162 = scmp.ne.s32.totalorder %s153, %s154
      %p163 = scmp.eq.s32.totalorder %s38, 0
      %p164 = por %p162, %p163
      %p165 = scmp.ne.s32.totalorder %s153, %s154
      %p166 = scmp.eq.s32.totalorder %s39, 1
      %p167 = por %p165, %p166
      %p169 = scmp.ne.s32.totalorder %s154, %s168
      %p170 = scmp.eq.s32.totalorder %s39, 0
      %p171 = por %p169, %p170
      %s173 = sadd.s32 %s172, 1
      %p176 = scmp.eq.s32.totalorder %s33, 1
      %p177 = scmp.ne.s32.totalorder %s172, %s174
      %p178 = scmp.eq.s32.totalorder %s33, 0
      %p179 = por %p177, %p178
      %p180 = scmp.ne.s32.totalorder %s172, %s174
      %p181 = scmp.eq.s32.totalorder %s38, 1
      %p182 = por %p180, %p181
      %p183 = scmp.ne.s32.totalorder %s174, %s175
      %p184 = scmp.eq.s32.totalorder %s38, 0
      %p185 = por %p183, %p184
      %p186 = scmp.ne.s32.totalorder %s174, %s175
      %p187 = scmp.eq.s32.totalorder %s39, 1
      %p188 = por %p186, %p187
      %p190 = scmp.ne.s32.totalorder %s175, %s189
      %p191 = scmp.eq.s32.totalorder %s39, 0
      %p192 = por %p190, %p191
      %s194 = sadd.s32 %s193, 1
      %p197 = scmp.eq.s32.totalorder %s33, 1
      %p198 = scmp.ne.s32.totalorder %s193, %s195
      %p199 = scmp.eq.s32.totalorder %s33, 0
      %p200 = por %p198, %p199
      %p201 = scmp.ne.s32.totalorder %s193, %s195
      %p202 = scmp.eq.s32.totalorder %s38, 1
      %p203 = por %p201, %p202
      %p204 = scmp.ne.s32.totalorder %s195, %s196
      %p205 = scmp.eq.s32.totalorder %s38, 0
      %p206 = por %p204, %p205
      %p207 = scmp.ne.s32.totalorder %s195, %s196
      %p208 = scmp.eq.s32.totalorder %s39, 1
      %p209 = por %p207, %p208
      %p211 = scmp.ne.s32.totalorder %s196, %s210
      %p212 = scmp.eq.s32.totalorder %s39, 0
      %p213 = por %p211, %p212
      %s215 = sadd.s32 %s214, 1
      %p218 = scmp.eq.s32.totalorder %s33, 1
      %p219 = scmp.ne.s32.totalorder %s214, %s216
      %p220 = scmp.eq.s32.totalorder %s33, 0
      %p221 = por %p219, %p220
      %p222 = scmp.ne.s32.totalorder %s214, %s216
      %p223 = scmp.eq.s32.totalorder %s38, 1
      %p224 = por %p222, %p223
      %p225 = scmp.ne.s32.totalorder %s216, %s217
      %p226 = scmp.eq.s32.totalorder %s38, 0
      %p227 = por %p225, %p226
      %p228 = scmp.ne.s32.totalorder %s216, %s217
      %p229 = scmp.eq.s32.totalorder %s39, 1
      %p230 = por %p228, %p229
      %p232 = scmp.ne.s32.totalorder %s217, %s231
      %p233 = scmp.eq.s32.totalorder %s39, 0
      %p234 = por %p232, %p233
      %s236 = sadd.s32 %s235, 1
      %p239 = scmp.eq.s32.totalorder %s33, 1
      %p240 = scmp.ne.s32.totalorder %s235, %s237
      %p241 = scmp.eq.s32.totalorder %s33, 0
      %p242 = por %p240, %p241
      %p243 = scmp.ne.s32.totalorder %s235, %s237
      %p244 = scmp.eq.s32.totalorder %s38, 1
      %p245 = por %p243, %p244
      %p246 = scmp.ne.s32.totalorder %s237, %s238
      %p247 = scmp.eq.s32.totalorder %s38, 0
      %p248 = por %p246, %p247
      %p249 = scmp.ne.s32.totalorder %s237, %s238
      %p250 = scmp.eq.s32.totalorder %s39, 1
      %p251 = por %p249, %p250
      %p253 = scmp.ne.s32.totalorder %s238, %s252
      %p254 = scmp.eq.s32.totalorder %s39, 0
      %p255 = por %p253, %p254
      %s257 = sadd.s32 %s256, 1
      %p260 = scmp.eq.s32.totalorder %s33, 1
      %p261 = scmp.ne.s32.totalorder %s256, %s258
      %p262 = scmp.eq.s32.totalorder %s33, 0
      %p263 = por %p261, %p262
      %p264 = scmp.ne.s32.totalorder %s256, %s258
      %p265 = scmp.eq.s32.totalorder %s38, 1
      %p266 = por %p264, %p265
      %p267 = scmp.ne.s32.totalorder %s258, %s259
      %p268 = scmp.eq.s32.totalorder %s38, 0
      %p269 = por %p267, %p268
      %p270 = scmp.ne.s32.totalorder %s258, %s259
      %p271 = scmp.eq.s32.totalorder %s39, 1
      %p272 = por %p270, %p271
      %p274 = scmp.ne.s32.totalorder %s259, %s273
      %p275 = scmp.eq.s32.totalorder %s39, 0
      %p276 = por %p274, %p275
      %s278 = sadd.s32 %s277, 1
      %p281 = scmp.eq.s32.totalorder %s33, 1
      %p282 = scmp.ne.s32.totalorder %s277, %s279
      %p283 = scmp.eq.s32.totalorder %s33, 0
      %p284 = por %p282, %p283
      %p285 = scmp.ne.s32.totalorder %s277, %s279
      %p286 = scmp.eq.s32.totalorder %s38, 1
      %p287 = por %p285, %p286
      %p288 = scmp.ne.s32.totalorder %s279, %s280
      %p289 = scmp.eq.s32.totalorder %s38, 0
      %p290 = por %p288, %p289
      %p291 = scmp.ne.s32.totalorder %s279, %s280
      %p292 = scmp.eq.s32.totalorder %s39, 1
      %p293 = por %p291, %p292
      %p295 = scmp.ne.s32.totalorder %s280, %s294
      %p296 = scmp.eq.s32.totalorder %s39, 0
      %p297 = por %p295, %p296
      %s299 = sadd.s32 %s298, 1
      %p302 = scmp.eq.s32.totalorder %s33, 1
      %p303 = scmp.ne.s32.totalorder %s298, %s300
      %p304 = scmp.eq.s32.totalorder %s33, 0
      %p305 = por %p303, %p304
      %p306 = scmp.ne.s32.totalorder %s298, %s300
      %p307 = scmp.eq.s32.totalorder %s38, 1
      %p308 = por %p306, %p307
      %p309 = scmp.ne.s32.totalorder %s300, %s301
      %p310 = scmp.eq.s32.totalorder %s38, 0
      %p311 = por %p309, %p310
      %p312 = scmp.ne.s32.totalorder %s300, %s301
      %p313 = scmp.eq.s32.totalorder %s39, 1
      %p314 = por %p312, %p313
      %p316 = scmp.ne.s32.totalorder %s301, %s315
      %p317 = scmp.eq.s32.totalorder %s39, 0
      %p318 = por %p316, %p317
      %s320 = sadd.s32 %s319, 1
      %p323 = scmp.eq.s32.totalorder %s33, 1
      %p324 = scmp.ne.s32.totalorder %s319, %s321
      %p325 = scmp.eq.s32.totalorder %s33, 0
      %p326 = por %p324, %p325
      %p327 = scmp.ne.s32.totalorder %s319, %s321
      %p328 = scmp.eq.s32.totalorder %s38, 1
      %p329 = por %p327, %p328
      %p330 = scmp.ne.s32.totalorder %s321, %s322
      %p331 = scmp.eq.s32.totalorder %s38, 0
      %p332 = por %p330, %p331
      %p333 = scmp.ne.s32.totalorder %s321, %s322
      %p334 = scmp.eq.s32.totalorder %s39, 1
      %p335 = por %p333, %p334
      %p337 = scmp.ne.s32.totalorder %s322, %s336
      %p338 = scmp.eq.s32.totalorder %s39, 0
      %p339 = por %p337, %p338
      %s341 = sadd.s32 %s340, 1
      %p344 = scmp.eq.s32.totalorder %s33, 1
      %p345 = scmp.ne.s32.totalorder %s340, %s342
      %p346 = scmp.eq.s32.totalorder %s33, 0
      %p347 = por %p345, %p346
      %p348 = scmp.ne.s32.totalorder %s340, %s342
      %p349 = scmp.eq.s32.totalorder %s38, 1
      %p350 = por %p348, %p349
      %p351 = scmp.ne.s32.totalorder %s342, %s343
      %p352 = scmp.eq.s32.totalorder %s38, 0
      %p353 = por %p351, %p352
      %p354 = scmp.ne.s32.totalorder %s342, %s343
      %p355 = scmp.eq.s32.totalorder %s39, 1
      %p356 = por %p354, %p355
      %p358 = scmp.ne.s32.totalorder %s343, %s357
      %p359 = scmp.eq.s32.totalorder %s39, 0
      %p360 = por %p358, %p359
      %s362 = sadd.s32 %s361, 1
      %p365 = scmp.eq.s32.totalorder %s33, 1
      %p366 = scmp.ne.s32.totalorder %s361, %s363
      %p367 = scmp.eq.s32.totalorder %s33, 0
      %p368 = por %p366, %p367
      %p369 = scmp.ne.s32.totalorder %s361, %s363
      %p370 = scmp.eq.s32.totalorder %s38, 1
      %p371 = por %p369, %p370
      %p372 = scmp.ne.s32.totalorder %s363, %s364
      %p373 = scmp.eq.s32.totalorder %s38, 0
      %p374 = por %p372, %p373
      %p375 = scmp.ne.s32.totalorder %s363, %s364
      %p376 = scmp.eq.s32.totalorder %s39, 1
      %p377 = por %p375, %p376
      %p379 = scmp.ne.s32.totalorder %s364, %s378
      %p380 = scmp.eq.s32.totalorder %s39, 0
      %p381 = por %p379, %p380
      %s383 = sadd.s32 %s382, 1
      %p386 = scmp.eq.s32.totalorder %s33, 1
      %p387 = scmp.ne.s32.totalorder %s382, %s384
      %p388 = scmp.eq.s32.totalorder %s33, 0
      %p389 = por %p387, %p388
      %p390 = scmp.ne.s32.totalorder %s382, %s384
      %p391 = scmp.eq.s32.totalorder %s38, 1
      %p392 = por %p390, %p391
      %p393 = scmp.ne.s32.totalorder %s384, %s385
      %p394 = scmp.eq.s32.totalorder %s38, 0
      %p395 = por %p393, %p394
      %p396 = scmp.ne.s32.totalorder %s384, %s385
      %p397 = scmp.eq.s32.totalorder %s39, 1
      %p398 = por %p396, %p397
      %p400 = scmp.ne.s32.totalorder %s385, %s399
      %p401 = scmp.eq.s32.totalorder %s39, 0
      %p402 = por %p400, %p401
      %s404 = sadd.s32 %s403, 1
      %p407 = scmp.eq.s32.totalorder %s33, 1
      %p408 = scmp.ne.s32.totalorder %s403, %s405
      %p409 = scmp.eq.s32.totalorder %s33, 0
      %p410 = por %p408, %p409
      %p411 = scmp.ne.s32.totalorder %s403, %s405
      %p412 = scmp.eq.s32.totalorder %s38, 1
      %p413 = por %p411, %p412
      %p414 = scmp.ne.s32.totalorder %s405, %s406
      %p415 = scmp.eq.s32.totalorder %s38, 0
      %p416 = por %p414, %p415
      %p417 = scmp.ne.s32.totalorder %s405, %s406
      %p418 = scmp.eq.s32.totalorder %s39, 1
      %p419 = por %p417, %p418
      %p421 = scmp.ne.s32.totalorder %s406, %s420
      %p422 = scmp.eq.s32.totalorder %s39, 0
      %p423 = por %p421, %p422
      %s425 = sadd.s32 %s424, 1
      %p428 = scmp.eq.s32.totalorder %s33, 1
      %p429 = scmp.ne.s32.totalorder %s424, %s426
      %p430 = scmp.eq.s32.totalorder %s33, 0
      %p431 = por %p429, %p430
      %p432 = scmp.ne.s32.totalorder %s424, %s426
      %p433 = scmp.eq.s32.totalorder %s38, 1
      %p434 = por %p432, %p433
      %p435 = scmp.ne.s32.totalorder %s426, %s427
      %p436 = scmp.eq.s32.totalorder %s38, 0
      %p437 = por %p435, %p436
      %p438 = scmp.ne.s32.totalorder %s426, %s427
      %p439 = scmp.eq.s32.totalorder %s39, 1
      %p440 = por %p438, %p439
      %p442 = scmp.ne.s32.totalorder %s427, %s441
      %p443 = scmp.eq.s32.totalorder %s39, 0
      %p444 = por %p442, %p443
      %s446 = sadd.s32 %s445, 1
      %p449 = scmp.eq.s32.totalorder %s33, 1
      %p450 = scmp.ne.s32.totalorder %s445, %s447
      %p451 = scmp.eq.s32.totalorder %s33, 0
      %p452 = por %p450, %p451
      %p453 = scmp.ne.s32.totalorder %s445, %s447
      %p454 = scmp.eq.s32.totalorder %s38, 1
      %p455 = por %p453, %p454
      %p456 = scmp.ne.s32.totalorder %s447, %s448
      %p457 = scmp.eq.s32.totalorder %s38, 0
      %p458 = por %p456, %p457
      %p459 = scmp.ne.s32.totalorder %s447, %s448
      %p460 = scmp.eq.s32.totalorder %s39, 1
      %p461 = por %p459, %p460
      %p463 = scmp.ne.s32.totalorder %s448, %s462
      %p464 = scmp.eq.s32.totalorder %s39, 0
      %p465 = por %p463, %p464
      %s467 = sadd.s32 %s466, 1
      %p470 = scmp.eq.s32.totalorder %s33, 1
      %p471 = scmp.ne.s32.totalorder %s466, %s468
      %p472 = scmp.eq.s32.totalorder %s33, 0
      %p473 = por %p471, %p472
      %p474 = scmp.ne.s32.totalorder %s466, %s468
      %p475 = scmp.eq.s32.totalorder %s38, 1
      %p476 = por %p474, %p475
      %p477 = scmp.ne.s32.totalorder %s468, %s469
      %p478 = scmp.eq.s32.totalorder %s38, 0
      %p479 = por %p477, %p478
      %p480 = scmp.ne.s32.totalorder %s468, %s469
      %p481 = scmp.eq.s32.totalorder %s39, 1
      %p482 = por %p480, %p481
      %p484 = scmp.ne.s32.totalorder %s469, %s483
      %p485 = scmp.eq.s32.totalorder %s39, 0
      %p486 = por %p484, %p485
      %s487 = ssub.s32 %s33, %s40
      %p488 = scmp.eq.s32.totalorder %s487, 0
      %s490 = sadd.s32 %s489, 1
      %s491 = scalar_select %p488, %s489, %s490
      %p494 = pneg %p488
      %p495 = scmp.eq.s32.totalorder %s33, 1
      %p496 = por %p494, %p495
      %p497 = scmp.ne.s32.totalorder %s489, %s492
      %p498 = scmp.eq.s32.totalorder %s33, 0
      %p499 = por %p497, %p498
      %p500 = scmp.ne.s32.totalorder %s489, %s492
      %p501 = scmp.eq.s32.totalorder %s38, 1
      %p502 = por %p500, %p501
      %p503 = scmp.ne.s32.totalorder %s492, %s493
      %p504 = scmp.eq.s32.totalorder %s38, 0
      %p505 = por %p503, %p504
      %p506 = scmp.ne.s32.totalorder %s492, %s493
      %p507 = scmp.eq.s32.totalorder %s39, 1
      %p508 = por %p506, %p507
      %p510 = scmp.ne.s32.totalorder %s493, %s509
      %p511 = scmp.eq.s32.totalorder %s39, 0
      %p512 = por %p510, %p511
      %p513 = scmp.le.s32.totalorder 1, %s33
      %p514 = scmp.lt.s32.totalorder %s33, 3
      %p515 = pnand %p513, %p514
      %p516 = pneg %p515
      // Predicated region
      $region9: #{critic_forward.1} parent=5 // pred_check
        _
      $region10: #{critic_forward.1} parent=5 // pred_check_branch
        %518 = sbr.rel (%p515) target = $region12
      $region11: #{critic_forward.1} parent=5 // pred_region
        %s519 = ssub.s32 %s33, 1
        // Predicated region
        $region13: #{critic_forward.1} parent=11 // pred_check
          %p520 = pneg %p80
        $region14: #{critic_forward.1} parent=11 // pred_check_branch
          %522 = sbr.rel (%p520) target = $region16
        $region15: #{critic_forward.1} parent=11 // pred_region
          _
        $region16: #{critic_forward.1} parent=11 // pred_fallthru
          _
        // Predicated region
        $region17: #{critic_forward.1} parent=11 // pred_check
          %p523 = pneg %p101
        $region18: #{critic_forward.1} parent=11 // pred_check_branch
          %525 = sbr.rel (%p523) target = $region20
        $region19: #{critic_forward.1} parent=11 // pred_region
          %s527 = ssub.s32 12288, 12288
          %528 = vsyncadd [#allocation4], %s527
          %s529 = sshll.u32 [#allocation3], 4
          %s530 = int_to_ptr.vmem [resolvable:$true] %s529
          %535 = dma.hbm_to_vmem [thread:$0]  %s2, 12288, %s530, [#allocation4], 128, 128, 8
        $region20: #{critic_forward.1} parent=11 // pred_fallthru
          _
        // Predicated region
        $region21: #{critic_forward.1} parent=11 // pred_check
          %p536 = pneg %p122
        $region22: #{critic_forward.1} parent=11 // pred_check_branch
          %538 = sbr.rel (%p536) target = $region24
        $region23: #{critic_forward.1} parent=11 // pred_region
          _
        $region24: #{critic_forward.1} parent=11 // pred_fallthru
          _
        // Predicated region
        $region25: #{critic_forward.1} parent=11 // pred_check
          %p539 = pneg %p143
        $region26: #{critic_forward.1} parent=11 // pred_check_branch
          %541 = sbr.rel (%p539) target = $region28
        $region27: #{critic_forward.1} parent=11 // pred_region
          _
        $region28: #{critic_forward.1} parent=11 // pred_fallthru
          _
        // Predicated region
        $region29: #{critic_forward.1} parent=11 // pred_check
          %p542 = pneg %p164
        $region30: #{critic_forward.1} parent=11 // pred_check_branch
          %544 = sbr.rel (%p542) target = $region32
        $region31: #{critic_forward.1} parent=11 // pred_region
          _
        $region32: #{critic_forward.1} parent=11 // pred_fallthru
          _
        // Predicated region
        $region33: #{critic_forward.1} parent=11 // pred_check
          %p545 = pneg %p185
        $region34: #{critic_forward.1} parent=11 // pred_check_branch
          %547 = sbr.rel (%p545) target = $region36
        $region35: #{critic_forward.1} parent=11 // pred_region
          %s549 = ssub.s32 8192, 8192
          %550 = vsyncadd [#allocation6], %s549
          %s551 = sshll.u32 [#allocation5], 4
          %s552 = int_to_ptr.vmem [resolvable:$true] %s551
          %557 = dma.hbm_to_vmem [thread:$0]  %s6, 8192, %s552, [#allocation6], 256, 256, 16
        $region36: #{critic_forward.1} parent=11 // pred_fallthru
          _
        // Predicated region
        $region37: #{critic_forward.1} parent=11 // pred_check
          %p558 = pneg %p206
        $region38: #{critic_forward.1} parent=11 // pred_check_branch
          %560 = sbr.rel (%p558) target = $region40
        $region39: #{critic_forward.1} parent=11 // pred_region
          _
        $region40: #{critic_forward.1} parent=11 // pred_fallthru
          _
        // Predicated region
        $region41: #{critic_forward.1} parent=11 // pred_check
          %p561 = pneg %p227
        $region42: #{critic_forward.1} parent=11 // pred_check_branch
          %563 = sbr.rel (%p561) target = $region44
        $region43: #{critic_forward.1} parent=11 // pred_region
          _
        $region44: #{critic_forward.1} parent=11 // pred_fallthru
          _
        // Predicated region
        $region45: #{critic_forward.1} parent=11 // pred_check
          %p564 = pneg %p248
        $region46: #{critic_forward.1} parent=11 // pred_check_branch
          %566 = sbr.rel (%p564) target = $region48
        $region47: #{critic_forward.1} parent=11 // pred_region
          _
        $region48: #{critic_forward.1} parent=11 // pred_fallthru
          _
        // Predicated region
        $region49: #{critic_forward.1} parent=11 // pred_check
          %p567 = pneg %p269
        $region50: #{critic_forward.1} parent=11 // pred_check_branch
          %569 = sbr.rel (%p567) target = $region52
        $region51: #{critic_forward.1} parent=11 // pred_region
          %s571 = ssub.s32 16384, 16384
          %572 = vsyncadd [#allocation6], %s571
          %s573 = sshll.u32 [#allocation7], 4
          %s574 = int_to_ptr.vmem [resolvable:$true] %s573
          %579 = dma.hbm_to_vmem [thread:$0]  %s10, 16384, %s574, [#allocation6], 128, 128, 8
        $region52: #{critic_forward.1} parent=11 // pred_fallthru
          _
        // Predicated region
        $region53: #{critic_forward.1} parent=11 // pred_check
          %p580 = pneg %p290
        $region54: #{critic_forward.1} parent=11 // pred_check_branch
          %582 = sbr.rel (%p580) target = $region56
        $region55: #{critic_forward.1} parent=11 // pred_region
          %s584 = ssub.s32 8192, 8192
          %585 = vsyncadd [#allocation9], %s584
          %s586 = sshll.u32 [#allocation8], 4
          %s587 = int_to_ptr.vmem [resolvable:$true] %s586
          %592 = dma.hbm_to_vmem [thread:$0]  %s11, 8192, %s587, [#allocation9], 256, 256, 16
        $region56: #{critic_forward.1} parent=11 // pred_fallthru
          _
        // Predicated region
        $region57: #{critic_forward.1} parent=11 // pred_check
          %p593 = pneg %p311
        $region58: #{critic_forward.1} parent=11 // pred_check_branch
          %595 = sbr.rel (%p593) target = $region60
        $region59: #{critic_forward.1} parent=11 // pred_region
          _
        $region60: #{critic_forward.1} parent=11 // pred_fallthru
          _
        // Predicated region
        $region61: #{critic_forward.1} parent=11 // pred_check
          %p596 = pneg %p332
        $region62: #{critic_forward.1} parent=11 // pred_check_branch
          %598 = sbr.rel (%p596) target = $region64
        $region63: #{critic_forward.1} parent=11 // pred_region
          _
        $region64: #{critic_forward.1} parent=11 // pred_fallthru
          _
        // Predicated region
        $region65: #{critic_forward.1} parent=11 // pred_check
          %p599 = pneg %p353
        $region66: #{critic_forward.1} parent=11 // pred_check_branch
          %601 = sbr.rel (%p599) target = $region68
        $region67: #{critic_forward.1} parent=11 // pred_region
          _
        $region68: #{critic_forward.1} parent=11 // pred_fallthru
          _
        // Predicated region
        $region69: #{critic_forward.1} parent=11 // pred_check
          %p602 = pneg %p374
        $region70: #{critic_forward.1} parent=11 // pred_check_branch
          %604 = sbr.rel (%p602) target = $region72
        $region71: #{critic_forward.1} parent=11 // pred_region
          %s606 = ssub.s32 16384, 16384
          %607 = vsyncadd [#allocation9], %s606
          %s608 = sshll.u32 [#allocation10], 4
          %s609 = int_to_ptr.vmem [resolvable:$true] %s608
          %614 = dma.hbm_to_vmem [thread:$0]  %s15, 16384, %s609, [#allocation9], 128, 128, 8
        $region72: #{critic_forward.1} parent=11 // pred_fallthru
          _
        // Predicated region
        $region73: #{critic_forward.1} parent=11 // pred_check
          %p615 = pneg %p395
        $region74: #{critic_forward.1} parent=11 // pred_check_branch
          %617 = sbr.rel (%p615) target = $region76
        $region75: #{critic_forward.1} parent=11 // pred_region
          %s619 = ssub.s32 8192, 8192
          %620 = vsyncadd [#allocation12], %s619
          %s621 = sshll.u32 [#allocation11], 4
          %s622 = int_to_ptr.vmem [resolvable:$true] %s621
          %627 = dma.hbm_to_vmem [thread:$0]  %s16, 8192, %s622, [#allocation12], 256, 256, 16
        $region76: #{critic_forward.1} parent=11 // pred_fallthru
          _
        // Predicated region
        $region77: #{critic_forward.1} parent=11 // pred_check
          %p628 = pneg %p416
        $region78: #{critic_forward.1} parent=11 // pred_check_branch
          %630 = sbr.rel (%p628) target = $region80
        $region79: #{critic_forward.1} parent=11 // pred_region
          _
        $region80: #{critic_forward.1} parent=11 // pred_fallthru
          _
        // Predicated region
        $region81: #{critic_forward.1} parent=11 // pred_check
          %p631 = pneg %p437
        $region82: #{critic_forward.1} parent=11 // pred_check_branch
          %633 = sbr.rel (%p631) target = $region84
        $region83: #{critic_forward.1} parent=11 // pred_region
          _
        $region84: #{critic_forward.1} parent=11 // pred_fallthru
          _
        // Predicated region
        $region85: #{critic_forward.1} parent=11 // pred_check
          %p634 = pneg %p458
        $region86: #{critic_forward.1} parent=11 // pred_check_branch
          %636 = sbr.rel (%p634) target = $region88
        $region87: #{critic_forward.1} parent=11 // pred_region
          _
        $region88: #{critic_forward.1} parent=11 // pred_fallthru
          _
        // Predicated region
        $region89: #{critic_forward.1} parent=11 // pred_check
          %p637 = pneg %p479
        $region90: #{critic_forward.1} parent=11 // pred_check_branch
          %639 = sbr.rel (%p637) target = $region92
        $region91: #{critic_forward.1} parent=11 // pred_region
          _
        $region92: #{critic_forward.1} parent=11 // pred_fallthru
          _
      $region12: #{critic_forward.1} parent=5 // pred_fallthru
        _
      %p640 = scmp.lt.s32.totalorder %s33, 2
      // Predicated region
      $region93: #{critic_forward.1} parent=5 // pred_check
        %p641 = pneg %p640
      $region94: #{critic_forward.1} parent=5 // pred_check_branch
        %643 = sbr.rel (%p641) target = $region96
      $region95: #{critic_forward.1} parent=5 // pred_region
        // Predicated region
        $region97: #{critic_forward.1} parent=95 // pred_check
          %p644 = pneg %p53
        $region98: #{critic_forward.1} parent=95 // pred_check_branch
          %646 = sbr.rel (%p644) target = $region100
        $region99: #{critic_forward.1} parent=95 // pred_region
          %p647 = scmp.lt.s32.totalorder %s33, 1
          %s648 = scalar_select %p647, %s33, 1
          %s649 = smul.addr %s648, 16
          %s650 = smul.addr %s649, 4
          %s651 = scalar_lea.vmem %s0, %s650
        $region100: #{critic_forward.1} parent=95 // pred_fallthru
          _
      $region96: #{critic_forward.1} parent=5 // pred_fallthru
        _
      %p652 = scmp.le.s32.totalorder 1, %s33
      %p653 = scmp.lt.s32.totalorder %s33, 3
      %p654 = pnand %p652, %p653
      %p655 = pneg %p654
      // Predicated region
      $region101: #{critic_forward.1} parent=5 // pred_check
        _
      $region102: #{critic_forward.1} parent=5 // pred_check_branch
        %657 = sbr.rel (%p654) target = $region104
      $region103: #{critic_forward.1} parent=5 // pred_region
        %s658 = ssub.s32 %s33, 1
        // Predicated region
        $region105: #{critic_forward.1} parent=103 // pred_check
          %p659 = pneg %p101
        $region106: #{critic_forward.1} parent=103 // pred_check_branch
          %661 = sbr.rel (%p659) target = $region108
        $region107: #{critic_forward.1} parent=103 // pred_region
          %662 = dma.done [#allocation4], 12288
        $region108: #{critic_forward.1} parent=103 // pred_fallthru
          _
        // Predicated region
        $region109: #{critic_forward.1} parent=103 // pred_check
          %p663 = pneg %p185
        $region110: #{critic_forward.1} parent=103 // pred_check_branch
          %665 = sbr.rel (%p663) target = $region112
        $region111: #{critic_forward.1} parent=103 // pred_region
          %666 = dma.done [#allocation6], 8192
        $region112: #{critic_forward.1} parent=103 // pred_fallthru
          _
        // Predicated region
        $region113: #{critic_forward.1} parent=103 // pred_check
          %p667 = pneg %p269
        $region114: #{critic_forward.1} parent=103 // pred_check_branch
          %669 = sbr.rel (%p667) target = $region116
        $region115: #{critic_forward.1} parent=103 // pred_region
          %670 = dma.done [#allocation6], 16384
        $region116: #{critic_forward.1} parent=103 // pred_fallthru
          _
        // Predicated region
        $region117: #{critic_forward.1} parent=103 // pred_check
          %p671 = pneg %p290
        $region118: #{critic_forward.1} parent=103 // pred_check_branch
          %673 = sbr.rel (%p671) target = $region120
        $region119: #{critic_forward.1} parent=103 // pred_region
          %674 = dma.done [#allocation9], 8192
        $region120: #{critic_forward.1} parent=103 // pred_fallthru
          _
        // Predicated region
        $region121: #{critic_forward.1} parent=103 // pred_check
          %p675 = pneg %p374
        $region122: #{critic_forward.1} parent=103 // pred_check_branch
          %677 = sbr.rel (%p675) target = $region124
        $region123: #{critic_forward.1} parent=103 // pred_region
          %678 = dma.done [#allocation9], 16384
        $region124: #{critic_forward.1} parent=103 // pred_fallthru
          _
        // Predicated region
        $region125: #{critic_forward.1} parent=103 // pred_check
          %p679 = pneg %p395
        $region126: #{critic_forward.1} parent=103 // pred_check_branch
          %681 = sbr.rel (%p679) target = $region128
        $region127: #{critic_forward.1} parent=103 // pred_region
          %682 = dma.done [#allocation12], 8192
        $region128: #{critic_forward.1} parent=103 // pred_fallthru
          _
        %p683 = scmp.lt.s32.totalorder %s38, 1
        %s684 = scalar_select %p683, %s38, 1
        %s685 = smul.addr %s684, 16
        %s686 = smul.addr %s685, 4
        %s687 = scalar_lea.vmem %s0, %s686
        %p688 = pneg %p59
        %p689 = pneg %p56
        %p690 = pneg %p80
        %p691 = pneg %p77
        %p692 = pneg %p101
        %p693 = pneg %p98
        %p694 = pneg %p122
        %p695 = pneg %p119
        %p696 = pneg %p143
        %p697 = pneg %p140
        %p698 = pneg %p164
        %p699 = pneg %p161
        %p700 = pneg %p185
        %p701 = pneg %p182
        %p702 = pneg %p206
        %p703 = pneg %p203
        %p704 = pneg %p227
        %p705 = pneg %p224
        %p706 = pneg %p248
        %p707 = pneg %p245
        %p708 = pneg %p269
        %p709 = pneg %p266
        %p710 = pneg %p290
        %p711 = pneg %p287
        %p712 = pneg %p311
        %p713 = pneg %p308
        %p714 = pneg %p332
        %p715 = pneg %p329
        %p716 = pneg %p353
        %p717 = pneg %p350
        %p718 = pneg %p374
        %p719 = pneg %p371
        %p720 = pneg %p395
        %p721 = pneg %p392
        %p722 = pneg %p416
        %p723 = pneg %p413
        %p724 = pneg %p437
        %p725 = pneg %p434
        %p726 = pneg %p458
        %p727 = pneg %p455
        %p728 = pneg %p479
        %p729 = pneg %p476
        %p730 = pneg %p505
        %p731 = pneg %p502
        %p732 = scmp.lt.s32.totalorder %s38, 1
        %s733 = scalar_select %p732, %s38, 1
        %s734 = scalar_lea.vmem %s21, %s733
        %p735 = scmp.lt.s32.totalorder %s38, 1
        %s736 = scalar_select %p735, %s38, 1
        %s737 = smul.addr %s736, 16
        %s738 = smul.addr %s737, 4
        %s739 = scalar_lea.vmem %s0, %s738
        %p740 = scmp.lt.s32.totalorder %s38, 1
        %s741 = scalar_select %p740, %s38, 1
        %s742 = scalar_lea.vmem %s21, %s741
        %v744 = vld [vmem:[%s739] sm:$0xff]
        %v745 = vld [vmem:[%s739 + $0x8] sm:$0xff]
        %v746 = vld [vmem:[%s739 + $0x10] sm:$0xff]
        %v747 = vld [vmem:[%s739 + $0x18] sm:$0xff]
        %v748 = vld [vmem:[%s739 + $0x20] sm:$0xff]
        %v749 = vld [vmem:[%s739 + $0x28] sm:$0xff]
        %v750 = vld [vmem:[%s739 + $0x30] sm:$0xff]
        %v751 = vld [vmem:[%s739 + $0x38] sm:$0xff]
        %v752 = vld [vmem:[%s1] sm:$0xf]
        %v753 = vld [vmem:[%s1 + $0x4] sm:$0xf]
        %v754 = vld [vmem:[%s1 + $0x8] sm:$0xf]
        %v755 = vld [vmem:[%s1 + $0xc] sm:$0xf]
        %v760 = vunpack.c.l.b16 %v752
        %v761 = vunpack.c.l.b16 %v753
        %v762 = vunpack.c.l.b16 %v754
        %v763 = vunpack.c.l.b16 %v755
        %v764 = vpack.c.b16 %v761, %v760
        %v765 = vpack.c.b16 %v763, %v762
        %v774 = vunpack.c.l.b16 %v744
        %v775 = vunpack.c.h.b16 %v744
        %v776 = vunpack.c.l.b16 %v745
        %v777 = vunpack.c.h.b16 %v745
        %v778 = vunpack.c.l.b16 %v746
        %v779 = vunpack.c.h.b16 %v746
        %v780 = vunpack.c.l.b16 %v747
        %v781 = vunpack.c.h.b16 %v747
        %v782 = vunpack.c.l.b16 %v748
        %v783 = vunpack.c.h.b16 %v748
        %v784 = vunpack.c.l.b16 %v749
        %v785 = vunpack.c.h.b16 %v749
        %v786 = vunpack.c.l.b16 %v750
        %v787 = vunpack.c.h.b16 %v750
        %v788 = vunpack.c.l.b16 %v751
        %v789 = vunpack.c.h.b16 %v751
        %v790 = vpack.c.b16 %v776, %v774
        %v791 = vpack.c.b16 %v777, %v775
        %v792 = vpack.c.b16 %v780, %v778
        %v793 = vpack.c.b16 %v781, %v779
        %v794 = vpack.c.b16 %v784, %v782
        %v795 = vpack.c.b16 %v785, %v783
        %v796 = vpack.c.b16 %v788, %v786
        %v797 = vpack.c.b16 %v789, %v787
        %vm806 = vcmask 523264
        %v808 = vsel %vm806, %v764, 0
        %v811 = vsel %vm806, %v765, 0
        %813 = vmatprep.subr.bf16.mxu0 %v791
        %814 = vmatpush1.bf16.msra.mxu0 %v790
        %815 = vmatprep.subr.bf16.mxu0 %v793
        %816 = vmatpush1.bf16.msra.mxu0 %v792
        %817 = vmatprep.subr.bf16.mxu0 %v795
        %818 = vmatpush1.bf16.msra.mxu0 %v794
        %819 = vmatprep.subr.bf16.mxu0 %v797
        %820 = vmatpush1.bf16.msra.mxu0 %v796
        %821 = vmatprep.subr.bf16.mxu0 0
        %822 = vmatpush1.bf16.msra.mxu0 0
        %823 = vmatprep.subr.bf16.mxu0 0
        %824 = vmatpush1.bf16.msra.mxu0 0
        %825 = vmatprep.subr.bf16.mxu0 0
        %826 = vmatpush1.bf16.msra.mxu0 0
        %827 = vmatprep.subr.bf16.mxu0 0
        %828 = vmatpush1.bf16.msra.mxu0 0
        %829 = vmatprep.subr.bf16.mxu0 0
        %830 = vmatpush1.bf16.msra.mxu0 0
        %831 = vmatprep.subr.bf16.mxu0 0
        %832 = vmatpush1.bf16.msra.mxu0 0
        %833 = vmatprep.subr.bf16.mxu0 0
        %834 = vmatpush1.bf16.msra.mxu0 0
        %835 = vmatprep.subr.bf16.mxu0 0
        %836 = vmatpush1.bf16.msra.mxu0 0
        %837 = vmatprep.subr.bf16.mxu0 0
        %838 = vmatpush1.bf16.msra.mxu0 0
        %839 = vmatprep.subr.bf16.mxu0 0
        %840 = vmatpush1.bf16.msra.mxu0 0
        %841 = vmatprep.subr.bf16.mxu0 0
        %842 = vmatpush1.bf16.msra.mxu0 0
        %843 = vmatprep.subr.bf16.mxu0 0
        %844 = vmatpush1.bf16.msra.mxu0 0
        %845 = vmatprep.mubr.bf16.mxu0 0
        %846 = vmatmul.mubr.bf16.gmra.mrb[0].mxu0 %v808
        %v847 = vpop.f32.mrb[0].mxu0
        %v848 = vadd.f32 0.0, %v847
        %v849 = vpop.f32.mrb[0].mxu0
        %v850 = vadd.f32 0.0, %v849
        %v851 = vpop.f32.mrb[0].mxu0
        %v852 = vadd.f32 0.0, %v851
        %v853 = vpop.f32.mrb[0].mxu0
        %v854 = vadd.f32 0.0, %v853
        %855 = vmatprep.mubr.bf16.mxu0 0
        %856 = vmatmul.mubr.bf16.gmra.mrb[0].mxu0 %v811
        %v857 = vpop.f32.mrb[0].mxu0
        %v858 = vadd.f32 0.0, %v857
        %v859 = vpop.f32.mrb[0].mxu0
        %v860 = vadd.f32 0.0, %v859
        %v861 = vpop.f32.mrb[0].mxu0
        %v862 = vadd.f32 0.0, %v861
        %v863 = vpop.f32.mrb[0].mxu0
        %v864 = vadd.f32 0.0, %v863
        %865 = vdwg.mxu0
        %v866 = vpack.c.bf16 %v852, %v848
        %v867 = vpack.c.bf16 %v854, %v850
        %v868 = vpack.c.bf16 %v862, %v858
        %v869 = vpack.c.bf16 %v864, %v860
        %v870 = vld [vmem:[#allocation3] sm:$0xff]
        %v871 = vld [vmem:[#allocation3 + $0x8] sm:$0xff]
        %v872 = vld [vmem:[#allocation3 + $0x10] sm:$0xff]
        %v873 = vld [vmem:[#allocation3 + $0x18] sm:$0xff]
        %v874 = vld [vmem:[#allocation3 + $0x20] sm:$0xff]
        %v875 = vld [vmem:[#allocation3 + $0x28] sm:$0xff]
        %v876 = vld [vmem:[#allocation3 + $0x30] sm:$0xff]
        %v877 = vld [vmem:[#allocation3 + $0x38] sm:$0xff]
        %v878 = vld [vmem:[#allocation3 + $0x40] sm:$0xff]
        %v879 = vld [vmem:[#allocation3 + $0x48] sm:$0xff]
        %v880 = vld [vmem:[#allocation3 + $0x50] sm:$0xff]
        %v881 = vld [vmem:[#allocation3 + $0x58] sm:$0xff]
        %v882 = vld [vmem:[#allocation3 + $0x60] sm:$0xff]
        %v883 = vld [vmem:[#allocation3 + $0x68] sm:$0xff]
        %v884 = vld [vmem:[#allocation3 + $0x70] sm:$0xff]
        %v885 = vld [vmem:[#allocation3 + $0x78] sm:$0xff]
        %v886 = vld [vmem:[#allocation3 + $0x80] sm:$0xff]
        %v887 = vld [vmem:[#allocation3 + $0x88] sm:$0xff]
        %v888 = vld [vmem:[#allocation3 + $0x90] sm:$0xff]
        %v889 = vld [vmem:[#allocation3 + $0x98] sm:$0xff]
        %v890 = vld [vmem:[#allocation3 + $0xa0] sm:$0xff]
        %v891 = vld [vmem:[#allocation3 + $0xa8] sm:$0xff]
        %v892 = vld [vmem:[#allocation3 + $0xb0] sm:$0xff]
        %v893 = vld [vmem:[#allocation3 + $0xb8] sm:$0xff]
        %s894 = scalar_lea.vmem %s1, 16
        %v895 = vld [vmem:[%s894] sm:$0xf]
        %v896 = vld [vmem:[%s894 + $0x4] sm:$0xf]
        %v897 = vld [vmem:[%s894 + $0x8] sm:$0xf]
        %v898 = vld [vmem:[%s894 + $0xc] sm:$0xf]
        %v903 = vunpack.c.l.b16 %v895
        %v904 = vunpack.c.l.b16 %v896
        %v905 = vunpack.c.l.b16 %v897
        %v906 = vunpack.c.l.b16 %v898
        %v907 = vpack.c.b16 %v904, %v903
        %v908 = vpack.c.b16 %v906, %v905
        %v910 = vsel %vm806, %v907, 0
        %v913 = vsel %vm806, %v908, 0
        %915 = vmatprep.subr.bf16.mxu0 %v791
        %916 = vmatpush1.bf16.msra.mxu0 %v790
        %917 = vmatprep.subr.bf16.mxu0 %v793
        %918 = vmatpush1.bf16.msra.mxu0 %v792
        %919 = vmatprep.subr.bf16.mxu0 %v795
        %920 = vmatpush1.bf16.msra.mxu0 %v794
        %921 = vmatprep.subr.bf16.mxu0 %v797
        %922 = vmatpush1.bf16.msra.mxu0 %v796
        %923 = vmatprep.subr.bf16.mxu0 0
        %924 = vmatpush1.bf16.msra.mxu0 0
        %925 = vmatprep.subr.bf16.mxu0 0
        %926 = vmatpush1.bf16.msra.mxu0 0
        %927 = vmatprep.subr.bf16.mxu0 0
        %928 = vmatpush1.bf16.msra.mxu0 0
        %929 = vmatprep.subr.bf16.mxu0 0
        %930 = vmatpush1.bf16.msra.mxu0 0
        %931 = vmatprep.subr.bf16.mxu0 0
        %932 = vmatpush1.bf16.msra.mxu0 0
        %933 = vmatprep.subr.bf16.mxu0 0
        %934 = vmatpush1.bf16.msra.mxu0 0
        %935 = vmatprep.subr.bf16.mxu0 0
        %936 = vmatpush1.bf16.msra.mxu0 0
        %937 = vmatprep.subr.bf16.mxu0 0
        %938 = vmatpush1.bf16.msra.mxu0 0
        %939 = vmatprep.subr.bf16.mxu0 0
        %940 = vmatpush1.bf16.msra.mxu0 0
        %941 = vmatprep.subr.bf16.mxu0 0
        %942 = vmatpush1.bf16.msra.mxu0 0
        %943 = vmatprep.subr.bf16.mxu0 0
        %944 = vmatpush1.bf16.msra.mxu0 0
        %945 = vmatprep.subr.bf16.mxu0 0
        %946 = vmatpush1.bf16.msra.mxu0 0
        %947 = vmatprep.mubr.bf16.mxu0 0
        %948 = vmatmul.mubr.bf16.gmra.mrb[0].mxu0 %v910
        %v949 = vpop.f32.mrb[0].mxu0
        %v950 = vadd.f32 0.0, %v949
        %v951 = vpop.f32.mrb[0].mxu0
        %v952 = vadd.f32 0.0, %v951
        %v953 = vpop.f32.mrb[0].mxu0
        %v954 = vadd.f32 0.0, %v953
        %v955 = vpop.f32.mrb[0].mxu0
        %v956 = vadd.f32 0.0, %v955
        %957 = vmatprep.mubr.bf16.mxu0 0
        %958 = vmatmul.mubr.bf16.gmra.mrb[0].mxu0 %v913
        %v959 = vpop.f32.mrb[0].mxu0
        %v960 = vadd.f32 0.0, %v959
        %v961 = vpop.f32.mrb[0].mxu0
        %v962 = vadd.f32 0.0, %v961
        %v963 = vpop.f32.mrb[0].mxu0
        %v964 = vadd.f32 0.0, %v963
        %v965 = vpop.f32.mrb[0].mxu0
        %v966 = vadd.f32 0.0, %v965
        %967 = vdwg.mxu0
        %v968 = vpack.c.bf16 %v954, %v950
        %v969 = vpack.c.bf16 %v956, %v952
        %v970 = vpack.c.bf16 %v964, %v960
        %v971 = vpack.c.bf16 %v966, %v962
        %s972 = scalar_lea.vmem [#allocation3], 192
        %v973 = vld [vmem:[%s972] sm:$0xff]
        %v974 = vld [vmem:[%s972 + $0x8] sm:$0xff]
        %v975 = vld [vmem:[%s972 + $0x10] sm:$0xff]
        %v976 = vld [vmem:[%s972 + $0x18] sm:$0xff]
        %v977 = vld [vmem:[%s972 + $0x20] sm:$0xff]
        %v978 = vld [vmem:[%s972 + $0x28] sm:$0xff]
        %v979 = vld [vmem:[%s972 + $0x30] sm:$0xff]
        %v980 = vld [vmem:[%s972 + $0x38] sm:$0xff]
        %v981 = vld [vmem:[%s972 + $0x40] sm:$0xff]
        %v982 = vld [vmem:[%s972 + $0x48] sm:$0xff]
        %v983 = vld [vmem:[%s972 + $0x50] sm:$0xff]
        %v984 = vld [vmem:[%s972 + $0x58] sm:$0xff]
        %v985 = vld [vmem:[%s972 + $0x60] sm:$0xff]
        %v986 = vld [vmem:[%s972 + $0x68] sm:$0xff]
        %v987 = vld [vmem:[%s972 + $0x70] sm:$0xff]
        %v988 = vld [vmem:[%s972 + $0x78] sm:$0xff]
        %v989 = vld [vmem:[%s972 + $0x80] sm:$0xff]
        %v990 = vld [vmem:[%s972 + $0x88] sm:$0xff]
        %v991 = vld [vmem:[%s972 + $0x90] sm:$0xff]
        %v992 = vld [vmem:[%s972 + $0x98] sm:$0xff]
        %v993 = vld [vmem:[%s972 + $0xa0] sm:$0xff]
        %v994 = vld [vmem:[%s972 + $0xa8] sm:$0xff]
        %v995 = vld [vmem:[%s972 + $0xb0] sm:$0xff]
        %v996 = vld [vmem:[%s972 + $0xb8] sm:$0xff]
        %v1021 = vunpack.c.l.b16 %v973
        %v1022 = vunpack.c.h.b16 %v973
        %v1023 = vunpack.c.l.b16 %v974
        %v1024 = vunpack.c.h.b16 %v974
        %v1025 = vunpack.c.l.b16 %v975
        %v1026 = vunpack.c.h.b16 %v975
        %v1027 = vunpack.c.l.b16 %v976
        %v1028 = vunpack.c.h.b16 %v976
        %v1029 = vunpack.c.l.b16 %v977
        %v1030 = vunpack.c.h.b16 %v977
        %v1031 = vunpack.c.l.b16 %v978
        %v1032 = vunpack.c.h.b16 %v978
        %v1033 = vunpack.c.l.b16 %v979
        %v1034 = vunpack.c.h.b16 %v979
        %v1035 = vunpack.c.l.b16 %v980
        %v1036 = vunpack.c.h.b16 %v980
        %v1037 = vunpack.c.l.b16 %v981
        %v1038 = vunpack.c.h.b16 %v981
        %v1039 = vunpack.c.l.b16 %v982
        %v1040 = vunpack.c.h.b16 %v982
        %v1041 = vunpack.c.l.b16 %v983
        %v1042 = vunpack.c.h.b16 %v983
        %v1043 = vunpack.c.l.b16 %v984
        %v1044 = vunpack.c.h.b16 %v984
        %v1045 = vunpack.c.l.b16 %v985
        %v1046 = vunpack.c.h.b16 %v985
        %v1047 = vunpack.c.l.b16 %v986
        %v1048 = vunpack.c.h.b16 %v986
        %v1049 = vunpack.c.l.b16 %v987
        %v1050 = vunpack.c.h.b16 %v987
        %v1051 = vunpack.c.l.b16 %v988
        %v1052 = vunpack.c.h.b16 %v988
        %v1053 = vunpack.c.l.b16 %v989
        %v1054 = vunpack.c.h.b16 %v989
        %v1055 = vunpack.c.l.b16 %v990
        %v1056 = vunpack.c.h.b16 %v990
        %v1057 = vunpack.c.l.b16 %v991
        %v1058 = vunpack.c.h.b16 %v991
        %v1059 = vunpack.c.l.b16 %v992
        %v1060 = vunpack.c.h.b16 %v992
        %v1061 = vunpack.c.l.b16 %v993
        %v1062 = vunpack.c.h.b16 %v993
        %v1063 = vunpack.c.l.b16 %v994
        %v1064 = vunpack.c.h.b16 %v994
        %v1065 = vunpack.c.l.b16 %v995
        %v1066 = vunpack.c.h.b16 %v995
        %v1067 = vunpack.c.l.b16 %v996
        %v1068 = vunpack.c.h.b16 %v996
        %v1069 = vpack.c.b16 %v1023, %v1021
        %v1070 = vpack.c.b16 %v1024, %v1022
        %v1071 = vpack.c.b16 %v1027, %v1025
        %v1072 = vpack.c.b16 %v1028, %v1026
        %v1073 = vpack.c.b16 %v1031, %v1029
        %v1074 = vpack.c.b16 %v1032, %v1030
        %v1075 = vpack.c.b16 %v1035, %v1033
        %v1076 = vpack.c.b16 %v1036, %v1034
        %v1077 = vpack.c.b16 %v1039, %v1037
        %v1078 = vpack.c.b16 %v1040, %v1038
        %v1079 = vpack.c.b16 %v1043, %v1041
        %v1080 = vpack.c.b16 %v1044, %v1042
        %v1081 = vpack.c.b16 %v1047, %v1045
        %v1082 = vpack.c.b16 %v1048, %v1046
        %v1083 = vpack.c.b16 %v1051, %v1049
        %v1084 = vpack.c.b16 %v1052, %v1050
        %v1085 = vpack.c.b16 %v1055, %v1053
        %v1086 = vpack.c.b16 %v1056, %v1054
        %v1087 = vpack.c.b16 %v1059, %v1057
        %v1088 = vpack.c.b16 %v1060, %v1058
        %v1089 = vpack.c.b16 %v1063, %v1061
        %v1090 = vpack.c.b16 %v1064, %v1062
        %v1091 = vpack.c.b16 %v1067, %v1065
        %v1092 = vpack.c.b16 %v1068, %v1066
        %v1118 = vsel %vm806, %v969, 0
        %v1121 = vsel %vm806, %v971, 0
        %1123 = vmatprep.subr.bf16.mxu0 %v1070
        %1124 = vmatpush1.bf16.msra.mxu0 %v1069
        %1125 = vmatprep.subr.bf16.mxu0 %v1072
        %1126 = vmatpush1.bf16.msra.mxu0 %v1071
        %1127 = vmatprep.subr.bf16.mxu0 %v1074
        %1128 = vmatpush1.bf16.msra.mxu0 %v1073
        %1129 = vmatprep.subr.bf16.mxu0 %v1076
        %1130 = vmatpush1.bf16.msra.mxu0 %v1075
        %1131 = vmatprep.subr.bf16.mxu0 %v1078
        %1132 = vmatpush1.bf16.msra.mxu0 %v1077
        %1133 = vmatprep.subr.bf16.mxu0 %v1080
        %1134 = vmatpush1.bf16.msra.mxu0 %v1079
        %1135 = vmatprep.subr.bf16.mxu0 %v1082
        %1136 = vmatpush1.bf16.msra.mxu0 %v1081
        %1137 = vmatprep.subr.bf16.mxu0 %v1084
        %1138 = vmatpush1.bf16.msra.mxu0 %v1083
        %1139 = vmatprep.subr.bf16.mxu0 %v1086
        %1140 = vmatpush1.bf16.msra.mxu0 %v1085
        %1141 = vmatprep.subr.bf16.mxu0 %v1088
        %1142 = vmatpush1.bf16.msra.mxu0 %v1087
        %1143 = vmatprep.subr.bf16.mxu0 %v1090
        %1144 = vmatpush1.bf16.msra.mxu0 %v1089
        %1145 = vmatprep.subr.bf16.mxu0 %v1092
        %1146 = vmatpush1.bf16.msra.mxu0 %v1091
        %1147 = vmatprep.subr.bf16.mxu0 0
        %1148 = vmatpush1.bf16.msra.mxu0 0
        %1149 = vmatprep.subr.bf16.mxu0 0
        %1150 = vmatpush1.bf16.msra.mxu0 0
        %1151 = vmatprep.subr.bf16.mxu0 0
        %1152 = vmatpush1.bf16.msra.mxu0 0
        %1153 = vmatprep.subr.bf16.mxu0 0
        %1154 = vmatpush1.bf16.msra.mxu0 0
        %1155 = vmatprep.mubr.bf16.mxu0 %v1118
        %1156 = vmatmul.mubr.bf16.gmra.mrb[0].mxu0 %v968
        %v1157 = vpop.f32.mrb[0].mxu0
        %v1158 = vadd.f32 0.0, %v1157
        %v1159 = vpop.f32.mrb[0].mxu0
        %v1160 = vadd.f32 0.0, %v1159
        %v1161 = vpop.f32.mrb[0].mxu0
        %v1162 = vadd.f32 0.0, %v1161
        %v1163 = vpop.f32.mrb[0].mxu0
        %v1164 = vadd.f32 0.0, %v1163
        %1165 = vmatprep.mubr.bf16.mxu0 %v1121
        %1166 = vmatmul.mubr.bf16.gmra.mrb[0].mxu0 %v970
        %v1167 = vpop.f32.mrb[0].mxu0
        %v1168 = vadd.f32 0.0, %v1167
        %v1169 = vpop.f32.mrb[0].mxu0
        %v1170 = vadd.f32 0.0, %v1169
        %v1171 = vpop.f32.mrb[0].mxu0
        %v1172 = vadd.f32 0.0, %v1171
        %v1173 = vpop.f32.mrb[0].mxu0
        %v1174 = vadd.f32 0.0, %v1173
        %1175 = vdwg.mxu0
        %v1200 = vunpack.c.l.b16 %v870
        %v1201 = vunpack.c.h.b16 %v870
        %v1202 = vunpack.c.l.b16 %v871
        %v1203 = vunpack.c.h.b16 %v871
        %v1204 = vunpack.c.l.b16 %v872
        %v1205 = vunpack.c.h.b16 %v872
        %v1206 = vunpack.c.l.b16 %v873
        %v1207 = vunpack.c.h.b16 %v873
        %v1208 = vunpack.c.l.b16 %v874
        %v1209 = vunpack.c.h.b16 %v874
        %v1210 = vunpack.c.l.b16 %v875
        %v1211 = vunpack.c.h.b16 %v875
        %v1212 = vunpack.c.l.b16 %v876
        %v1213 = vunpack.c.h.b16 %v876
        %v1214 = vunpack.c.l.b16 %v877
        %v1215 = vunpack.c.h.b16 %v877
        %v1216 = vunpack.c.l.b16 %v878
        %v1217 = vunpack.c.h.b16 %v878
        %v1218 = vunpack.c.l.b16 %v879
        %v1219 = vunpack.c.h.b16 %v879
        %v1220 = vunpack.c.l.b16 %v880
        %v1221 = vunpack.c.h.b16 %v880
        %v1222 = vunpack.c.l.b16 %v881
        %v1223 = vunpack.c.h.b16 %v881
        %v1224 = vunpack.c.l.b16 %v882
        %v1225 = vunpack.c.h.b16 %v882
        %v1226 = vunpack.c.l.b16 %v883
        %v1227 = vunpack.c.h.b16 %v883
        %v1228 = vunpack.c.l.b16 %v884
        %v1229 = vunpack.c.h.b16 %v884
        %v1230 = vunpack.c.l.b16 %v885
        %v1231 = vunpack.c.h.b16 %v885
        %v1232 = vunpack.c.l.b16 %v886
        %v1233 = vunpack.c.h.b16 %v886
        %v1234 = vunpack.c.l.b16 %v887
        %v1235 = vunpack.c.h.b16 %v887
        %v1236 = vunpack.c.l.b16 %v888
        %v1237 = vunpack.c.h.b16 %v888
        %v1238 = vunpack.c.l.b16 %v889
        %v1239 = vunpack.c.h.b16 %v889
        %v1240 = vunpack.c.l.b16 %v890
        %v1241 = vunpack.c.h.b16 %v890
        %v1242 = vunpack.c.l.b16 %v891
        %v1243 = vunpack.c.h.b16 %v891
        %v1244 = vunpack.c.l.b16 %v892
        %v1245 = vunpack.c.h.b16 %v892
        %v1246 = vunpack.c.l.b16 %v893
        %v1247 = vunpack.c.h.b16 %v893
        %v1248 = vpack.c.b16 %v1202, %v1200
        %v1249 = vpack.c.b16 %v1203, %v1201
        %v1250 = vpack.c.b16 %v1206, %v1204
        %v1251 = vpack.c.b16 %v1207, %v1205
        %v1252 = vpack.c.b16 %v1210, %v1208
        %v1253 = vpack.c.b16 %v1211, %v1209
        %v1254 = vpack.c.b16 %v1214, %v1212
        %v1255 = vpack.c.b16 %v1215, %v1213
        %v1256 = vpack.c.b16 %v1218, %v1216
        %v1257 = vpack.c.b16 %v1219, %v1217
        %v1258 = vpack.c.b16 %v1222, %v1220
        %v1259 = vpack.c.b16 %v1223, %v1221
        %v1260 = vpack.c.b16 %v1226, %v1224
        %v1261 = vpack.c.b16 %v1227, %v1225
        %v1262 = vpack.c.b16 %v1230, %v1228
        %v1263 = vpack.c.b16 %v1231, %v1229
        %v1264 = vpack.c.b16 %v1234, %v1232
        %v1265 = vpack.c.b16 %v1235, %v1233
        %v1266 = vpack.c.b16 %v1238, %v1236
        %v1267 = vpack.c.b16 %v1239, %v1237
        %v1268 = vpack.c.b16 %v1242, %v1240
        %v1269 = vpack.c.b16 %v1243, %v1241
        %v1270 = vpack.c.b16 %v1246, %v1244
        %v1271 = vpack.c.b16 %v1247, %v1245
        %v1297 = vsel %vm806, %v867, 0
        %v1300 = vsel %vm806, %v869, 0
        %1302 = vmatprep.subr.bf16.mxu0 %v1249
        %1303 = vmatpush1.bf16.msra.mxu0 %v1248
        %1304 = vmatprep.subr.bf16.mxu0 %v1251
        %1305 = vmatpush1.bf16.msra.mxu0 %v1250
        %1306 = vmatprep.subr.bf16.mxu0 %v1253
        %1307 = vmatpush1.bf16.msra.mxu0 %v1252
        %1308 = vmatprep.subr.bf16.mxu0 %v1255
        %1309 = vmatpush1.bf16.msra.mxu0 %v1254
        %1310 = vmatprep.subr.bf16.mxu0 %v1257
        %1311 = vmatpush1.bf16.msra.mxu0 %v1256
        %1312 = vmatprep.subr.bf16.mxu0 %v1259
        %1313 = vmatpush1.bf16.msra.mxu0 %v1258
        %1314 = vmatprep.subr.bf16.mxu0 %v1261
        %1315 = vmatpush1.bf16.msra.mxu0 %v1260
        %1316 = vmatprep.subr.bf16.mxu0 %v1263
        %1317 = vmatpush1.bf16.msra.mxu0 %v1262
        %1318 = vmatprep.subr.bf16.mxu0 %v1265
        %1319 = vmatpush1.bf16.msra.mxu0 %v1264
        %1320 = vmatprep.subr.bf16.mxu0 %v1267
        %1321 = vmatpush1.bf16.msra.mxu0 %v1266
        %1322 = vmatprep.subr.bf16.mxu0 %v1269
        %1323 = vmatpush1.bf16.msra.mxu0 %v1268
        %1324 = vmatprep.subr.bf16.mxu0 %v1271
        %1325 = vmatpush1.bf16.msra.mxu0 %v1270
        %1326 = vmatprep.subr.bf16.mxu0 0
        %1327 = vmatpush1.bf16.msra.mxu0 0
        %1328 = vmatprep.subr.bf16.mxu0 0
        %1329 = vmatpush1.bf16.msra.mxu0 0
        %1330 = vmatprep.subr.bf16.mxu0 0
        %1331 = vmatpush1.bf16.msra.mxu0 0
        %1332 = vmatprep.subr.bf16.mxu0 0
        %1333 = vmatpush1.bf16.msra.mxu0 0
        %1334 = vmatprep.mubr.bf16.mxu0 %v1297
        %1335 = vmatmul.mubr.bf16.gmra.mrb[0].mxu0 %v866
        %v1336 = vpop.f32.mrb[0].mxu0
        %v1337 = vadd.f32 %v1158, %v1336
        %v1338 = vpop.f32.mrb[0].mxu0
        %v1339 = vadd.f32 %v1160, %v1338
        %v1340 = vpop.f32.mrb[0].mxu0
        %v1341 = vadd.f32 %v1162, %v1340
        %v1342 = vpop.f32.mrb[0].mxu0
        %v1343 = vadd.f32 %v1164, %v1342
        %1344 = vmatprep.mubr.bf16.mxu0 %v1300
        %1345 = vmatmul.mubr.bf16.gmra.mrb[0].mxu0 %v868
        %v1346 = vpop.f32.mrb[0].mxu0
        %v1347 = vadd.f32 %v1168, %v1346
        %v1348 = vpop.f32.mrb[0].mxu0
        %v1349 = vadd.f32 %v1170, %v1348
        %v1350 = vpop.f32.mrb[0].mxu0
        %v1351 = vadd.f32 %v1172, %v1350
        %v1352 = vpop.f32.mrb[0].mxu0
        %v1353 = vadd.f32 %v1174, %v1352
        %1354 = vdwg.mxu0
        %s1355 = scalar_lea.vmem %s1, 32
        %v1356 = vld [vmem:[%s1355] sm:$0xf]
        %v1357 = vld [vmem:[%s1355 + $0x4] sm:$0xf]
        %v1358 = vld [vmem:[%s1355 + $0x8] sm:$0xf]
        %v1359 = vld [vmem:[%s1355 + $0xc] sm:$0xf]
        %v1364 = vunpack.c.l.b16 %v1356
        %v1365 = vunpack.c.l.b16 %v1357
        %v1366 = vunpack.c.l.b16 %v1358
        %v1367 = vunpack.c.l.b16 %v1359
        %v1368 = vpack.c.b16 %v1365, %v1364
        %v1369 = vpack.c.b16 %v1367, %v1366
        %v1371 = vsel %vm806, %v1368, 0
        %v1374 = vsel %vm806, %v1369, 0
        %1376 = vmatprep.subr.bf16.mxu0 %v791
        %1377 = vmatpush1.bf16.msra.mxu0 %v790
        %1378 = vmatprep.subr.bf16.mxu0 %v793
        %1379 = vmatpush1.bf16.msra.mxu0 %v792
        %1380 = vmatprep.subr.bf16.mxu0 %v795
        %1381 = vmatpush1.bf16.msra.mxu0 %v794
        %1382 = vmatprep.subr.bf16.mxu0 %v797
        %1383 = vmatpush1.bf16.msra.mxu0 %v796
        %1384 = vmatprep.subr.bf16.mxu0 0
        %1385 = vmatpush1.bf16.msra.mxu0 0
        %1386 = vmatprep.subr.bf16.mxu0 0
        %1387 = vmatpush1.bf16.msra.mxu0 0
        %1388 = vmatprep.subr.bf16.mxu0 0
        %1389 = vmatpush1.bf16.msra.mxu0 0
        %1390 = vmatprep.subr.bf16.mxu0 0
        %1391 = vmatpush1.bf16.msra.mxu0 0
        %1392 = vmatprep.subr.bf16.mxu0 0
        %1393 = vmatpush1.bf16.msra.mxu0 0
        %1394 = vmatprep.subr.bf16.mxu0 0
        %1395 = vmatpush1.bf16.msra.mxu0 0
        %1396 = vmatprep.subr.bf16.mxu0 0
        %1397 = vmatpush1.bf16.msra.mxu0 0
        %1398 = vmatprep.subr.bf16.mxu0 0
        %1399 = vmatpush1.bf16.msra.mxu0 0
        %1400 = vmatprep.subr.bf16.mxu0 0
        %1401 = vmatpush1.bf16.msra.mxu0 0
        %1402 = vmatprep.subr.bf16.mxu0 0
        %1403 = vmatpush1.bf16.msra.mxu0 0
        %1404 = vmatprep.subr.bf16.mxu0 0
        %1405 = vmatpush1.bf16.msra.mxu0 0
        %1406 = vmatprep.subr.bf16.mxu0 0
        %1407 = vmatpush1.bf16.msra.mxu0 0
        %1408 = vmatprep.mubr.bf16.mxu0 0
        %1409 = vmatmul.mubr.bf16.gmra.mrb[0].mxu0 %v1371
        %v1410 = vpop.f32.mrb[0].mxu0
        %v1411 = vadd.f32 0.0, %v1410
        %v1412 = vpop.f32.mrb[0].mxu0
        %v1413 = vadd.f32 0.0, %v1412
        %v1414 = vpop.f32.mrb[0].mxu0
        %v1415 = vadd.f32 0.0, %v1414
        %v1416 = vpop.f32.mrb[0].mxu0
        %v1417 = vadd.f32 0.0, %v1416
        %1418 = vmatprep.mubr.bf16.mxu0 0
        %1419 = vmatmul.mubr.bf16.gmra.mrb[0].mxu0 %v1374
        %v1420 = vpop.f32.mrb[0].mxu0
        %v1421 = vadd.f32 0.0, %v1420
        %v1422 = vpop.f32.mrb[0].mxu0
        %v1423 = vadd.f32 0.0, %v1422
        %v1424 = vpop.f32.mrb[0].mxu0
        %v1425 = vadd.f32 0.0, %v1424
        %v1426 = vpop.f32.mrb[0].mxu0
        %v1427 = vadd.f32 0.0, %v1426
        %1428 = vdwg.mxu0
        %v1429 = vpack.c.bf16 %v1415, %v1411
        %v1430 = vpack.c.bf16 %v1417, %v1413
        %v1431 = vpack.c.bf16 %v1425, %v1421
        %v1432 = vpack.c.bf16 %v1427, %v1423
        %s1433 = scalar_lea.vmem [#allocation3], 384
        %v1434 = vld [vmem:[%s1433] sm:$0xff]
        %v1435 = vld [vmem:[%s1433 + $0x8] sm:$0xff]
        %v1436 = vld [vmem:[%s1433 + $0x10] sm:$0xff]
        %v1437 = vld [vmem:[%s1433 + $0x18] sm:$0xff]
        %v1438 = vld [vmem:[%s1433 + $0x20] sm:$0xff]
        %v1439 = vld [vmem:[%s1433 + $0x28] sm:$0xff]
        %v1440 = vld [vmem:[%s1433 + $0x30] sm:$0xff]
        %v1441 = vld [vmem:[%s1433 + $0x38] sm:$0xff]
        %v1442 = vld [vmem:[%s1433 + $0x40] sm:$0xff]
        %v1443 = vld [vmem:[%s1433 + $0x48] sm:$0xff]
        %v1444 = vld [vmem:[%s1433 + $0x50] sm:$0xff]
        %v1445 = vld [vmem:[%s1433 + $0x58] sm:$0xff]
        %v1446 = vld [vmem:[%s1433 + $0x60] sm:$0xff]
        %v1447 = vld [vmem:[%s1433 + $0x68] sm:$0xff]
        %v1448 = vld [vmem:[%s1433 + $0x70] sm:$0xff]
        %v1449 = vld [vmem:[%s1433 + $0x78] sm:$0xff]
        %v1450 = vld [vmem:[%s1433 + $0x80] sm:$0xff]
        %v1451 = vld [vmem:[%s1433 + $0x88] sm:$0xff]
        %v1452 = vld [vmem:[%s1433 + $0x90] sm:$0xff]
        %v1453 = vld [vmem:[%s1433 + $0x98] sm:$0xff]
        %v1454 = vld [vmem:[%s1433 + $0xa0] sm:$0xff]
        %v1455 = vld [vmem:[%s1433 + $0xa8] sm:$0xff]
        %v1456 = vld [vmem:[%s1433 + $0xb0] sm:$0xff]
        %v1457 = vld [vmem:[%s1433 + $0xb8] sm:$0xff]
        %v1482 = vunpack.c.l.b16 %v1434
        %v1483 = vunpack.c.h.b16 %v1434
        %v1484 = vunpack.c.l.b16 %v1435
        %v1485 = vunpack.c.h.b16 %v1435
        %v1486 = vunpack.c.l.b16 %v1436
        %v1487 = vunpack.c.h.b16 %v1436
        %v1488 = vunpack.c.l.b16 %v1437
        %v1489 = vunpack.c.h.b16 %v1437
        %v1490 = vunpack.c.l.b16 %v1438
        %v1491 = vunpack.c.h.b16 %v1438
        %v1492 = vunpack.c.l.b16 %v1439
        %v1493 = vunpack.c.h.b16 %v1439
        %v1494 = vunpack.c.l.b16 %v1440
        %v1495 = vunpack.c.h.b16 %v1440
        %v1496 = vunpack.c.l.b16 %v1441
        %v1497 = vunpack.c.h.b16 %v1441
        %v1498 = vunpack.c.l.b16 %v1442
        %v1499 = vunpack.c.h.b16 %v1442
        %v1500 = vunpack.c.l.b16 %v1443
        %v1501 = vunpack.c.h.b16 %v1443
        %v1502 = vunpack.c.l.b16 %v1444
        %v1503 = vunpack.c.h.b16 %v1444
        %v1504 = vunpack.c.l.b16 %v1445
        %v1505 = vunpack.c.h.b16 %v1445
        %v1506 = vunpack.c.l.b16 %v1446
        %v1507 = vunpack.c.h.b16 %v1446
        %v1508 = vunpack.c.l.b16 %v1447
        %v1509 = vunpack.c.h.b16 %v1447
        %v1510 = vunpack.c.l.b16 %v1448
        %v1511 = vunpack.c.h.b16 %v1448
        %v1512 = vunpack.c.l.b16 %v1449
        %v1513 = vunpack.c.h.b16 %v1449
        %v1514 = vunpack.c.l.b16 %v1450
        %v1515 = vunpack.c.h.b16 %v1450
        %v1516 = vunpack.c.l.b16 %v1451
        %v1517 = vunpack.c.h.b16 %v1451
        %v1518 = vunpack.c.l.b16 %v1452
        %v1519 = vunpack.c.h.b16 %v1452
        %v1520 = vunpack.c.l.b16 %v1453
        %v1521 = vunpack.c.h.b16 %v1453
        %v1522 = vunpack.c.l.b16 %v1454
        %v1523 = vunpack.c.h.b16 %v1454
        %v1524 = vunpack.c.l.b16 %v1455
        %v1525 = vunpack.c.h.b16 %v1455
        %v1526 = vunpack.c.l.b16 %v1456
        %v1527 = vunpack.c.h.b16 %v1456
        %v1528 = vunpack.c.l.b16 %v1457
        %v1529 = vunpack.c.h.b16 %v1457
        %v1530 = vpack.c.b16 %v1484, %v1482
        %v1531 = vpack.c.b16 %v1485, %v1483
        %v1532 = vpack.c.b16 %v1488, %v1486
        %v1533 = vpack.c.b16 %v1489, %v1487
        %v1534 = vpack.c.b16 %v1492, %v1490
        %v1535 = vpack.c.b16 %v1493, %v1491
        %v1536 = vpack.c.b16 %v1496, %v1494
        %v1537 = vpack.c.b16 %v1497, %v1495
        %v1538 = vpack.c.b16 %v1500, %v1498
        %v1539 = vpack.c.b16 %v1501, %v1499
        %v1540 = vpack.c.b16 %v1504, %v1502
        %v1541 = vpack.c.b16 %v1505, %v1503
        %v1542 = vpack.c.b16 %v1508, %v1506
        %v1543 = vpack.c.b16 %v1509, %v1507
        %v1544 = vpack.c.b16 %v1512, %v1510
        %v1545 = vpack.c.b16 %v1513, %v1511
        %v1546 = vpack.c.b16 %v1516, %v1514
        %v1547 = vpack.c.b16 %v1517, %v1515
        %v1548 = vpack.c.b16 %v1520, %v1518
        %v1549 = vpack.c.b16 %v1521, %v1519
        %v1550 = vpack.c.b16 %v1524, %v1522
        %v1551 = vpack.c.b16 %v1525, %v1523
        %v1552 = vpack.c.b16 %v1528, %v1526
        %v1553 = vpack.c.b16 %v1529, %v1527
        %v1579 = vsel %vm806, %v1430, 0
        %v1582 = vsel %vm806, %v1432, 0
        %1584 = vmatprep.subr.bf16.mxu0 %v1531
        %1585 = vmatpush1.bf16.msra.mxu0 %v1530
        %1586 = vmatprep.subr.bf16.mxu0 %v1533
        %1587 = vmatpush1.bf16.msra.mxu0 %v1532
        %1588 = vmatprep.subr.bf16.mxu0 %v1535
        %1589 = vmatpush1.bf16.msra.mxu0 %v1534
        %1590 = vmatprep.subr.bf16.mxu0 %v1537
        %1591 = vmatpush1.bf16.msra.mxu0 %v1536
        %1592 = vmatprep.subr.bf16.mxu0 %v1539
        %1593 = vmatpush1.bf16.msra.mxu0 %v1538
        %1594 = vmatprep.subr.bf16.mxu0 %v1541
        %1595 = vmatpush1.bf16.msra.mxu0 %v1540
        %1596 = vmatprep.subr.bf16.mxu0 %v1543
        %1597 = vmatpush1.bf16.msra.mxu0 %v1542
        %1598 = vmatprep.subr.bf16.mxu0 %v1545
        %1599 = vmatpush1.bf16.msra.mxu0 %v1544
        %1600 = vmatprep.subr.bf16.mxu0 %v1547
        %1601 = vmatpush1.bf16.msra.mxu0 %v1546
        %1602 = vmatprep.subr.bf16.mxu0 %v1549
        %1603 = vmatpush1.bf16.msra.mxu0 %v1548
        %1604 = vmatprep.subr.bf16.mxu0 %v1551
        %1605 = vmatpush1.bf16.msra.mxu0 %v1550
        %1606 = vmatprep.subr.bf16.mxu0 %v1553
        %1607 = vmatpush1.bf16.msra.mxu0 %v1552
        %1608 = vmatprep.subr.bf16.mxu0 0
        %1609 = vmatpush1.bf16.msra.mxu0 0
        %1610 = vmatprep.subr.bf16.mxu0 0
        %1611 = vmatpush1.bf16.msra.mxu0 0
        %1612 = vmatprep.subr.bf16.mxu0 0
        %1613 = vmatpush1.bf16.msra.mxu0 0
        %1614 = vmatprep.subr.bf16.mxu0 0
        %1615 = vmatpush1.bf16.msra.mxu0 0
        %1616 = vmatprep.mubr.bf16.mxu0 %v1579
        %1617 = vmatmul.mubr.bf16.gmra.mrb[0].mxu0 %v1429
        %v1618 = vpop.f32.mrb[0].mxu0
        %v1619 = vadd.f32 0.0, %v1618
        %v1620 = vpop.f32.mrb[0].mxu0
        %v1621 = vadd.f32 0.0, %v1620
        %v1622 = vpop.f32.mrb[0].mxu0
        %v1623 = vadd.f32 0.0, %v1622
        %v1624 = vpop.f32.mrb[0].mxu0
        %v1625 = vadd.f32 0.0, %v1624
        %1626 = vmatprep.mubr.bf16.mxu0 %v1582
        %1627 = vmatmul.mubr.bf16.gmra.mrb[0].mxu0 %v1431
        %v1628 = vpop.f32.mrb[0].mxu0
        %v1629 = vadd.f32 0.0, %v1628
        %v1630 = vpop.f32.mrb[0].mxu0
        %v1631 = vadd.f32 0.0, %v1630
        %v1632 = vpop.f32.mrb[0].mxu0
        %v1633 = vadd.f32 0.0, %v1632
        %v1634 = vpop.f32.mrb[0].mxu0
        %v1635 = vadd.f32 0.0, %v1634
        %1636 = vdwg.mxu0
        %v1637 = vadd.f32 %v1337, %v1619
        %v1638 = vadd.f32 %v1339, %v1621
        %v1639 = vadd.f32 %v1341, %v1623
        %v1640 = vadd.f32 %v1343, %v1625
        %v1641 = vadd.f32 %v1347, %v1629
        %v1642 = vadd.f32 %v1349, %v1631
        %v1643 = vadd.f32 %v1351, %v1633
        %v1644 = vadd.f32 %v1353, %v1635
        %s1645 = scalar_lea.vmem %s1, 48
        %v1646 = vld [vmem:[%s1645] sm:$0xf]
        %v1647 = vld [vmem:[%s1645 + $0x4] sm:$0xf]
        %v1648 = vld [vmem:[%s1645 + $0x8] sm:$0xf]
        %v1649 = vld [vmem:[%s1645 + $0xc] sm:$0xf]
        %v1654 = vunpack.c.l.b16 %v1646
        %v1655 = vunpack.c.l.b16 %v1647
        %v1656 = vunpack.c.l.b16 %v1648
        %v1657 = vunpack.c.l.b16 %v1649
        %v1658 = vpack.c.b16 %v1655, %v1654
        %v1659 = vpack.c.b16 %v1657, %v1656
        %v1661 = vsel %vm806, %v1658, 0
        %v1664 = vsel %vm806, %v1659, 0
        %1666 = vmatprep.subr.bf16.mxu0 %v791
        %1667 = vmatpush1.bf16.msra.mxu0 %v790
        %1668 = vmatprep.subr.bf16.mxu0 %v793
        %1669 = vmatpush1.bf16.msra.mxu0 %v792
        %1670 = vmatprep.subr.bf16.mxu0 %v795
        %1671 = vmatpush1.bf16.msra.mxu0 %v794
        %1672 = vmatprep.subr.bf16.mxu0 %v797
        %1673 = vmatpush1.bf16.msra.mxu0 %v796
        %1674 = vmatprep.subr.bf16.mxu0 0
        %1675 = vmatpush1.bf16.msra.mxu0 0
        %1676 = vmatprep.subr.bf16.mxu0 0
        %1677 = vmatpush1.bf16.msra.mxu0 0
        %1678 = vmatprep.subr.bf16.mxu0 0
        %1679 = vmatpush1.bf16.msra.mxu0 0
        %1680 = vmatprep.subr.bf16.mxu0 0
        %1681 = vmatpush1.bf16.msra.mxu0 0
        %1682 = vmatprep.subr.bf16.mxu0 0
        %1683 = vmatpush1.bf16.msra.mxu0 0
        %1684 = vmatprep.subr.bf16.mxu0 0
        %1685 = vmatpush1.bf16.msra.mxu0 0
        %1686 = vmatprep.subr.bf16.mxu0 0
        %1687 = vmatpush1.bf16.msra.mxu0 0
        %1688 = vmatprep.subr.bf16.mxu0 0
        %1689 = vmatpush1.bf16.msra.mxu0 0
        %1690 = vmatprep.subr.bf16.mxu0 0
        %1691 = vmatpush1.bf16.msra.mxu0 0
        %1692 = vmatprep.subr.bf16.mxu0 0
        %1693 = vmatpush1.bf16.msra.mxu0 0
        %1694 = vmatprep.subr.bf16.mxu0 0
        %1695 = vmatpush1.bf16.msra.mxu0 0
        %1696 = vmatprep.subr.bf16.mxu0 0
        %1697 = vmatpush1.bf16.msra.mxu0 0
        %1698 = vmatprep.mubr.bf16.mxu0 0
        %1699 = vmatmul.mubr.bf16.gmra.mrb[0].mxu0 %v1661
        %v1700 = vpop.f32.mrb[0].mxu0
        %v1701 = vadd.f32 0.0, %v1700
        %v1702 = vpop.f32.mrb[0].mxu0
        %v1703 = vadd.f32 0.0, %v1702
        %v1704 = vpop.f32.mrb[0].mxu0
        %v1705 = vadd.f32 0.0, %v1704
        %v1706 = vpop.f32.mrb[0].mxu0
        %v1707 = vadd.f32 0.0, %v1706
        %1708 = vmatprep.mubr.bf16.mxu0 0
        %1709 = vmatmul.mubr.bf16.gmra.mrb[0].mxu0 %v1664
        %v1710 = vpop.f32.mrb[0].mxu0
        %v1711 = vadd.f32 0.0, %v1710
        %v1712 = vpop.f32.mrb[0].mxu0
        %v1713 = vadd.f32 0.0, %v1712
        %v1714 = vpop.f32.mrb[0].mxu0
        %v1715 = vadd.f32 0.0, %v1714
        %v1716 = vpop.f32.mrb[0].mxu0
        %v1717 = vadd.f32 0.0, %v1716
        %1718 = vdwg.mxu0
        %v1719 = vpack.c.bf16 %v1705, %v1701
        %v1720 = vpack.c.bf16 %v1707, %v1703
        %v1721 = vpack.c.bf16 %v1715, %v1711
        %v1722 = vpack.c.bf16 %v1717, %v1713
        %s1723 = scalar_lea.vmem [#allocation3], 576
        %v1724 = vld [vmem:[%s1723] sm:$0xff]
        %v1725 = vld [vmem:[%s1723 + $0x8] sm:$0xff]
        %v1726 = vld [vmem:[%s1723 + $0x10] sm:$0xff]
        %v1727 = vld [vmem:[%s1723 + $0x18] sm:$0xff]
        %v1728 = vld [vmem:[%s1723 + $0x20] sm:$0xff]
        %v1729 = vld [vmem:[%s1723 + $0x28] sm:$0xff]
        %v1730 = vld [vmem:[%s1723 + $0x30] sm:$0xff]
        %v1731 = vld [vmem:[%s1723 + $0x38] sm:$0xff]
        %v1732 = vld [vmem:[%s1723 + $0x40] sm:$0xff]
        %v1733 = vld [vmem:[%s1723 + $0x48] sm:$0xff]
        %v1734 = vld [vmem:[%s1723 + $0x50] sm:$0xff]
        %v1735 = vld [vmem:[%s1723 + $0x58] sm:$0xff]
        %v1736 = vld [vmem:[%s1723 + $0x60] sm:$0xff]
        %v1737 = vld [vmem:[%s1723 + $0x68] sm:$0xff]
        %v1738 = vld [vmem:[%s1723 + $0x70] sm:$0xff]
        %v1739 = vld [vmem:[%s1723 + $0x78] sm:$0xff]
        %v1740 = vld [vmem:[%s1723 + $0x80] sm:$0xff]
        %v1741 = vld [vmem:[%s1723 + $0x88] sm:$0xff]
        %v1742 = vld [vmem:[%s1723 + $0x90] sm:$0xff]
        %v1743 = vld [vmem:[%s1723 + $0x98] sm:$0xff]
        %v1744 = vld [vmem:[%s1723 + $0xa0] sm:$0xff]
        %v1745 = vld [vmem:[%s1723 + $0xa8] sm:$0xff]
        %v1746 = vld [vmem:[%s1723 + $0xb0] sm:$0xff]
        %v1747 = vld [vmem:[%s1723 + $0xb8] sm:$0xff]
        %v1772 = vunpack.c.l.b16 %v1724
        %v1773 = vunpack.c.h.b16 %v1724
        %v1774 = vunpack.c.l.b16 %v1725
        %v1775 = vunpack.c.h.b16 %v1725
        %v1776 = vunpack.c.l.b16 %v1726
        %v1777 = vunpack.c.h.b16 %v1726
        %v1778 = vunpack.c.l.b16 %v1727
        %v1779 = vunpack.c.h.b16 %v1727
        %v1780 = vunpack.c.l.b16 %v1728
        %v1781 = vunpack.c.h.b16 %v1728
        %v1782 = vunpack.c.l.b16 %v1729
        %v1783 = vunpack.c.h.b16 %v1729
        %v1784 = vunpack.c.l.b16 %v1730
        %v1785 = vunpack.c.h.b16 %v1730
        %v1786 = vunpack.c.l.b16 %v1731
        %v1787 = vunpack.c.h.b16 %v1731
        %v1788 = vunpack.c.l.b16 %v1732
        %v1789 = vunpack.c.h.b16 %v1732
        %v1790 = vunpack.c.l.b16 %v1733
        %v1791 = vunpack.c.h.b16 %v1733
        %v1792 = vunpack.c.l.b16 %v1734
        %v1793 = vunpack.c.h.b16 %v1734
        %v1794 = vunpack.c.l.b16 %v1735
        %v1795 = vunpack.c.h.b16 %v1735
        %v1796 = vunpack.c.l.b16 %v1736
        %v1797 = vunpack.c.h.b16 %v1736
        %v1798 = vunpack.c.l.b16 %v1737
        %v1799 = vunpack.c.h.b16 %v1737
        %v1800 = vunpack.c.l.b16 %v1738
        %v1801 = vunpack.c.h.b16 %v1738
        %v1802 = vunpack.c.l.b16 %v1739
        %v1803 = vunpack.c.h.b16 %v1739
        %v1804 = vunpack.c.l.b16 %v1740
        %v1805 = vunpack.c.h.b16 %v1740
        %v1806 = vunpack.c.l.b16 %v1741
        %v1807 = vunpack.c.h.b16 %v1741
        %v1808 = vunpack.c.l.b16 %v1742
        %v1809 = vunpack.c.h.b16 %v1742
        %v1810 = vunpack.c.l.b16 %v1743
        %v1811 = vunpack.c.h.b16 %v1743
        %v1812 = vunpack.c.l.b16 %v1744
        %v1813 = vunpack.c.h.b16 %v1744
        %v1814 = vunpack.c.l.b16 %v1745
        %v1815 = vunpack.c.h.b16 %v1745
        %v1816 = vunpack.c.l.b16 %v1746
        %v1817 = vunpack.c.h.b16 %v1746
        %v1818 = vunpack.c.l.b16 %v1747
        %v1819 = vunpack.c.h.b16 %v1747
        %v1820 = vpack.c.b16 %v1774, %v1772
        %v1821 = vpack.c.b16 %v1775, %v1773
        %v1822 = vpack.c.b16 %v1778, %v1776
        %v1823 = vpack.c.b16 %v1779, %v1777
        %v1824 = vpack.c.b16 %v1782, %v1780
        %v1825 = vpack.c.b16 %v1783, %v1781
        %v1826 = vpack.c.b16 %v1786, %v1784
        %v1827 = vpack.c.b16 %v1787, %v1785
        %v1828 = vpack.c.b16 %v1790, %v1788
        %v1829 = vpack.c.b16 %v1791, %v1789
        %v1830 = vpack.c.b16 %v1794, %v1792
        %v1831 = vpack.c.b16 %v1795, %v1793
        %v1832 = vpack.c.b16 %v1798, %v1796
        %v1833 = vpack.c.b16 %v1799, %v1797
        %v1834 = vpack.c.b16 %v1802, %v1800
        %v1835 = vpack.c.b16 %v1803, %v1801
        %v1836 = vpack.c.b16 %v1806, %v1804
        %v1837 = vpack.c.b16 %v1807, %v1805
        %v1838 = vpack.c.b16 %v1810, %v1808
        %v1839 = vpack.c.b16 %v1811, %v1809
        %v1840 = vpack.c.b16 %v1814, %v1812
        %v1841 = vpack.c.b16 %v1815, %v1813
        %v1842 = vpack.c.b16 %v1818, %v1816
        %v1843 = vpack.c.b16 %v1819, %v1817
        %v1869 = vsel %vm806, %v1720, 0
        %v1872 = vsel %vm806, %v1722, 0
        %1874 = vmatprep.subr.bf16.mxu0 %v1821
        %1875 = vmatpush1.bf16.msra.mxu0 %v1820
        %1876 = vmatprep.subr.bf16.mxu0 %v1823
        %1877 = vmatpush1.bf16.msra.mxu0 %v1822
        %1878 = vmatprep.subr.bf16.mxu0 %v1825
        %1879 = vmatpush1.bf16.msra.mxu0 %v1824
        %1880 = vmatprep.subr.bf16.mxu0 %v1827
        %1881 = vmatpush1.bf16.msra.mxu0 %v1826
        %1882 = vmatprep.subr.bf16.mxu0 %v1829
        %1883 = vmatpush1.bf16.msra.mxu0 %v1828
        %1884 = vmatprep.subr.bf16.mxu0 %v1831
        %1885 = vmatpush1.bf16.msra.mxu0 %v1830
        %1886 = vmatprep.subr.bf16.mxu0 %v1833
        %1887 = vmatpush1.bf16.msra.mxu0 %v1832
        %1888 = vmatprep.subr.bf16.mxu0 %v1835
        %1889 = vmatpush1.bf16.msra.mxu0 %v1834
        %1890 = vmatprep.subr.bf16.mxu0 %v1837
        %1891 = vmatpush1.bf16.msra.mxu0 %v1836
        %1892 = vmatprep.subr.bf16.mxu0 %v1839
        %1893 = vmatpush1.bf16.msra.mxu0 %v1838
        %1894 = vmatprep.subr.bf16.mxu0 %v1841
        %1895 = vmatpush1.bf16.msra.mxu0 %v1840
        %1896 = vmatprep.subr.bf16.mxu0 %v1843
        %1897 = vmatpush1.bf16.msra.mxu0 %v1842
        %1898 = vmatprep.subr.bf16.mxu0 0
        %1899 = vmatpush1.bf16.msra.mxu0 0
        %1900 = vmatprep.subr.bf16.mxu0 0
        %1901 = vmatpush1.bf16.msra.mxu0 0
        %1902 = vmatprep.subr.bf16.mxu0 0
        %1903 = vmatpush1.bf16.msra.mxu0 0
        %1904 = vmatprep.subr.bf16.mxu0 0
        %1905 = vmatpush1.bf16.msra.mxu0 0
        %1906 = vmatprep.mubr.bf16.mxu0 %v1869
        %1907 = vmatmul.mubr.bf16.gmra.mrb[0].mxu0 %v1719
        %v1908 = vpop.f32.mrb[0].mxu0
        %v1909 = vadd.f32 0.0, %v1908
        %v1910 = vpop.f32.mrb[0].mxu0
        %v1911 = vadd.f32 0.0, %v1910
        %v1912 = vpop.f32.mrb[0].mxu0
        %v1913 = vadd.f32 0.0, %v1912
        %v1914 = vpop.f32.mrb[0].mxu0
        %v1915 = vadd.f32 0.0, %v1914
        %1916 = vmatprep.mubr.bf16.mxu0 %v1872
        %1917 = vmatmul.mubr.bf16.gmra.mrb[0].mxu0 %v1721
        %v1918 = vpop.f32.mrb[0].mxu0
        %v1919 = vadd.f32 0.0, %v1918
        %v1920 = vpop.f32.mrb[0].mxu0
        %v1921 = vadd.f32 0.0, %v1920
        %v1922 = vpop.f32.mrb[0].mxu0
        %v1923 = vadd.f32 0.0, %v1922
        %v1924 = vpop.f32.mrb[0].mxu0
        %v1925 = vadd.f32 0.0, %v1924
        %1926 = vdwg.mxu0
        %v1927 = vadd.f32 %v1637, %v1909
        %v1928 = vadd.f32 %v1638, %v1911
        %v1929 = vadd.f32 %v1639, %v1913
        %v1930 = vadd.f32 %v1640, %v1915
        %v1931 = vadd.f32 %v1641, %v1919
        %v1932 = vadd.f32 %v1642, %v1921
        %v1933 = vadd.f32 %v1643, %v1923
        %v1934 = vadd.f32 %v1644, %v1925
        %v1935 = vld [vmem:[%s3] sm:$0x3]
        %v1937 = vlaneseq
        %v1938 = vshrl.u32 %v1937, 7
        %v1939 = vsub.s32 0, %v1938
        %v1940 = vrot.slane %v1935, %v1939
        %v1941 = vlaneseq
        %v1942 = vshrl.u32 %v1941, 7
        %v1943 = vsub.s32 1, %v1942
        %v1944 = vrot.slane %v1935, %v1943
        %v1947 = vadd.f32 %v1927, %v1940
        %v1948 = vadd.f32 %v1928, %v1944
        %v1949 = vadd.f32 %v1929, %v1940
        %v1950 = vadd.f32 %v1930, %v1944
        %v1951 = vadd.f32 %v1931, %v1940
        %v1952 = vadd.f32 %v1932, %v1944
        %v1953 = vadd.f32 %v1933, %v1940
        %v1954 = vadd.f32 %v1934, %v1944
        %vm1955 = vcmp.gt.f32.partialorder %v1947, 0.0
        %vm1956 = vcmp.gt.f32.partialorder %v1948, 0.0
        %vm1957 = vcmp.gt.f32.partialorder %v1949, 0.0
        %vm1958 = vcmp.gt.f32.partialorder %v1950, 0.0
        %vm1959 = vcmp.gt.f32.partialorder %v1951, 0.0
        %vm1960 = vcmp.gt.f32.partialorder %v1952, 0.0
        %vm1961 = vcmp.gt.f32.partialorder %v1953, 0.0
        %vm1962 = vcmp.gt.f32.partialorder %v1954, 0.0
        %v1963 = vmul.f32 %v1947, 0.2
        %v1964 = vmul.f32 %v1948, 0.2
        %v1965 = vmul.f32 %v1949, 0.2
        %v1966 = vmul.f32 %v1950, 0.2
        %v1967 = vmul.f32 %v1951, 0.2
        %v1968 = vmul.f32 %v1952, 0.2
        %v1969 = vmul.f32 %v1953, 0.2
        %v1970 = vmul.f32 %v1954, 0.2
        %v1971 = vsel %vm1955, %v1947, %v1963
        %v1972 = vsel %vm1956, %v1948, %v1964
        %v1973 = vsel %vm1957, %v1949, %v1965
        %v1974 = vsel %vm1958, %v1950, %v1966
        %v1975 = vsel %vm1959, %v1951, %v1967
        %v1976 = vsel %vm1960, %v1952, %v1968
        %v1977 = vsel %vm1961, %v1953, %v1969
        %v1978 = vsel %vm1962, %v1954, %v1970
        %v1979 = vpack.c.bf16 %v1973, %v1971
        %v1980 = vpack.c.bf16 %v1974, %v1972
        %v1981 = vpack.c.bf16 %v1977, %v1975
        %v1982 = vpack.c.bf16 %v1978, %v1976
        %v1983 = vld [vmem:[%s4] sm:$0xf]
        %v1984 = vld [vmem:[%s4 + $0x4] sm:$0xf]
        %v1987 = vunpack.c.l.b16 %v1983
        %v1988 = vunpack.c.l.b16 %v1984
        %v1989 = vpack.c.b16 %v1988, %v1987
        %vm1990 = vcmask 261120
        %v1992 = vsel %vm1990, %v1989, 0
        %1994 = vmatprep.subr.bf16.mxu0 %v1980
        %1995 = vmatpush1.bf16.msra.mxu0 %v1979
        %1996 = vmatprep.subr.bf16.mxu0 %v1982
        %1997 = vmatpush1.bf16.msra.mxu0 %v1981
        %1998 = vmatprep.subr.bf16.mxu0 0
        %1999 = vmatpush1.bf16.msra.mxu0 0
        %2000 = vmatprep.subr.bf16.mxu0 0
        %2001 = vmatpush1.bf16.msra.mxu0 0
        %2002 = vmatprep.subr.bf16.mxu0 0
        %2003 = vmatpush1.bf16.msra.mxu0 0
        %2004 = vmatprep.subr.bf16.mxu0 0
        %2005 = vmatpush1.bf16.msra.mxu0 0
        %2006 = vmatprep.subr.bf16.mxu0 0
        %2007 = vmatpush1.bf16.msra.mxu0 0
        %2008 = vmatprep.subr.bf16.mxu0 0
        %2009 = vmatpush1.bf16.msra.mxu0 0
        %2010 = vmatprep.subr.bf16.mxu0 0
        %2011 = vmatpush1.bf16.msra.mxu0 0
        %2012 = vmatprep.subr.bf16.mxu0 0
        %2013 = vmatpush1.bf16.msra.mxu0 0
        %2014 = vmatprep.subr.bf16.mxu0 0
        %2015 = vmatpush1.bf16.msra.mxu0 0
        %2016 = vmatprep.subr.bf16.mxu0 0
        %2017 = vmatpush1.bf16.msra.mxu0 0
        %2018 = vmatprep.subr.bf16.mxu0 0
        %2019 = vmatpush1.bf16.msra.mxu0 0
        %2020 = vmatprep.subr.bf16.mxu0 0
        %2021 = vmatpush1.bf16.msra.mxu0 0
        %2022 = vmatprep.subr.bf16.mxu0 0
        %2023 = vmatpush1.bf16.msra.mxu0 0
        %2024 = vmatprep.subr.bf16.mxu0 0
        %2025 = vmatpush1.bf16.msra.mxu0 0
        %2026 = vmatprep.mubr.bf16.mxu0 0
        %2027 = vmatmul.mubr.bf16.gmra.mrb[0].mxu0 %v1992
        %v2028 = vpop.f32.mrb[0].mxu0
        %v2029 = vadd.f32 0.0, %v2028
        %v2030 = vpop.f32.mrb[0].mxu0
        %v2031 = vadd.f32 0.0, %v2030
        %v2032 = vpop.f32.mrb[0].mxu0
        %v2033 = vadd.f32 0.0, %v2032
        %v2034 = vpop.f32.mrb[0].mxu0
        %v2035 = vadd.f32 0.0, %v2034
        %2036 = vdwg.mxu0
        %v2037 = vpack.c.bf16 %v2033, %v2029
        %v2038 = vpack.c.bf16 %v2035, %v2031
        %v2039 = vld [vmem:[%s5] sm:$0xff]
        %v2040 = vld [vmem:[%s5 + $0x8] sm:$0xff]
        %v2041 = vld [vmem:[%s5 + $0x10] sm:$0xff]
        %v2042 = vld [vmem:[%s5 + $0x18] sm:$0xff]
        %v2043 = vld [vmem:[%s5 + $0x20] sm:$0xff]
        %v2044 = vld [vmem:[%s5 + $0x28] sm:$0xff]
        %v2045 = vld [vmem:[%s5 + $0x30] sm:$0xff]
        %v2046 = vld [vmem:[%s5 + $0x38] sm:$0xff]
        %v2047 = vld [vmem:[%s5 + $0x40] sm:$0xff]
        %v2048 = vld [vmem:[%s5 + $0x48] sm:$0xff]
        %v2049 = vld [vmem:[%s5 + $0x50] sm:$0xff]
        %v2050 = vld [vmem:[%s5 + $0x58] sm:$0xff]
        %v2051 = vld [vmem:[%s5 + $0x60] sm:$0xff]
        %v2052 = vld [vmem:[%s5 + $0x68] sm:$0xff]
        %v2053 = vld [vmem:[%s5 + $0x70] sm:$0xff]
        %v2054 = vld [vmem:[%s5 + $0x78] sm:$0xff]
        %v2055 = vld [vmem:[%s5 + $0x80] sm:$0xff]
        %v2056 = vld [vmem:[%s5 + $0x88] sm:$0xff]
        %v2057 = vld [vmem:[%s5 + $0x90] sm:$0xff]
        %v2058 = vld [vmem:[%s5 + $0x98] sm:$0xff]
        %v2059 = vld [vmem:[%s5 + $0xa0] sm:$0xff]
        %v2060 = vld [vmem:[%s5 + $0xa8] sm:$0xff]
        %v2061 = vld [vmem:[%s5 + $0xb0] sm:$0xff]
        %v2062 = vld [vmem:[%s5 + $0xb8] sm:$0xff]
        %v2063 = vld [vmem:[%s5 + $0xc0] sm:$0xff]
        %v2064 = vld [vmem:[%s5 + $0xc8] sm:$0xff]
        %v2065 = vld [vmem:[%s5 + $0xd0] sm:$0xff]
        %v2066 = vld [vmem:[%s5 + $0xd8] sm:$0xff]
        %v2067 = vld [vmem:[%s5 + $0xe0] sm:$0xff]
        %v2068 = vld [vmem:[%s5 + $0xe8] sm:$0xff]
        %v2069 = vld [vmem:[%s5 + $0xf0] sm:$0xff]
        %v2070 = vld [vmem:[%s5 + $0xf8] sm:$0xff]
        %s2071 = scalar_lea.vmem %s4, 8
        %v2072 = vld [vmem:[%s2071] sm:$0xf]
        %v2073 = vld [vmem:[%s2071 + $0x4] sm:$0xf]
        %v2076 = vunpack.c.l.b16 %v2072
        %v2077 = vunpack.c.l.b16 %v2073
        %v2078 = vpack.c.b16 %v2077, %v2076
        %v2080 = vsel %vm1990, %v2078, 0
        %2082 = vmatprep.subr.bf16.mxu0 %v1980
        %2083 = vmatpush1.bf16.msra.mxu0 %v1979
        %2084 = vmatprep.subr.bf16.mxu0 %v1982
        %2085 = vmatpush1.bf16.msra.mxu0 %v1981
        %2086 = vmatprep.subr.bf16.mxu0 0
        %2087 = vmatpush1.bf16.msra.mxu0 0
        %2088 = vmatprep.subr.bf16.mxu0 0
        %2089 = vmatpush1.bf16.msra.mxu0 0
        %2090 = vmatprep.subr.bf16.mxu0 0
        %2091 = vmatpush1.bf16.msra.mxu0 0
        %2092 = vmatprep.subr.bf16.mxu0 0
        %2093 = vmatpush1.bf16.msra.mxu0 0
        %2094 = vmatprep.subr.bf16.mxu0 0
        %2095 = vmatpush1.bf16.msra.mxu0 0
        %2096 = vmatprep.subr.bf16.mxu0 0
        %2097 = vmatpush1.bf16.msra.mxu0 0
        %2098 = vmatprep.subr.bf16.mxu0 0
        %2099 = vmatpush1.bf16.msra.mxu0 0
        %2100 = vmatprep.subr.bf16.mxu0 0
        %2101 = vmatpush1.bf16.msra.mxu0 0
        %2102 = vmatprep.subr.bf16.mxu0 0
        %2103 = vmatpush1.bf16.msra.mxu0 0
        %2104 = vmatprep.subr.bf16.mxu0 0
        %2105 = vmatpush1.bf16.msra.mxu0 0
        %2106 = vmatprep.subr.bf16.mxu0 0
        %2107 = vmatpush1.bf16.msra.mxu0 0
        %2108 = vmatprep.subr.bf16.mxu0 0
        %2109 = vmatpush1.bf16.msra.mxu0 0
        %2110 = vmatprep.subr.bf16.mxu0 0
        %2111 = vmatpush1.bf16.msra.mxu0 0
        %2112 = vmatprep.subr.bf16.mxu0 0
        %2113 = vmatpush1.bf16.msra.mxu0 0
        %2114 = vmatprep.mubr.bf16.mxu0 0
        %2115 = vmatmul.mubr.bf16.gmra.mrb[0].mxu0 %v2080
        %v2116 = vpop.f32.mrb[0].mxu0
        %v2117 = vadd.f32 0.0, %v2116
        %v2118 = vpop.f32.mrb[0].mxu0
        %v2119 = vadd.f32 0.0, %v2118
        %v2120 = vpop.f32.mrb[0].mxu0
        %v2121 = vadd.f32 0.0, %v2120
        %v2122 = vpop.f32.mrb[0].mxu0
        %v2123 = vadd.f32 0.0, %v2122
        %2124 = vdwg.mxu0
        %v2125 = vpack.c.bf16 %v2121, %v2117
        %v2126 = vpack.c.bf16 %v2123, %v2119
        %s2127 = scalar_lea.vmem %s5, 256
        %v2128 = vld [vmem:[%s2127] sm:$0xff]
        %v2129 = vld [vmem:[%s2127 + $0x8] sm:$0xff]
        %v2130 = vld [vmem:[%s2127 + $0x10] sm:$0xff]
        %v2131 = vld [vmem:[%s2127 + $0x18] sm:$0xff]
        %v2132 = vld [vmem:[%s2127 + $0x20] sm:$0xff]
        %v2133 = vld [vmem:[%s2127 + $0x28] sm:$0xff]
        %v2134 = vld [vmem:[%s2127 + $0x30] sm:$0xff]
        %v2135 = vld [vmem:[%s2127 + $0x38] sm:$0xff]
        %v2136 = vld [vmem:[%s2127 + $0x40] sm:$0xff]
        %v2137 = vld [vmem:[%s2127 + $0x48] sm:$0xff]
        %v2138 = vld [vmem:[%s2127 + $0x50] sm:$0xff]
        %v2139 = vld [vmem:[%s2127 + $0x58] sm:$0xff]
        %v2140 = vld [vmem:[%s2127 + $0x60] sm:$0xff]
        %v2141 = vld [vmem:[%s2127 + $0x68] sm:$0xff]
        %v2142 = vld [vmem:[%s2127 + $0x70] sm:$0xff]
        %v2143 = vld [vmem:[%s2127 + $0x78] sm:$0xff]
        %v2144 = vld [vmem:[%s2127 + $0x80] sm:$0xff]
        %v2145 = vld [vmem:[%s2127 + $0x88] sm:$0xff]
        %v2146 = vld [vmem:[%s2127 + $0x90] sm:$0xff]
        %v2147 = vld [vmem:[%s2127 + $0x98] sm:$0xff]
        %v2148 = vld [vmem:[%s2127 + $0xa0] sm:$0xff]
        %v2149 = vld [vmem:[%s2127 + $0xa8] sm:$0xff]
        %v2150 = vld [vmem:[%s2127 + $0xb0] sm:$0xff]
        %v2151 = vld [vmem:[%s2127 + $0xb8] sm:$0xff]
        %v2152 = vld [vmem:[%s2127 + $0xc0] sm:$0xff]
        %v2153 = vld [vmem:[%s2127 + $0xc8] sm:$0xff]
        %v2154 = vld [vmem:[%s2127 + $0xd0] sm:$0xff]
        %v2155 = vld [vmem:[%s2127 + $0xd8] sm:$0xff]
        %v2156 = vld [vmem:[%s2127 + $0xe0] sm:$0xff]
        %v2157 = vld [vmem:[%s2127 + $0xe8] sm:$0xff]
        %v2158 = vld [vmem:[%s2127 + $0xf0] sm:$0xff]
        %v2159 = vld [vmem:[%s2127 + $0xf8] sm:$0xff]
        %v2192 = vunpack.c.l.b16 %v2128
        %v2193 = vunpack.c.h.b16 %v2128
        %v2194 = vunpack.c.l.b16 %v2129
        %v2195 = vunpack.c.h.b16 %v2129
        %v2196 = vunpack.c.l.b16 %v2130
        %v2197 = vunpack.c.h.b16 %v2130
        %v2198 = vunpack.c.l.b16 %v2131
        %v2199 = vunpack.c.h.b16 %v2131
        %v2200 = vunpack.c.l.b16 %v2132
        %v2201 = vunpack.c.h.b16 %v2132
        %v2202 = vunpack.c.l.b16 %v2133
        %v2203 = vunpack.c.h.b16 %v2133
        %v2204 = vunpack.c.l.b16 %v2134
        %v2205 = vunpack.c.h.b16 %v2134
        %v2206 = vunpack.c.l.b16 %v2135
        %v2207 = vunpack.c.h.b16 %v2135
        %v2208 = vunpack.c.l.b16 %v2136
        %v2209 = vunpack.c.h.b16 %v2136
        %v2210 = vunpack.c.l.b16 %v2137
        %v2211 = vunpack.c.h.b16 %v2137
        %v2212 = vunpack.c.l.b16 %v2138
        %v2213 = vunpack.c.h.b16 %v2138
        %v2214 = vunpack.c.l.b16 %v2139
        %v2215 = vunpack.c.h.b16 %v2139
        %v2216 = vunpack.c.l.b16 %v2140
        %v2217 = vunpack.c.h.b16 %v2140
        %v2218 = vunpack.c.l.b16 %v2141
        %v2219 = vunpack.c.h.b16 %v2141
        %v2220 = vunpack.c.l.b16 %v2142
        %v2221 = vunpack.c.h.b16 %v2142
        %v2222 = vunpack.c.l.b16 %v2143
        %v2223 = vunpack.c.h.b16 %v2143
        %v2224 = vunpack.c.l.b16 %v2144
        %v2225 = vunpack.c.h.b16 %v2144
        %v2226 = vunpack.c.l.b16 %v2145
        %v2227 = vunpack.c.h.b16 %v2145
        %v2228 = vunpack.c.l.b16 %v2146
        %v2229 = vunpack.c.h.b16 %v2146
        %v2230 = vunpack.c.l.b16 %v2147
        %v2231 = vunpack.c.h.b16 %v2147
        %v2232 = vunpack.c.l.b16 %v2148
        %v2233 = vunpack.c.h.b16 %v2148
        %v2234 = vunpack.c.l.b16 %v2149
        %v2235 = vunpack.c.h.b16 %v2149
        %v2236 = vunpack.c.l.b16 %v2150
        %v2237 = vunpack.c.h.b16 %v2150
        %v2238 = vunpack.c.l.b16 %v2151
        %v2239 = vunpack.c.h.b16 %v2151
        %v2240 = vunpack.c.l.b16 %v2152
        %v2241 = vunpack.c.h.b16 %v2152
        %v2242 = vunpack.c.l.b16 %v2153
        %v2243 = vunpack.c.h.b16 %v2153
        %v2244 = vunpack.c.l.b16 %v2154
        %v2245 = vunpack.c.h.b16 %v2154
        %v2246 = vunpack.c.l.b16 %v2155
        %v2247 = vunpack.c.h.b16 %v2155
        %v2248 = vunpack.c.l.b16 %v2156
        %v2249 = vunpack.c.h.b16 %v2156
        %v2250 = vunpack.c.l.b16 %v2157
        %v2251 = vunpack.c.h.b16 %v2157
        %v2252 = vunpack.c.l.b16 %v2158
        %v2253 = vunpack.c.h.b16 %v2158
        %v2254 = vunpack.c.l.b16 %v2159
        %v2255 = vunpack.c.h.b16 %v2159
        %v2256 = vpack.c.b16 %v2194, %v2192
        %v2257 = vpack.c.b16 %v2195, %v2193
        %v2258 = vpack.c.b16 %v2198, %v2196
        %v2259 = vpack.c.b16 %v2199, %v2197
        %v2260 = vpack.c.b16 %v2202, %v2200
        %v2261 = vpack.c.b16 %v2203, %v2201
        %v2262 = vpack.c.b16 %v2206, %v2204
        %v2263 = vpack.c.b16 %v2207, %v2205
        %v2264 = vpack.c.b16 %v2210, %v2208
        %v2265 = vpack.c.b16 %v2211, %v2209
        %v2266 = vpack.c.b16 %v2214, %v2212
        %v2267 = vpack.c.b16 %v2215, %v2213
        %v2268 = vpack.c.b16 %v2218, %v2216
        %v2269 = vpack.c.b16 %v2219, %v2217
        %v2270 = vpack.c.b16 %v2222, %v2220
        %v2271 = vpack.c.b16 %v2223, %v2221
        %v2272 = vpack.c.b16 %v2226, %v2224
        %v2273 = vpack.c.b16 %v2227, %v2225
        %v2274 = vpack.c.b16 %v2230, %v2228
        %v2275 = vpack.c.b16 %v2231, %v2229
        %v2276 = vpack.c.b16 %v2234, %v2232
        %v2277 = vpack.c.b16 %v2235, %v2233
        %v2278 = vpack.c.b16 %v2238, %v2236
        %v2279 = vpack.c.b16 %v2239, %v2237
        %v2280 = vpack.c.b16 %v2242, %v2240
        %v2281 = vpack.c.b16 %v2243, %v2241
        %v2282 = vpack.c.b16 %v2246, %v2244
        %v2283 = vpack.c.b16 %v2247, %v2245
        %v2284 = vpack.c.b16 %v2250, %v2248
        %v2285 = vpack.c.b16 %v2251, %v2249
        %v2286 = vpack.c.b16 %v2254, %v2252
        %v2287 = vpack.c.b16 %v2255, %v2253
        %2320 = vmatprep.subr.bf16.mxu0 %v2257
        %2321 = vmatpush1.bf16.msra.mxu0 %v2256
        %2322 = vmatprep.subr.bf16.mxu0 %v2259
        %2323 = vmatpush1.bf16.msra.mxu0 %v2258
        %2324 = vmatprep.subr.bf16.mxu0 %v2261
        %2325 = vmatpush1.bf16.msra.mxu0 %v2260
        %2326 = vmatprep.subr.bf16.mxu0 %v2263
        %2327 = vmatpush1.bf16.msra.mxu0 %v2262
        %2328 = vmatprep.subr.bf16.mxu0 %v2265
        %2329 = vmatpush1.bf16.msra.mxu0 %v2264
        %2330 = vmatprep.subr.bf16.mxu0 %v2267
        %2331 = vmatpush1.bf16.msra.mxu0 %v2266
        %2332 = vmatprep.subr.bf16.mxu0 %v2269
        %2333 = vmatpush1.bf16.msra.mxu0 %v2268
        %2334 = vmatprep.subr.bf16.mxu0 %v2271
        %2335 = vmatpush1.bf16.msra.mxu0 %v2270
        %2336 = vmatprep.subr.bf16.mxu0 %v2273
        %2337 = vmatpush1.bf16.msra.mxu0 %v2272
        %2338 = vmatprep.subr.bf16.mxu0 %v2275
        %2339 = vmatpush1.bf16.msra.mxu0 %v2274
        %2340 = vmatprep.subr.bf16.mxu0 %v2277
        %2341 = vmatpush1.bf16.msra.mxu0 %v2276
        %2342 = vmatprep.subr.bf16.mxu0 %v2279
        %2343 = vmatpush1.bf16.msra.mxu0 %v2278
        %2344 = vmatprep.subr.bf16.mxu0 %v2281
        %2345 = vmatpush1.bf16.msra.mxu0 %v2280
        %2346 = vmatprep.subr.bf16.mxu0 %v2283
        %2347 = vmatpush1.bf16.msra.mxu0 %v2282
        %2348 = vmatprep.subr.bf16.mxu0 %v2285
        %2349 = vmatpush1.bf16.msra.mxu0 %v2284
        %2350 = vmatprep.subr.bf16.mxu0 %v2287
        %2351 = vmatpush1.bf16.msra.mxu0 %v2286
        %2352 = vmatprep.mubr.bf16.mxu0 %v2126
        %2353 = vmatmul.mubr.bf16.gmra.mrb[0].mxu0 %v2125
        %v2354 = vpop.f32.mrb[0].mxu0
        %v2355 = vadd.f32 0.0, %v2354
        %v2356 = vpop.f32.mrb[0].mxu0
        %v2357 = vadd.f32 0.0, %v2356
        %v2358 = vpop.f32.mrb[0].mxu0
        %v2359 = vadd.f32 0.0, %v2358
        %v2360 = vpop.f32.mrb[0].mxu0
        %v2361 = vadd.f32 0.0, %v2360
        %2362 = vdwg.mxu0
        %v2395 = vunpack.c.l.b16 %v2039
        %v2396 = vunpack.c.h.b16 %v2039
        %v2397 = vunpack.c.l.b16 %v2040
        %v2398 = vunpack.c.h.b16 %v2040
        %v2399 = vunpack.c.l.b16 %v2041
        %v2400 = vunpack.c.h.b16 %v2041
        %v2401 = vunpack.c.l.b16 %v2042
        %v2402 = vunpack.c.h.b16 %v2042
        %v2403 = vunpack.c.l.b16 %v2043
        %v2404 = vunpack.c.h.b16 %v2043
        %v2405 = vunpack.c.l.b16 %v2044
        %v2406 = vunpack.c.h.b16 %v2044
        %v2407 = vunpack.c.l.b16 %v2045
        %v2408 = vunpack.c.h.b16 %v2045
        %v2409 = vunpack.c.l.b16 %v2046
        %v2410 = vunpack.c.h.b16 %v2046
        %v2411 = vunpack.c.l.b16 %v2047
        %v2412 = vunpack.c.h.b16 %v2047
        %v2413 = vunpack.c.l.b16 %v2048
        %v2414 = vunpack.c.h.b16 %v2048
        %v2415 = vunpack.c.l.b16 %v2049
        %v2416 = vunpack.c.h.b16 %v2049
        %v2417 = vunpack.c.l.b16 %v2050
        %v2418 = vunpack.c.h.b16 %v2050
        %v2419 = vunpack.c.l.b16 %v2051
        %v2420 = vunpack.c.h.b16 %v2051
        %v2421 = vunpack.c.l.b16 %v2052
        %v2422 = vunpack.c.h.b16 %v2052
        %v2423 = vunpack.c.l.b16 %v2053
        %v2424 = vunpack.c.h.b16 %v2053
        %v2425 = vunpack.c.l.b16 %v2054
        %v2426 = vunpack.c.h.b16 %v2054
        %v2427 = vunpack.c.l.b16 %v2055
        %v2428 = vunpack.c.h.b16 %v2055
        %v2429 = vunpack.c.l.b16 %v2056
        %v2430 = vunpack.c.h.b16 %v2056
        %v2431 = vunpack.c.l.b16 %v2057
        %v2432 = vunpack.c.h.b16 %v2057
        %v2433 = vunpack.c.l.b16 %v2058
        %v2434 = vunpack.c.h.b16 %v2058
        %v2435 = vunpack.c.l.b16 %v2059
        %v2436 = vunpack.c.h.b16 %v2059
        %v2437 = vunpack.c.l.b16 %v2060
        %v2438 = vunpack.c.h.b16 %v2060
        %v2439 = vunpack.c.l.b16 %v2061
        %v2440 = vunpack.c.h.b16 %v2061
        %v2441 = vunpack.c.l.b16 %v2062
        %v2442 = vunpack.c.h.b16 %v2062
        %v2443 = vunpack.c.l.b16 %v2063
        %v2444 = vunpack.c.h.b16 %v2063
        %v2445 = vunpack.c.l.b16 %v2064
        %v2446 = vunpack.c.h.b16 %v2064
        %v2447 = vunpack.c.l.b16 %v2065
        %v2448 = vunpack.c.h.b16 %v2065
        %v2449 = vunpack.c.l.b16 %v2066
        %v2450 = vunpack.c.h.b16 %v2066
        %v2451 = vunpack.c.l.b16 %v2067
        %v2452 = vunpack.c.h.b16 %v2067
        %v2453 = vunpack.c.l.b16 %v2068
        %v2454 = vunpack.c.h.b16 %v2068
        %v2455 = vunpack.c.l.b16 %v2069
        %v2456 = vunpack.c.h.b16 %v2069
        %v2457 = vunpack.c.l.b16 %v2070
        %v2458 = vunpack.c.h.b16 %v2070
        %v2459 = vpack.c.b16 %v2397, %v2395
        %v2460 = vpack.c.b16 %v2398, %v2396
        %v2461 = vpack.c.b16 %v2401, %v2399
        %v2462 = vpack.c.b16 %v2402, %v2400
        %v2463 = vpack.c.b16 %v2405, %v2403
        %v2464 = vpack.c.b16 %v2406, %v2404
        %v2465 = vpack.c.b16 %v2409, %v2407
        %v2466 = vpack.c.b16 %v2410, %v2408
        %v2467 = vpack.c.b16 %v2413, %v2411
        %v2468 = vpack.c.b16 %v2414, %v2412
        %v2469 = vpack.c.b16 %v2417, %v2415
        %v2470 = vpack.c.b16 %v2418, %v2416
        %v2471 = vpack.c.b16 %v2421, %v2419
        %v2472 = vpack.c.b16 %v2422, %v2420
        %v2473 = vpack.c.b16 %v2425, %v2423
        %v2474 = vpack.c.b16 %v2426, %v2424
        %v2475 = vpack.c.b16 %v2429, %v2427
        %v2476 = vpack.c.b16 %v2430, %v2428
        %v2477 = vpack.c.b16 %v2433, %v2431
        %v2478 = vpack.c.b16 %v2434, %v2432
        %v2479 = vpack.c.b16 %v2437, %v2435
        %v2480 = vpack.c.b16 %v2438, %v2436
        %v2481 = vpack.c.b16 %v2441, %v2439
        %v2482 = vpack.c.b16 %v2442, %v2440
        %v2483 = vpack.c.b16 %v2445, %v2443
        %v2484 = vpack.c.b16 %v2446, %v2444
        %v2485 = vpack.c.b16 %v2449, %v2447
        %v2486 = vpack.c.b16 %v2450, %v2448
        %v2487 = vpack.c.b16 %v2453, %v2451
        %v2488 = vpack.c.b16 %v2454, %v2452
        %v2489 = vpack.c.b16 %v2457, %v2455
        %v2490 = vpack.c.b16 %v2458, %v2456
        %2523 = vmatprep.subr.bf16.mxu0 %v2460
        %2524 = vmatpush1.bf16.msra.mxu0 %v2459
        %2525 = vmatprep.subr.bf16.mxu0 %v2462
        %2526 = vmatpush1.bf16.msra.mxu0 %v2461
        %2527 = vmatprep.subr.bf16.mxu0 %v2464
        %2528 = vmatpush1.bf16.msra.mxu0 %v2463
        %2529 = vmatprep.subr.bf16.mxu0 %v2466
        %2530 = vmatpush1.bf16.msra.mxu0 %v2465
        %2531 = vmatprep.subr.bf16.mxu0 %v2468
        %2532 = vmatpush1.bf16.msra.mxu0 %v2467
        %2533 = vmatprep.subr.bf16.mxu0 %v2470
        %2534 = vmatpush1.bf16.msra.mxu0 %v2469
        %2535 = vmatprep.subr.bf16.mxu0 %v2472
        %2536 = vmatpush1.bf16.msra.mxu0 %v2471
        %2537 = vmatprep.subr.bf16.mxu0 %v2474
        %2538 = vmatpush1.bf16.msra.mxu0 %v2473
        %2539 = vmatprep.subr.bf16.mxu0 %v2476
        %2540 = vmatpush1.bf16.msra.mxu0 %v2475
        %2541 = vmatprep.subr.bf16.mxu0 %v2478
        %2542 = vmatpush1.bf16.msra.mxu0 %v2477
        %2543 = vmatprep.subr.bf16.mxu0 %v2480
        %2544 = vmatpush1.bf16.msra.mxu0 %v2479
        %2545 = vmatprep.subr.bf16.mxu0 %v2482
        %2546 = vmatpush1.bf16.msra.mxu0 %v2481
        %2547 = vmatprep.subr.bf16.mxu0 %v2484
        %2548 = vmatpush1.bf16.msra.mxu0 %v2483
        %2549 = vmatprep.subr.bf16.mxu0 %v2486
        %2550 = vmatpush1.bf16.msra.mxu0 %v2485
        %2551 = vmatprep.subr.bf16.mxu0 %v2488
        %2552 = vmatpush1.bf16.msra.mxu0 %v2487
        %2553 = vmatprep.subr.bf16.mxu0 %v2490
        %2554 = vmatpush1.bf16.msra.mxu0 %v2489
        %2555 = vmatprep.mubr.bf16.mxu0 %v2038
        %2556 = vmatmul.mubr.bf16.gmra.mrb[0].mxu0 %v2037
        %v2557 = vpop.f32.mrb[0].mxu0
        %v2558 = vadd.f32 %v2355, %v2557
        %v2559 = vpop.f32.mrb[0].mxu0
        %v2560 = vadd.f32 %v2357, %v2559
        %v2561 = vpop.f32.mrb[0].mxu0
        %v2562 = vadd.f32 %v2359, %v2561
        %v2563 = vpop.f32.mrb[0].mxu0
        %v2564 = vadd.f32 %v2361, %v2563
        %2565 = vdwg.mxu0
        %s2566 = scalar_lea.vmem %s4, 16
        %v2567 = vld [vmem:[%s2566] sm:$0xf]
        %v2568 = vld [vmem:[%s2566 + $0x4] sm:$0xf]
        %v2571 = vunpack.c.l.b16 %v2567
        %v2572 = vunpack.c.l.b16 %v2568
        %v2573 = vpack.c.b16 %v2572, %v2571
        %v2575 = vsel %vm1990, %v2573, 0
        %2577 = vmatprep.subr.bf16.mxu0 %v1980
        %2578 = vmatpush1.bf16.msra.mxu0 %v1979
        %2579 = vmatprep.subr.bf16.mxu0 %v1982
        %2580 = vmatpush1.bf16.msra.mxu0 %v1981
        %2581 = vmatprep.subr.bf16.mxu0 0
        %2582 = vmatpush1.bf16.msra.mxu0 0
        %2583 = vmatprep.subr.bf16.mxu0 0
        %2584 = vmatpush1.bf16.msra.mxu0 0
        %2585 = vmatprep.subr.bf16.mxu0 0
        %2586 = vmatpush1.bf16.msra.mxu0 0
        %2587 = vmatprep.subr.bf16.mxu0 0
        %2588 = vmatpush1.bf16.msra.mxu0 0
        %2589 = vmatprep.subr.bf16.mxu0 0
        %2590 = vmatpush1.bf16.msra.mxu0 0
        %2591 = vmatprep.subr.bf16.mxu0 0
        %2592 = vmatpush1.bf16.msra.mxu0 0
        %2593 = vmatprep.subr.bf16.mxu0 0
        %2594 = vmatpush1.bf16.msra.mxu0 0
        %2595 = vmatprep.subr.bf16.mxu0 0
        %2596 = vmatpush1.bf16.msra.mxu0 0
        %2597 = vmatprep.subr.bf16.mxu0 0
        %2598 = vmatpush1.bf16.msra.mxu0 0
        %2599 = vmatprep.subr.bf16.mxu0 0
        %2600 = vmatpush1.bf16.msra.mxu0 0
        %2601 = vmatprep.subr.bf16.mxu0 0
        %2602 = vmatpush1.bf16.msra.mxu0 0
        %2603 = vmatprep.subr.bf16.mxu0 0
        %2604 = vmatpush1.bf16.msra.mxu0 0
        %2605 = vmatprep.subr.bf16.mxu0 0
        %2606 = vmatpush1.bf16.msra.mxu0 0
        %2607 = vmatprep.subr.bf16.mxu0 0
        %2608 = vmatpush1.bf16.msra.mxu0 0
        %2609 = vmatprep.mubr.bf16.mxu0 0
        %2610 = vmatmul.mubr.bf16.gmra.mrb[0].mxu0 %v2575
        %v2611 = vpop.f32.mrb[0].mxu0
        %v2612 = vadd.f32 0.0, %v2611
        %v2613 = vpop.f32.mrb[0].mxu0
        %v2614 = vadd.f32 0.0, %v2613
        %v2615 = vpop.f32.mrb[0].mxu0
        %v2616 = vadd.f32 0.0, %v2615
        %v2617 = vpop.f32.mrb[0].mxu0
        %v2618 = vadd.f32 0.0, %v2617
        %2619 = vdwg.mxu0
        %v2620 = vpack.c.bf16 %v2616, %v2612
        %v2621 = vpack.c.bf16 %v2618, %v2614
        %s2622 = scalar_lea.vmem %s5, 512
        %v2623 = vld [vmem:[%s2622] sm:$0xff]
        %v2624 = vld [vmem:[%s2622 + $0x8] sm:$0xff]
        %v2625 = vld [vmem:[%s2622 + $0x10] sm:$0xff]
        %v2626 = vld [vmem:[%s2622 + $0x18] sm:$0xff]
        %v2627 = vld [vmem:[%s2622 + $0x20] sm:$0xff]
        %v2628 = vld [vmem:[%s2622 + $0x28] sm:$0xff]
        %v2629 = vld [vmem:[%s2622 + $0x30] sm:$0xff]
        %v2630 = vld [vmem:[%s2622 + $0x38] sm:$0xff]
        %v2631 = vld [vmem:[%s2622 + $0x40] sm:$0xff]
        %v2632 = vld [vmem:[%s2622 + $0x48] sm:$0xff]
        %v2633 = vld [vmem:[%s2622 + $0x50] sm:$0xff]
        %v2634 = vld [vmem:[%s2622 + $0x58] sm:$0xff]
        %v2635 = vld [vmem:[%s2622 + $0x60] sm:$0xff]
        %v2636 = vld [vmem:[%s2622 + $0x68] sm:$0xff]
        %v2637 = vld [vmem:[%s2622 + $0x70] sm:$0xff]
        %v2638 = vld [vmem:[%s2622 + $0x78] sm:$0xff]
        %v2639 = vld [vmem:[%s2622 + $0x80] sm:$0xff]
        %v2640 = vld [vmem:[%s2622 + $0x88] sm:$0xff]
        %v2641 = vld [vmem:[%s2622 + $0x90] sm:$0xff]
        %v2642 = vld [vmem:[%s2622 + $0x98] sm:$0xff]
        %v2643 = vld [vmem:[%s2622 + $0xa0] sm:$0xff]
        %v2644 = vld [vmem:[%s2622 + $0xa8] sm:$0xff]
        %v2645 = vld [vmem:[%s2622 + $0xb0] sm:$0xff]
        %v2646 = vld [vmem:[%s2622 + $0xb8] sm:$0xff]
        %v2647 = vld [vmem:[%s2622 + $0xc0] sm:$0xff]
        %v2648 = vld [vmem:[%s2622 + $0xc8] sm:$0xff]
        %v2649 = vld [vmem:[%s2622 + $0xd0] sm:$0xff]
        %v2650 = vld [vmem:[%s2622 + $0xd8] sm:$0xff]
        %v2651 = vld [vmem:[%s2622 + $0xe0] sm:$0xff]
        %v2652 = vld [vmem:[%s2622 + $0xe8] sm:$0xff]
        %v2653 = vld [vmem:[%s2622 + $0xf0] sm:$0xff]
        %v2654 = vld [vmem:[%s2622 + $0xf8] sm:$0xff]
        %v2687 = vunpack.c.l.b16 %v2623
        %v2688 = vunpack.c.h.b16 %v2623
        %v2689 = vunpack.c.l.b16 %v2624
        %v2690 = vunpack.c.h.b16 %v2624
        %v2691 = vunpack.c.l.b16 %v2625
        %v2692 = vunpack.c.h.b16 %v2625
        %v2693 = vunpack.c.l.b16 %v2626
        %v2694 = vunpack.c.h.b16 %v2626
        %v2695 = vunpack.c.l.b16 %v2627
        %v2696 = vunpack.c.h.b16 %v2627
        %v2697 = vunpack.c.l.b16 %v2628
        %v2698 = vunpack.c.h.b16 %v2628
        %v2699 = vunpack.c.l.b16 %v2629
        %v2700 = vunpack.c.h.b16 %v2629
        %v2701 = vunpack.c.l.b16 %v2630
        %v2702 = vunpack.c.h.b16 %v2630
        %v2703 = vunpack.c.l.b16 %v2631
        %v2704 = vunpack.c.h.b16 %v2631
        %v2705 = vunpack.c.l.b16 %v2632
        %v2706 = vunpack.c.h.b16 %v2632
        %v2707 = vunpack.c.l.b16 %v2633
        %v2708 = vunpack.c.h.b16 %v2633
        %v2709 = vunpack.c.l.b16 %v2634
        %v2710 = vunpack.c.h.b16 %v2634
        %v2711 = vunpack.c.l.b16 %v2635
        %v2712 = vunpack.c.h.b16 %v2635
        %v2713 = vunpack.c.l.b16 %v2636
        %v2714 = vunpack.c.h.b16 %v2636
        %v2715 = vunpack.c.l.b16 %v2637
        %v2716 = vunpack.c.h.b16 %v2637
        %v2717 = vunpack.c.l.b16 %v2638
        %v2718 = vunpack.c.h.b16 %v2638
        %v2719 = vunpack.c.l.b16 %v2639
        %v2720 = vunpack.c.h.b16 %v2639
        %v2721 = vunpack.c.l.b16 %v2640
        %v2722 = vunpack.c.h.b16 %v2640
        %v2723 = vunpack.c.l.b16 %v2641
        %v2724 = vunpack.c.h.b16 %v2641
        %v2725 = vunpack.c.l.b16 %v2642
        %v2726 = vunpack.c.h.b16 %v2642
        %v2727 = vunpack.c.l.b16 %v2643
        %v2728 = vunpack.c.h.b16 %v2643
        %v2729 = vunpack.c.l.b16 %v2644
        %v2730 = vunpack.c.h.b16 %v2644
        %v2731 = vunpack.c.l.b16 %v2645
        %v2732 = vunpack.c.h.b16 %v2645
        %v2733 = vunpack.c.l.b16 %v2646
        %v2734 = vunpack.c.h.b16 %v2646
        %v2735 = vunpack.c.l.b16 %v2647
        %v2736 = vunpack.c.h.b16 %v2647
        %v2737 = vunpack.c.l.b16 %v2648
        %v2738 = vunpack.c.h.b16 %v2648
        %v2739 = vunpack.c.l.b16 %v2649
        %v2740 = vunpack.c.h.b16 %v2649
        %v2741 = vunpack.c.l.b16 %v2650
        %v2742 = vunpack.c.h.b16 %v2650
        %v2743 = vunpack.c.l.b16 %v2651
        %v2744 = vunpack.c.h.b16 %v2651
        %v2745 = vunpack.c.l.b16 %v2652
        %v2746 = vunpack.c.h.b16 %v2652
        %v2747 = vunpack.c.l.b16 %v2653
        %v2748 = vunpack.c.h.b16 %v2653
        %v2749 = vunpack.c.l.b16 %v2654
        %v2750 = vunpack.c.h.b16 %v2654
        %v2751 = vpack.c.b16 %v2689, %v2687
        %v2752 = vpack.c.b16 %v2690, %v2688
        %v2753 = vpack.c.b16 %v2693, %v2691
        %v2754 = vpack.c.b16 %v2694, %v2692
        %v2755 = vpack.c.b16 %v2697, %v2695
        %v2756 = vpack.c.b16 %v2698, %v2696
        %v2757 = vpack.c.b16 %v2701, %v2699
        %v2758 = vpack.c.b16 %v2702, %v2700
        %v2759 = vpack.c.b16 %v2705, %v2703
        %v2760 = vpack.c.b16 %v2706, %v2704
        %v2761 = vpack.c.b16 %v2709, %v2707
        %v2762 = vpack.c.b16 %v2710, %v2708
        %v2763 = vpack.c.b16 %v2713, %v2711
        %v2764 = vpack.c.b16 %v2714, %v2712
        %v2765 = vpack.c.b16 %v2717, %v2715
        %v2766 = vpack.c.b16 %v2718, %v2716
        %v2767 = vpack.c.b16 %v2721, %v2719
        %v2768 = vpack.c.b16 %v2722, %v2720
        %v2769 = vpack.c.b16 %v2725, %v2723
        %v2770 = vpack.c.b16 %v2726, %v2724
        %v2771 = vpack.c.b16 %v2729, %v2727
        %v2772 = vpack.c.b16 %v2730, %v2728
        %v2773 = vpack.c.b16 %v2733, %v2731
        %v2774 = vpack.c.b16 %v2734, %v2732
        %v2775 = vpack.c.b16 %v2737, %v2735
        %v2776 = vpack.c.b16 %v2738, %v2736
        %v2777 = vpack.c.b16 %v2741, %v2739
        %v2778 = vpack.c.b16 %v2742, %v2740
        %v2779 = vpack.c.b16 %v2745, %v2743
        %v2780 = vpack.c.b16 %v2746, %v2744
        %v2781 = vpack.c.b16 %v2749, %v2747
        %v2782 = vpack.c.b16 %v2750, %v2748
        %2815 = vmatprep.subr.bf16.mxu0 %v2752
        %2816 = vmatpush1.bf16.msra.mxu0 %v2751
        %2817 = vmatprep.subr.bf16.mxu0 %v2754
        %2818 = vmatpush1.bf16.msra.mxu0 %v2753
        %2819 = vmatprep.subr.bf16.mxu0 %v2756
        %2820 = vmatpush1.bf16.msra.mxu0 %v2755
        %2821 = vmatprep.subr.bf16.mxu0 %v2758
        %2822 = vmatpush1.bf16.msra.mxu0 %v2757
        %2823 = vmatprep.subr.bf16.mxu0 %v2760
        %2824 = vmatpush1.bf16.msra.mxu0 %v2759
        %2825 = vmatprep.subr.bf16.mxu0 %v2762
        %2826 = vmatpush1.bf16.msra.mxu0 %v2761
        %2827 = vmatprep.subr.bf16.mxu0 %v2764
        %2828 = vmatpush1.bf16.msra.mxu0 %v2763
        %2829 = vmatprep.subr.bf16.mxu0 %v2766
        %2830 = vmatpush1.bf16.msra.mxu0 %v2765
        %2831 = vmatprep.subr.bf16.mxu0 %v2768
        %2832 = vmatpush1.bf16.msra.mxu0 %v2767
        %2833 = vmatprep.subr.bf16.mxu0 %v2770
        %2834 = vmatpush1.bf16.msra.mxu0 %v2769
        %2835 = vmatprep.subr.bf16.mxu0 %v2772
        %2836 = vmatpush1.bf16.msra.mxu0 %v2771
        %2837 = vmatprep.subr.bf16.mxu0 %v2774
        %2838 = vmatpush1.bf16.msra.mxu0 %v2773
        %2839 = vmatprep.subr.bf16.mxu0 %v2776
        %2840 = vmatpush1.bf16.msra.mxu0 %v2775
        %2841 = vmatprep.subr.bf16.mxu0 %v2778
        %2842 = vmatpush1.bf16.msra.mxu0 %v2777
        %2843 = vmatprep.subr.bf16.mxu0 %v2780
        %2844 = vmatpush1.bf16.msra.mxu0 %v2779
        %2845 = vmatprep.subr.bf16.mxu0 %v2782
        %2846 = vmatpush1.bf16.msra.mxu0 %v2781
        %2847 = vmatprep.mubr.bf16.mxu0 %v2621
        %2848 = vmatmul.mubr.bf16.gmra.mrb[0].mxu0 %v2620
        %v2849 = vpop.f32.mrb[0].mxu0
        %v2850 = vadd.f32 0.0, %v2849
        %v2851 = vpop.f32.mrb[0].mxu0
        %v2852 = vadd.f32 0.0, %v2851
        %v2853 = vpop.f32.mrb[0].mxu0
        %v2854 = vadd.f32 0.0, %v2853
        %v2855 = vpop.f32.mrb[0].mxu0
        %v2856 = vadd.f32 0.0, %v2855
        %2857 = vdwg.mxu0
        %v2858 = vadd.f32 %v2558, %v2850
        %v2859 = vadd.f32 %v2560, %v2852
        %v2860 = vadd.f32 %v2562, %v2854
        %v2861 = vadd.f32 %v2564, %v2856
        %s2862 = scalar_lea.vmem %s4, 24
        %v2863 = vld [vmem:[%s2862] sm:$0xf]
        %v2864 = vld [vmem:[%s2862 + $0x4] sm:$0xf]
        %v2867 = vunpack.c.l.b16 %v2863
        %v2868 = vunpack.c.l.b16 %v2864
        %v2869 = vpack.c.b16 %v2868, %v2867
        %v2871 = vsel %vm1990, %v2869, 0
        %2873 = vmatprep.subr.bf16.mxu0 %v1980
        %2874 = vmatpush1.bf16.msra.mxu0 %v1979
        %2875 = vmatprep.subr.bf16.mxu0 %v1982
        %2876 = vmatpush1.bf16.msra.mxu0 %v1981
        %2877 = vmatprep.subr.bf16.mxu0 0
        %2878 = vmatpush1.bf16.msra.mxu0 0
        %2879 = vmatprep.subr.bf16.mxu0 0
        %2880 = vmatpush1.bf16.msra.mxu0 0
        %2881 = vmatprep.subr.bf16.mxu0 0
        %2882 = vmatpush1.bf16.msra.mxu0 0
        %2883 = vmatprep.subr.bf16.mxu0 0
        %2884 = vmatpush1.bf16.msra.mxu0 0
        %2885 = vmatprep.subr.bf16.mxu0 0
        %2886 = vmatpush1.bf16.msra.mxu0 0
        %2887 = vmatprep.subr.bf16.mxu0 0
        %2888 = vmatpush1.bf16.msra.mxu0 0
        %2889 = vmatprep.subr.bf16.mxu0 0
        %2890 = vmatpush1.bf16.msra.mxu0 0
        %2891 = vmatprep.subr.bf16.mxu0 0
        %2892 = vmatpush1.bf16.msra.mxu0 0
        %2893 = vmatprep.subr.bf16.mxu0 0
        %2894 = vmatpush1.bf16.msra.mxu0 0
        %2895 = vmatprep.subr.bf16.mxu0 0
        %2896 = vmatpush1.bf16.msra.mxu0 0
        %2897 = vmatprep.subr.bf16.mxu0 0
        %2898 = vmatpush1.bf16.msra.mxu0 0
        %2899 = vmatprep.subr.bf16.mxu0 0
        %2900 = vmatpush1.bf16.msra.mxu0 0
        %2901 = vmatprep.subr.bf16.mxu0 0
        %2902 = vmatpush1.bf16.msra.mxu0 0
        %2903 = vmatprep.subr.bf16.mxu0 0
        %2904 = vmatpush1.bf16.msra.mxu0 0
        %2905 = vmatprep.mubr.bf16.mxu0 0
        %2906 = vmatmul.mubr.bf16.gmra.mrb[0].mxu0 %v2871
        %v2907 = vpop.f32.mrb[0].mxu0
        %v2908 = vadd.f32 0.0, %v2907
        %v2909 = vpop.f32.mrb[0].mxu0
        %v2910 = vadd.f32 0.0, %v2909
        %v2911 = vpop.f32.mrb[0].mxu0
        %v2912 = vadd.f32 0.0, %v2911
        %v2913 = vpop.f32.mrb[0].mxu0
        %v2914 = vadd.f32 0.0, %v2913
        %2915 = vdwg.mxu0
        %v2916 = vpack.c.bf16 %v2912, %v2908
        %v2917 = vpack.c.bf16 %v2914, %v2910
        %s2918 = scalar_lea.vmem %s5, 768
        %v2919 = vld [vmem:[%s2918] sm:$0xff]
        %v2920 = vld [vmem:[%s2918 + $0x8] sm:$0xff]
        %v2921 = vld [vmem:[%s2918 + $0x10] sm:$0xff]
        %v2922 = vld [vmem:[%s2918 + $0x18] sm:$0xff]
        %v2923 = vld [vmem:[%s2918 + $0x20] sm:$0xff]
        %v2924 = vld [vmem:[%s2918 + $0x28] sm:$0xff]
        %v2925 = vld [vmem:[%s2918 + $0x30] sm:$0xff]
        %v2926 = vld [vmem:[%s2918 + $0x38] sm:$0xff]
        %v2927 = vld [vmem:[%s2918 + $0x40] sm:$0xff]
        %v2928 = vld [vmem:[%s2918 + $0x48] sm:$0xff]
        %v2929 = vld [vmem:[%s2918 + $0x50] sm:$0xff]
        %v2930 = vld [vmem:[%s2918 + $0x58] sm:$0xff]
        %v2931 = vld [vmem:[%s2918 + $0x60] sm:$0xff]
        %v2932 = vld [vmem:[%s2918 + $0x68] sm:$0xff]
        %v2933 = vld [vmem:[%s2918 + $0x70] sm:$0xff]
        %v2934 = vld [vmem:[%s2918 + $0x78] sm:$0xff]
        %v2935 = vld [vmem:[%s2918 + $0x80] sm:$0xff]
        %v2936 = vld [vmem:[%s2918 + $0x88] sm:$0xff]
        %v2937 = vld [vmem:[%s2918 + $0x90] sm:$0xff]
        %v2938 = vld [vmem:[%s2918 + $0x98] sm:$0xff]
        %v2939 = vld [vmem:[%s2918 + $0xa0] sm:$0xff]
        %v2940 = vld [vmem:[%s2918 + $0xa8] sm:$0xff]
        %v2941 = vld [vmem:[%s2918 + $0xb0] sm:$0xff]
        %v2942 = vld [vmem:[%s2918 + $0xb8] sm:$0xff]
        %v2943 = vld [vmem:[%s2918 + $0xc0] sm:$0xff]
        %v2944 = vld [vmem:[%s2918 + $0xc8] sm:$0xff]
        %v2945 = vld [vmem:[%s2918 + $0xd0] sm:$0xff]
        %v2946 = vld [vmem:[%s2918 + $0xd8] sm:$0xff]
        %v2947 = vld [vmem:[%s2918 + $0xe0] sm:$0xff]
        %v2948 = vld [vmem:[%s2918 + $0xe8] sm:$0xff]
        %v2949 = vld [vmem:[%s2918 + $0xf0] sm:$0xff]
        %v2950 = vld [vmem:[%s2918 + $0xf8] sm:$0xff]
        %v2983 = vunpack.c.l.b16 %v2919
        %v2984 = vunpack.c.h.b16 %v2919
        %v2985 = vunpack.c.l.b16 %v2920
        %v2986 = vunpack.c.h.b16 %v2920
        %v2987 = vunpack.c.l.b16 %v2921
        %v2988 = vunpack.c.h.b16 %v2921
        %v2989 = vunpack.c.l.b16 %v2922
        %v2990 = vunpack.c.h.b16 %v2922
        %v2991 = vunpack.c.l.b16 %v2923
        %v2992 = vunpack.c.h.b16 %v2923
        %v2993 = vunpack.c.l.b16 %v2924
        %v2994 = vunpack.c.h.b16 %v2924
        %v2995 = vunpack.c.l.b16 %v2925
        %v2996 = vunpack.c.h.b16 %v2925
        %v2997 = vunpack.c.l.b16 %v2926
        %v2998 = vunpack.c.h.b16 %v2926
        %v2999 = vunpack.c.l.b16 %v2927
        %v3000 = vunpack.c.h.b16 %v2927
        %v3001 = vunpack.c.l.b16 %v2928
        %v3002 = vunpack.c.h.b16 %v2928
        %v3003 = vunpack.c.l.b16 %v2929
        %v3004 = vunpack.c.h.b16 %v2929
        %v3005 = vunpack.c.l.b16 %v2930
        %v3006 = vunpack.c.h.b16 %v2930
        %v3007 = vunpack.c.l.b16 %v2931
        %v3008 = vunpack.c.h.b16 %v2931
        %v3009 = vunpack.c.l.b16 %v2932
        %v3010 = vunpack.c.h.b16 %v2932
        %v3011 = vunpack.c.l.b16 %v2933
        %v3012 = vunpack.c.h.b16 %v2933
        %v3013 = vunpack.c.l.b16 %v2934
        %v3014 = vunpack.c.h.b16 %v2934
        %v3015 = vunpack.c.l.b16 %v2935
        %v3016 = vunpack.c.h.b16 %v2935
        %v3017 = vunpack.c.l.b16 %v2936
        %v3018 = vunpack.c.h.b16 %v2936
        %v3019 = vunpack.c.l.b16 %v2937
        %v3020 = vunpack.c.h.b16 %v2937
        %v3021 = vunpack.c.l.b16 %v2938
        %v3022 = vunpack.c.h.b16 %v2938
        %v3023 = vunpack.c.l.b16 %v2939
        %v3024 = vunpack.c.h.b16 %v2939
        %v3025 = vunpack.c.l.b16 %v2940
        %v3026 = vunpack.c.h.b16 %v2940
        %v3027 = vunpack.c.l.b16 %v2941
        %v3028 = vunpack.c.h.b16 %v2941
        %v3029 = vunpack.c.l.b16 %v2942
        %v3030 = vunpack.c.h.b16 %v2942
        %v3031 = vunpack.c.l.b16 %v2943
        %v3032 = vunpack.c.h.b16 %v2943
        %v3033 = vunpack.c.l.b16 %v2944
        %v3034 = vunpack.c.h.b16 %v2944
        %v3035 = vunpack.c.l.b16 %v2945
        %v3036 = vunpack.c.h.b16 %v2945
        %v3037 = vunpack.c.l.b16 %v2946
        %v3038 = vunpack.c.h.b16 %v2946
        %v3039 = vunpack.c.l.b16 %v2947
        %v3040 = vunpack.c.h.b16 %v2947
        %v3041 = vunpack.c.l.b16 %v2948
        %v3042 = vunpack.c.h.b16 %v2948
        %v3043 = vunpack.c.l.b16 %v2949
        %v3044 = vunpack.c.h.b16 %v2949
        %v3045 = vunpack.c.l.b16 %v2950
        %v3046 = vunpack.c.h.b16 %v2950
        %v3047 = vpack.c.b16 %v2985, %v2983
        %v3048 = vpack.c.b16 %v2986, %v2984
        %v3049 = vpack.c.b16 %v2989, %v2987
        %v3050 = vpack.c.b16 %v2990, %v2988
        %v3051 = vpack.c.b16 %v2993, %v2991
        %v3052 = vpack.c.b16 %v2994, %v2992
        %v3053 = vpack.c.b16 %v2997, %v2995
        %v3054 = vpack.c.b16 %v2998, %v2996
        %v3055 = vpack.c.b16 %v3001, %v2999
        %v3056 = vpack.c.b16 %v3002, %v3000
        %v3057 = vpack.c.b16 %v3005, %v3003
        %v3058 = vpack.c.b16 %v3006, %v3004
        %v3059 = vpack.c.b16 %v3009, %v3007
        %v3060 = vpack.c.b16 %v3010, %v3008
        %v3061 = vpack.c.b16 %v3013, %v3011
        %v3062 = vpack.c.b16 %v3014, %v3012
        %v3063 = vpack.c.b16 %v3017, %v3015
        %v3064 = vpack.c.b16 %v3018, %v3016
        %v3065 = vpack.c.b16 %v3021, %v3019
        %v3066 = vpack.c.b16 %v3022, %v3020
        %v3067 = vpack.c.b16 %v3025, %v3023
        %v3068 = vpack.c.b16 %v3026, %v3024
        %v3069 = vpack.c.b16 %v3029, %v3027
        %v3070 = vpack.c.b16 %v3030, %v3028
        %v3071 = vpack.c.b16 %v3033, %v3031
        %v3072 = vpack.c.b16 %v3034, %v3032
        %v3073 = vpack.c.b16 %v3037, %v3035
        %v3074 = vpack.c.b16 %v3038, %v3036
        %v3075 = vpack.c.b16 %v3041, %v3039
        %v3076 = vpack.c.b16 %v3042, %v3040
        %v3077 = vpack.c.b16 %v3045, %v3043
        %v3078 = vpack.c.b16 %v3046, %v3044
        %3111 = vmatprep.subr.bf16.mxu0 %v3048
        %3112 = vmatpush1.bf16.msra.mxu0 %v3047
        %3113 = vmatprep.subr.bf16.mxu0 %v3050
        %3114 = vmatpush1.bf16.msra.mxu0 %v3049
        %3115 = vmatprep.subr.bf16.mxu0 %v3052
        %3116 = vmatpush1.bf16.msra.mxu0 %v3051
        %3117 = vmatprep.subr.bf16.mxu0 %v3054
        %3118 = vmatpush1.bf16.msra.mxu0 %v3053
        %3119 = vmatprep.subr.bf16.mxu0 %v3056
        %3120 = vmatpush1.bf16.msra.mxu0 %v3055
        %3121 = vmatprep.subr.bf16.mxu0 %v3058
        %3122 = vmatpush1.bf16.msra.mxu0 %v3057
        %3123 = vmatprep.subr.bf16.mxu0 %v3060
        %3124 = vmatpush1.bf16.msra.mxu0 %v3059
        %3125 = vmatprep.subr.bf16.mxu0 %v3062
        %3126 = vmatpush1.bf16.msra.mxu0 %v3061
        %3127 = vmatprep.subr.bf16.mxu0 %v3064
        %3128 = vmatpush1.bf16.msra.mxu0 %v3063
        %3129 = vmatprep.subr.bf16.mxu0 %v3066
        %3130 = vmatpush1.bf16.msra.mxu0 %v3065
        %3131 = vmatprep.subr.bf16.mxu0 %v3068
        %3132 = vmatpush1.bf16.msra.mxu0 %v3067
        %3133 = vmatprep.subr.bf16.mxu0 %v3070
        %3134 = vmatpush1.bf16.msra.mxu0 %v3069
        %3135 = vmatprep.subr.bf16.mxu0 %v3072
        %3136 = vmatpush1.bf16.msra.mxu0 %v3071
        %3137 = vmatprep.subr.bf16.mxu0 %v3074
        %3138 = vmatpush1.bf16.msra.mxu0 %v3073
        %3139 = vmatprep.subr.bf16.mxu0 %v3076
        %3140 = vmatpush1.bf16.msra.mxu0 %v3075
        %3141 = vmatprep.subr.bf16.mxu0 %v3078
        %3142 = vmatpush1.bf16.msra.mxu0 %v3077
        %3143 = vmatprep.mubr.bf16.mxu0 %v2917
        %3144 = vmatmul.mubr.bf16.gmra.mrb[0].mxu0 %v2916
        %v3145 = vpop.f32.mrb[0].mxu0
        %v3146 = vadd.f32 0.0, %v3145
        %v3147 = vpop.f32.mrb[0].mxu0
        %v3148 = vadd.f32 0.0, %v3147
        %v3149 = vpop.f32.mrb[0].mxu0
        %v3150 = vadd.f32 0.0, %v3149
        %v3151 = vpop.f32.mrb[0].mxu0
        %v3152 = vadd.f32 0.0, %v3151
        %3153 = vdwg.mxu0
        %v3154 = vadd.f32 %v2858, %v3146
        %v3155 = vadd.f32 %v2859, %v3148
        %v3156 = vadd.f32 %v2860, %v3150
        %v3157 = vadd.f32 %v2861, %v3152
        %v3158 = vadd.f32 %v3154, %v3156
        %v3159 = vrot.slane %v3158, 4
        %v3160 = vadd.f32 %v3158, %v3159
        %v3161 = vrot.slane %v3160, 2
        %v3162 = vadd.f32 %v3160, %v3161
        %v3163 = vrot.slane %v3162, 1
        %v3164 = vadd.f32 %v3162, %v3163
        %v3165 = vadd.f32 %v3155, %v3157
        %v3166 = vrot.slane %v3165, 4
        %v3167 = vadd.f32 %v3165, %v3166
        %v3168 = vrot.slane %v3167, 2
        %v3169 = vadd.f32 %v3167, %v3168
        %v3170 = vrot.slane %v3169, 1
        %v3171 = vadd.f32 %v3169, %v3170
        %v3172 = vld [vmem:[#allocation5] sm:$0xff]
        %v3173 = vld [vmem:[#allocation5 + $0x8] sm:$0xff]
        %v3174 = vld [vmem:[#allocation5 + $0x10] sm:$0xff]
        %v3175 = vld [vmem:[#allocation5 + $0x18] sm:$0xff]
        %v3176 = vld [vmem:[#allocation5 + $0x20] sm:$0xff]
        %v3177 = vld [vmem:[#allocation5 + $0x28] sm:$0xff]
        %v3178 = vld [vmem:[#allocation5 + $0x30] sm:$0xff]
        %v3179 = vld [vmem:[#allocation5 + $0x38] sm:$0xff]
        %v3180 = vld [vmem:[#allocation5 + $0x40] sm:$0xff]
        %v3181 = vld [vmem:[#allocation5 + $0x48] sm:$0xff]
        %v3182 = vld [vmem:[#allocation5 + $0x50] sm:$0xff]
        %v3183 = vld [vmem:[#allocation5 + $0x58] sm:$0xff]
        %v3184 = vld [vmem:[#allocation5 + $0x60] sm:$0xff]
        %v3185 = vld [vmem:[#allocation5 + $0x68] sm:$0xff]
        %v3186 = vld [vmem:[#allocation5 + $0x70] sm:$0xff]
        %v3187 = vld [vmem:[#allocation5 + $0x78] sm:$0xff]
        %v3188 = vld [vmem:[#allocation5 + $0x80] sm:$0xff]
        %v3189 = vld [vmem:[#allocation5 + $0x88] sm:$0xff]
        %v3190 = vld [vmem:[#allocation5 + $0x90] sm:$0xff]
        %v3191 = vld [vmem:[#allocation5 + $0x98] sm:$0xff]
        %v3192 = vld [vmem:[#allocation5 + $0xa0] sm:$0xff]
        %v3193 = vld [vmem:[#allocation5 + $0xa8] sm:$0xff]
        %v3194 = vld [vmem:[#allocation5 + $0xb0] sm:$0xff]
        %v3195 = vld [vmem:[#allocation5 + $0xb8] sm:$0xff]
        %v3196 = vld [vmem:[#allocation5 + $0xc0] sm:$0xff]
        %v3197 = vld [vmem:[#allocation5 + $0xc8] sm:$0xff]
        %v3198 = vld [vmem:[#allocation5 + $0xd0] sm:$0xff]
        %v3199 = vld [vmem:[#allocation5 + $0xd8] sm:$0xff]
        %v3200 = vld [vmem:[#allocation5 + $0xe0] sm:$0xff]
        %v3201 = vld [vmem:[#allocation5 + $0xe8] sm:$0xff]
        %v3202 = vld [vmem:[#allocation5 + $0xf0] sm:$0xff]
        %v3203 = vld [vmem:[#allocation5 + $0xf8] sm:$0xff]
        %v3204 = vld [vmem:[#allocation5 + $0x100] sm:$0xff]
        %v3205 = vld [vmem:[#allocation5 + $0x108] sm:$0xff]
        %v3206 = vld [vmem:[#allocation5 + $0x110] sm:$0xff]
        %v3207 = vld [vmem:[#allocation5 + $0x118] sm:$0xff]
        %v3208 = vld [vmem:[#allocation5 + $0x120] sm:$0xff]
        %v3209 = vld [vmem:[#allocation5 + $0x128] sm:$0xff]
        %v3210 = vld [vmem:[#allocation5 + $0x130] sm:$0xff]
        %v3211 = vld [vmem:[#allocation5 + $0x138] sm:$0xff]
        %v3212 = vld [vmem:[#allocation5 + $0x140] sm:$0xff]
        %v3213 = vld [vmem:[#allocation5 + $0x148] sm:$0xff]
        %v3214 = vld [vmem:[#allocation5 + $0x150] sm:$0xff]
        %v3215 = vld [vmem:[#allocation5 + $0x158] sm:$0xff]
        %v3216 = vld [vmem:[#allocation5 + $0x160] sm:$0xff]
        %v3217 = vld [vmem:[#allocation5 + $0x168] sm:$0xff]
        %v3218 = vld [vmem:[#allocation5 + $0x170] sm:$0xff]
        %v3219 = vld [vmem:[#allocation5 + $0x178] sm:$0xff]
        %v3220 = vld [vmem:[#allocation5 + $0x180] sm:$0xff]
        %v3221 = vld [vmem:[#allocation5 + $0x188] sm:$0xff]
        %v3222 = vld [vmem:[#allocation5 + $0x190] sm:$0xff]
        %v3223 = vld [vmem:[#allocation5 + $0x198] sm:$0xff]
        %v3224 = vld [vmem:[#allocation5 + $0x1a0] sm:$0xff]
        %v3225 = vld [vmem:[#allocation5 + $0x1a8] sm:$0xff]
        %v3226 = vld [vmem:[#allocation5 + $0x1b0] sm:$0xff]
        %v3227 = vld [vmem:[#allocation5 + $0x1b8] sm:$0xff]
        %v3228 = vld [vmem:[#allocation5 + $0x1c0] sm:$0xff]
        %v3229 = vld [vmem:[#allocation5 + $0x1c8] sm:$0xff]
        %v3230 = vld [vmem:[#allocation5 + $0x1d0] sm:$0xff]
        %v3231 = vld [vmem:[#allocation5 + $0x1d8] sm:$0xff]
        %v3232 = vld [vmem:[#allocation5 + $0x1e0] sm:$0xff]
        %v3233 = vld [vmem:[#allocation5 + $0x1e8] sm:$0xff]
        %v3234 = vld [vmem:[#allocation5 + $0x1f0] sm:$0xff]
        %v3235 = vld [vmem:[#allocation5 + $0x1f8] sm:$0xff]
        %3236 = vmatprep.subr.mxu0 %v3173
        %3237 = vmatpush1.msra.mxu0 %v3172
        %3238 = vmatprep.subr.mxu0 %v3175
        %3239 = vmatpush1.msra.mxu0 %v3174
        %3240 = vmatprep.subr.mxu0 %v3177
        %3241 = vmatpush1.msra.mxu0 %v3176
        %3242 = vmatprep.subr.mxu0 %v3179
        %3243 = vmatpush1.msra.mxu0 %v3178
        %3244 = vmatprep.subr.mxu0 %v3181
        %3245 = vmatpush1.msra.mxu0 %v3180
        %3246 = vmatprep.subr.mxu0 %v3183
        %3247 = vmatpush1.msra.mxu0 %v3182
        %3248 = vmatprep.subr.mxu0 %v3185
        %3249 = vmatpush1.msra.mxu0 %v3184
        %3250 = vmatprep.subr.mxu0 %v3187
        %3251 = vmatpush1.msra.mxu0 %v3186
        %3252 = vmatprep.subr.mxu0 %v3189
        %3253 = vmatpush1.msra.mxu0 %v3188
        %3254 = vmatprep.subr.mxu0 %v3191
        %3255 = vmatpush1.msra.mxu0 %v3190
        %3256 = vmatprep.subr.mxu0 %v3193
        %3257 = vmatpush1.msra.mxu0 %v3192
        %3258 = vmatprep.subr.mxu0 %v3195
        %3259 = vmatpush1.msra.mxu0 %v3194
        %3260 = vmatprep.subr.mxu0 %v3197
        %3261 = vmatpush1.msra.mxu0 %v3196
        %3262 = vmatprep.subr.mxu0 %v3199
        %3263 = vmatpush1.msra.mxu0 %v3198
        %3264 = vmatprep.subr.mxu0 %v3201
        %3265 = vmatpush1.msra.mxu0 %v3200
        %3266 = vmatprep.subr.mxu0 %v3203
        %3267 = vmatpush1.msra.mxu0 %v3202
        %3268 = vmatprep.subr.mxu0 %v3205
        %3269 = vmatpush1.msra.mxu0 %v3204
        %3270 = vmatprep.subr.mxu0 %v3207
        %3271 = vmatpush1.msra.mxu0 %v3206
        %3272 = vmatprep.subr.mxu0 %v3209
        %3273 = vmatpush1.msra.mxu0 %v3208
        %3274 = vmatprep.subr.mxu0 %v3211
        %3275 = vmatpush1.msra.mxu0 %v3210
        %3276 = vmatprep.subr.mxu0 %v3213
        %3277 = vmatpush1.msra.mxu0 %v3212
        %3278 = vmatprep.subr.mxu0 %v3215
        %3279 = vmatpush1.msra.mxu0 %v3214
        %3280 = vmatprep.subr.mxu0 %v3217
        %3281 = vmatpush1.msra.mxu0 %v3216
        %3282 = vmatprep.subr.mxu0 %v3219
        %3283 = vmatpush1.msra.mxu0 %v3218
        %3284 = vmatprep.subr.mxu0 %v3221
        %3285 = vmatpush1.msra.mxu0 %v3220
        %3286 = vmatprep.subr.mxu0 %v3223
        %3287 = vmatpush1.msra.mxu0 %v3222
        %3288 = vmatprep.subr.mxu0 %v3225
        %3289 = vmatpush1.msra.mxu0 %v3224
        %3290 = vmatprep.subr.mxu0 %v3227
        %3291 = vmatpush1.msra.mxu0 %v3226
        %3292 = vmatprep.subr.mxu0 %v3229
        %3293 = vmatpush1.msra.mxu0 %v3228
        %3294 = vmatprep.subr.mxu0 %v3231
        %3295 = vmatpush1.msra.mxu0 %v3230
        %3296 = vmatprep.subr.mxu0 %v3233
        %3297 = vmatpush1.msra.mxu0 %v3232
        %3298 = vmatprep.subr.mxu0 %v3235
        %3299 = vmatpush1.msra.mxu0 %v3234
        %3300 = vmatprep.mubr.f32.mxu0 %v3171
        %3301 = vmatmul.mubr.f32.gmra.mrb[0].mxu0 %v3164
        %v3302 = vpop.f32.mrb[0].mxu0
        %v3303 = vadd.f32 0.0, %v3302
        %v3304 = vpop.f32.mrb[0].mxu0
        %v3305 = vadd.f32 0.0, %v3304
        %3306 = vdwg.mxu0
        %v3307 = vlaneseq
        %v3308 = vshrl.u32 %v3307, 7
        %v3309 = vsub.s32 0, %v3308
        %v3310 = vrot.slane %v3303, %v3309
        %v3311 = vlaneseq
        %v3312 = vshrl.u32 %v3311, 7
        %v3313 = vsub.s32 0, %v3312
        %v3314 = vrot.slane %v3305, %v3313
        %v3315 = vsub.f32 %v3154, %v3310
        %v3316 = vsub.f32 %v3155, %v3314
        %v3317 = vsub.f32 %v3156, %v3310
        %v3318 = vsub.f32 %v3157, %v3314
        %v3319 = vmul.f32 %v3315, %v3315
        %v3320 = vmul.f32 %v3316, %v3316
        %v3321 = vmul.f32 %v3317, %v3317
        %v3322 = vmul.f32 %v3318, %v3318
        %v3323 = vadd.f32 %v3319, %v3321
        %v3324 = vrot.slane %v3323, 4
        %v3325 = vadd.f32 %v3323, %v3324
        %v3326 = vrot.slane %v3325, 2
        %v3327 = vadd.f32 %v3325, %v3326
        %v3328 = vrot.slane %v3327, 1
        %v3329 = vadd.f32 %v3327, %v3328
        %v3330 = vadd.f32 %v3320, %v3322
        %v3331 = vrot.slane %v3330, 4
        %v3332 = vadd.f32 %v3330, %v3331
        %v3333 = vrot.slane %v3332, 2
        %v3334 = vadd.f32 %v3332, %v3333
        %v3335 = vrot.slane %v3334, 1
        %v3336 = vadd.f32 %v3334, %v3335
        %3337 = vmatprep.subr.mxu0 %v3173
        %3338 = vmatpush1.msra.mxu0 %v3172
        %3339 = vmatprep.subr.mxu0 %v3175
        %3340 = vmatpush1.msra.mxu0 %v3174
        %3341 = vmatprep.subr.mxu0 %v3177
        %3342 = vmatpush1.msra.mxu0 %v3176
        %3343 = vmatprep.subr.mxu0 %v3179
        %3344 = vmatpush1.msra.mxu0 %v3178
        %3345 = vmatprep.subr.mxu0 %v3181
        %3346 = vmatpush1.msra.mxu0 %v3180
        %3347 = vmatprep.subr.mxu0 %v3183
        %3348 = vmatpush1.msra.mxu0 %v3182
        %3349 = vmatprep.subr.mxu0 %v3185
        %3350 = vmatpush1.msra.mxu0 %v3184
        %3351 = vmatprep.subr.mxu0 %v3187
        %3352 = vmatpush1.msra.mxu0 %v3186
        %3353 = vmatprep.subr.mxu0 %v3189
        %3354 = vmatpush1.msra.mxu0 %v3188
        %3355 = vmatprep.subr.mxu0 %v3191
        %3356 = vmatpush1.msra.mxu0 %v3190
        %3357 = vmatprep.subr.mxu0 %v3193
        %3358 = vmatpush1.msra.mxu0 %v3192
        %3359 = vmatprep.subr.mxu0 %v3195
        %3360 = vmatpush1.msra.mxu0 %v3194
        %3361 = vmatprep.subr.mxu0 %v3197
        %3362 = vmatpush1.msra.mxu0 %v3196
        %3363 = vmatprep.subr.mxu0 %v3199
        %3364 = vmatpush1.msra.mxu0 %v3198
        %3365 = vmatprep.subr.mxu0 %v3201
        %3366 = vmatpush1.msra.mxu0 %v3200
        %3367 = vmatprep.subr.mxu0 %v3203
        %3368 = vmatpush1.msra.mxu0 %v3202
        %3369 = vmatprep.subr.mxu0 %v3205
        %3370 = vmatpush1.msra.mxu0 %v3204
        %3371 = vmatprep.subr.mxu0 %v3207
        %3372 = vmatpush1.msra.mxu0 %v3206
        %3373 = vmatprep.subr.mxu0 %v3209
        %3374 = vmatpush1.msra.mxu0 %v3208
        %3375 = vmatprep.subr.mxu0 %v3211
        %3376 = vmatpush1.msra.mxu0 %v3210
        %3377 = vmatprep.subr.mxu0 %v3213
        %3378 = vmatpush1.msra.mxu0 %v3212
        %3379 = vmatprep.subr.mxu0 %v3215
        %3380 = vmatpush1.msra.mxu0 %v3214
        %3381 = vmatprep.subr.mxu0 %v3217
        %3382 = vmatpush1.msra.mxu0 %v3216
        %3383 = vmatprep.subr.mxu0 %v3219
        %3384 = vmatpush1.msra.mxu0 %v3218
        %3385 = vmatprep.subr.mxu0 %v3221
        %3386 = vmatpush1.msra.mxu0 %v3220
        %3387 = vmatprep.subr.mxu0 %v3223
        %3388 = vmatpush1.msra.mxu0 %v3222
        %3389 = vmatprep.subr.mxu0 %v3225
        %3390 = vmatpush1.msra.mxu0 %v3224
        %3391 = vmatprep.subr.mxu0 %v3227
        %3392 = vmatpush1.msra.mxu0 %v3226
        %3393 = vmatprep.subr.mxu0 %v3229
        %3394 = vmatpush1.msra.mxu0 %v3228
        %3395 = vmatprep.subr.mxu0 %v3231
        %3396 = vmatpush1.msra.mxu0 %v3230
        %3397 = vmatprep.subr.mxu0 %v3233
        %3398 = vmatpush1.msra.mxu0 %v3232
        %3399 = vmatprep.subr.mxu0 %v3235
        %3400 = vmatpush1.msra.mxu0 %v3234
        %3401 = vmatprep.mubr.f32.mxu0 %v3336
        %3402 = vmatmul.mubr.f32.gmra.mrb[0].mxu0 %v3329
        %v3403 = vpop.f32.mrb[0].mxu0
        %v3404 = vadd.f32 1e-05, %v3403
        %v3405 = vpop.f32.mrb[0].mxu0
        %v3406 = vadd.f32 1e-05, %v3405
        %3407 = vdwg.mxu0
        %v3408 = vrsqrt.pop %v3404
        %v3409 = vrsqrt.pop %v3406
        %v3410 = vlaneseq
        %v3411 = vshrl.u32 %v3410, 7
        %v3412 = vsub.s32 0, %v3411
        %v3413 = vrot.slane %v3408, %v3412
        %v3414 = vlaneseq
        %v3415 = vshrl.u32 %v3414, 7
        %v3416 = vsub.s32 0, %v3415
        %v3417 = vrot.slane %v3409, %v3416
        %v3418 = vmul.f32 %v3315, %v3413
        %v3419 = vmul.f32 %v3316, %v3417
        %v3420 = vmul.f32 %v3317, %v3413
        %v3421 = vmul.f32 %v3318, %v3417
        %v3422 = vld [vmem:[%s7] sm:$0x3]
        %v3424 = vlaneseq
        %v3425 = vshrl.u32 %v3424, 7
        %v3426 = vsub.s32 0, %v3425
        %v3427 = vrot.slane %v3422, %v3426
        %v3428 = vlaneseq
        %v3429 = vshrl.u32 %v3428, 7
        %v3430 = vsub.s32 1, %v3429
        %v3431 = vrot.slane %v3422, %v3430
        %v3434 = vmul.f32 %v3418, %v3427
        %v3435 = vmul.f32 %v3419, %v3431
        %v3436 = vmul.f32 %v3420, %v3427
        %v3437 = vmul.f32 %v3421, %v3431
        %v3438 = vld [vmem:[%s8] sm:$0x3]
        %v3440 = vlaneseq
        %v3441 = vshrl.u32 %v3440, 7
        %v3442 = vsub.s32 0, %v3441
        %v3443 = vrot.slane %v3438, %v3442
        %v3444 = vlaneseq
        %v3445 = vshrl.u32 %v3444, 7
        %v3446 = vsub.s32 1, %v3445
        %v3447 = vrot.slane %v3438, %v3446
        %v3450 = vadd.f32 %v3434, %v3443
        %v3451 = vadd.f32 %v3435, %v3447
        %v3452 = vadd.f32 %v3436, %v3443
        %v3453 = vadd.f32 %v3437, %v3447
        %vm3454 = vcmp.gt.f32.partialorder %v3450, 0.0
        %vm3455 = vcmp.gt.f32.partialorder %v3451, 0.0
        %vm3456 = vcmp.gt.f32.partialorder %v3452, 0.0
        %vm3457 = vcmp.gt.f32.partialorder %v3453, 0.0
        %v3458 = vmul.f32 %v3450, 0.2
        %v3459 = vmul.f32 %v3451, 0.2
        %v3460 = vmul.f32 %v3452, 0.2
        %v3461 = vmul.f32 %v3453, 0.2
        %v3462 = vsel %vm3454, %v3450, %v3458
        %v3463 = vsel %vm3455, %v3451, %v3459
        %v3464 = vsel %vm3456, %v3452, %v3460
        %v3465 = vsel %vm3457, %v3453, %v3461
        %v3466 = vpack.c.bf16 %v3464, %v3462
        %v3467 = vpack.c.bf16 %v3465, %v3463
        %v3468 = vld [vmem:[%s9] sm:$0xf]
        %vm3469 = vcmask 130048
        %v3471 = vsel %vm3469, %v3468, 0
        %3473 = vmatprep.subr.bf16.mxu0 %v3467
        %3474 = vmatpush1.bf16.msra.mxu0 %v3466
        %3475 = vmatprep.subr.bf16.mxu0 0
        %3476 = vmatpush1.bf16.msra.mxu0 0
        %3477 = vmatprep.subr.bf16.mxu0 0
        %3478 = vmatpush1.bf16.msra.mxu0 0
        %3479 = vmatprep.subr.bf16.mxu0 0
        %3480 = vmatpush1.bf16.msra.mxu0 0
        %3481 = vmatprep.subr.bf16.mxu0 0
        %3482 = vmatpush1.bf16.msra.mxu0 0
        %3483 = vmatprep.subr.bf16.mxu0 0
        %3484 = vmatpush1.bf16.msra.mxu0 0
        %3485 = vmatprep.subr.bf16.mxu0 0
        %3486 = vmatpush1.bf16.msra.mxu0 0
        %3487 = vmatprep.subr.bf16.mxu0 0
        %3488 = vmatpush1.bf16.msra.mxu0 0
        %3489 = vmatprep.subr.bf16.mxu0 0
        %3490 = vmatpush1.bf16.msra.mxu0 0
        %3491 = vmatprep.subr.bf16.mxu0 0
        %3492 = vmatpush1.bf16.msra.mxu0 0
        %3493 = vmatprep.subr.bf16.mxu0 0
        %3494 = vmatpush1.bf16.msra.mxu0 0
        %3495 = vmatprep.subr.bf16.mxu0 0
        %3496 = vmatpush1.bf16.msra.mxu0 0
        %3497 = vmatprep.subr.bf16.mxu0 0
        %3498 = vmatpush1.bf16.msra.mxu0 0
        %3499 = vmatprep.subr.bf16.mxu0 0
        %3500 = vmatpush1.bf16.msra.mxu0 0
        %3501 = vmatprep.subr.bf16.mxu0 0
        %3502 = vmatpush1.bf16.msra.mxu0 0
        %3503 = vmatprep.subr.bf16.mxu0 0
        %3504 = vmatpush1.bf16.msra.mxu0 0
        %3505 = vmatprep.mubr.bf16.mxu0 0
        %3506 = vmatmul.mubr.bf16.gmra.mrb[0].mxu0 %v3471
        %v3507 = vpop.f32.mrb[0].mxu0
        %v3508 = vadd.f32 0.0, %v3507
        %v3509 = vpop.f32.mrb[0].mxu0
        %v3510 = vadd.f32 0.0, %v3509
        %v3511 = vpop.f32.mrb[0].mxu0
        %v3512 = vpop.f32.mrb[0].mxu0
        %3513 = vdwg.mxu0
        %v3514 = vpack.c.bf16 %v3508, %v3508
        %v3515 = vpack.c.bf16 %v3510, %v3510
        %v3516 = vld [vmem:[#allocation7] sm:$0xff]
        %v3517 = vld [vmem:[#allocation7 + $0x8] sm:$0xff]
        %v3518 = vld [vmem:[#allocation7 + $0x10] sm:$0xff]
        %v3519 = vld [vmem:[#allocation7 + $0x18] sm:$0xff]
        %v3520 = vld [vmem:[#allocation7 + $0x20] sm:$0xff]
        %v3521 = vld [vmem:[#allocation7 + $0x28] sm:$0xff]
        %v3522 = vld [vmem:[#allocation7 + $0x30] sm:$0xff]
        %v3523 = vld [vmem:[#allocation7 + $0x38] sm:$0xff]
        %v3524 = vld [vmem:[#allocation7 + $0x40] sm:$0xff]
        %v3525 = vld [vmem:[#allocation7 + $0x48] sm:$0xff]
        %v3526 = vld [vmem:[#allocation7 + $0x50] sm:$0xff]
        %v3527 = vld [vmem:[#allocation7 + $0x58] sm:$0xff]
        %v3528 = vld [vmem:[#allocation7 + $0x60] sm:$0xff]
        %v3529 = vld [vmem:[#allocation7 + $0x68] sm:$0xff]
        %v3530 = vld [vmem:[#allocation7 + $0x70] sm:$0xff]
        %v3531 = vld [vmem:[#allocation7 + $0x78] sm:$0xff]
        %v3532 = vld [vmem:[#allocation7 + $0x80] sm:$0xff]
        %v3533 = vld [vmem:[#allocation7 + $0x88] sm:$0xff]
        %v3534 = vld [vmem:[#allocation7 + $0x90] sm:$0xff]
        %v3535 = vld [vmem:[#allocation7 + $0x98] sm:$0xff]
        %v3536 = vld [vmem:[#allocation7 + $0xa0] sm:$0xff]
        %v3537 = vld [vmem:[#allocation7 + $0xa8] sm:$0xff]
        %v3538 = vld [vmem:[#allocation7 + $0xb0] sm:$0xff]
        %v3539 = vld [vmem:[#allocation7 + $0xb8] sm:$0xff]
        %v3540 = vld [vmem:[#allocation7 + $0xc0] sm:$0xff]
        %v3541 = vld [vmem:[#allocation7 + $0xc8] sm:$0xff]
        %v3542 = vld [vmem:[#allocation7 + $0xd0] sm:$0xff]
        %v3543 = vld [vmem:[#allocation7 + $0xd8] sm:$0xff]
        %v3544 = vld [vmem:[#allocation7 + $0xe0] sm:$0xff]
        %v3545 = vld [vmem:[#allocation7 + $0xe8] sm:$0xff]
        %v3546 = vld [vmem:[#allocation7 + $0xf0] sm:$0xff]
        %v3547 = vld [vmem:[#allocation7 + $0xf8] sm:$0xff]
        %s3548 = scalar_lea.vmem %s9, 4
        %v3549 = vld [vmem:[%s3548] sm:$0xf]
        %v3551 = vsel %vm3469, %v3549, 0
        %3553 = vmatprep.subr.bf16.mxu0 %v3467
        %3554 = vmatpush1.bf16.msra.mxu0 %v3466
        %3555 = vmatprep.subr.bf16.mxu0 0
        %3556 = vmatpush1.bf16.msra.mxu0 0
        %3557 = vmatprep.subr.bf16.mxu0 0
        %3558 = vmatpush1.bf16.msra.mxu0 0
        %3559 = vmatprep.subr.bf16.mxu0 0
        %3560 = vmatpush1.bf16.msra.mxu0 0
        %3561 = vmatprep.subr.bf16.mxu0 0
        %3562 = vmatpush1.bf16.msra.mxu0 0
        %3563 = vmatprep.subr.bf16.mxu0 0
        %3564 = vmatpush1.bf16.msra.mxu0 0
        %3565 = vmatprep.subr.bf16.mxu0 0
        %3566 = vmatpush1.bf16.msra.mxu0 0
        %3567 = vmatprep.subr.bf16.mxu0 0
        %3568 = vmatpush1.bf16.msra.mxu0 0
        %3569 = vmatprep.subr.bf16.mxu0 0
        %3570 = vmatpush1.bf16.msra.mxu0 0
        %3571 = vmatprep.subr.bf16.mxu0 0
        %3572 = vmatpush1.bf16.msra.mxu0 0
        %3573 = vmatprep.subr.bf16.mxu0 0
        %3574 = vmatpush1.bf16.msra.mxu0 0
        %3575 = vmatprep.subr.bf16.mxu0 0
        %3576 = vmatpush1.bf16.msra.mxu0 0
        %3577 = vmatprep.subr.bf16.mxu0 0
        %3578 = vmatpush1.bf16.msra.mxu0 0
        %3579 = vmatprep.subr.bf16.mxu0 0
        %3580 = vmatpush1.bf16.msra.mxu0 0
        %3581 = vmatprep.subr.bf16.mxu0 0
        %3582 = vmatpush1.bf16.msra.mxu0 0
        %3583 = vmatprep.subr.bf16.mxu0 0
        %3584 = vmatpush1.bf16.msra.mxu0 0
        %3585 = vmatprep.mubr.bf16.mxu0 0
        %3586 = vmatmul.mubr.bf16.gmra.mrb[0].mxu0 %v3551
        %v3587 = vpop.f32.mrb[0].mxu0
        %v3588 = vadd.f32 0.0, %v3587
        %v3589 = vpop.f32.mrb[0].mxu0
        %v3590 = vadd.f32 0.0, %v3589
        %v3591 = vpop.f32.mrb[0].mxu0
        %v3592 = vpop.f32.mrb[0].mxu0
        %3593 = vdwg.mxu0
        %v3594 = vpack.c.bf16 %v3588, %v3588
        %v3595 = vpack.c.bf16 %v3590, %v3590
        %s3596 = scalar_lea.vmem [#allocation7], 256
        %v3597 = vld [vmem:[%s3596] sm:$0xff]
        %v3598 = vld [vmem:[%s3596 + $0x8] sm:$0xff]
        %v3599 = vld [vmem:[%s3596 + $0x10] sm:$0xff]
        %v3600 = vld [vmem:[%s3596 + $0x18] sm:$0xff]
        %v3601 = vld [vmem:[%s3596 + $0x20] sm:$0xff]
        %v3602 = vld [vmem:[%s3596 + $0x28] sm:$0xff]
        %v3603 = vld [vmem:[%s3596 + $0x30] sm:$0xff]
        %v3604 = vld [vmem:[%s3596 + $0x38] sm:$0xff]
        %v3605 = vld [vmem:[%s3596 + $0x40] sm:$0xff]
        %v3606 = vld [vmem:[%s3596 + $0x48] sm:$0xff]
        %v3607 = vld [vmem:[%s3596 + $0x50] sm:$0xff]
        %v3608 = vld [vmem:[%s3596 + $0x58] sm:$0xff]
        %v3609 = vld [vmem:[%s3596 + $0x60] sm:$0xff]
        %v3610 = vld [vmem:[%s3596 + $0x68] sm:$0xff]
        %v3611 = vld [vmem:[%s3596 + $0x70] sm:$0xff]
        %v3612 = vld [vmem:[%s3596 + $0x78] sm:$0xff]
        %v3613 = vld [vmem:[%s3596 + $0x80] sm:$0xff]
        %v3614 = vld [vmem:[%s3596 + $0x88] sm:$0xff]
        %v3615 = vld [vmem:[%s3596 + $0x90] sm:$0xff]
        %v3616 = vld [vmem:[%s3596 + $0x98] sm:$0xff]
        %v3617 = vld [vmem:[%s3596 + $0xa0] sm:$0xff]
        %v3618 = vld [vmem:[%s3596 + $0xa8] sm:$0xff]
        %v3619 = vld [vmem:[%s3596 + $0xb0] sm:$0xff]
        %v3620 = vld [vmem:[%s3596 + $0xb8] sm:$0xff]
        %v3621 = vld [vmem:[%s3596 + $0xc0] sm:$0xff]
        %v3622 = vld [vmem:[%s3596 + $0xc8] sm:$0xff]
        %v3623 = vld [vmem:[%s3596 + $0xd0] sm:$0xff]
        %v3624 = vld [vmem:[%s3596 + $0xd8] sm:$0xff]
        %v3625 = vld [vmem:[%s3596 + $0xe0] sm:$0xff]
        %v3626 = vld [vmem:[%s3596 + $0xe8] sm:$0xff]
        %v3627 = vld [vmem:[%s3596 + $0xf0] sm:$0xff]
        %v3628 = vld [vmem:[%s3596 + $0xf8] sm:$0xff]
        %v3661 = vunpack.c.l.b16 %v3597
        %v3662 = vunpack.c.h.b16 %v3597
        %v3663 = vunpack.c.l.b16 %v3598
        %v3664 = vunpack.c.h.b16 %v3598
        %v3665 = vunpack.c.l.b16 %v3599
        %v3666 = vunpack.c.h.b16 %v3599
        %v3667 = vunpack.c.l.b16 %v3600
        %v3668 = vunpack.c.h.b16 %v3600
        %v3669 = vunpack.c.l.b16 %v3601
        %v3670 = vunpack.c.h.b16 %v3601
        %v3671 = vunpack.c.l.b16 %v3602
        %v3672 = vunpack.c.h.b16 %v3602
        %v3673 = vunpack.c.l.b16 %v3603
        %v3674 = vunpack.c.h.b16 %v3603
        %v3675 = vunpack.c.l.b16 %v3604
        %v3676 = vunpack.c.h.b16 %v3604
        %v3677 = vunpack.c.l.b16 %v3605
        %v3678 = vunpack.c.h.b16 %v3605
        %v3679 = vunpack.c.l.b16 %v3606
        %v3680 = vunpack.c.h.b16 %v3606
        %v3681 = vunpack.c.l.b16 %v3607
        %v3682 = vunpack.c.h.b16 %v3607
        %v3683 = vunpack.c.l.b16 %v3608
        %v3684 = vunpack.c.h.b16 %v3608
        %v3685 = vunpack.c.l.b16 %v3609
        %v3686 = vunpack.c.h.b16 %v3609
        %v3687 = vunpack.c.l.b16 %v3610
        %v3688 = vunpack.c.h.b16 %v3610
        %v3689 = vunpack.c.l.b16 %v3611
        %v3690 = vunpack.c.h.b16 %v3611
        %v3691 = vunpack.c.l.b16 %v3612
        %v3692 = vunpack.c.h.b16 %v3612
        %v3693 = vunpack.c.l.b16 %v3613
        %v3694 = vunpack.c.h.b16 %v3613
        %v3695 = vunpack.c.l.b16 %v3614
        %v3696 = vunpack.c.h.b16 %v3614
        %v3697 = vunpack.c.l.b16 %v3615
        %v3698 = vunpack.c.h.b16 %v3615
        %v3699 = vunpack.c.l.b16 %v3616
        %v3700 = vunpack.c.h.b16 %v3616
        %v3701 = vunpack.c.l.b16 %v3617
        %v3702 = vunpack.c.h.b16 %v3617
        %v3703 = vunpack.c.l.b16 %v3618
        %v3704 = vunpack.c.h.b16 %v3618
        %v3705 = vunpack.c.l.b16 %v3619
        %v3706 = vunpack.c.h.b16 %v3619
        %v3707 = vunpack.c.l.b16 %v3620
        %v3708 = vunpack.c.h.b16 %v3620
        %v3709 = vunpack.c.l.b16 %v3621
        %v3710 = vunpack.c.h.b16 %v3621
        %v3711 = vunpack.c.l.b16 %v3622
        %v3712 = vunpack.c.h.b16 %v3622
        %v3713 = vunpack.c.l.b16 %v3623
        %v3714 = vunpack.c.h.b16 %v3623
        %v3715 = vunpack.c.l.b16 %v3624
        %v3716 = vunpack.c.h.b16 %v3624
        %v3717 = vunpack.c.l.b16 %v3625
        %v3718 = vunpack.c.h.b16 %v3625
        %v3719 = vunpack.c.l.b16 %v3626
        %v3720 = vunpack.c.h.b16 %v3626
        %v3721 = vunpack.c.l.b16 %v3627
        %v3722 = vunpack.c.h.b16 %v3627
        %v3723 = vunpack.c.l.b16 %v3628
        %v3724 = vunpack.c.h.b16 %v3628
        %v3725 = vpack.c.b16 %v3663, %v3661
        %v3726 = vpack.c.b16 %v3664, %v3662
        %v3727 = vpack.c.b16 %v3667, %v3665
        %v3728 = vpack.c.b16 %v3668, %v3666
        %v3729 = vpack.c.b16 %v3671, %v3669
        %v3730 = vpack.c.b16 %v3672, %v3670
        %v3731 = vpack.c.b16 %v3675, %v3673
        %v3732 = vpack.c.b16 %v3676, %v3674
        %v3733 = vpack.c.b16 %v3679, %v3677
        %v3734 = vpack.c.b16 %v3680, %v3678
        %v3735 = vpack.c.b16 %v3683, %v3681
        %v3736 = vpack.c.b16 %v3684, %v3682
        %v3737 = vpack.c.b16 %v3687, %v3685
        %v3738 = vpack.c.b16 %v3688, %v3686
        %v3739 = vpack.c.b16 %v3691, %v3689
        %v3740 = vpack.c.b16 %v3692, %v3690
        %v3741 = vpack.c.b16 %v3695, %v3693
        %v3742 = vpack.c.b16 %v3696, %v3694
        %v3743 = vpack.c.b16 %v3699, %v3697
        %v3744 = vpack.c.b16 %v3700, %v3698
        %v3745 = vpack.c.b16 %v3703, %v3701
        %v3746 = vpack.c.b16 %v3704, %v3702
        %v3747 = vpack.c.b16 %v3707, %v3705
        %v3748 = vpack.c.b16 %v3708, %v3706
        %v3749 = vpack.c.b16 %v3711, %v3709
        %v3750 = vpack.c.b16 %v3712, %v3710
        %v3751 = vpack.c.b16 %v3715, %v3713
        %v3752 = vpack.c.b16 %v3716, %v3714
        %v3753 = vpack.c.b16 %v3719, %v3717
        %v3754 = vpack.c.b16 %v3720, %v3718
        %v3755 = vpack.c.b16 %v3723, %v3721
        %v3756 = vpack.c.b16 %v3724, %v3722
        %3789 = vmatprep.subr.bf16.mxu0 %v3726
        %3790 = vmatpush1.bf16.msra.mxu0 %v3725
        %3791 = vmatprep.subr.bf16.mxu0 %v3728
        %3792 = vmatpush1.bf16.msra.mxu0 %v3727
        %3793 = vmatprep.subr.bf16.mxu0 %v3730
        %3794 = vmatpush1.bf16.msra.mxu0 %v3729
        %3795 = vmatprep.subr.bf16.mxu0 %v3732
        %3796 = vmatpush1.bf16.msra.mxu0 %v3731
        %3797 = vmatprep.subr.bf16.mxu0 %v3734
        %3798 = vmatpush1.bf16.msra.mxu0 %v3733
        %3799 = vmatprep.subr.bf16.mxu0 %v3736
        %3800 = vmatpush1.bf16.msra.mxu0 %v3735
        %3801 = vmatprep.subr.bf16.mxu0 %v3738
        %3802 = vmatpush1.bf16.msra.mxu0 %v3737
        %3803 = vmatprep.subr.bf16.mxu0 %v3740
        %3804 = vmatpush1.bf16.msra.mxu0 %v3739
        %3805 = vmatprep.subr.bf16.mxu0 %v3742
        %3806 = vmatpush1.bf16.msra.mxu0 %v3741
        %3807 = vmatprep.subr.bf16.mxu0 %v3744
        %3808 = vmatpush1.bf16.msra.mxu0 %v3743
        %3809 = vmatprep.subr.bf16.mxu0 %v3746
        %3810 = vmatpush1.bf16.msra.mxu0 %v3745
        %3811 = vmatprep.subr.bf16.mxu0 %v3748
        %3812 = vmatpush1.bf16.msra.mxu0 %v3747
        %3813 = vmatprep.subr.bf16.mxu0 %v3750
        %3814 = vmatpush1.bf16.msra.mxu0 %v3749
        %3815 = vmatprep.subr.bf16.mxu0 %v3752
        %3816 = vmatpush1.bf16.msra.mxu0 %v3751
        %3817 = vmatprep.subr.bf16.mxu0 %v3754
        %3818 = vmatpush1.bf16.msra.mxu0 %v3753
        %3819 = vmatprep.subr.bf16.mxu0 %v3756
        %3820 = vmatpush1.bf16.msra.mxu0 %v3755
        %3821 = vmatprep.mubr.bf16.mxu0 %v3595
        %3822 = vmatmul.mubr.bf16.gmra.mrb[0].mxu0 %v3594
        %v3823 = vpop.f32.mrb[0].mxu0
        %v3824 = vadd.f32 0.0, %v3823
        %v3825 = vpop.f32.mrb[0].mxu0
        %v3826 = vadd.f32 0.0, %v3825
        %v3827 = vpop.f32.mrb[0].mxu0
        %v3828 = vpop.f32.mrb[0].mxu0
        %3829 = vdwg.mxu0
        %v3862 = vunpack.c.l.b16 %v3516
        %v3863 = vunpack.c.h.b16 %v3516
        %v3864 = vunpack.c.l.b16 %v3517
        %v3865 = vunpack.c.h.b16 %v3517
        %v3866 = vunpack.c.l.b16 %v3518
        %v3867 = vunpack.c.h.b16 %v3518
        %v3868 = vunpack.c.l.b16 %v3519
        %v3869 = vunpack.c.h.b16 %v3519
        %v3870 = vunpack.c.l.b16 %v3520
        %v3871 = vunpack.c.h.b16 %v3520
        %v3872 = vunpack.c.l.b16 %v3521
        %v3873 = vunpack.c.h.b16 %v3521
        %v3874 = vunpack.c.l.b16 %v3522
        %v3875 = vunpack.c.h.b16 %v3522
        %v3876 = vunpack.c.l.b16 %v3523
        %v3877 = vunpack.c.h.b16 %v3523
        %v3878 = vunpack.c.l.b16 %v3524
        %v3879 = vunpack.c.h.b16 %v3524
        %v3880 = vunpack.c.l.b16 %v3525
        %v3881 = vunpack.c.h.b16 %v3525
        %v3882 = vunpack.c.l.b16 %v3526
        %v3883 = vunpack.c.h.b16 %v3526
        %v3884 = vunpack.c.l.b16 %v3527
        %v3885 = vunpack.c.h.b16 %v3527
        %v3886 = vunpack.c.l.b16 %v3528
        %v3887 = vunpack.c.h.b16 %v3528
        %v3888 = vunpack.c.l.b16 %v3529
        %v3889 = vunpack.c.h.b16 %v3529
        %v3890 = vunpack.c.l.b16 %v3530
        %v3891 = vunpack.c.h.b16 %v3530
        %v3892 = vunpack.c.l.b16 %v3531
        %v3893 = vunpack.c.h.b16 %v3531
        %v3894 = vunpack.c.l.b16 %v3532
        %v3895 = vunpack.c.h.b16 %v3532
        %v3896 = vunpack.c.l.b16 %v3533
        %v3897 = vunpack.c.h.b16 %v3533
        %v3898 = vunpack.c.l.b16 %v3534
        %v3899 = vunpack.c.h.b16 %v3534
        %v3900 = vunpack.c.l.b16 %v3535
        %v3901 = vunpack.c.h.b16 %v3535
        %v3902 = vunpack.c.l.b16 %v3536
        %v3903 = vunpack.c.h.b16 %v3536
        %v3904 = vunpack.c.l.b16 %v3537
        %v3905 = vunpack.c.h.b16 %v3537
        %v3906 = vunpack.c.l.b16 %v3538
        %v3907 = vunpack.c.h.b16 %v3538
        %v3908 = vunpack.c.l.b16 %v3539
        %v3909 = vunpack.c.h.b16 %v3539
        %v3910 = vunpack.c.l.b16 %v3540
        %v3911 = vunpack.c.h.b16 %v3540
        %v3912 = vunpack.c.l.b16 %v3541
        %v3913 = vunpack.c.h.b16 %v3541
        %v3914 = vunpack.c.l.b16 %v3542
        %v3915 = vunpack.c.h.b16 %v3542
        %v3916 = vunpack.c.l.b16 %v3543
        %v3917 = vunpack.c.h.b16 %v3543
        %v3918 = vunpack.c.l.b16 %v3544
        %v3919 = vunpack.c.h.b16 %v3544
        %v3920 = vunpack.c.l.b16 %v3545
        %v3921 = vunpack.c.h.b16 %v3545
        %v3922 = vunpack.c.l.b16 %v3546
        %v3923 = vunpack.c.h.b16 %v3546
        %v3924 = vunpack.c.l.b16 %v3547
        %v3925 = vunpack.c.h.b16 %v3547
        %v3926 = vpack.c.b16 %v3864, %v3862
        %v3927 = vpack.c.b16 %v3865, %v3863
        %v3928 = vpack.c.b16 %v3868, %v3866
        %v3929 = vpack.c.b16 %v3869, %v3867
        %v3930 = vpack.c.b16 %v3872, %v3870
        %v3931 = vpack.c.b16 %v3873, %v3871
        %v3932 = vpack.c.b16 %v3876, %v3874
        %v3933 = vpack.c.b16 %v3877, %v3875
        %v3934 = vpack.c.b16 %v3880, %v3878
        %v3935 = vpack.c.b16 %v3881, %v3879
        %v3936 = vpack.c.b16 %v3884, %v3882
        %v3937 = vpack.c.b16 %v3885, %v3883
        %v3938 = vpack.c.b16 %v3888, %v3886
        %v3939 = vpack.c.b16 %v3889, %v3887
        %v3940 = vpack.c.b16 %v3892, %v3890
        %v3941 = vpack.c.b16 %v3893, %v3891
        %v3942 = vpack.c.b16 %v3896, %v3894
        %v3943 = vpack.c.b16 %v3897, %v3895
        %v3944 = vpack.c.b16 %v3900, %v3898
        %v3945 = vpack.c.b16 %v3901, %v3899
        %v3946 = vpack.c.b16 %v3904, %v3902
        %v3947 = vpack.c.b16 %v3905, %v3903
        %v3948 = vpack.c.b16 %v3908, %v3906
        %v3949 = vpack.c.b16 %v3909, %v3907
        %v3950 = vpack.c.b16 %v3912, %v3910
        %v3951 = vpack.c.b16 %v3913, %v3911
        %v3952 = vpack.c.b16 %v3916, %v3914
        %v3953 = vpack.c.b16 %v3917, %v3915
        %v3954 = vpack.c.b16 %v3920, %v3918
        %v3955 = vpack.c.b16 %v3921, %v3919
        %v3956 = vpack.c.b16 %v3924, %v3922
        %v3957 = vpack.c.b16 %v3925, %v3923
        %3990 = vmatprep.subr.bf16.mxu0 %v3927
        %3991 = vmatpush1.bf16.msra.mxu0 %v3926
        %3992 = vmatprep.subr.bf16.mxu0 %v3929
        %3993 = vmatpush1.bf16.msra.mxu0 %v3928
        %3994 = vmatprep.subr.bf16.mxu0 %v3931
        %3995 = vmatpush1.bf16.msra.mxu0 %v3930
        %3996 = vmatprep.subr.bf16.mxu0 %v3933
        %3997 = vmatpush1.bf16.msra.mxu0 %v3932
        %3998 = vmatprep.subr.bf16.mxu0 %v3935
        %3999 = vmatpush1.bf16.msra.mxu0 %v3934
        %4000 = vmatprep.subr.bf16.mxu0 %v3937
        %4001 = vmatpush1.bf16.msra.mxu0 %v3936
        %4002 = vmatprep.subr.bf16.mxu0 %v3939
        %4003 = vmatpush1.bf16.msra.mxu0 %v3938
        %4004 = vmatprep.subr.bf16.mxu0 %v3941
        %4005 = vmatpush1.bf16.msra.mxu0 %v3940
        %4006 = vmatprep.subr.bf16.mxu0 %v3943
        %4007 = vmatpush1.bf16.msra.mxu0 %v3942
        %4008 = vmatprep.subr.bf16.mxu0 %v3945
        %4009 = vmatpush1.bf16.msra.mxu0 %v3944
        %4010 = vmatprep.subr.bf16.mxu0 %v3947
        %4011 = vmatpush1.bf16.msra.mxu0 %v3946
        %4012 = vmatprep.subr.bf16.mxu0 %v3949
        %4013 = vmatpush1.bf16.msra.mxu0 %v3948
        %4014 = vmatprep.subr.bf16.mxu0 %v3951
        %4015 = vmatpush1.bf16.msra.mxu0 %v3950
        %4016 = vmatprep.subr.bf16.mxu0 %v3953
        %4017 = vmatpush1.bf16.msra.mxu0 %v3952
        %4018 = vmatprep.subr.bf16.mxu0 %v3955
        %4019 = vmatpush1.bf16.msra.mxu0 %v3954
        %4020 = vmatprep.subr.bf16.mxu0 %v3957
        %4021 = vmatpush1.bf16.msra.mxu0 %v3956
        %4022 = vmatprep.mubr.bf16.mxu0 %v3515
        %4023 = vmatmul.mubr.bf16.gmra.mrb[0].mxu0 %v3514
        %v4024 = vpop.f32.mrb[0].mxu0
        %v4025 = vadd.f32 %v3824, %v4024
        %v4026 = vpop.f32.mrb[0].mxu0
        %v4027 = vadd.f32 %v3826, %v4026
        %v4028 = vpop.f32.mrb[0].mxu0
        %v4029 = vpop.f32.mrb[0].mxu0
        %4030 = vdwg.mxu0
        %s4031 = scalar_lea.vmem %s9, 8
        %v4032 = vld [vmem:[%s4031] sm:$0xf]
        %v4034 = vsel %vm3469, %v4032, 0
        %4036 = vmatprep.subr.bf16.mxu0 %v3467
        %4037 = vmatpush1.bf16.msra.mxu0 %v3466
        %4038 = vmatprep.subr.bf16.mxu0 0
        %4039 = vmatpush1.bf16.msra.mxu0 0
        %4040 = vmatprep.subr.bf16.mxu0 0
        %4041 = vmatpush1.bf16.msra.mxu0 0
        %4042 = vmatprep.subr.bf16.mxu0 0
        %4043 = vmatpush1.bf16.msra.mxu0 0
        %4044 = vmatprep.subr.bf16.mxu0 0
        %4045 = vmatpush1.bf16.msra.mxu0 0
        %4046 = vmatprep.subr.bf16.mxu0 0
        %4047 = vmatpush1.bf16.msra.mxu0 0
        %4048 = vmatprep.subr.bf16.mxu0 0
        %4049 = vmatpush1.bf16.msra.mxu0 0
        %4050 = vmatprep.subr.bf16.mxu0 0
        %4051 = vmatpush1.bf16.msra.mxu0 0
        %4052 = vmatprep.subr.bf16.mxu0 0
        %4053 = vmatpush1.bf16.msra.mxu0 0
        %4054 = vmatprep.subr.bf16.mxu0 0
        %4055 = vmatpush1.bf16.msra.mxu0 0
        %4056 = vmatprep.subr.bf16.mxu0 0
        %4057 = vmatpush1.bf16.msra.mxu0 0
        %4058 = vmatprep.subr.bf16.mxu0 0
        %4059 = vmatpush1.bf16.msra.mxu0 0
        %4060 = vmatprep.subr.bf16.mxu0 0
        %4061 = vmatpush1.bf16.msra.mxu0 0
        %4062 = vmatprep.subr.bf16.mxu0 0
        %4063 = vmatpush1.bf16.msra.mxu0 0
        %4064 = vmatprep.subr.bf16.mxu0 0
        %4065 = vmatpush1.bf16.msra.mxu0 0
        %4066 = vmatprep.subr.bf16.mxu0 0
        %4067 = vmatpush1.bf16.msra.mxu0 0
        %4068 = vmatprep.mubr.bf16.mxu0 0
        %4069 = vmatmul.mubr.bf16.gmra.mrb[0].mxu0 %v4034
        %v4070 = vpop.f32.mrb[0].mxu0
        %v4071 = vadd.f32 0.0, %v4070
        %v4072 = vpop.f32.mrb[0].mxu0
        %v4073 = vadd.f32 0.0, %v4072
        %v4074 = vpop.f32.mrb[0].mxu0
        %v4075 = vpop.f32.mrb[0].mxu0
        %4076 = vdwg.mxu0
        %v4077 = vpack.c.bf16 %v4071, %v4071
        %v4078 = vpack.c.bf16 %v4073, %v4073
        %s4079 = scalar_lea.vmem [#allocation7], 512
        %v4080 = vld [vmem:[%s4079] sm:$0xff]
        %v4081 = vld [vmem:[%s4079 + $0x8] sm:$0xff]
        %v4082 = vld [vmem:[%s4079 + $0x10] sm:$0xff]
        %v4083 = vld [vmem:[%s4079 + $0x18] sm:$0xff]
        %v4084 = vld [vmem:[%s4079 + $0x20] sm:$0xff]
        %v4085 = vld [vmem:[%s4079 + $0x28] sm:$0xff]
        %v4086 = vld [vmem:[%s4079 + $0x30] sm:$0xff]
        %v4087 = vld [vmem:[%s4079 + $0x38] sm:$0xff]
        %v4088 = vld [vmem:[%s4079 + $0x40] sm:$0xff]
        %v4089 = vld [vmem:[%s4079 + $0x48] sm:$0xff]
        %v4090 = vld [vmem:[%s4079 + $0x50] sm:$0xff]
        %v4091 = vld [vmem:[%s4079 + $0x58] sm:$0xff]
        %v4092 = vld [vmem:[%s4079 + $0x60] sm:$0xff]
        %v4093 = vld [vmem:[%s4079 + $0x68] sm:$0xff]
        %v4094 = vld [vmem:[%s4079 + $0x70] sm:$0xff]
        %v4095 = vld [vmem:[%s4079 + $0x78] sm:$0xff]
        %v4096 = vld [vmem:[%s4079 + $0x80] sm:$0xff]
        %v4097 = vld [vmem:[%s4079 + $0x88] sm:$0xff]
        %v4098 = vld [vmem:[%s4079 + $0x90] sm:$0xff]
        %v4099 = vld [vmem:[%s4079 + $0x98] sm:$0xff]
        %v4100 = vld [vmem:[%s4079 + $0xa0] sm:$0xff]
        %v4101 = vld [vmem:[%s4079 + $0xa8] sm:$0xff]
        %v4102 = vld [vmem:[%s4079 + $0xb0] sm:$0xff]
        %v4103 = vld [vmem:[%s4079 + $0xb8] sm:$0xff]
        %v4104 = vld [vmem:[%s4079 + $0xc0] sm:$0xff]
        %v4105 = vld [vmem:[%s4079 + $0xc8] sm:$0xff]
        %v4106 = vld [vmem:[%s4079 + $0xd0] sm:$0xff]
        %v4107 = vld [vmem:[%s4079 + $0xd8] sm:$0xff]
        %v4108 = vld [vmem:[%s4079 + $0xe0] sm:$0xff]
        %v4109 = vld [vmem:[%s4079 + $0xe8] sm:$0xff]
        %v4110 = vld [vmem:[%s4079 + $0xf0] sm:$0xff]
        %v4111 = vld [vmem:[%s4079 + $0xf8] sm:$0xff]
        %v4144 = vunpack.c.l.b16 %v4080
        %v4145 = vunpack.c.h.b16 %v4080
        %v4146 = vunpack.c.l.b16 %v4081
        %v4147 = vunpack.c.h.b16 %v4081
        %v4148 = vunpack.c.l.b16 %v4082
        %v4149 = vunpack.c.h.b16 %v4082
        %v4150 = vunpack.c.l.b16 %v4083
        %v4151 = vunpack.c.h.b16 %v4083
        %v4152 = vunpack.c.l.b16 %v4084
        %v4153 = vunpack.c.h.b16 %v4084
        %v4154 = vunpack.c.l.b16 %v4085
        %v4155 = vunpack.c.h.b16 %v4085
        %v4156 = vunpack.c.l.b16 %v4086
        %v4157 = vunpack.c.h.b16 %v4086
        %v4158 = vunpack.c.l.b16 %v4087
        %v4159 = vunpack.c.h.b16 %v4087
        %v4160 = vunpack.c.l.b16 %v4088
        %v4161 = vunpack.c.h.b16 %v4088
        %v4162 = vunpack.c.l.b16 %v4089
        %v4163 = vunpack.c.h.b16 %v4089
        %v4164 = vunpack.c.l.b16 %v4090
        %v4165 = vunpack.c.h.b16 %v4090
        %v4166 = vunpack.c.l.b16 %v4091
        %v4167 = vunpack.c.h.b16 %v4091
        %v4168 = vunpack.c.l.b16 %v4092
        %v4169 = vunpack.c.h.b16 %v4092
        %v4170 = vunpack.c.l.b16 %v4093
        %v4171 = vunpack.c.h.b16 %v4093
        %v4172 = vunpack.c.l.b16 %v4094
        %v4173 = vunpack.c.h.b16 %v4094
        %v4174 = vunpack.c.l.b16 %v4095
        %v4175 = vunpack.c.h.b16 %v4095
        %v4176 = vunpack.c.l.b16 %v4096
        %v4177 = vunpack.c.h.b16 %v4096
        %v4178 = vunpack.c.l.b16 %v4097
        %v4179 = vunpack.c.h.b16 %v4097
        %v4180 = vunpack.c.l.b16 %v4098
        %v4181 = vunpack.c.h.b16 %v4098
        %v4182 = vunpack.c.l.b16 %v4099
        %v4183 = vunpack.c.h.b16 %v4099
        %v4184 = vunpack.c.l.b16 %v4100
        %v4185 = vunpack.c.h.b16 %v4100
        %v4186 = vunpack.c.l.b16 %v4101
        %v4187 = vunpack.c.h.b16 %v4101
        %v4188 = vunpack.c.l.b16 %v4102
        %v4189 = vunpack.c.h.b16 %v4102
        %v4190 = vunpack.c.l.b16 %v4103
        %v4191 = vunpack.c.h.b16 %v4103
        %v4192 = vunpack.c.l.b16 %v4104
        %v4193 = vunpack.c.h.b16 %v4104
        %v4194 = vunpack.c.l.b16 %v4105
        %v4195 = vunpack.c.h.b16 %v4105
        %v4196 = vunpack.c.l.b16 %v4106
        %v4197 = vunpack.c.h.b16 %v4106
        %v4198 = vunpack.c.l.b16 %v4107
        %v4199 = vunpack.c.h.b16 %v4107
        %v4200 = vunpack.c.l.b16 %v4108
        %v4201 = vunpack.c.h.b16 %v4108
        %v4202 = vunpack.c.l.b16 %v4109
        %v4203 = vunpack.c.h.b16 %v4109
        %v4204 = vunpack.c.l.b16 %v4110
        %v4205 = vunpack.c.h.b16 %v4110
        %v4206 = vunpack.c.l.b16 %v4111
        %v4207 = vunpack.c.h.b16 %v4111
        %v4208 = vpack.c.b16 %v4146, %v4144
        %v4209 = vpack.c.b16 %v4147, %v4145
        %v4210 = vpack.c.b16 %v4150, %v4148
        %v4211 = vpack.c.b16 %v4151, %v4149
        %v4212 = vpack.c.b16 %v4154, %v4152
        %v4213 = vpack.c.b16 %v4155, %v4153
        %v4214 = vpack.c.b16 %v4158, %v4156
        %v4215 = vpack.c.b16 %v4159, %v4157
        %v4216 = vpack.c.b16 %v4162, %v4160
        %v4217 = vpack.c.b16 %v4163, %v4161
        %v4218 = vpack.c.b16 %v4166, %v4164
        %v4219 = vpack.c.b16 %v4167, %v4165
        %v4220 = vpack.c.b16 %v4170, %v4168
        %v4221 = vpack.c.b16 %v4171, %v4169
        %v4222 = vpack.c.b16 %v4174, %v4172
        %v4223 = vpack.c.b16 %v4175, %v4173
        %v4224 = vpack.c.b16 %v4178, %v4176
        %v4225 = vpack.c.b16 %v4179, %v4177
        %v4226 = vpack.c.b16 %v4182, %v4180
        %v4227 = vpack.c.b16 %v4183, %v4181
        %v4228 = vpack.c.b16 %v4186, %v4184
        %v4229 = vpack.c.b16 %v4187, %v4185
        %v4230 = vpack.c.b16 %v4190, %v4188
        %v4231 = vpack.c.b16 %v4191, %v4189
        %v4232 = vpack.c.b16 %v4194, %v4192
        %v4233 = vpack.c.b16 %v4195, %v4193
        %v4234 = vpack.c.b16 %v4198, %v4196
        %v4235 = vpack.c.b16 %v4199, %v4197
        %v4236 = vpack.c.b16 %v4202, %v4200
        %v4237 = vpack.c.b16 %v4203, %v4201
        %v4238 = vpack.c.b16 %v4206, %v4204
        %v4239 = vpack.c.b16 %v4207, %v4205
        %4272 = vmatprep.subr.bf16.mxu0 %v4209
        %4273 = vmatpush1.bf16.msra.mxu0 %v4208
        %4274 = vmatprep.subr.bf16.mxu0 %v4211
        %4275 = vmatpush1.bf16.msra.mxu0 %v4210
        %4276 = vmatprep.subr.bf16.mxu0 %v4213
        %4277 = vmatpush1.bf16.msra.mxu0 %v4212
        %4278 = vmatprep.subr.bf16.mxu0 %v4215
        %4279 = vmatpush1.bf16.msra.mxu0 %v4214
        %4280 = vmatprep.subr.bf16.mxu0 %v4217
        %4281 = vmatpush1.bf16.msra.mxu0 %v4216
        %4282 = vmatprep.subr.bf16.mxu0 %v4219
        %4283 = vmatpush1.bf16.msra.mxu0 %v4218
        %4284 = vmatprep.subr.bf16.mxu0 %v4221
        %4285 = vmatpush1.bf16.msra.mxu0 %v4220
        %4286 = vmatprep.subr.bf16.mxu0 %v4223
        %4287 = vmatpush1.bf16.msra.mxu0 %v4222
        %4288 = vmatprep.subr.bf16.mxu0 %v4225
        %4289 = vmatpush1.bf16.msra.mxu0 %v4224
        %4290 = vmatprep.subr.bf16.mxu0 %v4227
        %4291 = vmatpush1.bf16.msra.mxu0 %v4226
        %4292 = vmatprep.subr.bf16.mxu0 %v4229
        %4293 = vmatpush1.bf16.msra.mxu0 %v4228
        %4294 = vmatprep.subr.bf16.mxu0 %v4231
        %4295 = vmatpush1.bf16.msra.mxu0 %v4230
        %4296 = vmatprep.subr.bf16.mxu0 %v4233
        %4297 = vmatpush1.bf16.msra.mxu0 %v4232
        %4298 = vmatprep.subr.bf16.mxu0 %v4235
        %4299 = vmatpush1.bf16.msra.mxu0 %v4234
        %4300 = vmatprep.subr.bf16.mxu0 %v4237
        %4301 = vmatpush1.bf16.msra.mxu0 %v4236
        %4302 = vmatprep.subr.bf16.mxu0 %v4239
        %4303 = vmatpush1.bf16.msra.mxu0 %v4238
        %4304 = vmatprep.mubr.bf16.mxu0 %v4078
        %4305 = vmatmul.mubr.bf16.gmra.mrb[0].mxu0 %v4077
        %v4306 = vpop.f32.mrb[0].mxu0
        %v4307 = vadd.f32 0.0, %v4306
        %v4308 = vpop.f32.mrb[0].mxu0
        %v4309 = vadd.f32 0.0, %v4308
        %v4310 = vpop.f32.mrb[0].mxu0
        %v4311 = vpop.f32.mrb[0].mxu0
        %4312 = vdwg.mxu0
        %v4313 = vadd.f32 %v4025, %v4307
        %v4314 = vadd.f32 %v4027, %v4309
        %s4315 = scalar_lea.vmem %s9, 12
        %v4316 = vld [vmem:[%s4315] sm:$0xf]
        %v4318 = vsel %vm3469, %v4316, 0
        %4320 = vmatprep.subr.bf16.mxu0 %v3467
        %4321 = vmatpush1.bf16.msra.mxu0 %v3466
        %4322 = vmatprep.subr.bf16.mxu0 0
        %4323 = vmatpush1.bf16.msra.mxu0 0
        %4324 = vmatprep.subr.bf16.mxu0 0
        %4325 = vmatpush1.bf16.msra.mxu0 0
        %4326 = vmatprep.subr.bf16.mxu0 0
        %4327 = vmatpush1.bf16.msra.mxu0 0
        %4328 = vmatprep.subr.bf16.mxu0 0
        %4329 = vmatpush1.bf16.msra.mxu0 0
        %4330 = vmatprep.subr.bf16.mxu0 0
        %4331 = vmatpush1.bf16.msra.mxu0 0
        %4332 = vmatprep.subr.bf16.mxu0 0
        %4333 = vmatpush1.bf16.msra.mxu0 0
        %4334 = vmatprep.subr.bf16.mxu0 0
        %4335 = vmatpush1.bf16.msra.mxu0 0
        %4336 = vmatprep.subr.bf16.mxu0 0
        %4337 = vmatpush1.bf16.msra.mxu0 0
        %4338 = vmatprep.subr.bf16.mxu0 0
        %4339 = vmatpush1.bf16.msra.mxu0 0
        %4340 = vmatprep.subr.bf16.mxu0 0
        %4341 = vmatpush1.bf16.msra.mxu0 0
        %4342 = vmatprep.subr.bf16.mxu0 0
        %4343 = vmatpush1.bf16.msra.mxu0 0
        %4344 = vmatprep.subr.bf16.mxu0 0
        %4345 = vmatpush1.bf16.msra.mxu0 0
        %4346 = vmatprep.subr.bf16.mxu0 0
        %4347 = vmatpush1.bf16.msra.mxu0 0
        %4348 = vmatprep.subr.bf16.mxu0 0
        %4349 = vmatpush1.bf16.msra.mxu0 0
        %4350 = vmatprep.subr.bf16.mxu0 0
        %4351 = vmatpush1.bf16.msra.mxu0 0
        %4352 = vmatprep.mubr.bf16.mxu0 0
        %4353 = vmatmul.mubr.bf16.gmra.mrb[0].mxu0 %v4318
        %v4354 = vpop.f32.mrb[0].mxu0
        %v4355 = vadd.f32 0.0, %v4354
        %v4356 = vpop.f32.mrb[0].mxu0
        %v4357 = vadd.f32 0.0, %v4356
        %v4358 = vpop.f32.mrb[0].mxu0
        %v4359 = vpop.f32.mrb[0].mxu0
        %4360 = vdwg.mxu0
        %v4361 = vpack.c.bf16 %v4355, %v4355
        %v4362 = vpack.c.bf16 %v4357, %v4357
        %s4363 = scalar_lea.vmem [#allocation7], 768
        %v4364 = vld [vmem:[%s4363] sm:$0xff]
        %v4365 = vld [vmem:[%s4363 + $0x8] sm:$0xff]
        %v4366 = vld [vmem:[%s4363 + $0x10] sm:$0xff]
        %v4367 = vld [vmem:[%s4363 + $0x18] sm:$0xff]
        %v4368 = vld [vmem:[%s4363 + $0x20] sm:$0xff]
        %v4369 = vld [vmem:[%s4363 + $0x28] sm:$0xff]
        %v4370 = vld [vmem:[%s4363 + $0x30] sm:$0xff]
        %v4371 = vld [vmem:[%s4363 + $0x38] sm:$0xff]
        %v4372 = vld [vmem:[%s4363 + $0x40] sm:$0xff]
        %v4373 = vld [vmem:[%s4363 + $0x48] sm:$0xff]
        %v4374 = vld [vmem:[%s4363 + $0x50] sm:$0xff]
        %v4375 = vld [vmem:[%s4363 + $0x58] sm:$0xff]
        %v4376 = vld [vmem:[%s4363 + $0x60] sm:$0xff]
        %v4377 = vld [vmem:[%s4363 + $0x68] sm:$0xff]
        %v4378 = vld [vmem:[%s4363 + $0x70] sm:$0xff]
        %v4379 = vld [vmem:[%s4363 + $0x78] sm:$0xff]
        %v4380 = vld [vmem:[%s4363 + $0x80] sm:$0xff]
        %v4381 = vld [vmem:[%s4363 + $0x88] sm:$0xff]
        %v4382 = vld [vmem:[%s4363 + $0x90] sm:$0xff]
        %v4383 = vld [vmem:[%s4363 + $0x98] sm:$0xff]
        %v4384 = vld [vmem:[%s4363 + $0xa0] sm:$0xff]
        %v4385 = vld [vmem:[%s4363 + $0xa8] sm:$0xff]
        %v4386 = vld [vmem:[%s4363 + $0xb0] sm:$0xff]
        %v4387 = vld [vmem:[%s4363 + $0xb8] sm:$0xff]
        %v4388 = vld [vmem:[%s4363 + $0xc0] sm:$0xff]
        %v4389 = vld [vmem:[%s4363 + $0xc8] sm:$0xff]
        %v4390 = vld [vmem:[%s4363 + $0xd0] sm:$0xff]
        %v4391 = vld [vmem:[%s4363 + $0xd8] sm:$0xff]
        %v4392 = vld [vmem:[%s4363 + $0xe0] sm:$0xff]
        %v4393 = vld [vmem:[%s4363 + $0xe8] sm:$0xff]
        %v4394 = vld [vmem:[%s4363 + $0xf0] sm:$0xff]
        %v4395 = vld [vmem:[%s4363 + $0xf8] sm:$0xff]
        %v4428 = vunpack.c.l.b16 %v4364
        %v4429 = vunpack.c.h.b16 %v4364
        %v4430 = vunpack.c.l.b16 %v4365
        %v4431 = vunpack.c.h.b16 %v4365
        %v4432 = vunpack.c.l.b16 %v4366
        %v4433 = vunpack.c.h.b16 %v4366
        %v4434 = vunpack.c.l.b16 %v4367
        %v4435 = vunpack.c.h.b16 %v4367
        %v4436 = vunpack.c.l.b16 %v4368
        %v4437 = vunpack.c.h.b16 %v4368
        %v4438 = vunpack.c.l.b16 %v4369
        %v4439 = vunpack.c.h.b16 %v4369
        %v4440 = vunpack.c.l.b16 %v4370
        %v4441 = vunpack.c.h.b16 %v4370
        %v4442 = vunpack.c.l.b16 %v4371
        %v4443 = vunpack.c.h.b16 %v4371
        %v4444 = vunpack.c.l.b16 %v4372
        %v4445 = vunpack.c.h.b16 %v4372
        %v4446 = vunpack.c.l.b16 %v4373
        %v4447 = vunpack.c.h.b16 %v4373
        %v4448 = vunpack.c.l.b16 %v4374
        %v4449 = vunpack.c.h.b16 %v4374
        %v4450 = vunpack.c.l.b16 %v4375
        %v4451 = vunpack.c.h.b16 %v4375
        %v4452 = vunpack.c.l.b16 %v4376
        %v4453 = vunpack.c.h.b16 %v4376
        %v4454 = vunpack.c.l.b16 %v4377
        %v4455 = vunpack.c.h.b16 %v4377
        %v4456 = vunpack.c.l.b16 %v4378
        %v4457 = vunpack.c.h.b16 %v4378
        %v4458 = vunpack.c.l.b16 %v4379
        %v4459 = vunpack.c.h.b16 %v4379
        %v4460 = vunpack.c.l.b16 %v4380
        %v4461 = vunpack.c.h.b16 %v4380
        %v4462 = vunpack.c.l.b16 %v4381
        %v4463 = vunpack.c.h.b16 %v4381
        %v4464 = vunpack.c.l.b16 %v4382
        %v4465 = vunpack.c.h.b16 %v4382
        %v4466 = vunpack.c.l.b16 %v4383
        %v4467 = vunpack.c.h.b16 %v4383
        %v4468 = vunpack.c.l.b16 %v4384
        %v4469 = vunpack.c.h.b16 %v4384
        %v4470 = vunpack.c.l.b16 %v4385
        %v4471 = vunpack.c.h.b16 %v4385
        %v4472 = vunpack.c.l.b16 %v4386
        %v4473 = vunpack.c.h.b16 %v4386
        %v4474 = vunpack.c.l.b16 %v4387
        %v4475 = vunpack.c.h.b16 %v4387
        %v4476 = vunpack.c.l.b16 %v4388
        %v4477 = vunpack.c.h.b16 %v4388
        %v4478 = vunpack.c.l.b16 %v4389
        %v4479 = vunpack.c.h.b16 %v4389
        %v4480 = vunpack.c.l.b16 %v4390
        %v4481 = vunpack.c.h.b16 %v4390
        %v4482 = vunpack.c.l.b16 %v4391
        %v4483 = vunpack.c.h.b16 %v4391
        %v4484 = vunpack.c.l.b16 %v4392
        %v4485 = vunpack.c.h.b16 %v4392
        %v4486 = vunpack.c.l.b16 %v4393
        %v4487 = vunpack.c.h.b16 %v4393
        %v4488 = vunpack.c.l.b16 %v4394
        %v4489 = vunpack.c.h.b16 %v4394
        %v4490 = vunpack.c.l.b16 %v4395
        %v4491 = vunpack.c.h.b16 %v4395
        %v4492 = vpack.c.b16 %v4430, %v4428
        %v4493 = vpack.c.b16 %v4431, %v4429
        %v4494 = vpack.c.b16 %v4434, %v4432
        %v4495 = vpack.c.b16 %v4435, %v4433
        %v4496 = vpack.c.b16 %v4438, %v4436
        %v4497 = vpack.c.b16 %v4439, %v4437
        %v4498 = vpack.c.b16 %v4442, %v4440
        %v4499 = vpack.c.b16 %v4443, %v4441
        %v4500 = vpack.c.b16 %v4446, %v4444
        %v4501 = vpack.c.b16 %v4447, %v4445
        %v4502 = vpack.c.b16 %v4450, %v4448
        %v4503 = vpack.c.b16 %v4451, %v4449
        %v4504 = vpack.c.b16 %v4454, %v4452
        %v4505 = vpack.c.b16 %v4455, %v4453
        %v4506 = vpack.c.b16 %v4458, %v4456
        %v4507 = vpack.c.b16 %v4459, %v4457
        %v4508 = vpack.c.b16 %v4462, %v4460
        %v4509 = vpack.c.b16 %v4463, %v4461
        %v4510 = vpack.c.b16 %v4466, %v4464
        %v4511 = vpack.c.b16 %v4467, %v4465
        %v4512 = vpack.c.b16 %v4470, %v4468
        %v4513 = vpack.c.b16 %v4471, %v4469
        %v4514 = vpack.c.b16 %v4474, %v4472
        %v4515 = vpack.c.b16 %v4475, %v4473
        %v4516 = vpack.c.b16 %v4478, %v4476
        %v4517 = vpack.c.b16 %v4479, %v4477
        %v4518 = vpack.c.b16 %v4482, %v4480
        %v4519 = vpack.c.b16 %v4483, %v4481
        %v4520 = vpack.c.b16 %v4486, %v4484
        %v4521 = vpack.c.b16 %v4487, %v4485
        %v4522 = vpack.c.b16 %v4490, %v4488
        %v4523 = vpack.c.b16 %v4491, %v4489
        %4556 = vmatprep.subr.bf16.mxu0 %v4493
        %4557 = vmatpush1.bf16.msra.mxu0 %v4492
        %4558 = vmatprep.subr.bf16.mxu0 %v4495
        %4559 = vmatpush1.bf16.msra.mxu0 %v4494
        %4560 = vmatprep.subr.bf16.mxu0 %v4497
        %4561 = vmatpush1.bf16.msra.mxu0 %v4496
        %4562 = vmatprep.subr.bf16.mxu0 %v4499
        %4563 = vmatpush1.bf16.msra.mxu0 %v4498
        %4564 = vmatprep.subr.bf16.mxu0 %v4501
        %4565 = vmatpush1.bf16.msra.mxu0 %v4500
        %4566 = vmatprep.subr.bf16.mxu0 %v4503
        %4567 = vmatpush1.bf16.msra.mxu0 %v4502
        %4568 = vmatprep.subr.bf16.mxu0 %v4505
        %4569 = vmatpush1.bf16.msra.mxu0 %v4504
        %4570 = vmatprep.subr.bf16.mxu0 %v4507
        %4571 = vmatpush1.bf16.msra.mxu0 %v4506
        %4572 = vmatprep.subr.bf16.mxu0 %v4509
        %4573 = vmatpush1.bf16.msra.mxu0 %v4508
        %4574 = vmatprep.subr.bf16.mxu0 %v4511
        %4575 = vmatpush1.bf16.msra.mxu0 %v4510
        %4576 = vmatprep.subr.bf16.mxu0 %v4513
        %4577 = vmatpush1.bf16.msra.mxu0 %v4512
        %4578 = vmatprep.subr.bf16.mxu0 %v4515
        %4579 = vmatpush1.bf16.msra.mxu0 %v4514
        %4580 = vmatprep.subr.bf16.mxu0 %v4517
        %4581 = vmatpush1.bf16.msra.mxu0 %v4516
        %4582 = vmatprep.subr.bf16.mxu0 %v4519
        %4583 = vmatpush1.bf16.msra.mxu0 %v4518
        %4584 = vmatprep.subr.bf16.mxu0 %v4521
        %4585 = vmatpush1.bf16.msra.mxu0 %v4520
        %4586 = vmatprep.subr.bf16.mxu0 %v4523
        %4587 = vmatpush1.bf16.msra.mxu0 %v4522
        %4588 = vmatprep.mubr.bf16.mxu0 %v4362
        %4589 = vmatmul.mubr.bf16.gmra.mrb[0].mxu0 %v4361
        %v4590 = vpop.f32.mrb[0].mxu0
        %v4591 = vadd.f32 0.0, %v4590
        %v4592 = vpop.f32.mrb[0].mxu0
        %v4593 = vadd.f32 0.0, %v4592
        %v4594 = vpop.f32.mrb[0].mxu0
        %v4595 = vpop.f32.mrb[0].mxu0
        %4596 = vdwg.mxu0
        %v4597 = vadd.f32 %v4313, %v4591
        %v4598 = vadd.f32 %v4314, %v4593
        %v4599 = vrot.slane %v4597, 4
        %v4600 = vadd.f32 %v4597, %v4599
        %v4601 = vrot.slane %v4600, 2
        %v4602 = vadd.f32 %v4600, %v4601
        %v4603 = vrot.slane %v4602, 1
        %v4604 = vadd.f32 %v4602, %v4603
        %v4605 = vrot.slane %v4598, 4
        %v4606 = vadd.f32 %v4598, %v4605
        %v4607 = vrot.slane %v4606, 2
        %v4608 = vadd.f32 %v4606, %v4607
        %v4609 = vrot.slane %v4608, 1
        %v4610 = vadd.f32 %v4608, %v4609
        %v4611 = vld [vmem:[#allocation8] sm:$0xff]
        %v4612 = vld [vmem:[#allocation8 + $0x8] sm:$0xff]
        %v4613 = vld [vmem:[#allocation8 + $0x10] sm:$0xff]
        %v4614 = vld [vmem:[#allocation8 + $0x18] sm:$0xff]
        %v4615 = vld [vmem:[#allocation8 + $0x20] sm:$0xff]
        %v4616 = vld [vmem:[#allocation8 + $0x28] sm:$0xff]
        %v4617 = vld [vmem:[#allocation8 + $0x30] sm:$0xff]
        %v4618 = vld [vmem:[#allocation8 + $0x38] sm:$0xff]
        %v4619 = vld [vmem:[#allocation8 + $0x40] sm:$0xff]
        %v4620 = vld [vmem:[#allocation8 + $0x48] sm:$0xff]
        %v4621 = vld [vmem:[#allocation8 + $0x50] sm:$0xff]
        %v4622 = vld [vmem:[#allocation8 + $0x58] sm:$0xff]
        %v4623 = vld [vmem:[#allocation8 + $0x60] sm:$0xff]
        %v4624 = vld [vmem:[#allocation8 + $0x68] sm:$0xff]
        %v4625 = vld [vmem:[#allocation8 + $0x70] sm:$0xff]
        %v4626 = vld [vmem:[#allocation8 + $0x78] sm:$0xff]
        %v4627 = vld [vmem:[#allocation8 + $0x80] sm:$0xff]
        %v4628 = vld [vmem:[#allocation8 + $0x88] sm:$0xff]
        %v4629 = vld [vmem:[#allocation8 + $0x90] sm:$0xff]
        %v4630 = vld [vmem:[#allocation8 + $0x98] sm:$0xff]
        %v4631 = vld [vmem:[#allocation8 + $0xa0] sm:$0xff]
        %v4632 = vld [vmem:[#allocation8 + $0xa8] sm:$0xff]
        %v4633 = vld [vmem:[#allocation8 + $0xb0] sm:$0xff]
        %v4634 = vld [vmem:[#allocation8 + $0xb8] sm:$0xff]
        %v4635 = vld [vmem:[#allocation8 + $0xc0] sm:$0xff]
        %v4636 = vld [vmem:[#allocation8 + $0xc8] sm:$0xff]
        %v4637 = vld [vmem:[#allocation8 + $0xd0] sm:$0xff]
        %v4638 = vld [vmem:[#allocation8 + $0xd8] sm:$0xff]
        %v4639 = vld [vmem:[#allocation8 + $0xe0] sm:$0xff]
        %v4640 = vld [vmem:[#allocation8 + $0xe8] sm:$0xff]
        %v4641 = vld [vmem:[#allocation8 + $0xf0] sm:$0xff]
        %v4642 = vld [vmem:[#allocation8 + $0xf8] sm:$0xff]
        %v4643 = vld [vmem:[#allocation8 + $0x100] sm:$0xff]
        %v4644 = vld [vmem:[#allocation8 + $0x108] sm:$0xff]
        %v4645 = vld [vmem:[#allocation8 + $0x110] sm:$0xff]
        %v4646 = vld [vmem:[#allocation8 + $0x118] sm:$0xff]
        %v4647 = vld [vmem:[#allocation8 + $0x120] sm:$0xff]
        %v4648 = vld [vmem:[#allocation8 + $0x128] sm:$0xff]
        %v4649 = vld [vmem:[#allocation8 + $0x130] sm:$0xff]
        %v4650 = vld [vmem:[#allocation8 + $0x138] sm:$0xff]
        %v4651 = vld [vmem:[#allocation8 + $0x140] sm:$0xff]
        %v4652 = vld [vmem:[#allocation8 + $0x148] sm:$0xff]
        %v4653 = vld [vmem:[#allocation8 + $0x150] sm:$0xff]
        %v4654 = vld [vmem:[#allocation8 + $0x158] sm:$0xff]
        %v4655 = vld [vmem:[#allocation8 + $0x160] sm:$0xff]
        %v4656 = vld [vmem:[#allocation8 + $0x168] sm:$0xff]
        %v4657 = vld [vmem:[#allocation8 + $0x170] sm:$0xff]
        %v4658 = vld [vmem:[#allocation8 + $0x178] sm:$0xff]
        %v4659 = vld [vmem:[#allocation8 + $0x180] sm:$0xff]
        %v4660 = vld [vmem:[#allocation8 + $0x188] sm:$0xff]
        %v4661 = vld [vmem:[#allocation8 + $0x190] sm:$0xff]
        %v4662 = vld [vmem:[#allocation8 + $0x198] sm:$0xff]
        %v4663 = vld [vmem:[#allocation8 + $0x1a0] sm:$0xff]
        %v4664 = vld [vmem:[#allocation8 + $0x1a8] sm:$0xff]
        %v4665 = vld [vmem:[#allocation8 + $0x1b0] sm:$0xff]
        %v4666 = vld [vmem:[#allocation8 + $0x1b8] sm:$0xff]
        %v4667 = vld [vmem:[#allocation8 + $0x1c0] sm:$0xff]
        %v4668 = vld [vmem:[#allocation8 + $0x1c8] sm:$0xff]
        %v4669 = vld [vmem:[#allocation8 + $0x1d0] sm:$0xff]
        %v4670 = vld [vmem:[#allocation8 + $0x1d8] sm:$0xff]
        %v4671 = vld [vmem:[#allocation8 + $0x1e0] sm:$0xff]
        %v4672 = vld [vmem:[#allocation8 + $0x1e8] sm:$0xff]
        %v4673 = vld [vmem:[#allocation8 + $0x1f0] sm:$0xff]
        %v4674 = vld [vmem:[#allocation8 + $0x1f8] sm:$0xff]
        %4675 = vmatprep.subr.mxu0 %v4612
        %4676 = vmatpush1.msra.mxu0 %v4611
        %4677 = vmatprep.subr.mxu0 %v4614
        %4678 = vmatpush1.msra.mxu0 %v4613
        %4679 = vmatprep.subr.mxu0 %v4616
        %4680 = vmatpush1.msra.mxu0 %v4615
        %4681 = vmatprep.subr.mxu0 %v4618
        %4682 = vmatpush1.msra.mxu0 %v4617
        %4683 = vmatprep.subr.mxu0 %v4620
        %4684 = vmatpush1.msra.mxu0 %v4619
        %4685 = vmatprep.subr.mxu0 %v4622
        %4686 = vmatpush1.msra.mxu0 %v4621
        %4687 = vmatprep.subr.mxu0 %v4624
        %4688 = vmatpush1.msra.mxu0 %v4623
        %4689 = vmatprep.subr.mxu0 %v4626
        %4690 = vmatpush1.msra.mxu0 %v4625
        %4691 = vmatprep.subr.mxu0 %v4628
        %4692 = vmatpush1.msra.mxu0 %v4627
        %4693 = vmatprep.subr.mxu0 %v4630
        %4694 = vmatpush1.msra.mxu0 %v4629
        %4695 = vmatprep.subr.mxu0 %v4632
        %4696 = vmatpush1.msra.mxu0 %v4631
        %4697 = vmatprep.subr.mxu0 %v4634
        %4698 = vmatpush1.msra.mxu0 %v4633
        %4699 = vmatprep.subr.mxu0 %v4636
        %4700 = vmatpush1.msra.mxu0 %v4635
        %4701 = vmatprep.subr.mxu0 %v4638
        %4702 = vmatpush1.msra.mxu0 %v4637
        %4703 = vmatprep.subr.mxu0 %v4640
        %4704 = vmatpush1.msra.mxu0 %v4639
        %4705 = vmatprep.subr.mxu0 %v4642
        %4706 = vmatpush1.msra.mxu0 %v4641
        %4707 = vmatprep.subr.mxu0 %v4644
        %4708 = vmatpush1.msra.mxu0 %v4643
        %4709 = vmatprep.subr.mxu0 %v4646
        %4710 = vmatpush1.msra.mxu0 %v4645
        %4711 = vmatprep.subr.mxu0 %v4648
        %4712 = vmatpush1.msra.mxu0 %v4647
        %4713 = vmatprep.subr.mxu0 %v4650
        %4714 = vmatpush1.msra.mxu0 %v4649
        %4715 = vmatprep.subr.mxu0 %v4652
        %4716 = vmatpush1.msra.mxu0 %v4651
        %4717 = vmatprep.subr.mxu0 %v4654
        %4718 = vmatpush1.msra.mxu0 %v4653
        %4719 = vmatprep.subr.mxu0 %v4656
        %4720 = vmatpush1.msra.mxu0 %v4655
        %4721 = vmatprep.subr.mxu0 %v4658
        %4722 = vmatpush1.msra.mxu0 %v4657
        %4723 = vmatprep.subr.mxu0 %v4660
        %4724 = vmatpush1.msra.mxu0 %v4659
        %4725 = vmatprep.subr.mxu0 %v4662
        %4726 = vmatpush1.msra.mxu0 %v4661
        %4727 = vmatprep.subr.mxu0 %v4664
        %4728 = vmatpush1.msra.mxu0 %v4663
        %4729 = vmatprep.subr.mxu0 %v4666
        %4730 = vmatpush1.msra.mxu0 %v4665
        %4731 = vmatprep.subr.mxu0 %v4668
        %4732 = vmatpush1.msra.mxu0 %v4667
        %4733 = vmatprep.subr.mxu0 %v4670
        %4734 = vmatpush1.msra.mxu0 %v4669
        %4735 = vmatprep.subr.mxu0 %v4672
        %4736 = vmatpush1.msra.mxu0 %v4671
        %4737 = vmatprep.subr.mxu0 %v4674
        %4738 = vmatpush1.msra.mxu0 %v4673
        %4739 = vmatprep.mubr.f32.mxu0 %v4610
        %4740 = vmatmul.mubr.f32.gmra.mrb[0].mxu0 %v4604
        %v4741 = vpop.f32.mrb[0].mxu0
        %v4742 = vadd.f32 0.0, %v4741
        %v4743 = vpop.f32.mrb[0].mxu0
        %v4744 = vadd.f32 0.0, %v4743
        %4745 = vdwg.mxu0
        %v4746 = vlaneseq
        %v4747 = vshrl.u32 %v4746, 7
        %v4748 = vsub.s32 0, %v4747
        %v4749 = vrot.slane %v4742, %v4748
        %v4750 = vlaneseq
        %v4751 = vshrl.u32 %v4750, 7
        %v4752 = vsub.s32 0, %v4751
        %v4753 = vrot.slane %v4744, %v4752
        %v4754 = vsub.f32 %v4597, %v4749
        %v4755 = vsub.f32 %v4598, %v4753
        %v4756 = vmul.f32 %v4754, %v4754
        %v4757 = vmul.f32 %v4755, %v4755
        %v4758 = vrot.slane %v4756, 4
        %v4759 = vadd.f32 %v4756, %v4758
        %v4760 = vrot.slane %v4759, 2
        %v4761 = vadd.f32 %v4759, %v4760
        %v4762 = vrot.slane %v4761, 1
        %v4763 = vadd.f32 %v4761, %v4762
        %v4764 = vrot.slane %v4757, 4
        %v4765 = vadd.f32 %v4757, %v4764
        %v4766 = vrot.slane %v4765, 2
        %v4767 = vadd.f32 %v4765, %v4766
        %v4768 = vrot.slane %v4767, 1
        %v4769 = vadd.f32 %v4767, %v4768
        %4770 = vmatprep.subr.mxu0 %v4612
        %4771 = vmatpush1.msra.mxu0 %v4611
        %4772 = vmatprep.subr.mxu0 %v4614
        %4773 = vmatpush1.msra.mxu0 %v4613
        %4774 = vmatprep.subr.mxu0 %v4616
        %4775 = vmatpush1.msra.mxu0 %v4615
        %4776 = vmatprep.subr.mxu0 %v4618
        %4777 = vmatpush1.msra.mxu0 %v4617
        %4778 = vmatprep.subr.mxu0 %v4620
        %4779 = vmatpush1.msra.mxu0 %v4619
        %4780 = vmatprep.subr.mxu0 %v4622
        %4781 = vmatpush1.msra.mxu0 %v4621
        %4782 = vmatprep.subr.mxu0 %v4624
        %4783 = vmatpush1.msra.mxu0 %v4623
        %4784 = vmatprep.subr.mxu0 %v4626
        %4785 = vmatpush1.msra.mxu0 %v4625
        %4786 = vmatprep.subr.mxu0 %v4628
        %4787 = vmatpush1.msra.mxu0 %v4627
        %4788 = vmatprep.subr.mxu0 %v4630
        %4789 = vmatpush1.msra.mxu0 %v4629
        %4790 = vmatprep.subr.mxu0 %v4632
        %4791 = vmatpush1.msra.mxu0 %v4631
        %4792 = vmatprep.subr.mxu0 %v4634
        %4793 = vmatpush1.msra.mxu0 %v4633
        %4794 = vmatprep.subr.mxu0 %v4636
        %4795 = vmatpush1.msra.mxu0 %v4635
        %4796 = vmatprep.subr.mxu0 %v4638
        %4797 = vmatpush1.msra.mxu0 %v4637
        %4798 = vmatprep.subr.mxu0 %v4640
        %4799 = vmatpush1.msra.mxu0 %v4639
        %4800 = vmatprep.subr.mxu0 %v4642
        %4801 = vmatpush1.msra.mxu0 %v4641
        %4802 = vmatprep.subr.mxu0 %v4644
        %4803 = vmatpush1.msra.mxu0 %v4643
        %4804 = vmatprep.subr.mxu0 %v4646
        %4805 = vmatpush1.msra.mxu0 %v4645
        %4806 = vmatprep.subr.mxu0 %v4648
        %4807 = vmatpush1.msra.mxu0 %v4647
        %4808 = vmatprep.subr.mxu0 %v4650
        %4809 = vmatpush1.msra.mxu0 %v4649
        %4810 = vmatprep.subr.mxu0 %v4652
        %4811 = vmatpush1.msra.mxu0 %v4651
        %4812 = vmatprep.subr.mxu0 %v4654
        %4813 = vmatpush1.msra.mxu0 %v4653
        %4814 = vmatprep.subr.mxu0 %v4656
        %4815 = vmatpush1.msra.mxu0 %v4655
        %4816 = vmatprep.subr.mxu0 %v4658
        %4817 = vmatpush1.msra.mxu0 %v4657
        %4818 = vmatprep.subr.mxu0 %v4660
        %4819 = vmatpush1.msra.mxu0 %v4659
        %4820 = vmatprep.subr.mxu0 %v4662
        %4821 = vmatpush1.msra.mxu0 %v4661
        %4822 = vmatprep.subr.mxu0 %v4664
        %4823 = vmatpush1.msra.mxu0 %v4663
        %4824 = vmatprep.subr.mxu0 %v4666
        %4825 = vmatpush1.msra.mxu0 %v4665
        %4826 = vmatprep.subr.mxu0 %v4668
        %4827 = vmatpush1.msra.mxu0 %v4667
        %4828 = vmatprep.subr.mxu0 %v4670
        %4829 = vmatpush1.msra.mxu0 %v4669
        %4830 = vmatprep.subr.mxu0 %v4672
        %4831 = vmatpush1.msra.mxu0 %v4671
        %4832 = vmatprep.subr.mxu0 %v4674
        %4833 = vmatpush1.msra.mxu0 %v4673
        %4834 = vmatprep.mubr.f32.mxu0 %v4769
        %4835 = vmatmul.mubr.f32.gmra.mrb[0].mxu0 %v4763
        %v4836 = vpop.f32.mrb[0].mxu0
        %v4837 = vadd.f32 1e-05, %v4836
        %v4838 = vpop.f32.mrb[0].mxu0
        %v4839 = vadd.f32 1e-05, %v4838
        %4840 = vdwg.mxu0
        %v4841 = vrsqrt.pop %v4837
        %v4842 = vrsqrt.pop %v4839
        %v4843 = vlaneseq
        %v4844 = vshrl.u32 %v4843, 7
        %v4845 = vsub.s32 0, %v4844
        %v4846 = vrot.slane %v4841, %v4845
        %v4847 = vlaneseq
        %v4848 = vshrl.u32 %v4847, 7
        %v4849 = vsub.s32 0, %v4848
        %v4850 = vrot.slane %v4842, %v4849
        %v4851 = vmul.f32 %v4754, %v4846
        %v4852 = vmul.f32 %v4755, %v4850
        %v4853 = vld [vmem:[%s12] sm:$0x3]
        %v4855 = vlaneseq
        %v4856 = vshrl.u32 %v4855, 7
        %v4857 = vsub.s32 0, %v4856
        %v4858 = vrot.slane %v4853, %v4857
        %v4859 = vlaneseq
        %v4860 = vshrl.u32 %v4859, 7
        %v4861 = vsub.s32 1, %v4860
        %v4862 = vrot.slane %v4853, %v4861
        %v4865 = vmul.f32 %v4851, %v4858
        %v4866 = vmul.f32 %v4852, %v4862
        %v4867 = vld [vmem:[%s13] sm:$0x3]
        %v4869 = vlaneseq
        %v4870 = vshrl.u32 %v4869, 7
        %v4871 = vsub.s32 0, %v4870
        %v4872 = vrot.slane %v4867, %v4871
        %v4873 = vlaneseq
        %v4874 = vshrl.u32 %v4873, 7
        %v4875 = vsub.s32 1, %v4874
        %v4876 = vrot.slane %v4867, %v4875
        %v4879 = vadd.f32 %v4865, %v4872
        %v4880 = vadd.f32 %v4866, %v4876
        %vm4881 = vcmp.gt.f32.partialorder %v4879, 0.0
        %vm4882 = vcmp.gt.f32.partialorder %v4880, 0.0
        %v4883 = vmul.f32 %v4879, 0.2
        %v4884 = vmul.f32 %v4880, 0.2
        %v4885 = vsel %vm4881, %v4879, %v4883
        %v4886 = vsel %vm4882, %v4880, %v4884
        %v4887 = vpack.c.bf16 %v4885, %v4885
        %v4888 = vpack.c.bf16 %v4886, %v4886
        %v4889 = vld [vmem:[%s14] sm:$0x3]
        %vm4890 = vcmask 64512
        %v4892 = vsel %vm4890, %v4889, 0
        %vm4894 = vcmask 1043456
        %v4896 = vsel %vm4894, %v4887, 0
        %v4899 = vsel %vm4894, %v4888, 0
        %4901 = vmatprep.subr.bf16.mxu0 %v4899
        %4902 = vmatpush1.bf16.msra.mxu0 %v4896
        %4903 = vmatprep.subr.bf16.mxu0 0
        %4904 = vmatpush1.bf16.msra.mxu0 0
        %4905 = vmatprep.subr.bf16.mxu0 0
        %4906 = vmatpush1.bf16.msra.mxu0 0
        %4907 = vmatprep.subr.bf16.mxu0 0
        %4908 = vmatpush1.bf16.msra.mxu0 0
        %4909 = vmatprep.subr.bf16.mxu0 0
        %4910 = vmatpush1.bf16.msra.mxu0 0
        %4911 = vmatprep.subr.bf16.mxu0 0
        %4912 = vmatpush1.bf16.msra.mxu0 0
        %4913 = vmatprep.subr.bf16.mxu0 0
        %4914 = vmatpush1.bf16.msra.mxu0 0
        %4915 = vmatprep.subr.bf16.mxu0 0
        %4916 = vmatpush1.bf16.msra.mxu0 0
        %4917 = vmatprep.subr.bf16.mxu0 0
        %4918 = vmatpush1.bf16.msra.mxu0 0
        %4919 = vmatprep.subr.bf16.mxu0 0
        %4920 = vmatpush1.bf16.msra.mxu0 0
        %4921 = vmatprep.subr.bf16.mxu0 0
        %4922 = vmatpush1.bf16.msra.mxu0 0
        %4923 = vmatprep.subr.bf16.mxu0 0
        %4924 = vmatpush1.bf16.msra.mxu0 0
        %4925 = vmatprep.subr.bf16.mxu0 0
        %4926 = vmatpush1.bf16.msra.mxu0 0
        %4927 = vmatprep.subr.bf16.mxu0 0
        %4928 = vmatpush1.bf16.msra.mxu0 0
        %4929 = vmatprep.subr.bf16.mxu0 0
        %4930 = vmatpush1.bf16.msra.mxu0 0
        %4931 = vmatprep.subr.bf16.mxu0 0
        %4932 = vmatpush1.bf16.msra.mxu0 0
        %4933 = vmatprep.mubr.bf16.mxu0 0
        %4934 = vmatmul.mubr.bf16.gmra.mrb[0].mxu0 %v4892
        %v4935 = vpop.f32.mrb[0].mxu0
        %v4936 = vadd.f32 0.0, %v4935
        %v4937 = vpop.f32.mrb[0].mxu0
        %v4938 = vadd.f32 0.0, %v4937
        %v4939 = vpop.f32.mrb[0].mxu0
        %v4940 = vpop.f32.mrb[0].mxu0
        %4941 = vdwg.mxu0
        %v4942 = vpack.c.bf16 %v4936, %v4936
        %v4943 = vpack.c.bf16 %v4938, %v4938
        %v4944 = vld [vmem:[#allocation10] sm:$0xff]
        %v4945 = vld [vmem:[#allocation10 + $0x8] sm:$0xff]
        %v4946 = vld [vmem:[#allocation10 + $0x10] sm:$0xff]
        %v4947 = vld [vmem:[#allocation10 + $0x18] sm:$0xff]
        %v4948 = vld [vmem:[#allocation10 + $0x20] sm:$0xff]
        %v4949 = vld [vmem:[#allocation10 + $0x28] sm:$0xff]
        %v4950 = vld [vmem:[#allocation10 + $0x30] sm:$0xff]
        %v4951 = vld [vmem:[#allocation10 + $0x38] sm:$0xff]
        %v4952 = vld [vmem:[#allocation10 + $0x40] sm:$0xff]
        %v4953 = vld [vmem:[#allocation10 + $0x48] sm:$0xff]
        %v4954 = vld [vmem:[#allocation10 + $0x50] sm:$0xff]
        %v4955 = vld [vmem:[#allocation10 + $0x58] sm:$0xff]
        %v4956 = vld [vmem:[#allocation10 + $0x60] sm:$0xff]
        %v4957 = vld [vmem:[#allocation10 + $0x68] sm:$0xff]
        %v4958 = vld [vmem:[#allocation10 + $0x70] sm:$0xff]
        %v4959 = vld [vmem:[#allocation10 + $0x78] sm:$0xff]
        %v4960 = vld [vmem:[#allocation10 + $0x80] sm:$0xff]
        %v4961 = vld [vmem:[#allocation10 + $0x88] sm:$0xff]
        %v4962 = vld [vmem:[#allocation10 + $0x90] sm:$0xff]
        %v4963 = vld [vmem:[#allocation10 + $0x98] sm:$0xff]
        %v4964 = vld [vmem:[#allocation10 + $0xa0] sm:$0xff]
        %v4965 = vld [vmem:[#allocation10 + $0xa8] sm:$0xff]
        %v4966 = vld [vmem:[#allocation10 + $0xb0] sm:$0xff]
        %v4967 = vld [vmem:[#allocation10 + $0xb8] sm:$0xff]
        %v4968 = vld [vmem:[#allocation10 + $0xc0] sm:$0xff]
        %v4969 = vld [vmem:[#allocation10 + $0xc8] sm:$0xff]
        %v4970 = vld [vmem:[#allocation10 + $0xd0] sm:$0xff]
        %v4971 = vld [vmem:[#allocation10 + $0xd8] sm:$0xff]
        %v4972 = vld [vmem:[#allocation10 + $0xe0] sm:$0xff]
        %v4973 = vld [vmem:[#allocation10 + $0xe8] sm:$0xff]
        %v4974 = vld [vmem:[#allocation10 + $0xf0] sm:$0xff]
        %v4975 = vld [vmem:[#allocation10 + $0xf8] sm:$0xff]
        %s4976 = scalar_lea.vmem %s14, 2
        %v4977 = vld [vmem:[%s4976] sm:$0x3]
        %v4979 = vsel %vm4890, %v4977, 0
        %4981 = vmatprep.subr.bf16.mxu0 %v4899
        %4982 = vmatpush1.bf16.msra.mxu0 %v4896
        %4983 = vmatprep.subr.bf16.mxu0 0
        %4984 = vmatpush1.bf16.msra.mxu0 0
        %4985 = vmatprep.subr.bf16.mxu0 0
        %4986 = vmatpush1.bf16.msra.mxu0 0
        %4987 = vmatprep.subr.bf16.mxu0 0
        %4988 = vmatpush1.bf16.msra.mxu0 0
        %4989 = vmatprep.subr.bf16.mxu0 0
        %4990 = vmatpush1.bf16.msra.mxu0 0
        %4991 = vmatprep.subr.bf16.mxu0 0
        %4992 = vmatpush1.bf16.msra.mxu0 0
        %4993 = vmatprep.subr.bf16.mxu0 0
        %4994 = vmatpush1.bf16.msra.mxu0 0
        %4995 = vmatprep.subr.bf16.mxu0 0
        %4996 = vmatpush1.bf16.msra.mxu0 0
        %4997 = vmatprep.subr.bf16.mxu0 0
        %4998 = vmatpush1.bf16.msra.mxu0 0
        %4999 = vmatprep.subr.bf16.mxu0 0
        %5000 = vmatpush1.bf16.msra.mxu0 0
        %5001 = vmatprep.subr.bf16.mxu0 0
        %5002 = vmatpush1.bf16.msra.mxu0 0
        %5003 = vmatprep.subr.bf16.mxu0 0
        %5004 = vmatpush1.bf16.msra.mxu0 0
        %5005 = vmatprep.subr.bf16.mxu0 0
        %5006 = vmatpush1.bf16.msra.mxu0 0
        %5007 = vmatprep.subr.bf16.mxu0 0
        %5008 = vmatpush1.bf16.msra.mxu0 0
        %5009 = vmatprep.subr.bf16.mxu0 0
        %5010 = vmatpush1.bf16.msra.mxu0 0
        %5011 = vmatprep.subr.bf16.mxu0 0
        %5012 = vmatpush1.bf16.msra.mxu0 0
        %5013 = vmatprep.mubr.bf16.mxu0 0
        %5014 = vmatmul.mubr.bf16.gmra.mrb[0].mxu0 %v4979
        %v5015 = vpop.f32.mrb[0].mxu0
        %v5016 = vadd.f32 0.0, %v5015
        %v5017 = vpop.f32.mrb[0].mxu0
        %v5018 = vadd.f32 0.0, %v5017
        %v5019 = vpop.f32.mrb[0].mxu0
        %v5020 = vpop.f32.mrb[0].mxu0
        %5021 = vdwg.mxu0
        %v5022 = vpack.c.bf16 %v5016, %v5016
        %v5023 = vpack.c.bf16 %v5018, %v5018
        %s5024 = scalar_lea.vmem [#allocation10], 256
        %v5025 = vld [vmem:[%s5024] sm:$0xff]
        %v5026 = vld [vmem:[%s5024 + $0x8] sm:$0xff]
        %v5027 = vld [vmem:[%s5024 + $0x10] sm:$0xff]
        %v5028 = vld [vmem:[%s5024 + $0x18] sm:$0xff]
        %v5029 = vld [vmem:[%s5024 + $0x20] sm:$0xff]
        %v5030 = vld [vmem:[%s5024 + $0x28] sm:$0xff]
        %v5031 = vld [vmem:[%s5024 + $0x30] sm:$0xff]
        %v5032 = vld [vmem:[%s5024 + $0x38] sm:$0xff]
        %v5033 = vld [vmem:[%s5024 + $0x40] sm:$0xff]
        %v5034 = vld [vmem:[%s5024 + $0x48] sm:$0xff]
        %v5035 = vld [vmem:[%s5024 + $0x50] sm:$0xff]
        %v5036 = vld [vmem:[%s5024 + $0x58] sm:$0xff]
        %v5037 = vld [vmem:[%s5024 + $0x60] sm:$0xff]
        %v5038 = vld [vmem:[%s5024 + $0x68] sm:$0xff]
        %v5039 = vld [vmem:[%s5024 + $0x70] sm:$0xff]
        %v5040 = vld [vmem:[%s5024 + $0x78] sm:$0xff]
        %v5041 = vld [vmem:[%s5024 + $0x80] sm:$0xff]
        %v5042 = vld [vmem:[%s5024 + $0x88] sm:$0xff]
        %v5043 = vld [vmem:[%s5024 + $0x90] sm:$0xff]
        %v5044 = vld [vmem:[%s5024 + $0x98] sm:$0xff]
        %v5045 = vld [vmem:[%s5024 + $0xa0] sm:$0xff]
        %v5046 = vld [vmem:[%s5024 + $0xa8] sm:$0xff]
        %v5047 = vld [vmem:[%s5024 + $0xb0] sm:$0xff]
        %v5048 = vld [vmem:[%s5024 + $0xb8] sm:$0xff]
        %v5049 = vld [vmem:[%s5024 + $0xc0] sm:$0xff]
        %v5050 = vld [vmem:[%s5024 + $0xc8] sm:$0xff]
        %v5051 = vld [vmem:[%s5024 + $0xd0] sm:$0xff]
        %v5052 = vld [vmem:[%s5024 + $0xd8] sm:$0xff]
        %v5053 = vld [vmem:[%s5024 + $0xe0] sm:$0xff]
        %v5054 = vld [vmem:[%s5024 + $0xe8] sm:$0xff]
        %v5055 = vld [vmem:[%s5024 + $0xf0] sm:$0xff]
        %v5056 = vld [vmem:[%s5024 + $0xf8] sm:$0xff]
        %v5089 = vunpack.c.l.b16 %v5025
        %v5090 = vunpack.c.h.b16 %v5025
        %v5091 = vunpack.c.l.b16 %v5026
        %v5092 = vunpack.c.h.b16 %v5026
        %v5093 = vunpack.c.l.b16 %v5027
        %v5094 = vunpack.c.h.b16 %v5027
        %v5095 = vunpack.c.l.b16 %v5028
        %v5096 = vunpack.c.h.b16 %v5028
        %v5097 = vunpack.c.l.b16 %v5029
        %v5098 = vunpack.c.h.b16 %v5029
        %v5099 = vunpack.c.l.b16 %v5030
        %v5100 = vunpack.c.h.b16 %v5030
        %v5101 = vunpack.c.l.b16 %v5031
        %v5102 = vunpack.c.h.b16 %v5031
        %v5103 = vunpack.c.l.b16 %v5032
        %v5104 = vunpack.c.h.b16 %v5032
        %v5105 = vunpack.c.l.b16 %v5033
        %v5106 = vunpack.c.h.b16 %v5033
        %v5107 = vunpack.c.l.b16 %v5034
        %v5108 = vunpack.c.h.b16 %v5034
        %v5109 = vunpack.c.l.b16 %v5035
        %v5110 = vunpack.c.h.b16 %v5035
        %v5111 = vunpack.c.l.b16 %v5036
        %v5112 = vunpack.c.h.b16 %v5036
        %v5113 = vunpack.c.l.b16 %v5037
        %v5114 = vunpack.c.h.b16 %v5037
        %v5115 = vunpack.c.l.b16 %v5038
        %v5116 = vunpack.c.h.b16 %v5038
        %v5117 = vunpack.c.l.b16 %v5039
        %v5118 = vunpack.c.h.b16 %v5039
        %v5119 = vunpack.c.l.b16 %v5040
        %v5120 = vunpack.c.h.b16 %v5040
        %v5121 = vunpack.c.l.b16 %v5041
        %v5122 = vunpack.c.h.b16 %v5041
        %v5123 = vunpack.c.l.b16 %v5042
        %v5124 = vunpack.c.h.b16 %v5042
        %v5125 = vunpack.c.l.b16 %v5043
        %v5126 = vunpack.c.h.b16 %v5043
        %v5127 = vunpack.c.l.b16 %v5044
        %v5128 = vunpack.c.h.b16 %v5044
        %v5129 = vunpack.c.l.b16 %v5045
        %v5130 = vunpack.c.h.b16 %v5045
        %v5131 = vunpack.c.l.b16 %v5046
        %v5132 = vunpack.c.h.b16 %v5046
        %v5133 = vunpack.c.l.b16 %v5047
        %v5134 = vunpack.c.h.b16 %v5047
        %v5135 = vunpack.c.l.b16 %v5048
        %v5136 = vunpack.c.h.b16 %v5048
        %v5137 = vunpack.c.l.b16 %v5049
        %v5138 = vunpack.c.h.b16 %v5049
        %v5139 = vunpack.c.l.b16 %v5050
        %v5140 = vunpack.c.h.b16 %v5050
        %v5141 = vunpack.c.l.b16 %v5051
        %v5142 = vunpack.c.h.b16 %v5051
        %v5143 = vunpack.c.l.b16 %v5052
        %v5144 = vunpack.c.h.b16 %v5052
        %v5145 = vunpack.c.l.b16 %v5053
        %v5146 = vunpack.c.h.b16 %v5053
        %v5147 = vunpack.c.l.b16 %v5054
        %v5148 = vunpack.c.h.b16 %v5054
        %v5149 = vunpack.c.l.b16 %v5055
        %v5150 = vunpack.c.h.b16 %v5055
        %v5151 = vunpack.c.l.b16 %v5056
        %v5152 = vunpack.c.h.b16 %v5056
        %v5153 = vpack.c.b16 %v5091, %v5089
        %v5154 = vpack.c.b16 %v5092, %v5090
        %v5155 = vpack.c.b16 %v5095, %v5093
        %v5156 = vpack.c.b16 %v5096, %v5094
        %v5157 = vpack.c.b16 %v5099, %v5097
        %v5158 = vpack.c.b16 %v5100, %v5098
        %v5159 = vpack.c.b16 %v5103, %v5101
        %v5160 = vpack.c.b16 %v5104, %v5102
        %v5161 = vpack.c.b16 %v5107, %v5105
        %v5162 = vpack.c.b16 %v5108, %v5106
        %v5163 = vpack.c.b16 %v5111, %v5109
        %v5164 = vpack.c.b16 %v5112, %v5110
        %v5165 = vpack.c.b16 %v5115, %v5113
        %v5166 = vpack.c.b16 %v5116, %v5114
        %v5167 = vpack.c.b16 %v5119, %v5117
        %v5168 = vpack.c.b16 %v5120, %v5118
        %v5169 = vpack.c.b16 %v5123, %v5121
        %v5170 = vpack.c.b16 %v5124, %v5122
        %v5171 = vpack.c.b16 %v5127, %v5125
        %v5172 = vpack.c.b16 %v5128, %v5126
        %v5173 = vpack.c.b16 %v5131, %v5129
        %v5174 = vpack.c.b16 %v5132, %v5130
        %v5175 = vpack.c.b16 %v5135, %v5133
        %v5176 = vpack.c.b16 %v5136, %v5134
        %v5177 = vpack.c.b16 %v5139, %v5137
        %v5178 = vpack.c.b16 %v5140, %v5138
        %v5179 = vpack.c.b16 %v5143, %v5141
        %v5180 = vpack.c.b16 %v5144, %v5142
        %v5181 = vpack.c.b16 %v5147, %v5145
        %v5182 = vpack.c.b16 %v5148, %v5146
        %v5183 = vpack.c.b16 %v5151, %v5149
        %v5184 = vpack.c.b16 %v5152, %v5150
        %5217 = vmatprep.subr.bf16.mxu0 %v5154
        %5218 = vmatpush1.bf16.msra.mxu0 %v5153
        %5219 = vmatprep.subr.bf16.mxu0 %v5156
        %5220 = vmatpush1.bf16.msra.mxu0 %v5155
        %5221 = vmatprep.subr.bf16.mxu0 %v5158
        %5222 = vmatpush1.bf16.msra.mxu0 %v5157
        %5223 = vmatprep.subr.bf16.mxu0 %v5160
        %5224 = vmatpush1.bf16.msra.mxu0 %v5159
        %5225 = vmatprep.subr.bf16.mxu0 %v5162
        %5226 = vmatpush1.bf16.msra.mxu0 %v5161
        %5227 = vmatprep.subr.bf16.mxu0 %v5164
        %5228 = vmatpush1.bf16.msra.mxu0 %v5163
        %5229 = vmatprep.subr.bf16.mxu0 %v5166
        %5230 = vmatpush1.bf16.msra.mxu0 %v5165
        %5231 = vmatprep.subr.bf16.mxu0 %v5168
        %5232 = vmatpush1.bf16.msra.mxu0 %v5167
        %5233 = vmatprep.subr.bf16.mxu0 %v5170
        %5234 = vmatpush1.bf16.msra.mxu0 %v5169
        %5235 = vmatprep.subr.bf16.mxu0 %v5172
        %5236 = vmatpush1.bf16.msra.mxu0 %v5171
        %5237 = vmatprep.subr.bf16.mxu0 %v5174
        %5238 = vmatpush1.bf16.msra.mxu0 %v5173
        %5239 = vmatprep.subr.bf16.mxu0 %v5176
        %5240 = vmatpush1.bf16.msra.mxu0 %v5175
        %5241 = vmatprep.subr.bf16.mxu0 %v5178
        %5242 = vmatpush1.bf16.msra.mxu0 %v5177
        %5243 = vmatprep.subr.bf16.mxu0 %v5180
        %5244 = vmatpush1.bf16.msra.mxu0 %v5179
        %5245 = vmatprep.subr.bf16.mxu0 %v5182
        %5246 = vmatpush1.bf16.msra.mxu0 %v5181
        %5247 = vmatprep.subr.bf16.mxu0 %v5184
        %5248 = vmatpush1.bf16.msra.mxu0 %v5183
        %5249 = vmatprep.mubr.bf16.mxu0 %v5023
        %5250 = vmatmul.mubr.bf16.gmra.mrb[0].mxu0 %v5022
        %v5251 = vpop.f32.mrb[0].mxu0
        %v5252 = vadd.f32 0.0, %v5251
        %v5253 = vpop.f32.mrb[0].mxu0
        %v5254 = vadd.f32 0.0, %v5253
        %v5255 = vpop.f32.mrb[0].mxu0
        %v5256 = vpop.f32.mrb[0].mxu0
        %5257 = vdwg.mxu0
        %v5290 = vunpack.c.l.b16 %v4944
        %v5291 = vunpack.c.h.b16 %v4944
        %v5292 = vunpack.c.l.b16 %v4945
        %v5293 = vunpack.c.h.b16 %v4945
        %v5294 = vunpack.c.l.b16 %v4946
        %v5295 = vunpack.c.h.b16 %v4946
        %v5296 = vunpack.c.l.b16 %v4947
        %v5297 = vunpack.c.h.b16 %v4947
        %v5298 = vunpack.c.l.b16 %v4948
        %v5299 = vunpack.c.h.b16 %v4948
        %v5300 = vunpack.c.l.b16 %v4949
        %v5301 = vunpack.c.h.b16 %v4949
        %v5302 = vunpack.c.l.b16 %v4950
        %v5303 = vunpack.c.h.b16 %v4950
        %v5304 = vunpack.c.l.b16 %v4951
        %v5305 = vunpack.c.h.b16 %v4951
        %v5306 = vunpack.c.l.b16 %v4952
        %v5307 = vunpack.c.h.b16 %v4952
        %v5308 = vunpack.c.l.b16 %v4953
        %v5309 = vunpack.c.h.b16 %v4953
        %v5310 = vunpack.c.l.b16 %v4954
        %v5311 = vunpack.c.h.b16 %v4954
        %v5312 = vunpack.c.l.b16 %v4955
        %v5313 = vunpack.c.h.b16 %v4955
        %v5314 = vunpack.c.l.b16 %v4956
        %v5315 = vunpack.c.h.b16 %v4956
        %v5316 = vunpack.c.l.b16 %v4957
        %v5317 = vunpack.c.h.b16 %v4957
        %v5318 = vunpack.c.l.b16 %v4958
        %v5319 = vunpack.c.h.b16 %v4958
        %v5320 = vunpack.c.l.b16 %v4959
        %v5321 = vunpack.c.h.b16 %v4959
        %v5322 = vunpack.c.l.b16 %v4960
        %v5323 = vunpack.c.h.b16 %v4960
        %v5324 = vunpack.c.l.b16 %v4961
        %v5325 = vunpack.c.h.b16 %v4961
        %v5326 = vunpack.c.l.b16 %v4962
        %v5327 = vunpack.c.h.b16 %v4962
        %v5328 = vunpack.c.l.b16 %v4963
        %v5329 = vunpack.c.h.b16 %v4963
        %v5330 = vunpack.c.l.b16 %v4964
        %v5331 = vunpack.c.h.b16 %v4964
        %v5332 = vunpack.c.l.b16 %v4965
        %v5333 = vunpack.c.h.b16 %v4965
        %v5334 = vunpack.c.l.b16 %v4966
        %v5335 = vunpack.c.h.b16 %v4966
        %v5336 = vunpack.c.l.b16 %v4967
        %v5337 = vunpack.c.h.b16 %v4967
        %v5338 = vunpack.c.l.b16 %v4968
        %v5339 = vunpack.c.h.b16 %v4968
        %v5340 = vunpack.c.l.b16 %v4969
        %v5341 = vunpack.c.h.b16 %v4969
        %v5342 = vunpack.c.l.b16 %v4970
        %v5343 = vunpack.c.h.b16 %v4970
        %v5344 = vunpack.c.l.b16 %v4971
        %v5345 = vunpack.c.h.b16 %v4971
        %v5346 = vunpack.c.l.b16 %v4972
        %v5347 = vunpack.c.h.b16 %v4972
        %v5348 = vunpack.c.l.b16 %v4973
        %v5349 = vunpack.c.h.b16 %v4973
        %v5350 = vunpack.c.l.b16 %v4974
        %v5351 = vunpack.c.h.b16 %v4974
        %v5352 = vunpack.c.l.b16 %v4975
        %v5353 = vunpack.c.h.b16 %v4975
        %v5354 = vpack.c.b16 %v5292, %v5290
        %v5355 = vpack.c.b16 %v5293, %v5291
        %v5356 = vpack.c.b16 %v5296, %v5294
        %v5357 = vpack.c.b16 %v5297, %v5295
        %v5358 = vpack.c.b16 %v5300, %v5298
        %v5359 = vpack.c.b16 %v5301, %v5299
        %v5360 = vpack.c.b16 %v5304, %v5302
        %v5361 = vpack.c.b16 %v5305, %v5303
        %v5362 = vpack.c.b16 %v5308, %v5306
        %v5363 = vpack.c.b16 %v5309, %v5307
        %v5364 = vpack.c.b16 %v5312, %v5310
        %v5365 = vpack.c.b16 %v5313, %v5311
        %v5366 = vpack.c.b16 %v5316, %v5314
        %v5367 = vpack.c.b16 %v5317, %v5315
        %v5368 = vpack.c.b16 %v5320, %v5318
        %v5369 = vpack.c.b16 %v5321, %v5319
        %v5370 = vpack.c.b16 %v5324, %v5322
        %v5371 = vpack.c.b16 %v5325, %v5323
        %v5372 = vpack.c.b16 %v5328, %v5326
        %v5373 = vpack.c.b16 %v5329, %v5327
        %v5374 = vpack.c.b16 %v5332, %v5330
        %v5375 = vpack.c.b16 %v5333, %v5331
        %v5376 = vpack.c.b16 %v5336, %v5334
        %v5377 = vpack.c.b16 %v5337, %v5335
        %v5378 = vpack.c.b16 %v5340, %v5338
        %v5379 = vpack.c.b16 %v5341, %v5339
        %v5380 = vpack.c.b16 %v5344, %v5342
        %v5381 = vpack.c.b16 %v5345, %v5343
        %v5382 = vpack.c.b16 %v5348, %v5346
        %v5383 = vpack.c.b16 %v5349, %v5347
        %v5384 = vpack.c.b16 %v5352, %v5350
        %v5385 = vpack.c.b16 %v5353, %v5351
        %5418 = vmatprep.subr.bf16.mxu0 %v5355
        %5419 = vmatpush1.bf16.msra.mxu0 %v5354
        %5420 = vmatprep.subr.bf16.mxu0 %v5357
        %5421 = vmatpush1.bf16.msra.mxu0 %v5356
        %5422 = vmatprep.subr.bf16.mxu0 %v5359
        %5423 = vmatpush1.bf16.msra.mxu0 %v5358
        %5424 = vmatprep.subr.bf16.mxu0 %v5361
        %5425 = vmatpush1.bf16.msra.mxu0 %v5360
        %5426 = vmatprep.subr.bf16.mxu0 %v5363
        %5427 = vmatpush1.bf16.msra.mxu0 %v5362
        %5428 = vmatprep.subr.bf16.mxu0 %v5365
        %5429 = vmatpush1.bf16.msra.mxu0 %v5364
        %5430 = vmatprep.subr.bf16.mxu0 %v5367
        %5431 = vmatpush1.bf16.msra.mxu0 %v5366
        %5432 = vmatprep.subr.bf16.mxu0 %v5369
        %5433 = vmatpush1.bf16.msra.mxu0 %v5368
        %5434 = vmatprep.subr.bf16.mxu0 %v5371
        %5435 = vmatpush1.bf16.msra.mxu0 %v5370
        %5436 = vmatprep.subr.bf16.mxu0 %v5373
        %5437 = vmatpush1.bf16.msra.mxu0 %v5372
        %5438 = vmatprep.subr.bf16.mxu0 %v5375
        %5439 = vmatpush1.bf16.msra.mxu0 %v5374
        %5440 = vmatprep.subr.bf16.mxu0 %v5377
        %5441 = vmatpush1.bf16.msra.mxu0 %v5376
        %5442 = vmatprep.subr.bf16.mxu0 %v5379
        %5443 = vmatpush1.bf16.msra.mxu0 %v5378
        %5444 = vmatprep.subr.bf16.mxu0 %v5381
        %5445 = vmatpush1.bf16.msra.mxu0 %v5380
        %5446 = vmatprep.subr.bf16.mxu0 %v5383
        %5447 = vmatpush1.bf16.msra.mxu0 %v5382
        %5448 = vmatprep.subr.bf16.mxu0 %v5385
        %5449 = vmatpush1.bf16.msra.mxu0 %v5384
        %5450 = vmatprep.mubr.bf16.mxu0 %v4943
        %5451 = vmatmul.mubr.bf16.gmra.mrb[0].mxu0 %v4942
        %v5452 = vpop.f32.mrb[0].mxu0
        %v5453 = vadd.f32 %v5252, %v5452
        %v5454 = vpop.f32.mrb[0].mxu0
        %v5455 = vadd.f32 %v5254, %v5454
        %v5456 = vpop.f32.mrb[0].mxu0
        %v5457 = vpop.f32.mrb[0].mxu0
        %5458 = vdwg.mxu0
        %s5459 = scalar_lea.vmem %s14, 4
        %v5460 = vld [vmem:[%s5459] sm:$0x3]
        %v5462 = vsel %vm4890, %v5460, 0
        %5464 = vmatprep.subr.bf16.mxu0 %v4899
        %5465 = vmatpush1.bf16.msra.mxu0 %v4896
        %5466 = vmatprep.subr.bf16.mxu0 0
        %5467 = vmatpush1.bf16.msra.mxu0 0
        %5468 = vmatprep.subr.bf16.mxu0 0
        %5469 = vmatpush1.bf16.msra.mxu0 0
        %5470 = vmatprep.subr.bf16.mxu0 0
        %5471 = vmatpush1.bf16.msra.mxu0 0
        %5472 = vmatprep.subr.bf16.mxu0 0
        %5473 = vmatpush1.bf16.msra.mxu0 0
        %5474 = vmatprep.subr.bf16.mxu0 0
        %5475 = vmatpush1.bf16.msra.mxu0 0
        %5476 = vmatprep.subr.bf16.mxu0 0
        %5477 = vmatpush1.bf16.msra.mxu0 0
        %5478 = vmatprep.subr.bf16.mxu0 0
        %5479 = vmatpush1.bf16.msra.mxu0 0
        %5480 = vmatprep.subr.bf16.mxu0 0
        %5481 = vmatpush1.bf16.msra.mxu0 0
        %5482 = vmatprep.subr.bf16.mxu0 0
        %5483 = vmatpush1.bf16.msra.mxu0 0
        %5484 = vmatprep.subr.bf16.mxu0 0
        %5485 = vmatpush1.bf16.msra.mxu0 0
        %5486 = vmatprep.subr.bf16.mxu0 0
        %5487 = vmatpush1.bf16.msra.mxu0 0
        %5488 = vmatprep.subr.bf16.mxu0 0
        %5489 = vmatpush1.bf16.msra.mxu0 0
        %5490 = vmatprep.subr.bf16.mxu0 0
        %5491 = vmatpush1.bf16.msra.mxu0 0
        %5492 = vmatprep.subr.bf16.mxu0 0
        %5493 = vmatpush1.bf16.msra.mxu0 0
        %5494 = vmatprep.subr.bf16.mxu0 0
        %5495 = vmatpush1.bf16.msra.mxu0 0
        %5496 = vmatprep.mubr.bf16.mxu0 0
        %5497 = vmatmul.mubr.bf16.gmra.mrb[0].mxu0 %v5462
        %v5498 = vpop.f32.mrb[0].mxu0
        %v5499 = vadd.f32 0.0, %v5498
        %v5500 = vpop.f32.mrb[0].mxu0
        %v5501 = vadd.f32 0.0, %v5500
        %v5502 = vpop.f32.mrb[0].mxu0
        %v5503 = vpop.f32.mrb[0].mxu0
        %5504 = vdwg.mxu0
        %v5505 = vpack.c.bf16 %v5499, %v5499
        %v5506 = vpack.c.bf16 %v5501, %v5501
        %s5507 = scalar_lea.vmem [#allocation10], 512
        %v5508 = vld [vmem:[%s5507] sm:$0xff]
        %v5509 = vld [vmem:[%s5507 + $0x8] sm:$0xff]
        %v5510 = vld [vmem:[%s5507 + $0x10] sm:$0xff]
        %v5511 = vld [vmem:[%s5507 + $0x18] sm:$0xff]
        %v5512 = vld [vmem:[%s5507 + $0x20] sm:$0xff]
        %v5513 = vld [vmem:[%s5507 + $0x28] sm:$0xff]
        %v5514 = vld [vmem:[%s5507 + $0x30] sm:$0xff]
        %v5515 = vld [vmem:[%s5507 + $0x38] sm:$0xff]
        %v5516 = vld [vmem:[%s5507 + $0x40] sm:$0xff]
        %v5517 = vld [vmem:[%s5507 + $0x48] sm:$0xff]
        %v5518 = vld [vmem:[%s5507 + $0x50] sm:$0xff]
        %v5519 = vld [vmem:[%s5507 + $0x58] sm:$0xff]
        %v5520 = vld [vmem:[%s5507 + $0x60] sm:$0xff]
        %v5521 = vld [vmem:[%s5507 + $0x68] sm:$0xff]
        %v5522 = vld [vmem:[%s5507 + $0x70] sm:$0xff]
        %v5523 = vld [vmem:[%s5507 + $0x78] sm:$0xff]
        %v5524 = vld [vmem:[%s5507 + $0x80] sm:$0xff]
        %v5525 = vld [vmem:[%s5507 + $0x88] sm:$0xff]
        %v5526 = vld [vmem:[%s5507 + $0x90] sm:$0xff]
        %v5527 = vld [vmem:[%s5507 + $0x98] sm:$0xff]
        %v5528 = vld [vmem:[%s5507 + $0xa0] sm:$0xff]
        %v5529 = vld [vmem:[%s5507 + $0xa8] sm:$0xff]
        %v5530 = vld [vmem:[%s5507 + $0xb0] sm:$0xff]
        %v5531 = vld [vmem:[%s5507 + $0xb8] sm:$0xff]
        %v5532 = vld [vmem:[%s5507 + $0xc0] sm:$0xff]
        %v5533 = vld [vmem:[%s5507 + $0xc8] sm:$0xff]
        %v5534 = vld [vmem:[%s5507 + $0xd0] sm:$0xff]
        %v5535 = vld [vmem:[%s5507 + $0xd8] sm:$0xff]
        %v5536 = vld [vmem:[%s5507 + $0xe0] sm:$0xff]
        %v5537 = vld [vmem:[%s5507 + $0xe8] sm:$0xff]
        %v5538 = vld [vmem:[%s5507 + $0xf0] sm:$0xff]
        %v5539 = vld [vmem:[%s5507 + $0xf8] sm:$0xff]
        %v5572 = vunpack.c.l.b16 %v5508
        %v5573 = vunpack.c.h.b16 %v5508
        %v5574 = vunpack.c.l.b16 %v5509
        %v5575 = vunpack.c.h.b16 %v5509
        %v5576 = vunpack.c.l.b16 %v5510
        %v5577 = vunpack.c.h.b16 %v5510
        %v5578 = vunpack.c.l.b16 %v5511
        %v5579 = vunpack.c.h.b16 %v5511
        %v5580 = vunpack.c.l.b16 %v5512
        %v5581 = vunpack.c.h.b16 %v5512
        %v5582 = vunpack.c.l.b16 %v5513
        %v5583 = vunpack.c.h.b16 %v5513
        %v5584 = vunpack.c.l.b16 %v5514
        %v5585 = vunpack.c.h.b16 %v5514
        %v5586 = vunpack.c.l.b16 %v5515
        %v5587 = vunpack.c.h.b16 %v5515
        %v5588 = vunpack.c.l.b16 %v5516
        %v5589 = vunpack.c.h.b16 %v5516
        %v5590 = vunpack.c.l.b16 %v5517
        %v5591 = vunpack.c.h.b16 %v5517
        %v5592 = vunpack.c.l.b16 %v5518
        %v5593 = vunpack.c.h.b16 %v5518
        %v5594 = vunpack.c.l.b16 %v5519
        %v5595 = vunpack.c.h.b16 %v5519
        %v5596 = vunpack.c.l.b16 %v5520
        %v5597 = vunpack.c.h.b16 %v5520
        %v5598 = vunpack.c.l.b16 %v5521
        %v5599 = vunpack.c.h.b16 %v5521
        %v5600 = vunpack.c.l.b16 %v5522
        %v5601 = vunpack.c.h.b16 %v5522
        %v5602 = vunpack.c.l.b16 %v5523
        %v5603 = vunpack.c.h.b16 %v5523
        %v5604 = vunpack.c.l.b16 %v5524
        %v5605 = vunpack.c.h.b16 %v5524
        %v5606 = vunpack.c.l.b16 %v5525
        %v5607 = vunpack.c.h.b16 %v5525
        %v5608 = vunpack.c.l.b16 %v5526
        %v5609 = vunpack.c.h.b16 %v5526
        %v5610 = vunpack.c.l.b16 %v5527
        %v5611 = vunpack.c.h.b16 %v5527
        %v5612 = vunpack.c.l.b16 %v5528
        %v5613 = vunpack.c.h.b16 %v5528
        %v5614 = vunpack.c.l.b16 %v5529
        %v5615 = vunpack.c.h.b16 %v5529
        %v5616 = vunpack.c.l.b16 %v5530
        %v5617 = vunpack.c.h.b16 %v5530
        %v5618 = vunpack.c.l.b16 %v5531
        %v5619 = vunpack.c.h.b16 %v5531
        %v5620 = vunpack.c.l.b16 %v5532
        %v5621 = vunpack.c.h.b16 %v5532
        %v5622 = vunpack.c.l.b16 %v5533
        %v5623 = vunpack.c.h.b16 %v5533
        %v5624 = vunpack.c.l.b16 %v5534
        %v5625 = vunpack.c.h.b16 %v5534
        %v5626 = vunpack.c.l.b16 %v5535
        %v5627 = vunpack.c.h.b16 %v5535
        %v5628 = vunpack.c.l.b16 %v5536
        %v5629 = vunpack.c.h.b16 %v5536
        %v5630 = vunpack.c.l.b16 %v5537
        %v5631 = vunpack.c.h.b16 %v5537
        %v5632 = vunpack.c.l.b16 %v5538
        %v5633 = vunpack.c.h.b16 %v5538
        %v5634 = vunpack.c.l.b16 %v5539
        %v5635 = vunpack.c.h.b16 %v5539
        %v5636 = vpack.c.b16 %v5574, %v5572
        %v5637 = vpack.c.b16 %v5575, %v5573
        %v5638 = vpack.c.b16 %v5578, %v5576
        %v5639 = vpack.c.b16 %v5579, %v5577
        %v5640 = vpack.c.b16 %v5582, %v5580
        %v5641 = vpack.c.b16 %v5583, %v5581
        %v5642 = vpack.c.b16 %v5586, %v5584
        %v5643 = vpack.c.b16 %v5587, %v5585
        %v5644 = vpack.c.b16 %v5590, %v5588
        %v5645 = vpack.c.b16 %v5591, %v5589
        %v5646 = vpack.c.b16 %v5594, %v5592
        %v5647 = vpack.c.b16 %v5595, %v5593
        %v5648 = vpack.c.b16 %v5598, %v5596
        %v5649 = vpack.c.b16 %v5599, %v5597
        %v5650 = vpack.c.b16 %v5602, %v5600
        %v5651 = vpack.c.b16 %v5603, %v5601
        %v5652 = vpack.c.b16 %v5606, %v5604
        %v5653 = vpack.c.b16 %v5607, %v5605
        %v5654 = vpack.c.b16 %v5610, %v5608
        %v5655 = vpack.c.b16 %v5611, %v5609
        %v5656 = vpack.c.b16 %v5614, %v5612
        %v5657 = vpack.c.b16 %v5615, %v5613
        %v5658 = vpack.c.b16 %v5618, %v5616
        %v5659 = vpack.c.b16 %v5619, %v5617
        %v5660 = vpack.c.b16 %v5622, %v5620
        %v5661 = vpack.c.b16 %v5623, %v5621
        %v5662 = vpack.c.b16 %v5626, %v5624
        %v5663 = vpack.c.b16 %v5627, %v5625
        %v5664 = vpack.c.b16 %v5630, %v5628
        %v5665 = vpack.c.b16 %v5631, %v5629
        %v5666 = vpack.c.b16 %v5634, %v5632
        %v5667 = vpack.c.b16 %v5635, %v5633
        %5700 = vmatprep.subr.bf16.mxu0 %v5637
        %5701 = vmatpush1.bf16.msra.mxu0 %v5636
        %5702 = vmatprep.subr.bf16.mxu0 %v5639
        %5703 = vmatpush1.bf16.msra.mxu0 %v5638
        %5704 = vmatprep.subr.bf16.mxu0 %v5641
        %5705 = vmatpush1.bf16.msra.mxu0 %v5640
        %5706 = vmatprep.subr.bf16.mxu0 %v5643
        %5707 = vmatpush1.bf16.msra.mxu0 %v5642
        %5708 = vmatprep.subr.bf16.mxu0 %v5645
        %5709 = vmatpush1.bf16.msra.mxu0 %v5644
        %5710 = vmatprep.subr.bf16.mxu0 %v5647
        %5711 = vmatpush1.bf16.msra.mxu0 %v5646
        %5712 = vmatprep.subr.bf16.mxu0 %v5649
        %5713 = vmatpush1.bf16.msra.mxu0 %v5648
        %5714 = vmatprep.subr.bf16.mxu0 %v5651
        %5715 = vmatpush1.bf16.msra.mxu0 %v5650
        %5716 = vmatprep.subr.bf16.mxu0 %v5653
        %5717 = vmatpush1.bf16.msra.mxu0 %v5652
        %5718 = vmatprep.subr.bf16.mxu0 %v5655
        %5719 = vmatpush1.bf16.msra.mxu0 %v5654
        %5720 = vmatprep.subr.bf16.mxu0 %v5657
        %5721 = vmatpush1.bf16.msra.mxu0 %v5656
        %5722 = vmatprep.subr.bf16.mxu0 %v5659
        %5723 = vmatpush1.bf16.msra.mxu0 %v5658
        %5724 = vmatprep.subr.bf16.mxu0 %v5661
        %5725 = vmatpush1.bf16.msra.mxu0 %v5660
        %5726 = vmatprep.subr.bf16.mxu0 %v5663
        %5727 = vmatpush1.bf16.msra.mxu0 %v5662
        %5728 = vmatprep.subr.bf16.mxu0 %v5665
        %5729 = vmatpush1.bf16.msra.mxu0 %v5664
        %5730 = vmatprep.subr.bf16.mxu0 %v5667
        %5731 = vmatpush1.bf16.msra.mxu0 %v5666
        %5732 = vmatprep.mubr.bf16.mxu0 %v5506
        %5733 = vmatmul.mubr.bf16.gmra.mrb[0].mxu0 %v5505
        %v5734 = vpop.f32.mrb[0].mxu0
        %v5735 = vadd.f32 0.0, %v5734
        %v5736 = vpop.f32.mrb[0].mxu0
        %v5737 = vadd.f32 0.0, %v5736
        %v5738 = vpop.f32.mrb[0].mxu0
        %v5739 = vpop.f32.mrb[0].mxu0
        %5740 = vdwg.mxu0
        %v5741 = vadd.f32 %v5453, %v5735
        %v5742 = vadd.f32 %v5455, %v5737
        %s5743 = scalar_lea.vmem %s14, 6
        %v5744 = vld [vmem:[%s5743] sm:$0x3]
        %v5746 = vsel %vm4890, %v5744, 0
        %5748 = vmatprep.subr.bf16.mxu0 %v4899
        %5749 = vmatpush1.bf16.msra.mxu0 %v4896
        %5750 = vmatprep.subr.bf16.mxu0 0
        %5751 = vmatpush1.bf16.msra.mxu0 0
        %5752 = vmatprep.subr.bf16.mxu0 0
        %5753 = vmatpush1.bf16.msra.mxu0 0
        %5754 = vmatprep.subr.bf16.mxu0 0
        %5755 = vmatpush1.bf16.msra.mxu0 0
        %5756 = vmatprep.subr.bf16.mxu0 0
        %5757 = vmatpush1.bf16.msra.mxu0 0
        %5758 = vmatprep.subr.bf16.mxu0 0
        %5759 = vmatpush1.bf16.msra.mxu0 0
        %5760 = vmatprep.subr.bf16.mxu0 0
        %5761 = vmatpush1.bf16.msra.mxu0 0
        %5762 = vmatprep.subr.bf16.mxu0 0
        %5763 = vmatpush1.bf16.msra.mxu0 0
        %5764 = vmatprep.subr.bf16.mxu0 0
        %5765 = vmatpush1.bf16.msra.mxu0 0
        %5766 = vmatprep.subr.bf16.mxu0 0
        %5767 = vmatpush1.bf16.msra.mxu0 0
        %5768 = vmatprep.subr.bf16.mxu0 0
        %5769 = vmatpush1.bf16.msra.mxu0 0
        %5770 = vmatprep.subr.bf16.mxu0 0
        %5771 = vmatpush1.bf16.msra.mxu0 0
        %5772 = vmatprep.subr.bf16.mxu0 0
        %5773 = vmatpush1.bf16.msra.mxu0 0
        %5774 = vmatprep.subr.bf16.mxu0 0
        %5775 = vmatpush1.bf16.msra.mxu0 0
        %5776 = vmatprep.subr.bf16.mxu0 0
        %5777 = vmatpush1.bf16.msra.mxu0 0
        %5778 = vmatprep.subr.bf16.mxu0 0
        %5779 = vmatpush1.bf16.msra.mxu0 0
        %5780 = vmatprep.mubr.bf16.mxu0 0
        %5781 = vmatmul.mubr.bf16.gmra.mrb[0].mxu0 %v5746
        %v5782 = vpop.f32.mrb[0].mxu0
        %v5783 = vadd.f32 0.0, %v5782
        %v5784 = vpop.f32.mrb[0].mxu0
        %v5785 = vadd.f32 0.0, %v5784
        %v5786 = vpop.f32.mrb[0].mxu0
        %v5787 = vpop.f32.mrb[0].mxu0
        %5788 = vdwg.mxu0
        %v5789 = vpack.c.bf16 %v5783, %v5783
        %v5790 = vpack.c.bf16 %v5785, %v5785
        %s5791 = scalar_lea.vmem [#allocation10], 768
        %v5792 = vld [vmem:[%s5791] sm:$0xff]
        %v5793 = vld [vmem:[%s5791 + $0x8] sm:$0xff]
        %v5794 = vld [vmem:[%s5791 + $0x10] sm:$0xff]
        %v5795 = vld [vmem:[%s5791 + $0x18] sm:$0xff]
        %v5796 = vld [vmem:[%s5791 + $0x20] sm:$0xff]
        %v5797 = vld [vmem:[%s5791 + $0x28] sm:$0xff]
        %v5798 = vld [vmem:[%s5791 + $0x30] sm:$0xff]
        %v5799 = vld [vmem:[%s5791 + $0x38] sm:$0xff]
        %v5800 = vld [vmem:[%s5791 + $0x40] sm:$0xff]
        %v5801 = vld [vmem:[%s5791 + $0x48] sm:$0xff]
        %v5802 = vld [vmem:[%s5791 + $0x50] sm:$0xff]
        %v5803 = vld [vmem:[%s5791 + $0x58] sm:$0xff]
        %v5804 = vld [vmem:[%s5791 + $0x60] sm:$0xff]
        %v5805 = vld [vmem:[%s5791 + $0x68] sm:$0xff]
        %v5806 = vld [vmem:[%s5791 + $0x70] sm:$0xff]
        %v5807 = vld [vmem:[%s5791 + $0x78] sm:$0xff]
        %v5808 = vld [vmem:[%s5791 + $0x80] sm:$0xff]
        %v5809 = vld [vmem:[%s5791 + $0x88] sm:$0xff]
        %v5810 = vld [vmem:[%s5791 + $0x90] sm:$0xff]
        %v5811 = vld [vmem:[%s5791 + $0x98] sm:$0xff]
        %v5812 = vld [vmem:[%s5791 + $0xa0] sm:$0xff]
        %v5813 = vld [vmem:[%s5791 + $0xa8] sm:$0xff]
        %v5814 = vld [vmem:[%s5791 + $0xb0] sm:$0xff]
        %v5815 = vld [vmem:[%s5791 + $0xb8] sm:$0xff]
        %v5816 = vld [vmem:[%s5791 + $0xc0] sm:$0xff]
        %v5817 = vld [vmem:[%s5791 + $0xc8] sm:$0xff]
        %v5818 = vld [vmem:[%s5791 + $0xd0] sm:$0xff]
        %v5819 = vld [vmem:[%s5791 + $0xd8] sm:$0xff]
        %v5820 = vld [vmem:[%s5791 + $0xe0] sm:$0xff]
        %v5821 = vld [vmem:[%s5791 + $0xe8] sm:$0xff]
        %v5822 = vld [vmem:[%s5791 + $0xf0] sm:$0xff]
        %v5823 = vld [vmem:[%s5791 + $0xf8] sm:$0xff]
        %v5856 = vunpack.c.l.b16 %v5792
        %v5857 = vunpack.c.h.b16 %v5792
        %v5858 = vunpack.c.l.b16 %v5793
        %v5859 = vunpack.c.h.b16 %v5793
        %v5860 = vunpack.c.l.b16 %v5794
        %v5861 = vunpack.c.h.b16 %v5794
        %v5862 = vunpack.c.l.b16 %v5795
        %v5863 = vunpack.c.h.b16 %v5795
        %v5864 = vunpack.c.l.b16 %v5796
        %v5865 = vunpack.c.h.b16 %v5796
        %v5866 = vunpack.c.l.b16 %v5797
        %v5867 = vunpack.c.h.b16 %v5797
        %v5868 = vunpack.c.l.b16 %v5798
        %v5869 = vunpack.c.h.b16 %v5798
        %v5870 = vunpack.c.l.b16 %v5799
        %v5871 = vunpack.c.h.b16 %v5799
        %v5872 = vunpack.c.l.b16 %v5800
        %v5873 = vunpack.c.h.b16 %v5800
        %v5874 = vunpack.c.l.b16 %v5801
        %v5875 = vunpack.c.h.b16 %v5801
        %v5876 = vunpack.c.l.b16 %v5802
        %v5877 = vunpack.c.h.b16 %v5802
        %v5878 = vunpack.c.l.b16 %v5803
        %v5879 = vunpack.c.h.b16 %v5803
        %v5880 = vunpack.c.l.b16 %v5804
        %v5881 = vunpack.c.h.b16 %v5804
        %v5882 = vunpack.c.l.b16 %v5805
        %v5883 = vunpack.c.h.b16 %v5805
        %v5884 = vunpack.c.l.b16 %v5806
        %v5885 = vunpack.c.h.b16 %v5806
        %v5886 = vunpack.c.l.b16 %v5807
        %v5887 = vunpack.c.h.b16 %v5807
        %v5888 = vunpack.c.l.b16 %v5808
        %v5889 = vunpack.c.h.b16 %v5808
        %v5890 = vunpack.c.l.b16 %v5809
        %v5891 = vunpack.c.h.b16 %v5809
        %v5892 = vunpack.c.l.b16 %v5810
        %v5893 = vunpack.c.h.b16 %v5810
        %v5894 = vunpack.c.l.b16 %v5811
        %v5895 = vunpack.c.h.b16 %v5811
        %v5896 = vunpack.c.l.b16 %v5812
        %v5897 = vunpack.c.h.b16 %v5812
        %v5898 = vunpack.c.l.b16 %v5813
        %v5899 = vunpack.c.h.b16 %v5813
        %v5900 = vunpack.c.l.b16 %v5814
        %v5901 = vunpack.c.h.b16 %v5814
        %v5902 = vunpack.c.l.b16 %v5815
        %v5903 = vunpack.c.h.b16 %v5815
        %v5904 = vunpack.c.l.b16 %v5816
        %v5905 = vunpack.c.h.b16 %v5816
        %v5906 = vunpack.c.l.b16 %v5817
        %v5907 = vunpack.c.h.b16 %v5817
        %v5908 = vunpack.c.l.b16 %v5818
        %v5909 = vunpack.c.h.b16 %v5818
        %v5910 = vunpack.c.l.b16 %v5819
        %v5911 = vunpack.c.h.b16 %v5819
        %v5912 = vunpack.c.l.b16 %v5820
        %v5913 = vunpack.c.h.b16 %v5820
        %v5914 = vunpack.c.l.b16 %v5821
        %v5915 = vunpack.c.h.b16 %v5821
        %v5916 = vunpack.c.l.b16 %v5822
        %v5917 = vunpack.c.h.b16 %v5822
        %v5918 = vunpack.c.l.b16 %v5823
        %v5919 = vunpack.c.h.b16 %v5823
        %v5920 = vpack.c.b16 %v5858, %v5856
        %v5921 = vpack.c.b16 %v5859, %v5857
        %v5922 = vpack.c.b16 %v5862, %v5860
        %v5923 = vpack.c.b16 %v5863, %v5861
        %v5924 = vpack.c.b16 %v5866, %v5864
        %v5925 = vpack.c.b16 %v5867, %v5865
        %v5926 = vpack.c.b16 %v5870, %v5868
        %v5927 = vpack.c.b16 %v5871, %v5869
        %v5928 = vpack.c.b16 %v5874, %v5872
        %v5929 = vpack.c.b16 %v5875, %v5873
        %v5930 = vpack.c.b16 %v5878, %v5876
        %v5931 = vpack.c.b16 %v5879, %v5877
        %v5932 = vpack.c.b16 %v5882, %v5880
        %v5933 = vpack.c.b16 %v5883, %v5881
        %v5934 = vpack.c.b16 %v5886, %v5884
        %v5935 = vpack.c.b16 %v5887, %v5885
        %v5936 = vpack.c.b16 %v5890, %v5888
        %v5937 = vpack.c.b16 %v5891, %v5889
        %v5938 = vpack.c.b16 %v5894, %v5892
        %v5939 = vpack.c.b16 %v5895, %v5893
        %v5940 = vpack.c.b16 %v5898, %v5896
        %v5941 = vpack.c.b16 %v5899, %v5897
        %v5942 = vpack.c.b16 %v5902, %v5900
        %v5943 = vpack.c.b16 %v5903, %v5901
        %v5944 = vpack.c.b16 %v5906, %v5904
        %v5945 = vpack.c.b16 %v5907, %v5905
        %v5946 = vpack.c.b16 %v5910, %v5908
        %v5947 = vpack.c.b16 %v5911, %v5909
        %v5948 = vpack.c.b16 %v5914, %v5912
        %v5949 = vpack.c.b16 %v5915, %v5913
        %v5950 = vpack.c.b16 %v5918, %v5916
        %v5951 = vpack.c.b16 %v5919, %v5917
        %5984 = vmatprep.subr.bf16.mxu0 %v5921
        %5985 = vmatpush1.bf16.msra.mxu0 %v5920
        %5986 = vmatprep.subr.bf16.mxu0 %v5923
        %5987 = vmatpush1.bf16.msra.mxu0 %v5922
        %5988 = vmatprep.subr.bf16.mxu0 %v5925
        %5989 = vmatpush1.bf16.msra.mxu0 %v5924
        %5990 = vmatprep.subr.bf16.mxu0 %v5927
        %5991 = vmatpush1.bf16.msra.mxu0 %v5926
        %5992 = vmatprep.subr.bf16.mxu0 %v5929
        %5993 = vmatpush1.bf16.msra.mxu0 %v5928
        %5994 = vmatprep.subr.bf16.mxu0 %v5931
        %5995 = vmatpush1.bf16.msra.mxu0 %v5930
        %5996 = vmatprep.subr.bf16.mxu0 %v5933
        %5997 = vmatpush1.bf16.msra.mxu0 %v5932
        %5998 = vmatprep.subr.bf16.mxu0 %v5935
        %5999 = vmatpush1.bf16.msra.mxu0 %v5934
        %6000 = vmatprep.subr.bf16.mxu0 %v5937
        %6001 = vmatpush1.bf16.msra.mxu0 %v5936
        %6002 = vmatprep.subr.bf16.mxu0 %v5939
        %6003 = vmatpush1.bf16.msra.mxu0 %v5938
        %6004 = vmatprep.subr.bf16.mxu0 %v5941
        %6005 = vmatpush1.bf16.msra.mxu0 %v5940
        %6006 = vmatprep.subr.bf16.mxu0 %v5943
        %6007 = vmatpush1.bf16.msra.mxu0 %v5942
        %6008 = vmatprep.subr.bf16.mxu0 %v5945
        %6009 = vmatpush1.bf16.msra.mxu0 %v5944
        %6010 = vmatprep.subr.bf16.mxu0 %v5947
        %6011 = vmatpush1.bf16.msra.mxu0 %v5946
        %6012 = vmatprep.subr.bf16.mxu0 %v5949
        %6013 = vmatpush1.bf16.msra.mxu0 %v5948
        %6014 = vmatprep.subr.bf16.mxu0 %v5951
        %6015 = vmatpush1.bf16.msra.mxu0 %v5950
        %6016 = vmatprep.mubr.bf16.mxu0 %v5790
        %6017 = vmatmul.mubr.bf16.gmra.mrb[0].mxu0 %v5789
        %v6018 = vpop.f32.mrb[0].mxu0
        %v6019 = vadd.f32 0.0, %v6018
        %v6020 = vpop.f32.mrb[0].mxu0
        %v6021 = vadd.f32 0.0, %v6020
        %v6022 = vpop.f32.mrb[0].mxu0
        %v6023 = vpop.f32.mrb[0].mxu0
        %6024 = vdwg.mxu0
        %v6025 = vadd.f32 %v5741, %v6019
        %v6026 = vadd.f32 %v5742, %v6021
        %v6027 = vsel %vm4894, %v6025, 0.0
        %v6028 = vrot.slane %v6027, 4
        %v6029 = vadd.f32 %v6027, %v6028
        %v6030 = vrot.slane %v6029, 2
        %v6031 = vadd.f32 %v6029, %v6030
        %v6032 = vrot.slane %v6031, 1
        %v6033 = vadd.f32 %v6031, %v6032
        %v6034 = vsel %vm4894, %v6026, 0.0
        %v6035 = vrot.slane %v6034, 4
        %v6036 = vadd.f32 %v6034, %v6035
        %v6037 = vrot.slane %v6036, 2
        %v6038 = vadd.f32 %v6036, %v6037
        %v6039 = vrot.slane %v6038, 1
        %v6040 = vadd.f32 %v6038, %v6039
        %v6041 = vld [vmem:[#allocation11] sm:$0xff]
        %v6042 = vld [vmem:[#allocation11 + $0x8] sm:$0xff]
        %v6043 = vld [vmem:[#allocation11 + $0x10] sm:$0xff]
        %v6044 = vld [vmem:[#allocation11 + $0x18] sm:$0xff]
        %v6045 = vld [vmem:[#allocation11 + $0x20] sm:$0xff]
        %v6046 = vld [vmem:[#allocation11 + $0x28] sm:$0xff]
        %v6047 = vld [vmem:[#allocation11 + $0x30] sm:$0xff]
        %v6048 = vld [vmem:[#allocation11 + $0x38] sm:$0xff]
        %v6049 = vld [vmem:[#allocation11 + $0x40] sm:$0xff]
        %v6050 = vld [vmem:[#allocation11 + $0x48] sm:$0xff]
        %v6051 = vld [vmem:[#allocation11 + $0x50] sm:$0xff]
        %v6052 = vld [vmem:[#allocation11 + $0x58] sm:$0xff]
        %v6053 = vld [vmem:[#allocation11 + $0x60] sm:$0xff]
        %v6054 = vld [vmem:[#allocation11 + $0x68] sm:$0xff]
        %v6055 = vld [vmem:[#allocation11 + $0x70] sm:$0xff]
        %v6056 = vld [vmem:[#allocation11 + $0x78] sm:$0xff]
        %v6057 = vld [vmem:[#allocation11 + $0x80] sm:$0xff]
        %v6058 = vld [vmem:[#allocation11 + $0x88] sm:$0xff]
        %v6059 = vld [vmem:[#allocation11 + $0x90] sm:$0xff]
        %v6060 = vld [vmem:[#allocation11 + $0x98] sm:$0xff]
        %v6061 = vld [vmem:[#allocation11 + $0xa0] sm:$0xff]
        %v6062 = vld [vmem:[#allocation11 + $0xa8] sm:$0xff]
        %v6063 = vld [vmem:[#allocation11 + $0xb0] sm:$0xff]
        %v6064 = vld [vmem:[#allocation11 + $0xb8] sm:$0xff]
        %v6065 = vld [vmem:[#allocation11 + $0xc0] sm:$0xff]
        %v6066 = vld [vmem:[#allocation11 + $0xc8] sm:$0xff]
        %v6067 = vld [vmem:[#allocation11 + $0xd0] sm:$0xff]
        %v6068 = vld [vmem:[#allocation11 + $0xd8] sm:$0xff]
        %v6069 = vld [vmem:[#allocation11 + $0xe0] sm:$0xff]
        %v6070 = vld [vmem:[#allocation11 + $0xe8] sm:$0xff]
        %v6071 = vld [vmem:[#allocation11 + $0xf0] sm:$0xff]
        %v6072 = vld [vmem:[#allocation11 + $0xf8] sm:$0xff]
        %v6073 = vld [vmem:[#allocation11 + $0x100] sm:$0xff]
        %v6074 = vld [vmem:[#allocation11 + $0x108] sm:$0xff]
        %v6075 = vld [vmem:[#allocation11 + $0x110] sm:$0xff]
        %v6076 = vld [vmem:[#allocation11 + $0x118] sm:$0xff]
        %v6077 = vld [vmem:[#allocation11 + $0x120] sm:$0xff]
        %v6078 = vld [vmem:[#allocation11 + $0x128] sm:$0xff]
        %v6079 = vld [vmem:[#allocation11 + $0x130] sm:$0xff]
        %v6080 = vld [vmem:[#allocation11 + $0x138] sm:$0xff]
        %v6081 = vld [vmem:[#allocation11 + $0x140] sm:$0xff]
        %v6082 = vld [vmem:[#allocation11 + $0x148] sm:$0xff]
        %v6083 = vld [vmem:[#allocation11 + $0x150] sm:$0xff]
        %v6084 = vld [vmem:[#allocation11 + $0x158] sm:$0xff]
        %v6085 = vld [vmem:[#allocation11 + $0x160] sm:$0xff]
        %v6086 = vld [vmem:[#allocation11 + $0x168] sm:$0xff]
        %v6087 = vld [vmem:[#allocation11 + $0x170] sm:$0xff]
        %v6088 = vld [vmem:[#allocation11 + $0x178] sm:$0xff]
        %v6089 = vld [vmem:[#allocation11 + $0x180] sm:$0xff]
        %v6090 = vld [vmem:[#allocation11 + $0x188] sm:$0xff]
        %v6091 = vld [vmem:[#allocation11 + $0x190] sm:$0xff]
        %v6092 = vld [vmem:[#allocation11 + $0x198] sm:$0xff]
        %v6093 = vld [vmem:[#allocation11 + $0x1a0] sm:$0xff]
        %v6094 = vld [vmem:[#allocation11 + $0x1a8] sm:$0xff]
        %v6095 = vld [vmem:[#allocation11 + $0x1b0] sm:$0xff]
        %v6096 = vld [vmem:[#allocation11 + $0x1b8] sm:$0xff]
        %v6097 = vld [vmem:[#allocation11 + $0x1c0] sm:$0xff]
        %v6098 = vld [vmem:[#allocation11 + $0x1c8] sm:$0xff]
        %v6099 = vld [vmem:[#allocation11 + $0x1d0] sm:$0xff]
        %v6100 = vld [vmem:[#allocation11 + $0x1d8] sm:$0xff]
        %v6101 = vld [vmem:[#allocation11 + $0x1e0] sm:$0xff]
        %v6102 = vld [vmem:[#allocation11 + $0x1e8] sm:$0xff]
        %v6103 = vld [vmem:[#allocation11 + $0x1f0] sm:$0xff]
        %v6104 = vld [vmem:[#allocation11 + $0x1f8] sm:$0xff]
        %6105 = vmatprep.subr.mxu0 %v6042
        %6106 = vmatpush1.msra.mxu0 %v6041
        %6107 = vmatprep.subr.mxu0 %v6044
        %6108 = vmatpush1.msra.mxu0 %v6043
        %6109 = vmatprep.subr.mxu0 %v6046
        %6110 = vmatpush1.msra.mxu0 %v6045
        %6111 = vmatprep.subr.mxu0 %v6048
        %6112 = vmatpush1.msra.mxu0 %v6047
        %6113 = vmatprep.subr.mxu0 %v6050
        %6114 = vmatpush1.msra.mxu0 %v6049
        %6115 = vmatprep.subr.mxu0 %v6052
        %6116 = vmatpush1.msra.mxu0 %v6051
        %6117 = vmatprep.subr.mxu0 %v6054
        %6118 = vmatpush1.msra.mxu0 %v6053
        %6119 = vmatprep.subr.mxu0 %v6056
        %6120 = vmatpush1.msra.mxu0 %v6055
        %6121 = vmatprep.subr.mxu0 %v6058
        %6122 = vmatpush1.msra.mxu0 %v6057
        %6123 = vmatprep.subr.mxu0 %v6060
        %6124 = vmatpush1.msra.mxu0 %v6059
        %6125 = vmatprep.subr.mxu0 %v6062
        %6126 = vmatpush1.msra.mxu0 %v6061
        %6127 = vmatprep.subr.mxu0 %v6064
        %6128 = vmatpush1.msra.mxu0 %v6063
        %6129 = vmatprep.subr.mxu0 %v6066
        %6130 = vmatpush1.msra.mxu0 %v6065
        %6131 = vmatprep.subr.mxu0 %v6068
        %6132 = vmatpush1.msra.mxu0 %v6067
        %6133 = vmatprep.subr.mxu0 %v6070
        %6134 = vmatpush1.msra.mxu0 %v6069
        %6135 = vmatprep.subr.mxu0 %v6072
        %6136 = vmatpush1.msra.mxu0 %v6071
        %6137 = vmatprep.subr.mxu0 %v6074
        %6138 = vmatpush1.msra.mxu0 %v6073
        %6139 = vmatprep.subr.mxu0 %v6076
        %6140 = vmatpush1.msra.mxu0 %v6075
        %6141 = vmatprep.subr.mxu0 %v6078
        %6142 = vmatpush1.msra.mxu0 %v6077
        %6143 = vmatprep.subr.mxu0 %v6080
        %6144 = vmatpush1.msra.mxu0 %v6079
        %6145 = vmatprep.subr.mxu0 %v6082
        %6146 = vmatpush1.msra.mxu0 %v6081
        %6147 = vmatprep.subr.mxu0 %v6084
        %6148 = vmatpush1.msra.mxu0 %v6083
        %6149 = vmatprep.subr.mxu0 %v6086
        %6150 = vmatpush1.msra.mxu0 %v6085
        %6151 = vmatprep.subr.mxu0 %v6088
        %6152 = vmatpush1.msra.mxu0 %v6087
        %6153 = vmatprep.subr.mxu0 %v6090
        %6154 = vmatpush1.msra.mxu0 %v6089
        %6155 = vmatprep.subr.mxu0 %v6092
        %6156 = vmatpush1.msra.mxu0 %v6091
        %6157 = vmatprep.subr.mxu0 %v6094
        %6158 = vmatpush1.msra.mxu0 %v6093
        %6159 = vmatprep.subr.mxu0 %v6096
        %6160 = vmatpush1.msra.mxu0 %v6095
        %6161 = vmatprep.subr.mxu0 %v6098
        %6162 = vmatpush1.msra.mxu0 %v6097
        %6163 = vmatprep.subr.mxu0 %v6100
        %6164 = vmatpush1.msra.mxu0 %v6099
        %6165 = vmatprep.subr.mxu0 %v6102
        %6166 = vmatpush1.msra.mxu0 %v6101
        %6167 = vmatprep.subr.mxu0 %v6104
        %6168 = vmatpush1.msra.mxu0 %v6103
        %6169 = vmatprep.mubr.f32.mxu0 %v6040
        %6170 = vmatmul.mubr.f32.gmra.mrb[0].mxu0 %v6033
        %v6171 = vpop.f32.mrb[0].mxu0
        %v6172 = vadd.f32 0.0, %v6171
        %v6173 = vpop.f32.mrb[0].mxu0
        %v6174 = vadd.f32 0.0, %v6173
        %6175 = vdwg.mxu0
        %v6176 = vlaneseq
        %v6177 = vshrl.u32 %v6176, 7
        %v6178 = vsub.s32 0, %v6177
        %v6179 = vrot.slane %v6172, %v6178
        %v6180 = vlaneseq
        %v6181 = vshrl.u32 %v6180, 7
        %v6182 = vsub.s32 0, %v6181
        %v6183 = vrot.slane %v6174, %v6182
        %v6184 = vsub.f32 %v6025, %v6179
        %v6185 = vsub.f32 %v6026, %v6183
        %v6186 = vmul.f32 %v6184, %v6184
        %v6187 = vmul.f32 %v6185, %v6185
        %v6188 = vsel %vm4894, %v6186, 0.0
        %v6189 = vrot.slane %v6188, 4
        %v6190 = vadd.f32 %v6188, %v6189
        %v6191 = vrot.slane %v6190, 2
        %v6192 = vadd.f32 %v6190, %v6191
        %v6193 = vrot.slane %v6192, 1
        %v6194 = vadd.f32 %v6192, %v6193
        %v6195 = vsel %vm4894, %v6187, 0.0
        %v6196 = vrot.slane %v6195, 4
        %v6197 = vadd.f32 %v6195, %v6196
        %v6198 = vrot.slane %v6197, 2
        %v6199 = vadd.f32 %v6197, %v6198
        %v6200 = vrot.slane %v6199, 1
        %v6201 = vadd.f32 %v6199, %v6200
        %6202 = vmatprep.subr.mxu0 %v6042
        %6203 = vmatpush1.msra.mxu0 %v6041
        %6204 = vmatprep.subr.mxu0 %v6044
        %6205 = vmatpush1.msra.mxu0 %v6043
        %6206 = vmatprep.subr.mxu0 %v6046
        %6207 = vmatpush1.msra.mxu0 %v6045
        %6208 = vmatprep.subr.mxu0 %v6048
        %6209 = vmatpush1.msra.mxu0 %v6047
        %6210 = vmatprep.subr.mxu0 %v6050
        %6211 = vmatpush1.msra.mxu0 %v6049
        %6212 = vmatprep.subr.mxu0 %v6052
        %6213 = vmatpush1.msra.mxu0 %v6051
        %6214 = vmatprep.subr.mxu0 %v6054
        %6215 = vmatpush1.msra.mxu0 %v6053
        %6216 = vmatprep.subr.mxu0 %v6056
        %6217 = vmatpush1.msra.mxu0 %v6055
        %6218 = vmatprep.subr.mxu0 %v6058
        %6219 = vmatpush1.msra.mxu0 %v6057
        %6220 = vmatprep.subr.mxu0 %v6060
        %6221 = vmatpush1.msra.mxu0 %v6059
        %6222 = vmatprep.subr.mxu0 %v6062
        %6223 = vmatpush1.msra.mxu0 %v6061
        %6224 = vmatprep.subr.mxu0 %v6064
        %6225 = vmatpush1.msra.mxu0 %v6063
        %6226 = vmatprep.subr.mxu0 %v6066
        %6227 = vmatpush1.msra.mxu0 %v6065
        %6228 = vmatprep.subr.mxu0 %v6068
        %6229 = vmatpush1.msra.mxu0 %v6067
        %6230 = vmatprep.subr.mxu0 %v6070
        %6231 = vmatpush1.msra.mxu0 %v6069
        %6232 = vmatprep.subr.mxu0 %v6072
        %6233 = vmatpush1.msra.mxu0 %v6071
        %6234 = vmatprep.subr.mxu0 %v6074
        %6235 = vmatpush1.msra.mxu0 %v6073
        %6236 = vmatprep.subr.mxu0 %v6076
        %6237 = vmatpush1.msra.mxu0 %v6075
        %6238 = vmatprep.subr.mxu0 %v6078
        %6239 = vmatpush1.msra.mxu0 %v6077
        %6240 = vmatprep.subr.mxu0 %v6080
        %6241 = vmatpush1.msra.mxu0 %v6079
        %6242 = vmatprep.subr.mxu0 %v6082
        %6243 = vmatpush1.msra.mxu0 %v6081
        %6244 = vmatprep.subr.mxu0 %v6084
        %6245 = vmatpush1.msra.mxu0 %v6083
        %6246 = vmatprep.subr.mxu0 %v6086
        %6247 = vmatpush1.msra.mxu0 %v6085
        %6248 = vmatprep.subr.mxu0 %v6088
        %6249 = vmatpush1.msra.mxu0 %v6087
        %6250 = vmatprep.subr.mxu0 %v6090
        %6251 = vmatpush1.msra.mxu0 %v6089
        %6252 = vmatprep.subr.mxu0 %v6092
        %6253 = vmatpush1.msra.mxu0 %v6091
        %6254 = vmatprep.subr.mxu0 %v6094
        %6255 = vmatpush1.msra.mxu0 %v6093
        %6256 = vmatprep.subr.mxu0 %v6096
        %6257 = vmatpush1.msra.mxu0 %v6095
        %6258 = vmatprep.subr.mxu0 %v6098
        %6259 = vmatpush1.msra.mxu0 %v6097
        %6260 = vmatprep.subr.mxu0 %v6100
        %6261 = vmatpush1.msra.mxu0 %v6099
        %6262 = vmatprep.subr.mxu0 %v6102
        %6263 = vmatpush1.msra.mxu0 %v6101
        %6264 = vmatprep.subr.mxu0 %v6104
        %6265 = vmatpush1.msra.mxu0 %v6103
        %6266 = vmatprep.mubr.f32.mxu0 %v6201
        %6267 = vmatmul.mubr.f32.gmra.mrb[0].mxu0 %v6194
        %v6268 = vpop.f32.mrb[0].mxu0
        %v6269 = vadd.f32 1e-05, %v6268
        %v6270 = vpop.f32.mrb[0].mxu0
        %v6271 = vadd.f32 1e-05, %v6270
        %6272 = vdwg.mxu0
        %v6273 = vrsqrt.pop %v6269
        %v6274 = vrsqrt.pop %v6271
        %v6275 = vlaneseq
        %v6276 = vshrl.u32 %v6275, 7
        %v6277 = vsub.s32 0, %v6276
        %v6278 = vrot.slane %v6273, %v6277
        %v6279 = vlaneseq
        %v6280 = vshrl.u32 %v6279, 7
        %v6281 = vsub.s32 0, %v6280
        %v6282 = vrot.slane %v6274, %v6281
        %v6283 = vmul.f32 %v6184, %v6278
        %v6284 = vmul.f32 %v6185, %v6282
        %v6285 = vld [vmem:[%s17] sm:$0x3]
        %v6287 = vlaneseq
        %v6288 = vshrl.u32 %v6287, 7
        %v6289 = vsub.s32 0, %v6288
        %v6290 = vrot.slane %v6285, %v6289
        %v6291 = vlaneseq
        %v6292 = vshrl.u32 %v6291, 7
        %v6293 = vsub.s32 1, %v6292
        %v6294 = vrot.slane %v6285, %v6293
        %v6297 = vmul.f32 %v6283, %v6290
        %v6298 = vmul.f32 %v6284, %v6294
        %v6299 = vld [vmem:[%s18] sm:$0x3]
        %v6301 = vlaneseq
        %v6302 = vshrl.u32 %v6301, 7
        %v6303 = vsub.s32 0, %v6302
        %v6304 = vrot.slane %v6299, %v6303
        %v6305 = vlaneseq
        %v6306 = vshrl.u32 %v6305, 7
        %v6307 = vsub.s32 1, %v6306
        %v6308 = vrot.slane %v6299, %v6307
        %v6311 = vadd.f32 %v6297, %v6304
        %v6312 = vadd.f32 %v6298, %v6308
        %vm6313 = vcmp.gt.f32.partialorder %v6311, 0.0
        %vm6314 = vcmp.gt.f32.partialorder %v6312, 0.0
        %v6315 = vmul.f32 %v6311, 0.2
        %v6316 = vmul.f32 %v6312, 0.2
        %v6317 = vsel %vm6313, %v6311, %v6315
        %v6318 = vsel %vm6314, %v6312, %v6316
        %v6319 = vld [vmem:[%s19] sm:$0xf]
        %v6320 = vunpack.c.l.bf16 %v6319
        %v6322 = vcombine.high %v6320, %v6320
        %v6324 = vmul.f32 %v6317, %v6320
        %v6325 = vmul.f32 %v6318, %v6322
        %v6326 = vsel %vm4894, %v6324, 0.0
        %v6327 = vsel %vm4894, %v6325, 0.0
        %v6328 = vadd.f32 %v6326, %v6327
        %6329 = vadd.xlane.f32.xlu0 %v6328
        %v6330 = vpop.xlane.xlu0 %6329
        %v6331 = vsel %vm4894, %v6330, 0.0
        %v6332 = vrot.slane %v6331, 4
        %v6333 = vadd.f32 %v6331, %v6332
        %v6334 = vrot.slane %v6333, 2
        %v6335 = vadd.f32 %v6333, %v6334
        %v6336 = vrot.slane %v6335, 1
        %v6337 = vadd.f32 %v6335, %v6336
        %v6338 = vld [vmem:[#allocation2] sm:$0x1]
        %v6339 = vadd.f32 %v6337, %v6338
        %vm6340 = vcmask 0
        %6341 = vst.msk [vmem:[%s742] sm:$0x1] %vm6340, %v6339
        %p6342 = scmp.lt.s32.totalorder %s38, 1
        %s6343 = scalar_select %p6342, %s38, 1
        %s6344 = scalar_lea.vmem %s21, %s6343
        // Predicated region
        $region129: #{critic_forward.1} parent=103 // pred_check
          %p6345 = pneg %p502
        $region130: #{critic_forward.1} parent=103 // pred_check_branch
          %6347 = sbr.rel (%p6345) target = $region132
        $region131: #{critic_forward.1} parent=103 // pred_region
          _
        $region132: #{critic_forward.1} parent=103 // pred_fallthru
          _
      $region104: #{critic_forward.1} parent=5 // pred_fallthru
        _
      %p6348 = scmp.le.s32.totalorder 2, %s33
      // Predicated region
      $region133: #{critic_forward.1} parent=5 // pred_check
        %p6349 = pneg %p6348
      $region134: #{critic_forward.1} parent=5 // pred_check_branch
        %6351 = sbr.rel (%p6349) target = $region136
      $region135: #{critic_forward.1} parent=5 // pred_region
        %s6352 = ssub.s32 %s33, 2
        // Predicated region
        $region137: #{critic_forward.1} parent=135 // pred_check
          %p6353 = pneg %p508
        $region138: #{critic_forward.1} parent=135 // pred_check_branch
          %6355 = sbr.rel (%p6353) target = $region140
        $region139: #{critic_forward.1} parent=135 // pred_region
          %p6356 = scmp.lt.s32.totalorder %s39, 1
          %s6357 = scalar_select %p6356, %s39, 1
          %s6358 = scalar_lea.vmem %s21, %s6357
        $region140: #{critic_forward.1} parent=135 // pred_fallthru
          _
      $region136: #{critic_forward.1} parent=5 // pred_fallthru
        _
    $region6: #{critic_forward.1} parent=1 // loop_footer
      %s37 = sadd.s32 1, %s33
    $region7: #{critic_forward.1} parent=1 // loop_footer_branch
      %32 = sbr.rel target = $region3
    $region8: #{critic_forward.1} parent=1 // loop_exit
      _
    %6359 = vsyncpa [#allocation4], 1
    %s6360 = scalar_lea.sflag [#allocation4], 1
    %6361 = vsyncpa %s6360, 1
    %6362 = vsyncpa [#allocation6], 1
    %6363 = vsyncpa [#allocation9], 1
    %6364 = vsyncpa [#allocation12], 1

</llo_original>
